<compile_context>
chip_gen: v7x
topology: tpu7x:2x2x1
jax: 0.10.0
libtpu: 0.0.40
codegen_flags: <defaults>
</compile_context>

<pallas_src>
import math

import jax
import jax.numpy as jnp
from jax import lax
from jax.experimental import pallas as pl
from jax.experimental.pallas import tpu as pltpu

_HP = 128        # per-gate lane padding (one full lane tile per gate)
_BN_EPS = 1e-5


# ----------------------------------------------------------------------------
# Fused kernel
# ----------------------------------------------------------------------------
def _build_fused_kernel(Td, Ts, n_layers, Bp, Hp):
    def kernel(*refs):
        it = iter(refs)
        xd_ref = next(it)          # (Td*Bp, M)  time-major, batch padded to 8
        xs_ref = next(it)          # (Ts*Bp, M)
        xam_ref = next(it)         # (Bp, Hp)    xa/xm packed into spare lanes
        wih_d = next(it)           # (M, 4*Hp)
        whh_d = next(it)           # (Hp, 4*Hp)
        b_d = next(it)             # (1, 4*Hp)
        wih_s0 = next(it)          # (M, 4*Hp)
        whh_s0 = next(it)          # (Hp, 4*Hp)
        b_s0 = next(it)            # (1, 4*Hp)
        deep = [(next(it), next(it)) for _ in range(n_layers - 1)]
        bn1_ref = next(it)         # (2, 2*Hp)   rows = [scale, shift]
        w1_ref = next(it)          # (2*Hp, H2)
        b1_ref = next(it)          # (1, H2)
        bn2_ref = next(it)         # (2, H2)
        w2_ref = next(it)          # (H2, 2)
        b2_ref = next(it)          # (1, 2)
        out_ref = next(it)         # (Bp, 2)

        def cell(g, c):
            # PyTorch gate order i, f, g, o; each gate owns one 128-lane tile,
            # so every slice is lane-tile aligned.
            i_g = jax.nn.sigmoid(g[:, 0 * Hp:1 * Hp])
            f_g = jax.nn.sigmoid(g[:, 1 * Hp:2 * Hp])
            g_g = jnp.tanh(g[:, 2 * Hp:3 * Hp])
            o_g = jax.nn.sigmoid(g[:, 3 * Hp:4 * Hp])
            c = f_g * c + i_g * g_g
            return o_g * jnp.tanh(c), c

        zeros = jnp.zeros((Bp, Hp), jnp.float32)

        # --- LSTM_default: batched input projection + unrolled recurrence ----
        gx_d = jnp.dot(xd_ref[...], wih_d[...],
                       preferred_element_type=jnp.float32) + b_d[...]
        h_d, c_d = zeros, zeros
        for t in range(Td):
            g = gx_d[t * Bp:(t + 1) * Bp, :] + jnp.dot(
                h_d, whh_d[...], preferred_element_type=jnp.float32)
            h_d, c_d = cell(g, c_d)

        # --- LSTM_system stack: wavefront by value (no scratch) --------------
        gx_s = jnp.dot(xs_ref[...], wih_s0[...],
                       preferred_element_type=jnp.float32) + b_s0[...]
        h = [zeros] * n_layers
        c = [zeros] * n_layers
        for t in range(Ts):
            g = gx_s[t * Bp:(t + 1) * Bp, :] + jnp.dot(
                h[0], whh_s0[...], preferred_element_type=jnp.float32)
            h[0], c[0] = cell(g, c[0])
            for l in range(1, n_layers):
                w_cat, b_l = deep[l - 1]
                # [input | prev hidden] -> one fused (Bp, 2Hp) @ (2Hp, 4Hp)
                g = jnp.dot(jnp.concatenate([h[l - 1], h[l]], axis=1),
                            w_cat[...],
                            preferred_element_type=jnp.float32) + b_l[...]
                h[l], c[l] = cell(g, c[l])

        # --- MLP head: BN -> ReLU -> Linear -> BN -> ReLU -> (Dropout=id) -> Linear
        # Padded lanes of h_d are exactly 0, so xa/xm live in those lanes.
        bn1 = bn1_ref[...]
        feat = jnp.concatenate([h_d + xam_ref[...], h[n_layers - 1]], axis=1)
        z = jnp.maximum(feat * bn1[0:1, :] + bn1[1:2, :], 0.0)
        z = jnp.dot(z, w1_ref[...],
                    preferred_element_type=jnp.float32) + b1_ref[...]
        bn2 = bn2_ref[...]
        z = jnp.maximum(z * bn2[0:1, :] + bn2[1:2, :], 0.0)
        out_ref[...] = jnp.dot(z, w2_ref[...],
                               preferred_element_type=jnp.float32) + b2_ref[...]

    return kernel


# ----------------------------------------------------------------------------
# Host-side weight packing (constant-folded under jit)
# ----------------------------------------------------------------------------
def _pack_lstm(wih, whh, bih, bhh, in_pad, Hp=_HP):
    """Gate-pad LSTM weights so each gate occupies its own 128-lane tile.

    wih: (4H, I), whh: (4H, H), biases (4H,).  PyTorch gate order i, f, g, o.
    Returns wih_t (in_pad, 4*Hp), whh_t (Hp, 4*Hp), b (1, 4*Hp).
    Padded rows/cols are zero -> padded lanes of h, c stay exactly 0.
    """
    four_h, I = wih.shape
    H = four_h // 4
    wih_g = wih.reshape(4, H, I).astype(jnp.float32)
    whh_g = whh.reshape(4, H, H).astype(jnp.float32)
    wih_p = jnp.zeros((4, Hp, in_pad), jnp.float32).at[:, :H, :I].set(wih_g)
    whh_p = jnp.zeros((4, Hp, Hp), jnp.float32).at[:, :H, :H].set(whh_g)
    b_p = jnp.zeros((4, Hp), jnp.float32).at[:, :H].set(
        (bih + bhh).reshape(4, H).astype(jnp.float32))
    wih_t = jnp.transpose(wih_p, (2, 0, 1)).reshape(in_pad, 4 * Hp)
    whh_t = jnp.transpose(whh_p, (2, 0, 1)).reshape(Hp, 4 * Hp)
    return wih_t, whh_t, b_p.reshape(1, 4 * Hp)


def _bn_scale_shift(bn_stack, eps=_BN_EPS):
    gamma, beta, mean, var = bn_stack[0], bn_stack[1], bn_stack[2], bn_stack[3]
    scale = gamma * lax.rsqrt(var + eps)
    shift = beta - mean * scale
    return scale.astype(jnp.float32), shift.astype(jnp.float32)


# ----------------------------------------------------------------------------
# Forward wrapper (one pallas_call)
# ----------------------------------------------------------------------------
def hybrid_lstm_lc_forward(params, xd, xs, xa, xm):
    """Mirrors HybridLSTM_LC.forward (eval mode)."""
    B, Td, M = xd.shape
    Ts = xs.shape[1]
    Hp = _HP
    Hd = params["lstm_d"][0]["whh"].shape[1]          # 64
    H = params["lstm_s"][0]["whh"].shape[1]           # features
    H2 = params["w1"].shape[0]                        # features // 2
    n_layers = len(params["lstm_s"])
    assert Hd <= Hp and H <= Hp and Hd + M + 1 <= Hp

    Bp = ((B + 7) // 8) * 8                           # sublane-tile padded batch

    def pad_batch_tm(x, T):
        # (B, T, M) -> time-major (T*Bp, M), batch zero-padded to Bp rows.
        x = jnp.transpose(x, (1, 0, 2)).astype(jnp.float32)
        x = jnp.pad(x, ((0, 0), (0, Bp - B), (0, 0)))
        return x.reshape(T * Bp, M)

    xd_flat = pad_batch_tm(xd, Td)
    xs_flat = pad_batch_tm(xs, Ts)

    # xa / xm packed into the zero lanes of the xd-hidden 128-lane tile.
    xam = jnp.zeros((Bp, Hp), jnp.float32)
    xam = xam.at[:B, Hd:Hd + M].set(xa.astype(jnp.float32))
    xam = xam.at[:B, Hd + M].set(xm.reshape(-1).astype(jnp.float32))

    # LSTM weight packing.
    pd = params["lstm_d"][0]
    wih_d, whh_d, b_d = _pack_lstm(pd["wih"], pd["whh"], pd["bih"], pd["bhh"], M)
    p0 = params["lstm_s"][0]
    wih_s0, whh_s0, b_s0 = _pack_lstm(p0["wih"], p0["whh"], p0["bih"], p0["bhh"], M)
    deep = []
    for p in params["lstm_s"][1:]:
        wih_l, whh_l, b_l = _pack_lstm(p["wih"], p["whh"], p["bih"], p["bhh"], Hp)
        deep.append((jnp.concatenate([wih_l, whh_l], axis=0), b_l))   # (2Hp, 4Hp)

    # Head parameters permuted to the packed 256-lane feature layout:
    #   lanes [0:Hd)        -> xd_out features
    #   lanes [Hd:Hd+M)     -> xa features
    #   lane  [Hd+M]        -> xm
    #   lanes [Hp:Hp+H)     -> xs_out features
    sc1, sh1 = _bn_scale_shift(params["bn1"])
    bn1 = jnp.zeros((2, 2 * Hp), jnp.float32)
    bn1 = bn1.at[0, :Hd].set(sc1[:Hd]).at[1, :Hd].set(sh1[:Hd])
    bn1 = bn1.at[0, Hd:Hd + M].set(sc1[Hd + H:Hd + H + M])
    bn1 = bn1.at[1, Hd:Hd + M].set(sh1[Hd + H:Hd + H + M])
    bn1 = bn1.at[0, Hd + M].set(sc1[Hd + H + M])
    bn1 = bn1.at[1, Hd + M].set(sh1[Hd + H + M])
    bn1 = bn1.at[0, Hp:Hp + H].set(sc1[Hd:Hd + H])
    bn1 = bn1.at[1, Hp:Hp + H].set(sh1[Hd:Hd + H])

    w1t = params["w1"].T.astype(jnp.float32)          # (F, H2)
    w1 = jnp.zeros((2 * Hp, H2), jnp.float32)
    w1 = w1.at[:Hd].set(w1t[:Hd])
    w1 = w1.at[Hd:Hd + M].set(w1t[Hd + H:Hd + H + M])
    w1 = w1.at[Hd + M].set(w1t[Hd + H + M])
    w1 = w1.at[Hp:Hp + H].set(w1t[Hd:Hd + H])
    b1 = params["b1"].reshape(1, H2).astype(jnp.float32)

    sc2, sh2 = _bn_scale_shift(params["bn2"])
    bn2 = jnp.stack([sc2, sh2]).astype(jnp.float32)
    w2 = params["w2"].T.astype(jnp.float32)           # (H2, 2)
    b2 = params["b2"].reshape(1, 2).astype(jnp.float32)

    args = [xd_flat, xs_flat, xam, wih_d, whh_d, b_d, wih_s0, whh_s0, b_s0]
    for w_cat, b_l in deep:
        args += [w_cat, b_l]
    args += [bn1, w1, b1, bn2, w2, b2]

    kernel = _build_fused_kernel(Td, Ts, n_layers, Bp, Hp)
    vmem = pl.BlockSpec(memory_space=pltpu.MemorySpace.VMEM)
    out = pl.pallas_call(
        kernel,
        out_shape=jax.ShapeDtypeStruct((Bp, 2), jnp.float32),
        in_specs=[vmem] * len(args),
        out_specs=vmem,
    )(*args)
    return out[:B]


# ----------------------------------------------------------------------------
# Pure-JAX reference (for correctness check)
# ----------------------------------------------------------------------------
def _lstm_ref(x_btI, wih, whh, bih, bhh):
    B, T, _ = x_btI.shape
    H = whh.shape[1]
    h = jnp.zeros((B, H), jnp.float32)
    c = jnp.zeros((B, H), jnp.float32)
    outs = []
    for t in range(T):
        g = x_btI[:, t, :] @ wih.T + h @ whh.T + bih + bhh
        i = jax.nn.sigmoid(g[:, 0 * H:1 * H])
        f = jax.nn.sigmoid(g[:, 1 * H:2 * H])
        gg = jnp.tanh(g[:, 2 * H:3 * H])
        o = jax.nn.sigmoid(g[:, 3 * H:4 * H])
        c = f * c + i * gg
        h = o * jnp.tanh(c)
        outs.append(h)
    return jnp.stack(outs, axis=1)


def ref_forward(params, xd, xs, xa, xm):
    pd = params["lstm_d"][0]
    hd = _lstm_ref(xd, pd["wih"], pd["whh"], pd["bih"], pd["bhh"])[:, -1, :]
    x = xs
    for p in params["lstm_s"]:
        x = _lstm_ref(x, p["wih"], p["whh"], p["bih"], p["bhh"])
    hs = x[:, -1, :]
    tmp = jnp.concatenate([hd, hs, xa, xm.reshape(-1, 1)], axis=1)
    bn1 = params["bn1"]
    z = (tmp - bn1[2]) / jnp.sqrt(bn1[3] + _BN_EPS) * bn1[0] + bn1[1]
    z = jnp.maximum(z, 0.0)
    z = z @ params["w1"].T + params["b1"]
    bn2 = params["bn2"]
    z = (z - bn2[2]) / jnp.sqrt(bn2[3] + _BN_EPS) * bn2[0] + bn2[1]
    z = jnp.maximum(z, 0.0)
    return z @ params["w2"].T + params["b2"]


# ----------------------------------------------------------------------------
# Deterministic parameter init (PyTorch-like shapes; synthetic values)
# ----------------------------------------------------------------------------
def init_params(key, cfg):
    M = cfg["mean_val"]
    H = cfg["features"]
    L = cfg["layers"]
    keys = iter(jax.random.split(key, 64))

    def u(shape, bound):
        return jax.random.uniform(next(keys), shape, jnp.float32, -bound, bound)

    params = {}

    # nn.LSTM(M, 64, 1)
    kd = 1.0 / math.sqrt(64)
    params["lstm_d"] = [dict(wih=u((4 * 64, M), kd), whh=u((4 * 64, 64), kd),
                             bih=u((4 * 64,), kd), bhh=u((4 * 64,), kd))]

    # nn.LSTM(M, H, L)
    ks = 1.0 / math.sqrt(H)
    layers = []
    for l in range(L):
        in_sz = M if l == 0 else H
        layers.append(dict(wih=u((4 * H, in_sz), ks), whh=u((4 * H, H), ks),
                           bih=u((4 * H,), ks), bhh=u((4 * H,), ks)))
    params["lstm_s"] = layers

    # NN head
    F = 64 + H + M + 1
    H2 = H // 2
    params["bn1"] = jnp.stack([jnp.ones(F), jnp.zeros(F),
                               jnp.zeros(F), jnp.ones(F)]).astype(jnp.float32)
    k1 = 1.0 / math.sqrt(F)
    params["w1"] = u((H2, F), k1)
    params["b1"] = u((H2,), k1)
    params["bn2"] = jnp.stack([jnp.ones(H2), jnp.zeros(H2),
                               jnp.zeros(H2), jnp.ones(H2)]).astype(jnp.float32)
    k2 = 1.0 / math.sqrt(H2)
    params["w2"] = u((2, H2), k2)
    params["b2"] = u((2,), k2)
    return params


# ----------------------------------------------------------------------------
if __name__ == "__main__":
    model_cfg = dict(dflt_seq=8, hist_seq=8, mean_val=4, features=32, layers=2)
    B = 4

    root = jax.random.PRNGKey(0)
    kp, kd, ks, ka, km = jax.random.split(root, 5)

    params = init_params(kp, model_cfg)
    xd = jax.random.normal(kd, (B, model_cfg["dflt_seq"], model_cfg["mean_val"]),
                           jnp.float32)
    xs = jax.random.normal(ks, (B, model_cfg["hist_seq"], model_cfg["mean_val"]),
                           jnp.float32)
    xa = jax.random.normal(ka, (B, model_cfg["mean_val"]), jnp.float32)
    xm = jax.random.normal(km, (B,), jnp.float32)

    fwd = jax.jit(lambda xd, xs, xa, xm: hybrid_lstm_lc_forward(params, xd, xs, xa, xm))
    out = fwd(xd, xs, xa, xm)
    jax.block_until_ready(out)
    assert out.shape == (B, 2) and out.dtype == jnp.float32

    ref = ref_forward(params, xd, xs, xa, xm)
    assert jnp.allclose(out, ref, rtol=2e-3, atol=2e-3), (out, ref)
    print("KERNEL_OK")
</pallas_src>

<mosaic_0001>
module attributes {stable_mosaic.version = 11 : i64} {
  func.func @kernel(%arg0: memref<64x4xf32, #tpu.memory_space<vmem>>, %arg1: memref<64x4xf32, #tpu.memory_space<vmem>>, %arg2: memref<8x128xf32, #tpu.memory_space<vmem>>, %arg3: memref<4x512xf32, #tpu.memory_space<vmem>>, %arg4: memref<128x512xf32, #tpu.memory_space<vmem>>, %arg5: memref<1x512xf32, #tpu.memory_space<vmem>>, %arg6: memref<4x512xf32, #tpu.memory_space<vmem>>, %arg7: memref<128x512xf32, #tpu.memory_space<vmem>>, %arg8: memref<1x512xf32, #tpu.memory_space<vmem>>, %arg9: memref<256x512xf32, #tpu.memory_space<vmem>>, %arg10: memref<1x512xf32, #tpu.memory_space<vmem>>, %arg11: memref<2x256xf32, #tpu.memory_space<vmem>>, %arg12: memref<256x16xf32, #tpu.memory_space<vmem>>, %arg13: memref<1x16xf32, #tpu.memory_space<vmem>>, %arg14: memref<2x16xf32, #tpu.memory_space<vmem>>, %arg15: memref<16x2xf32, #tpu.memory_space<vmem>>, %arg16: memref<1x2xf32, #tpu.memory_space<vmem>>, %arg17: memref<8x2xf32, #tpu.memory_space<vmem>>) attributes {dimension_semantics = [], scalar_prefetch = 0 : i64, scratch_operands = 0 : i64, tpu.core_type = #tpu.core_type<tc>} {
    %cst = arith.constant 0.000000e+00 : f32
    %0 = vector.broadcast %cst : f32 to vector<8x128xf32>
    %c0 = arith.constant 0 : index
    %c0_0 = arith.constant 0 : index
    %1 = vector.load %arg0[%c0, %c0_0] : memref<64x4xf32, #tpu.memory_space<vmem>>, vector<64x4xf32>
    %c0_1 = arith.constant 0 : index
    %c0_2 = arith.constant 0 : index
    %2 = vector.load %arg3[%c0_1, %c0_2] : memref<4x512xf32, #tpu.memory_space<vmem>>, vector<4x512xf32>
    %cst_3 = arith.constant dense<0.000000e+00> : vector<64x512xf32>
    %3 = tpu.matmul %1, %2, %cst_3 {dimension_numbers = #tpu.dot_dimension_numbers<[1], [0], [0], [1], [0, 0, 1, 1], [], []>} : vector<64x4xf32>, vector<4x512xf32>, vector<64x512xf32> -> vector<64x512xf32>
    %c0_4 = arith.constant 0 : index
    %c0_5 = arith.constant 0 : index
    %4 = vector.load %arg5[%c0_4, %c0_5] : memref<1x512xf32, #tpu.memory_space<vmem>>, vector<1x512xf32>
    %5 = vector.broadcast %4 : vector<1x512xf32> to vector<64x512xf32>
    %6 = arith.addf %3, %5 : vector<64x512xf32>
    %7 = vector.extract_strided_slice %6 {offsets = [0, 0], sizes = [8, 512], strides = [1, 1]} : vector<64x512xf32> to vector<8x512xf32>
    %c0_6 = arith.constant 0 : index
    %c0_7 = arith.constant 0 : index
    %8 = vector.load %arg4[%c0_6, %c0_7] : memref<128x512xf32, #tpu.memory_space<vmem>>, vector<128x512xf32>
    %cst_8 = arith.constant dense<0.000000e+00> : vector<8x512xf32>
    %9 = tpu.matmul %0, %8, %cst_8 {dimension_numbers = #tpu.dot_dimension_numbers<[1], [0], [0], [1], [0, 0, 1, 1], [], []>} : vector<8x128xf32>, vector<128x512xf32>, vector<8x512xf32> -> vector<8x512xf32>
    %10 = arith.addf %7, %9 : vector<8x512xf32>
    %11 = vector.extract_strided_slice %10 {offsets = [0, 0], sizes = [8, 128], strides = [1, 1]} : vector<8x512xf32> to vector<8x128xf32>
    %12 = arith.negf %11 : vector<8x128xf32>
    %13 = math.exp %12 : vector<8x128xf32>
    %cst_9 = arith.constant 1.000000e+00 : f32
    %14 = vector.broadcast %cst_9 : f32 to vector<8x128xf32>
    %15 = arith.addf %14, %13 : vector<8x128xf32>
    %16 = arith.divf %14, %15 : vector<8x128xf32>
    %17 = vector.extract_strided_slice %10 {offsets = [0, 128], sizes = [8, 128], strides = [1, 1]} : vector<8x512xf32> to vector<8x128xf32>
    %18 = arith.negf %17 : vector<8x128xf32>
    %19 = math.exp %18 : vector<8x128xf32>
    %cst_10 = arith.constant 1.000000e+00 : f32
    %20 = vector.broadcast %cst_10 : f32 to vector<8x128xf32>
    %21 = arith.addf %20, %19 : vector<8x128xf32>
    %22 = arith.divf %20, %21 : vector<8x128xf32>
    %23 = vector.extract_strided_slice %10 {offsets = [0, 256], sizes = [8, 128], strides = [1, 1]} : vector<8x512xf32> to vector<8x128xf32>
    %24 = math.tanh %23 : vector<8x128xf32>
    %25 = vector.extract_strided_slice %10 {offsets = [0, 384], sizes = [8, 128], strides = [1, 1]} : vector<8x512xf32> to vector<8x128xf32>
    %26 = arith.negf %25 : vector<8x128xf32>
    %27 = math.exp %26 : vector<8x128xf32>
    %cst_11 = arith.constant 1.000000e+00 : f32
    %28 = vector.broadcast %cst_11 : f32 to vector<8x128xf32>
    %29 = arith.addf %28, %27 : vector<8x128xf32>
    %30 = arith.divf %28, %29 : vector<8x128xf32>
    %31 = arith.mulf %22, %0 : vector<8x128xf32>
    %32 = arith.mulf %16, %24 : vector<8x128xf32>
    %33 = arith.addf %31, %32 : vector<8x128xf32>
    %34 = math.tanh %33 : vector<8x128xf32>
    %35 = arith.mulf %30, %34 : vector<8x128xf32>
    %36 = vector.extract_strided_slice %6 {offsets = [8, 0], sizes = [8, 512], strides = [1, 1]} : vector<64x512xf32> to vector<8x512xf32>
    %c0_12 = arith.constant 0 : index
    %c0_13 = arith.constant 0 : index
    %37 = vector.load %arg4[%c0_12, %c0_13] : memref<128x512xf32, #tpu.memory_space<vmem>>, vector<128x512xf32>
    %cst_14 = arith.constant dense<0.000000e+00> : vector<8x512xf32>
    %38 = tpu.matmul %35, %37, %cst_14 {dimension_numbers = #tpu.dot_dimension_numbers<[1], [0], [0], [1], [0, 0, 1, 1], [], []>} : vector<8x128xf32>, vector<128x512xf32>, vector<8x512xf32> -> vector<8x512xf32>
    %39 = arith.addf %36, %38 : vector<8x512xf32>
    %40 = vector.extract_strided_slice %39 {offsets = [0, 0], sizes = [8, 128], strides = [1, 1]} : vector<8x512xf32> to vector<8x128xf32>
    %41 = arith.negf %40 : vector<8x128xf32>
    %42 = math.exp %41 : vector<8x128xf32>
    %cst_15 = arith.constant 1.000000e+00 : f32
    %43 = vector.broadcast %cst_15 : f32 to vector<8x128xf32>
    %44 = arith.addf %43, %42 : vector<8x128xf32>
    %45 = arith.divf %43, %44 : vector<8x128xf32>
    %46 = vector.extract_strided_slice %39 {offsets = [0, 128], sizes = [8, 128], strides = [1, 1]} : vector<8x512xf32> to vector<8x128xf32>
    %47 = arith.negf %46 : vector<8x128xf32>
    %48 = math.exp %47 : vector<8x128xf32>
    %cst_16 = arith.constant 1.000000e+00 : f32
    %49 = vector.broadcast %cst_16 : f32 to vector<8x128xf32>
    %50 = arith.addf %49, %48 : vector<8x128xf32>
    %51 = arith.divf %49, %50 : vector<8x128xf32>
    %52 = vector.extract_strided_slice %39 {offsets = [0, 256], sizes = [8, 128], strides = [1, 1]} : vector<8x512xf32> to vector<8x128xf32>
    %53 = math.tanh %52 : vector<8x128xf32>
    %54 = vector.extract_strided_slice %39 {offsets = [0, 384], sizes = [8, 128], strides = [1, 1]} : vector<8x512xf32> to vector<8x128xf32>
    %55 = arith.negf %54 : vector<8x128xf32>
    %56 = math.exp %55 : vector<8x128xf32>
    %cst_17 = arith.constant 1.000000e+00 : f32
    %57 = vector.broadcast %cst_17 : f32 to vector<8x128xf32>
    %58 = arith.addf %57, %56 : vector<8x128xf32>
    %59 = arith.divf %57, %58 : vector<8x128xf32>
    %60 = arith.mulf %51, %33 : vector<8x128xf32>
    %61 = arith.mulf %45, %53 : vector<8x128xf32>
    %62 = arith.addf %60, %61 : vector<8x128xf32>
    %63 = math.tanh %62 : vector<8x128xf32>
    %64 = arith.mulf %59, %63 : vector<8x128xf32>
    %65 = vector.extract_strided_slice %6 {offsets = [16, 0], sizes = [8, 512], strides = [1, 1]} : vector<64x512xf32> to vector<8x512xf32>
    %c0_18 = arith.constant 0 : index
    %c0_19 = arith.constant 0 : index
    %66 = vector.load %arg4[%c0_18, %c0_19] : memref<128x512xf32, #tpu.memory_space<vmem>>, vector<128x512xf32>
    %cst_20 = arith.constant dense<0.000000e+00> : vector<8x512xf32>
    %67 = tpu.matmul %64, %66, %cst_20 {dimension_numbers = #tpu.dot_dimension_numbers<[1], [0], [0], [1], [0, 0, 1, 1], [], []>} : vector<8x128xf32>, vector<128x512xf32>, vector<8x512xf32> -> vector<8x512xf32>
    %68 = arith.addf %65, %67 : vector<8x512xf32>
    %69 = vector.extract_strided_slice %68 {offsets = [0, 0], sizes = [8, 128], strides = [1, 1]} : vector<8x512xf32> to vector<8x128xf32>
    %70 = arith.negf %69 : vector<8x128xf32>
    %71 = math.exp %70 : vector<8x128xf32>
    %cst_21 = arith.constant 1.000000e+00 : f32
    %72 = vector.broadcast %cst_21 : f32 to vector<8x128xf32>
    %73 = arith.addf %72, %71 : vector<8x128xf32>
    %74 = arith.divf %72, %73 : vector<8x128xf32>
    %75 = vector.extract_strided_slice %68 {offsets = [0, 128], sizes = [8, 128], strides = [1, 1]} : vector<8x512xf32> to vector<8x128xf32>
    %76 = arith.negf %75 : vector<8x128xf32>
    %77 = math.exp %76 : vector<8x128xf32>
    %cst_22 = arith.constant 1.000000e+00 : f32
    %78 = vector.broadcast %cst_22 : f32 to vector<8x128xf32>
    %79 = arith.addf %78, %77 : vector<8x128xf32>
    %80 = arith.divf %78, %79 : vector<8x128xf32>
    %81 = vector.extract_strided_slice %68 {offsets = [0, 256], sizes = [8, 128], strides = [1, 1]} : vector<8x512xf32> to vector<8x128xf32>
    %82 = math.tanh %81 : vector<8x128xf32>
    %83 = vector.extract_strided_slice %68 {offsets = [0, 384], sizes = [8, 128], strides = [1, 1]} : vector<8x512xf32> to vector<8x128xf32>
    %84 = arith.negf %83 : vector<8x128xf32>
    %85 = math.exp %84 : vector<8x128xf32>
    %cst_23 = arith.constant 1.000000e+00 : f32
    %86 = vector.broadcast %cst_23 : f32 to vector<8x128xf32>
    %87 = arith.addf %86, %85 : vector<8x128xf32>
    %88 = arith.divf %86, %87 : vector<8x128xf32>
    %89 = arith.mulf %80, %62 : vector<8x128xf32>
    %90 = arith.mulf %74, %82 : vector<8x128xf32>
    %91 = arith.addf %89, %90 : vector<8x128xf32>
    %92 = math.tanh %91 : vector<8x128xf32>
    %93 = arith.mulf %88, %92 : vector<8x128xf32>
    %94 = vector.extract_strided_slice %6 {offsets = [24, 0], sizes = [8, 512], strides = [1, 1]} : vector<64x512xf32> to vector<8x512xf32>
    %c0_24 = arith.constant 0 : index
    %c0_25 = arith.constant 0 : index
    %95 = vector.load %arg4[%c0_24, %c0_25] : memref<128x512xf32, #tpu.memory_space<vmem>>, vector<128x512xf32>
    %cst_26 = arith.constant dense<0.000000e+00> : vector<8x512xf32>
    %96 = tpu.matmul %93, %95, %cst_26 {dimension_numbers = #tpu.dot_dimension_numbers<[1], [0], [0], [1], [0, 0, 1, 1], [], []>} : vector<8x128xf32>, vector<128x512xf32>, vector<8x512xf32> -> vector<8x512xf32>
    %97 = arith.addf %94, %96 : vector<8x512xf32>
    %98 = vector.extract_strided_slice %97 {offsets = [0, 0], sizes = [8, 128], strides = [1, 1]} : vector<8x512xf32> to vector<8x128xf32>
    %99 = arith.negf %98 : vector<8x128xf32>
    %100 = math.exp %99 : vector<8x128xf32>
    %cst_27 = arith.constant 1.000000e+00 : f32
    %101 = vector.broadcast %cst_27 : f32 to vector<8x128xf32>
    %102 = arith.addf %101, %100 : vector<8x128xf32>
    %103 = arith.divf %101, %102 : vector<8x128xf32>
    %104 = vector.extract_strided_slice %97 {offsets = [0, 128], sizes = [8, 128], strides = [1, 1]} : vector<8x512xf32> to vector<8x128xf32>
    %105 = arith.negf %104 : vector<8x128xf32>
    %106 = math.exp %105 : vector<8x128xf32>
    %cst_28 = arith.constant 1.000000e+00 : f32
    %107 = vector.broadcast %cst_28 : f32 to vector<8x128xf32>
    %108 = arith.addf %107, %106 : vector<8x128xf32>
    %109 = arith.divf %107, %108 : vector<8x128xf32>
    %110 = vector.extract_strided_slice %97 {offsets = [0, 256], sizes = [8, 128], strides = [1, 1]} : vector<8x512xf32> to vector<8x128xf32>
    %111 = math.tanh %110 : vector<8x128xf32>
    %112 = vector.extract_strided_slice %97 {offsets = [0, 384], sizes = [8, 128], strides = [1, 1]} : vector<8x512xf32> to vector<8x128xf32>
    %113 = arith.negf %112 : vector<8x128xf32>
    %114 = math.exp %113 : vector<8x128xf32>
    %cst_29 = arith.constant 1.000000e+00 : f32
    %115 = vector.broadcast %cst_29 : f32 to vector<8x128xf32>
    %116 = arith.addf %115, %114 : vector<8x128xf32>
    %117 = arith.divf %115, %116 : vector<8x128xf32>
    %118 = arith.mulf %109, %91 : vector<8x128xf32>
    %119 = arith.mulf %103, %111 : vector<8x128xf32>
    %120 = arith.addf %118, %119 : vector<8x128xf32>
    %121 = math.tanh %120 : vector<8x128xf32>
    %122 = arith.mulf %117, %121 : vector<8x128xf32>
    %123 = vector.extract_strided_slice %6 {offsets = [32, 0], sizes = [8, 512], strides = [1, 1]} : vector<64x512xf32> to vector<8x512xf32>
    %c0_30 = arith.constant 0 : index
    %c0_31 = arith.constant 0 : index
    %124 = vector.load %arg4[%c0_30, %c0_31] : memref<128x512xf32, #tpu.memory_space<vmem>>, vector<128x512xf32>
    %cst_32 = arith.constant dense<0.000000e+00> : vector<8x512xf32>
    %125 = tpu.matmul %122, %124, %cst_32 {dimension_numbers = #tpu.dot_dimension_numbers<[1], [0], [0], [1], [0, 0, 1, 1], [], []>} : vector<8x128xf32>, vector<128x512xf32>, vector<8x512xf32> -> vector<8x512xf32>
    %126 = arith.addf %123, %125 : vector<8x512xf32>
    %127 = vector.extract_strided_slice %126 {offsets = [0, 0], sizes = [8, 128], strides = [1, 1]} : vector<8x512xf32> to vector<8x128xf32>
    %128 = arith.negf %127 : vector<8x128xf32>
    %129 = math.exp %128 : vector<8x128xf32>
    %cst_33 = arith.constant 1.000000e+00 : f32
    %130 = vector.broadcast %cst_33 : f32 to vector<8x128xf32>
    %131 = arith.addf %130, %129 : vector<8x128xf32>
    %132 = arith.divf %130, %131 : vector<8x128xf32>
    %133 = vector.extract_strided_slice %126 {offsets = [0, 128], sizes = [8, 128], strides = [1, 1]} : vector<8x512xf32> to vector<8x128xf32>
    %134 = arith.negf %133 : vector<8x128xf32>
    %135 = math.exp %134 : vector<8x128xf32>
    %cst_34 = arith.constant 1.000000e+00 : f32
    %136 = vector.broadcast %cst_34 : f32 to vector<8x128xf32>
    %137 = arith.addf %136, %135 : vector<8x128xf32>
    %138 = arith.divf %136, %137 : vector<8x128xf32>
    %139 = vector.extract_strided_slice %126 {offsets = [0, 256], sizes = [8, 128], strides = [1, 1]} : vector<8x512xf32> to vector<8x128xf32>
    %140 = math.tanh %139 : vector<8x128xf32>
    %141 = vector.extract_strided_slice %126 {offsets = [0, 384], sizes = [8, 128], strides = [1, 1]} : vector<8x512xf32> to vector<8x128xf32>
    %142 = arith.negf %141 : vector<8x128xf32>
    %143 = math.exp %142 : vector<8x128xf32>
    %cst_35 = arith.constant 1.000000e+00 : f32
    %144 = vector.broadcast %cst_35 : f32 to vector<8x128xf32>
    %145 = arith.addf %144, %143 : vector<8x128xf32>
    %146 = arith.divf %144, %145 : vector<8x128xf32>
    %147 = arith.mulf %138, %120 : vector<8x128xf32>
    %148 = arith.mulf %132, %140 : vector<8x128xf32>
    %149 = arith.addf %147, %148 : vector<8x128xf32>
    %150 = math.tanh %149 : vector<8x128xf32>
    %151 = arith.mulf %146, %150 : vector<8x128xf32>
    %152 = vector.extract_strided_slice %6 {offsets = [40, 0], sizes = [8, 512], strides = [1, 1]} : vector<64x512xf32> to vector<8x512xf32>
    %c0_36 = arith.constant 0 : index
    %c0_37 = arith.constant 0 : index
    %153 = vector.load %arg4[%c0_36, %c0_37] : memref<128x512xf32, #tpu.memory_space<vmem>>, vector<128x512xf32>
    %cst_38 = arith.constant dense<0.000000e+00> : vector<8x512xf32>
    %154 = tpu.matmul %151, %153, %cst_38 {dimension_numbers = #tpu.dot_dimension_numbers<[1], [0], [0], [1], [0, 0, 1, 1], [], []>} : vector<8x128xf32>, vector<128x512xf32>, vector<8x512xf32> -> vector<8x512xf32>
    %155 = arith.addf %152, %154 : vector<8x512xf32>
    %156 = vector.extract_strided_slice %155 {offsets = [0, 0], sizes = [8, 128], strides = [1, 1]} : vector<8x512xf32> to vector<8x128xf32>
    %157 = arith.negf %156 : vector<8x128xf32>
    %158 = math.exp %157 : vector<8x128xf32>
    %cst_39 = arith.constant 1.000000e+00 : f32
    %159 = vector.broadcast %cst_39 : f32 to vector<8x128xf32>
    %160 = arith.addf %159, %158 : vector<8x128xf32>
    %161 = arith.divf %159, %160 : vector<8x128xf32>
    %162 = vector.extract_strided_slice %155 {offsets = [0, 128], sizes = [8, 128], strides = [1, 1]} : vector<8x512xf32> to vector<8x128xf32>
    %163 = arith.negf %162 : vector<8x128xf32>
    %164 = math.exp %163 : vector<8x128xf32>
    %cst_40 = arith.constant 1.000000e+00 : f32
    %165 = vector.broadcast %cst_40 : f32 to vector<8x128xf32>
    %166 = arith.addf %165, %164 : vector<8x128xf32>
    %167 = arith.divf %165, %166 : vector<8x128xf32>
    %168 = vector.extract_strided_slice %155 {offsets = [0, 256], sizes = [8, 128], strides = [1, 1]} : vector<8x512xf32> to vector<8x128xf32>
    %169 = math.tanh %168 : vector<8x128xf32>
    %170 = vector.extract_strided_slice %155 {offsets = [0, 384], sizes = [8, 128], strides = [1, 1]} : vector<8x512xf32> to vector<8x128xf32>
    %171 = arith.negf %170 : vector<8x128xf32>
    %172 = math.exp %171 : vector<8x128xf32>
    %cst_41 = arith.constant 1.000000e+00 : f32
    %173 = vector.broadcast %cst_41 : f32 to vector<8x128xf32>
    %174 = arith.addf %173, %172 : vector<8x128xf32>
    %175 = arith.divf %173, %174 : vector<8x128xf32>
    %176 = arith.mulf %167, %149 : vector<8x128xf32>
    %177 = arith.mulf %161, %169 : vector<8x128xf32>
    %178 = arith.addf %176, %177 : vector<8x128xf32>
    %179 = math.tanh %178 : vector<8x128xf32>
    %180 = arith.mulf %175, %179 : vector<8x128xf32>
    %181 = vector.extract_strided_slice %6 {offsets = [48, 0], sizes = [8, 512], strides = [1, 1]} : vector<64x512xf32> to vector<8x512xf32>
    %c0_42 = arith.constant 0 : index
    %c0_43 = arith.constant 0 : index
    %182 = vector.load %arg4[%c0_42, %c0_43] : memref<128x512xf32, #tpu.memory_space<vmem>>, vector<128x512xf32>
    %cst_44 = arith.constant dense<0.000000e+00> : vector<8x512xf32>
    %183 = tpu.matmul %180, %182, %cst_44 {dimension_numbers = #tpu.dot_dimension_numbers<[1], [0], [0], [1], [0, 0, 1, 1], [], []>} : vector<8x128xf32>, vector<128x512xf32>, vector<8x512xf32> -> vector<8x512xf32>
    %184 = arith.addf %181, %183 : vector<8x512xf32>
    %185 = vector.extract_strided_slice %184 {offsets = [0, 0], sizes = [8, 128], strides = [1, 1]} : vector<8x512xf32> to vector<8x128xf32>
    %186 = arith.negf %185 : vector<8x128xf32>
    %187 = math.exp %186 : vector<8x128xf32>
    %cst_45 = arith.constant 1.000000e+00 : f32
    %188 = vector.broadcast %cst_45 : f32 to vector<8x128xf32>
    %189 = arith.addf %188, %187 : vector<8x128xf32>
    %190 = arith.divf %188, %189 : vector<8x128xf32>
    %191 = vector.extract_strided_slice %184 {offsets = [0, 128], sizes = [8, 128], strides = [1, 1]} : vector<8x512xf32> to vector<8x128xf32>
    %192 = arith.negf %191 : vector<8x128xf32>
    %193 = math.exp %192 : vector<8x128xf32>
    %cst_46 = arith.constant 1.000000e+00 : f32
    %194 = vector.broadcast %cst_46 : f32 to vector<8x128xf32>
    %195 = arith.addf %194, %193 : vector<8x128xf32>
    %196 = arith.divf %194, %195 : vector<8x128xf32>
    %197 = vector.extract_strided_slice %184 {offsets = [0, 256], sizes = [8, 128], strides = [1, 1]} : vector<8x512xf32> to vector<8x128xf32>
    %198 = math.tanh %197 : vector<8x128xf32>
    %199 = vector.extract_strided_slice %184 {offsets = [0, 384], sizes = [8, 128], strides = [1, 1]} : vector<8x512xf32> to vector<8x128xf32>
    %200 = arith.negf %199 : vector<8x128xf32>
    %201 = math.exp %200 : vector<8x128xf32>
    %cst_47 = arith.constant 1.000000e+00 : f32
    %202 = vector.broadcast %cst_47 : f32 to vector<8x128xf32>
    %203 = arith.addf %202, %201 : vector<8x128xf32>
    %204 = arith.divf %202, %203 : vector<8x128xf32>
    %205 = arith.mulf %196, %178 : vector<8x128xf32>
    %206 = arith.mulf %190, %198 : vector<8x128xf32>
    %207 = arith.addf %205, %206 : vector<8x128xf32>
    %208 = math.tanh %207 : vector<8x128xf32>
    %209 = arith.mulf %204, %208 : vector<8x128xf32>
    %210 = vector.extract_strided_slice %6 {offsets = [56, 0], sizes = [8, 512], strides = [1, 1]} : vector<64x512xf32> to vector<8x512xf32>
    %c0_48 = arith.constant 0 : index
    %c0_49 = arith.constant 0 : index
    %211 = vector.load %arg4[%c0_48, %c0_49] : memref<128x512xf32, #tpu.memory_space<vmem>>, vector<128x512xf32>
    %cst_50 = arith.constant dense<0.000000e+00> : vector<8x512xf32>
    %212 = tpu.matmul %209, %211, %cst_50 {dimension_numbers = #tpu.dot_dimension_numbers<[1], [0], [0], [1], [0, 0, 1, 1], [], []>} : vector<8x128xf32>, vector<128x512xf32>, vector<8x512xf32> -> vector<8x512xf32>
    %213 = arith.addf %210, %212 : vector<8x512xf32>
    %214 = vector.extract_strided_slice %213 {offsets = [0, 0], sizes = [8, 128], strides = [1, 1]} : vector<8x512xf32> to vector<8x128xf32>
    %215 = arith.negf %214 : vector<8x128xf32>
    %216 = math.exp %215 : vector<8x128xf32>
    %cst_51 = arith.constant 1.000000e+00 : f32
    %217 = vector.broadcast %cst_51 : f32 to vector<8x128xf32>
    %218 = arith.addf %217, %216 : vector<8x128xf32>
    %219 = arith.divf %217, %218 : vector<8x128xf32>
    %220 = vector.extract_strided_slice %213 {offsets = [0, 128], sizes = [8, 128], strides = [1, 1]} : vector<8x512xf32> to vector<8x128xf32>
    %221 = arith.negf %220 : vector<8x128xf32>
    %222 = math.exp %221 : vector<8x128xf32>
    %cst_52 = arith.constant 1.000000e+00 : f32
    %223 = vector.broadcast %cst_52 : f32 to vector<8x128xf32>
    %224 = arith.addf %223, %222 : vector<8x128xf32>
    %225 = arith.divf %223, %224 : vector<8x128xf32>
    %226 = vector.extract_strided_slice %213 {offsets = [0, 256], sizes = [8, 128], strides = [1, 1]} : vector<8x512xf32> to vector<8x128xf32>
    %227 = math.tanh %226 : vector<8x128xf32>
    %228 = vector.extract_strided_slice %213 {offsets = [0, 384], sizes = [8, 128], strides = [1, 1]} : vector<8x512xf32> to vector<8x128xf32>
    %229 = arith.negf %228 : vector<8x128xf32>
    %230 = math.exp %229 : vector<8x128xf32>
    %cst_53 = arith.constant 1.000000e+00 : f32
    %231 = vector.broadcast %cst_53 : f32 to vector<8x128xf32>
    %232 = arith.addf %231, %230 : vector<8x128xf32>
    %233 = arith.divf %231, %232 : vector<8x128xf32>
    %234 = arith.mulf %225, %207 : vector<8x128xf32>
    %235 = arith.mulf %219, %227 : vector<8x128xf32>
    %236 = arith.addf %234, %235 : vector<8x128xf32>
    %237 = math.tanh %236 : vector<8x128xf32>
    %238 = arith.mulf %233, %237 : vector<8x128xf32>
    %c0_54 = arith.constant 0 : index
    %c0_55 = arith.constant 0 : index
    %239 = vector.load %arg1[%c0_54, %c0_55] : memref<64x4xf32, #tpu.memory_space<vmem>>, vector<64x4xf32>
    %c0_56 = arith.constant 0 : index
    %c0_57 = arith.constant 0 : index
    %240 = vector.load %arg6[%c0_56, %c0_57] : memref<4x512xf32, #tpu.memory_space<vmem>>, vector<4x512xf32>
    %cst_58 = arith.constant dense<0.000000e+00> : vector<64x512xf32>
    %241 = tpu.matmul %239, %240, %cst_58 {dimension_numbers = #tpu.dot_dimension_numbers<[1], [0], [0], [1], [0, 0, 1, 1], [], []>} : vector<64x4xf32>, vector<4x512xf32>, vector<64x512xf32> -> vector<64x512xf32>
    %c0_59 = arith.constant 0 : index
    %c0_60 = arith.constant 0 : index
    %242 = vector.load %arg8[%c0_59, %c0_60] : memref<1x512xf32, #tpu.memory_space<vmem>>, vector<1x512xf32>
    %243 = vector.broadcast %242 : vector<1x512xf32> to vector<64x512xf32>
    %244 = arith.addf %241, %243 : vector<64x512xf32>
    %245 = vector.extract_strided_slice %244 {offsets = [0, 0], sizes = [8, 512], strides = [1, 1]} : vector<64x512xf32> to vector<8x512xf32>
    %c0_61 = arith.constant 0 : index
    %c0_62 = arith.constant 0 : index
    %246 = vector.load %arg7[%c0_61, %c0_62] : memref<128x512xf32, #tpu.memory_space<vmem>>, vector<128x512xf32>
    %cst_63 = arith.constant dense<0.000000e+00> : vector<8x512xf32>
    %247 = tpu.matmul %0, %246, %cst_63 {dimension_numbers = #tpu.dot_dimension_numbers<[1], [0], [0], [1], [0, 0, 1, 1], [], []>} : vector<8x128xf32>, vector<128x512xf32>, vector<8x512xf32> -> vector<8x512xf32>
    %248 = arith.addf %245, %247 : vector<8x512xf32>
    %249 = vector.extract_strided_slice %248 {offsets = [0, 0], sizes = [8, 128], strides = [1, 1]} : vector<8x512xf32> to vector<8x128xf32>
    %250 = arith.negf %249 : vector<8x128xf32>
    %251 = math.exp %250 : vector<8x128xf32>
    %cst_64 = arith.constant 1.000000e+00 : f32
    %252 = vector.broadcast %cst_64 : f32 to vector<8x128xf32>
    %253 = arith.addf %252, %251 : vector<8x128xf32>
    %254 = arith.divf %252, %253 : vector<8x128xf32>
    %255 = vector.extract_strided_slice %248 {offsets = [0, 128], sizes = [8, 128], strides = [1, 1]} : vector<8x512xf32> to vector<8x128xf32>
    %256 = arith.negf %255 : vector<8x128xf32>
    %257 = math.exp %256 : vector<8x128xf32>
    %cst_65 = arith.constant 1.000000e+00 : f32
    %258 = vector.broadcast %cst_65 : f32 to vector<8x128xf32>
    %259 = arith.addf %258, %257 : vector<8x128xf32>
    %260 = arith.divf %258, %259 : vector<8x128xf32>
    %261 = vector.extract_strided_slice %248 {offsets = [0, 256], sizes = [8, 128], strides = [1, 1]} : vector<8x512xf32> to vector<8x128xf32>
    %262 = math.tanh %261 : vector<8x128xf32>
    %263 = vector.extract_strided_slice %248 {offsets = [0, 384], sizes = [8, 128], strides = [1, 1]} : vector<8x512xf32> to vector<8x128xf32>
    %264 = arith.negf %263 : vector<8x128xf32>
    %265 = math.exp %264 : vector<8x128xf32>
    %cst_66 = arith.constant 1.000000e+00 : f32
    %266 = vector.broadcast %cst_66 : f32 to vector<8x128xf32>
    %267 = arith.addf %266, %265 : vector<8x128xf32>
    %268 = arith.divf %266, %267 : vector<8x128xf32>
    %269 = arith.mulf %260, %0 : vector<8x128xf32>
    %270 = arith.mulf %254, %262 : vector<8x128xf32>
    %271 = arith.addf %269, %270 : vector<8x128xf32>
    %272 = math.tanh %271 : vector<8x128xf32>
    %273 = arith.mulf %268, %272 : vector<8x128xf32>
    %274 = tpu.concatenate %273, %0 in 1 : vector<8x128xf32>, vector<8x128xf32> -> vector<8x256xf32>
    %c0_67 = arith.constant 0 : index
    %c0_68 = arith.constant 0 : index
    %275 = vector.load %arg9[%c0_67, %c0_68] : memref<256x512xf32, #tpu.memory_space<vmem>>, vector<256x512xf32>
    %cst_69 = arith.constant dense<0.000000e+00> : vector<8x512xf32>
    %276 = tpu.matmul %274, %275, %cst_69 {dimension_numbers = #tpu.dot_dimension_numbers<[1], [0], [0], [1], [0, 0, 1, 1], [], []>} : vector<8x256xf32>, vector<256x512xf32>, vector<8x512xf32> -> vector<8x512xf32>
    %c0_70 = arith.constant 0 : index
    %c0_71 = arith.constant 0 : index
    %277 = vector.load %arg10[%c0_70, %c0_71] : memref<1x512xf32, #tpu.memory_space<vmem>>, vector<1x512xf32>
    %278 = vector.broadcast %277 : vector<1x512xf32> to vector<8x512xf32>
    %279 = arith.addf %276, %278 : vector<8x512xf32>
    %280 = vector.extract_strided_slice %279 {offsets = [0, 0], sizes = [8, 128], strides = [1, 1]} : vector<8x512xf32> to vector<8x128xf32>
    %281 = arith.negf %280 : vector<8x128xf32>
    %282 = math.exp %281 : vector<8x128xf32>
    %cst_72 = arith.constant 1.000000e+00 : f32
    %283 = vector.broadcast %cst_72 : f32 to vector<8x128xf32>
    %284 = arith.addf %283, %282 : vector<8x128xf32>
    %285 = arith.divf %283, %284 : vector<8x128xf32>
    %286 = vector.extract_strided_slice %279 {offsets = [0, 128], sizes = [8, 128], strides = [1, 1]} : vector<8x512xf32> to vector<8x128xf32>
    %287 = arith.negf %286 : vector<8x128xf32>
    %288 = math.exp %287 : vector<8x128xf32>
    %cst_73 = arith.constant 1.000000e+00 : f32
    %289 = vector.broadcast %cst_73 : f32 to vector<8x128xf32>
    %290 = arith.addf %289, %288 : vector<8x128xf32>
    %291 = arith.divf %289, %290 : vector<8x128xf32>
    %292 = vector.extract_strided_slice %279 {offsets = [0, 256], sizes = [8, 128], strides = [1, 1]} : vector<8x512xf32> to vector<8x128xf32>
    %293 = math.tanh %292 : vector<8x128xf32>
    %294 = vector.extract_strided_slice %279 {offsets = [0, 384], sizes = [8, 128], strides = [1, 1]} : vector<8x512xf32> to vector<8x128xf32>
    %295 = arith.negf %294 : vector<8x128xf32>
    %296 = math.exp %295 : vector<8x128xf32>
    %cst_74 = arith.constant 1.000000e+00 : f32
    %297 = vector.broadcast %cst_74 : f32 to vector<8x128xf32>
    %298 = arith.addf %297, %296 : vector<8x128xf32>
    %299 = arith.divf %297, %298 : vector<8x128xf32>
    %300 = arith.mulf %291, %0 : vector<8x128xf32>
    %301 = arith.mulf %285, %293 : vector<8x128xf32>
    %302 = arith.addf %300, %301 : vector<8x128xf32>
    %303 = math.tanh %302 : vector<8x128xf32>
    %304 = arith.mulf %299, %303 : vector<8x128xf32>
    %305 = vector.extract_strided_slice %244 {offsets = [8, 0], sizes = [8, 512], strides = [1, 1]} : vector<64x512xf32> to vector<8x512xf32>
    %c0_75 = arith.constant 0 : index
    %c0_76 = arith.constant 0 : index
    %306 = vector.load %arg7[%c0_75, %c0_76] : memref<128x512xf32, #tpu.memory_space<vmem>>, vector<128x512xf32>
    %cst_77 = arith.constant dense<0.000000e+00> : vector<8x512xf32>
    %307 = tpu.matmul %273, %306, %cst_77 {dimension_numbers = #tpu.dot_dimension_numbers<[1], [0], [0], [1], [0, 0, 1, 1], [], []>} : vector<8x128xf32>, vector<128x512xf32>, vector<8x512xf32> -> vector<8x512xf32>
    %308 = arith.addf %305, %307 : vector<8x512xf32>
    %309 = vector.extract_strided_slice %308 {offsets = [0, 0], sizes = [8, 128], strides = [1, 1]} : vector<8x512xf32> to vector<8x128xf32>
    %310 = arith.negf %309 : vector<8x128xf32>
    %311 = math.exp %310 : vector<8x128xf32>
    %cst_78 = arith.constant 1.000000e+00 : f32
    %312 = vector.broadcast %cst_78 : f32 to vector<8x128xf32>
    %313 = arith.addf %312, %311 : vector<8x128xf32>
    %314 = arith.divf %312, %313 : vector<8x128xf32>
    %315 = vector.extract_strided_slice %308 {offsets = [0, 128], sizes = [8, 128], strides = [1, 1]} : vector<8x512xf32> to vector<8x128xf32>
    %316 = arith.negf %315 : vector<8x128xf32>
    %317 = math.exp %316 : vector<8x128xf32>
    %cst_79 = arith.constant 1.000000e+00 : f32
    %318 = vector.broadcast %cst_79 : f32 to vector<8x128xf32>
    %319 = arith.addf %318, %317 : vector<8x128xf32>
    %320 = arith.divf %318, %319 : vector<8x128xf32>
    %321 = vector.extract_strided_slice %308 {offsets = [0, 256], sizes = [8, 128], strides = [1, 1]} : vector<8x512xf32> to vector<8x128xf32>
    %322 = math.tanh %321 : vector<8x128xf32>
    %323 = vector.extract_strided_slice %308 {offsets = [0, 384], sizes = [8, 128], strides = [1, 1]} : vector<8x512xf32> to vector<8x128xf32>
    %324 = arith.negf %323 : vector<8x128xf32>
    %325 = math.exp %324 : vector<8x128xf32>
    %cst_80 = arith.constant 1.000000e+00 : f32
    %326 = vector.broadcast %cst_80 : f32 to vector<8x128xf32>
    %327 = arith.addf %326, %325 : vector<8x128xf32>
    %328 = arith.divf %326, %327 : vector<8x128xf32>
    %329 = arith.mulf %320, %271 : vector<8x128xf32>
    %330 = arith.mulf %314, %322 : vector<8x128xf32>
    %331 = arith.addf %329, %330 : vector<8x128xf32>
    %332 = math.tanh %331 : vector<8x128xf32>
    %333 = arith.mulf %328, %332 : vector<8x128xf32>
    %334 = tpu.concatenate %333, %304 in 1 : vector<8x128xf32>, vector<8x128xf32> -> vector<8x256xf32>
    %c0_81 = arith.constant 0 : index
    %c0_82 = arith.constant 0 : index
    %335 = vector.load %arg9[%c0_81, %c0_82] : memref<256x512xf32, #tpu.memory_space<vmem>>, vector<256x512xf32>
    %cst_83 = arith.constant dense<0.000000e+00> : vector<8x512xf32>
    %336 = tpu.matmul %334, %335, %cst_83 {dimension_numbers = #tpu.dot_dimension_numbers<[1], [0], [0], [1], [0, 0, 1, 1], [], []>} : vector<8x256xf32>, vector<256x512xf32>, vector<8x512xf32> -> vector<8x512xf32>
    %c0_84 = arith.constant 0 : index
    %c0_85 = arith.constant 0 : index
    %337 = vector.load %arg10[%c0_84, %c0_85] : memref<1x512xf32, #tpu.memory_space<vmem>>, vector<1x512xf32>
    %338 = vector.broadcast %337 : vector<1x512xf32> to vector<8x512xf32>
    %339 = arith.addf %336, %338 : vector<8x512xf32>
    %340 = vector.extract_strided_slice %339 {offsets = [0, 0], sizes = [8, 128], strides = [1, 1]} : vector<8x512xf32> to vector<8x128xf32>
    %341 = arith.negf %340 : vector<8x128xf32>
    %342 = math.exp %341 : vector<8x128xf32>
    %cst_86 = arith.constant 1.000000e+00 : f32
    %343 = vector.broadcast %cst_86 : f32 to vector<8x128xf32>
    %344 = arith.addf %343, %342 : vector<8x128xf32>
    %345 = arith.divf %343, %344 : vector<8x128xf32>
    %346 = vector.extract_strided_slice %339 {offsets = [0, 128], sizes = [8, 128], strides = [1, 1]} : vector<8x512xf32> to vector<8x128xf32>
    %347 = arith.negf %346 : vector<8x128xf32>
    %348 = math.exp %347 : vector<8x128xf32>
    %cst_87 = arith.constant 1.000000e+00 : f32
    %349 = vector.broadcast %cst_87 : f32 to vector<8x128xf32>
    %350 = arith.addf %349, %348 : vector<8x128xf32>
    %351 = arith.divf %349, %350 : vector<8x128xf32>
    %352 = vector.extract_strided_slice %339 {offsets = [0, 256], sizes = [8, 128], strides = [1, 1]} : vector<8x512xf32> to vector<8x128xf32>
    %353 = math.tanh %352 : vector<8x128xf32>
    %354 = vector.extract_strided_slice %339 {offsets = [0, 384], sizes = [8, 128], strides = [1, 1]} : vector<8x512xf32> to vector<8x128xf32>
    %355 = arith.negf %354 : vector<8x128xf32>
    %356 = math.exp %355 : vector<8x128xf32>
    %cst_88 = arith.constant 1.000000e+00 : f32
    %357 = vector.broadcast %cst_88 : f32 to vector<8x128xf32>
    %358 = arith.addf %357, %356 : vector<8x128xf32>
    %359 = arith.divf %357, %358 : vector<8x128xf32>
    %360 = arith.mulf %351, %302 : vector<8x128xf32>
    %361 = arith.mulf %345, %353 : vector<8x128xf32>
    %362 = arith.addf %360, %361 : vector<8x128xf32>
    %363 = math.tanh %362 : vector<8x128xf32>
    %364 = arith.mulf %359, %363 : vector<8x128xf32>
    %365 = vector.extract_strided_slice %244 {offsets = [16, 0], sizes = [8, 512], strides = [1, 1]} : vector<64x512xf32> to vector<8x512xf32>
    %c0_89 = arith.constant 0 : index
    %c0_90 = arith.constant 0 : index
    %366 = vector.load %arg7[%c0_89, %c0_90] : memref<128x512xf32, #tpu.memory_space<vmem>>, vector<128x512xf32>
    %cst_91 = arith.constant dense<0.000000e+00> : vector<8x512xf32>
    %367 = tpu.matmul %333, %366, %cst_91 {dimension_numbers = #tpu.dot_dimension_numbers<[1], [0], [0], [1], [0, 0, 1, 1], [], []>} : vector<8x128xf32>, vector<128x512xf32>, vector<8x512xf32> -> vector<8x512xf32>
    %368 = arith.addf %365, %367 : vector<8x512xf32>
    %369 = vector.extract_strided_slice %368 {offsets = [0, 0], sizes = [8, 128], strides = [1, 1]} : vector<8x512xf32> to vector<8x128xf32>
    %370 = arith.negf %369 : vector<8x128xf32>
    %371 = math.exp %370 : vector<8x128xf32>
    %cst_92 = arith.constant 1.000000e+00 : f32
    %372 = vector.broadcast %cst_92 : f32 to vector<8x128xf32>
    %373 = arith.addf %372, %371 : vector<8x128xf32>
    %374 = arith.divf %372, %373 : vector<8x128xf32>
    %375 = vector.extract_strided_slice %368 {offsets = [0, 128], sizes = [8, 128], strides = [1, 1]} : vector<8x512xf32> to vector<8x128xf32>
    %376 = arith.negf %375 : vector<8x128xf32>
    %377 = math.exp %376 : vector<8x128xf32>
    %cst_93 = arith.constant 1.000000e+00 : f32
    %378 = vector.broadcast %cst_93 : f32 to vector<8x128xf32>
    %379 = arith.addf %378, %377 : vector<8x128xf32>
    %380 = arith.divf %378, %379 : vector<8x128xf32>
    %381 = vector.extract_strided_slice %368 {offsets = [0, 256], sizes = [8, 128], strides = [1, 1]} : vector<8x512xf32> to vector<8x128xf32>
    %382 = math.tanh %381 : vector<8x128xf32>
    %383 = vector.extract_strided_slice %368 {offsets = [0, 384], sizes = [8, 128], strides = [1, 1]} : vector<8x512xf32> to vector<8x128xf32>
    %384 = arith.negf %383 : vector<8x128xf32>
    %385 = math.exp %384 : vector<8x128xf32>
    %cst_94 = arith.constant 1.000000e+00 : f32
    %386 = vector.broadcast %cst_94 : f32 to vector<8x128xf32>
    %387 = arith.addf %386, %385 : vector<8x128xf32>
    %388 = arith.divf %386, %387 : vector<8x128xf32>
    %389 = arith.mulf %380, %331 : vector<8x128xf32>
    %390 = arith.mulf %374, %382 : vector<8x128xf32>
    %391 = arith.addf %389, %390 : vector<8x128xf32>
    %392 = math.tanh %391 : vector<8x128xf32>
    %393 = arith.mulf %388, %392 : vector<8x128xf32>
    %394 = tpu.concatenate %393, %364 in 1 : vector<8x128xf32>, vector<8x128xf32> -> vector<8x256xf32>
    %c0_95 = arith.constant 0 : index
    %c0_96 = arith.constant 0 : index
    %395 = vector.load %arg9[%c0_95, %c0_96] : memref<256x512xf32, #tpu.memory_space<vmem>>, vector<256x512xf32>
    %cst_97 = arith.constant dense<0.000000e+00> : vector<8x512xf32>
    %396 = tpu.matmul %394, %395, %cst_97 {dimension_numbers = #tpu.dot_dimension_numbers<[1], [0], [0], [1], [0, 0, 1, 1], [], []>} : vector<8x256xf32>, vector<256x512xf32>, vector<8x512xf32> -> vector<8x512xf32>
    %c0_98 = arith.constant 0 : index
    %c0_99 = arith.constant 0 : index
    %397 = vector.load %arg10[%c0_98, %c0_99] : memref<1x512xf32, #tpu.memory_space<vmem>>, vector<1x512xf32>
    %398 = vector.broadcast %397 : vector<1x512xf32> to vector<8x512xf32>
    %399 = arith.addf %396, %398 : vector<8x512xf32>
    %400 = vector.extract_strided_slice %399 {offsets = [0, 0], sizes = [8, 128], strides = [1, 1]} : vector<8x512xf32> to vector<8x128xf32>
    %401 = arith.negf %400 : vector<8x128xf32>
    %402 = math.exp %401 : vector<8x128xf32>
    %cst_100 = arith.constant 1.000000e+00 : f32
    %403 = vector.broadcast %cst_100 : f32 to vector<8x128xf32>
    %404 = arith.addf %403, %402 : vector<8x128xf32>
    %405 = arith.divf %403, %404 : vector<8x128xf32>
    %406 = vector.extract_strided_slice %399 {offsets = [0, 128], sizes = [8, 128], strides = [1, 1]} : vector<8x512xf32> to vector<8x128xf32>
    %407 = arith.negf %406 : vector<8x128xf32>
    %408 = math.exp %407 : vector<8x128xf32>
    %cst_101 = arith.constant 1.000000e+00 : f32
    %409 = vector.broadcast %cst_101 : f32 to vector<8x128xf32>
    %410 = arith.addf %409, %408 : vector<8x128xf32>
    %411 = arith.divf %409, %410 : vector<8x128xf32>
    %412 = vector.extract_strided_slice %399 {offsets = [0, 256], sizes = [8, 128], strides = [1, 1]} : vector<8x512xf32> to vector<8x128xf32>
    %413 = math.tanh %412 : vector<8x128xf32>
    %414 = vector.extract_strided_slice %399 {offsets = [0, 384], sizes = [8, 128], strides = [1, 1]} : vector<8x512xf32> to vector<8x128xf32>
    %415 = arith.negf %414 : vector<8x128xf32>
    %416 = math.exp %415 : vector<8x128xf32>
    %cst_102 = arith.constant 1.000000e+00 : f32
    %417 = vector.broadcast %cst_102 : f32 to vector<8x128xf32>
    %418 = arith.addf %417, %416 : vector<8x128xf32>
    %419 = arith.divf %417, %418 : vector<8x128xf32>
    %420 = arith.mulf %411, %362 : vector<8x128xf32>
    %421 = arith.mulf %405, %413 : vector<8x128xf32>
    %422 = arith.addf %420, %421 : vector<8x128xf32>
    %423 = math.tanh %422 : vector<8x128xf32>
    %424 = arith.mulf %419, %423 : vector<8x128xf32>
    %425 = vector.extract_strided_slice %244 {offsets = [24, 0], sizes = [8, 512], strides = [1, 1]} : vector<64x512xf32> to vector<8x512xf32>
    %c0_103 = arith.constant 0 : index
    %c0_104 = arith.constant 0 : index
    %426 = vector.load %arg7[%c0_103, %c0_104] : memref<128x512xf32, #tpu.memory_space<vmem>>, vector<128x512xf32>
    %cst_105 = arith.constant dense<0.000000e+00> : vector<8x512xf32>
    %427 = tpu.matmul %393, %426, %cst_105 {dimension_numbers = #tpu.dot_dimension_numbers<[1], [0], [0], [1], [0, 0, 1, 1], [], []>} : vector<8x128xf32>, vector<128x512xf32>, vector<8x512xf32> -> vector<8x512xf32>
    %428 = arith.addf %425, %427 : vector<8x512xf32>
    %429 = vector.extract_strided_slice %428 {offsets = [0, 0], sizes = [8, 128], strides = [1, 1]} : vector<8x512xf32> to vector<8x128xf32>
    %430 = arith.negf %429 : vector<8x128xf32>
    %431 = math.exp %430 : vector<8x128xf32>
    %cst_106 = arith.constant 1.000000e+00 : f32
    %432 = vector.broadcast %cst_106 : f32 to vector<8x128xf32>
    %433 = arith.addf %432, %431 : vector<8x128xf32>
    %434 = arith.divf %432, %433 : vector<8x128xf32>
    %435 = vector.extract_strided_slice %428 {offsets = [0, 128], sizes = [8, 128], strides = [1, 1]} : vector<8x512xf32> to vector<8x128xf32>
    %436 = arith.negf %435 : vector<8x128xf32>
    %437 = math.exp %436 : vector<8x128xf32>
    %cst_107 = arith.constant 1.000000e+00 : f32
    %438 = vector.broadcast %cst_107 : f32 to vector<8x128xf32>
    %439 = arith.addf %438, %437 : vector<8x128xf32>
    %440 = arith.divf %438, %439 : vector<8x128xf32>
    %441 = vector.extract_strided_slice %428 {offsets = [0, 256], sizes = [8, 128], strides = [1, 1]} : vector<8x512xf32> to vector<8x128xf32>
    %442 = math.tanh %441 : vector<8x128xf32>
    %443 = vector.extract_strided_slice %428 {offsets = [0, 384], sizes = [8, 128], strides = [1, 1]} : vector<8x512xf32> to vector<8x128xf32>
    %444 = arith.negf %443 : vector<8x128xf32>
    %445 = math.exp %444 : vector<8x128xf32>
    %cst_108 = arith.constant 1.000000e+00 : f32
    %446 = vector.broadcast %cst_108 : f32 to vector<8x128xf32>
    %447 = arith.addf %446, %445 : vector<8x128xf32>
    %448 = arith.divf %446, %447 : vector<8x128xf32>
    %449 = arith.mulf %440, %391 : vector<8x128xf32>
    %450 = arith.mulf %434, %442 : vector<8x128xf32>
    %451 = arith.addf %449, %450 : vector<8x128xf32>
    %452 = math.tanh %451 : vector<8x128xf32>
    %453 = arith.mulf %448, %452 : vector<8x128xf32>
    %454 = tpu.concatenate %453, %424 in 1 : vector<8x128xf32>, vector<8x128xf32> -> vector<8x256xf32>
    %c0_109 = arith.constant 0 : index
    %c0_110 = arith.constant 0 : index
    %455 = vector.load %arg9[%c0_109, %c0_110] : memref<256x512xf32, #tpu.memory_space<vmem>>, vector<256x512xf32>
    %cst_111 = arith.constant dense<0.000000e+00> : vector<8x512xf32>
    %456 = tpu.matmul %454, %455, %cst_111 {dimension_numbers = #tpu.dot_dimension_numbers<[1], [0], [0], [1], [0, 0, 1, 1], [], []>} : vector<8x256xf32>, vector<256x512xf32>, vector<8x512xf32> -> vector<8x512xf32>
    %c0_112 = arith.constant 0 : index
    %c0_113 = arith.constant 0 : index
    %457 = vector.load %arg10[%c0_112, %c0_113] : memref<1x512xf32, #tpu.memory_space<vmem>>, vector<1x512xf32>
    %458 = vector.broadcast %457 : vector<1x512xf32> to vector<8x512xf32>
    %459 = arith.addf %456, %458 : vector<8x512xf32>
    %460 = vector.extract_strided_slice %459 {offsets = [0, 0], sizes = [8, 128], strides = [1, 1]} : vector<8x512xf32> to vector<8x128xf32>
    %461 = arith.negf %460 : vector<8x128xf32>
    %462 = math.exp %461 : vector<8x128xf32>
    %cst_114 = arith.constant 1.000000e+00 : f32
    %463 = vector.broadcast %cst_114 : f32 to vector<8x128xf32>
    %464 = arith.addf %463, %462 : vector<8x128xf32>
    %465 = arith.divf %463, %464 : vector<8x128xf32>
    %466 = vector.extract_strided_slice %459 {offsets = [0, 128], sizes = [8, 128], strides = [1, 1]} : vector<8x512xf32> to vector<8x128xf32>
    %467 = arith.negf %466 : vector<8x128xf32>
    %468 = math.exp %467 : vector<8x128xf32>
    %cst_115 = arith.constant 1.000000e+00 : f32
    %469 = vector.broadcast %cst_115 : f32 to vector<8x128xf32>
    %470 = arith.addf %469, %468 : vector<8x128xf32>
    %471 = arith.divf %469, %470 : vector<8x128xf32>
    %472 = vector.extract_strided_slice %459 {offsets = [0, 256], sizes = [8, 128], strides = [1, 1]} : vector<8x512xf32> to vector<8x128xf32>
    %473 = math.tanh %472 : vector<8x128xf32>
    %474 = vector.extract_strided_slice %459 {offsets = [0, 384], sizes = [8, 128], strides = [1, 1]} : vector<8x512xf32> to vector<8x128xf32>
    %475 = arith.negf %474 : vector<8x128xf32>
    %476 = math.exp %475 : vector<8x128xf32>
    %cst_116 = arith.constant 1.000000e+00 : f32
    %477 = vector.broadcast %cst_116 : f32 to vector<8x128xf32>
    %478 = arith.addf %477, %476 : vector<8x128xf32>
    %479 = arith.divf %477, %478 : vector<8x128xf32>
    %480 = arith.mulf %471, %422 : vector<8x128xf32>
    %481 = arith.mulf %465, %473 : vector<8x128xf32>
    %482 = arith.addf %480, %481 : vector<8x128xf32>
    %483 = math.tanh %482 : vector<8x128xf32>
    %484 = arith.mulf %479, %483 : vector<8x128xf32>
    %485 = vector.extract_strided_slice %244 {offsets = [32, 0], sizes = [8, 512], strides = [1, 1]} : vector<64x512xf32> to vector<8x512xf32>
    %c0_117 = arith.constant 0 : index
    %c0_118 = arith.constant 0 : index
    %486 = vector.load %arg7[%c0_117, %c0_118] : memref<128x512xf32, #tpu.memory_space<vmem>>, vector<128x512xf32>
    %cst_119 = arith.constant dense<0.000000e+00> : vector<8x512xf32>
    %487 = tpu.matmul %453, %486, %cst_119 {dimension_numbers = #tpu.dot_dimension_numbers<[1], [0], [0], [1], [0, 0, 1, 1], [], []>} : vector<8x128xf32>, vector<128x512xf32>, vector<8x512xf32> -> vector<8x512xf32>
    %488 = arith.addf %485, %487 : vector<8x512xf32>
    %489 = vector.extract_strided_slice %488 {offsets = [0, 0], sizes = [8, 128], strides = [1, 1]} : vector<8x512xf32> to vector<8x128xf32>
    %490 = arith.negf %489 : vector<8x128xf32>
    %491 = math.exp %490 : vector<8x128xf32>
    %cst_120 = arith.constant 1.000000e+00 : f32
    %492 = vector.broadcast %cst_120 : f32 to vector<8x128xf32>
    %493 = arith.addf %492, %491 : vector<8x128xf32>
    %494 = arith.divf %492, %493 : vector<8x128xf32>
    %495 = vector.extract_strided_slice %488 {offsets = [0, 128], sizes = [8, 128], strides = [1, 1]} : vector<8x512xf32> to vector<8x128xf32>
    %496 = arith.negf %495 : vector<8x128xf32>
    %497 = math.exp %496 : vector<8x128xf32>
    %cst_121 = arith.constant 1.000000e+00 : f32
    %498 = vector.broadcast %cst_121 : f32 to vector<8x128xf32>
    %499 = arith.addf %498, %497 : vector<8x128xf32>
    %500 = arith.divf %498, %499 : vector<8x128xf32>
    %501 = vector.extract_strided_slice %488 {offsets = [0, 256], sizes = [8, 128], strides = [1, 1]} : vector<8x512xf32> to vector<8x128xf32>
    %502 = math.tanh %501 : vector<8x128xf32>
    %503 = vector.extract_strided_slice %488 {offsets = [0, 384], sizes = [8, 128], strides = [1, 1]} : vector<8x512xf32> to vector<8x128xf32>
    %504 = arith.negf %503 : vector<8x128xf32>
    %505 = math.exp %504 : vector<8x128xf32>
    %cst_122 = arith.constant 1.000000e+00 : f32
    %506 = vector.broadcast %cst_122 : f32 to vector<8x128xf32>
    %507 = arith.addf %506, %505 : vector<8x128xf32>
    %508 = arith.divf %506, %507 : vector<8x128xf32>
    %509 = arith.mulf %500, %451 : vector<8x128xf32>
    %510 = arith.mulf %494, %502 : vector<8x128xf32>
    %511 = arith.addf %509, %510 : vector<8x128xf32>
    %512 = math.tanh %511 : vector<8x128xf32>
    %513 = arith.mulf %508, %512 : vector<8x128xf32>
    %514 = tpu.concatenate %513, %484 in 1 : vector<8x128xf32>, vector<8x128xf32> -> vector<8x256xf32>
    %c0_123 = arith.constant 0 : index
    %c0_124 = arith.constant 0 : index
    %515 = vector.load %arg9[%c0_123, %c0_124] : memref<256x512xf32, #tpu.memory_space<vmem>>, vector<256x512xf32>
    %cst_125 = arith.constant dense<0.000000e+00> : vector<8x512xf32>
    %516 = tpu.matmul %514, %515, %cst_125 {dimension_numbers = #tpu.dot_dimension_numbers<[1], [0], [0], [1], [0, 0, 1, 1], [], []>} : vector<8x256xf32>, vector<256x512xf32>, vector<8x512xf32> -> vector<8x512xf32>
    %c0_126 = arith.constant 0 : index
    %c0_127 = arith.constant 0 : index
    %517 = vector.load %arg10[%c0_126, %c0_127] : memref<1x512xf32, #tpu.memory_space<vmem>>, vector<1x512xf32>
    %518 = vector.broadcast %517 : vector<1x512xf32> to vector<8x512xf32>
    %519 = arith.addf %516, %518 : vector<8x512xf32>
    %520 = vector.extract_strided_slice %519 {offsets = [0, 0], sizes = [8, 128], strides = [1, 1]} : vector<8x512xf32> to vector<8x128xf32>
    %521 = arith.negf %520 : vector<8x128xf32>
    %522 = math.exp %521 : vector<8x128xf32>
    %cst_128 = arith.constant 1.000000e+00 : f32
    %523 = vector.broadcast %cst_128 : f32 to vector<8x128xf32>
    %524 = arith.addf %523, %522 : vector<8x128xf32>
    %525 = arith.divf %523, %524 : vector<8x128xf32>
    %526 = vector.extract_strided_slice %519 {offsets = [0, 128], sizes = [8, 128], strides = [1, 1]} : vector<8x512xf32> to vector<8x128xf32>
    %527 = arith.negf %526 : vector<8x128xf32>
    %528 = math.exp %527 : vector<8x128xf32>
    %cst_129 = arith.constant 1.000000e+00 : f32
    %529 = vector.broadcast %cst_129 : f32 to vector<8x128xf32>
    %530 = arith.addf %529, %528 : vector<8x128xf32>
    %531 = arith.divf %529, %530 : vector<8x128xf32>
    %532 = vector.extract_strided_slice %519 {offsets = [0, 256], sizes = [8, 128], strides = [1, 1]} : vector<8x512xf32> to vector<8x128xf32>
    %533 = math.tanh %532 : vector<8x128xf32>
    %534 = vector.extract_strided_slice %519 {offsets = [0, 384], sizes = [8, 128], strides = [1, 1]} : vector<8x512xf32> to vector<8x128xf32>
    %535 = arith.negf %534 : vector<8x128xf32>
    %536 = math.exp %535 : vector<8x128xf32>
    %cst_130 = arith.constant 1.000000e+00 : f32
    %537 = vector.broadcast %cst_130 : f32 to vector<8x128xf32>
    %538 = arith.addf %537, %536 : vector<8x128xf32>
    %539 = arith.divf %537, %538 : vector<8x128xf32>
    %540 = arith.mulf %531, %482 : vector<8x128xf32>
    %541 = arith.mulf %525, %533 : vector<8x128xf32>
    %542 = arith.addf %540, %541 : vector<8x128xf32>
    %543 = math.tanh %542 : vector<8x128xf32>
    %544 = arith.mulf %539, %543 : vector<8x128xf32>
    %545 = vector.extract_strided_slice %244 {offsets = [40, 0], sizes = [8, 512], strides = [1, 1]} : vector<64x512xf32> to vector<8x512xf32>
    %c0_131 = arith.constant 0 : index
    %c0_132 = arith.constant 0 : index
    %546 = vector.load %arg7[%c0_131, %c0_132] : memref<128x512xf32, #tpu.memory_space<vmem>>, vector<128x512xf32>
    %cst_133 = arith.constant dense<0.000000e+00> : vector<8x512xf32>
    %547 = tpu.matmul %513, %546, %cst_133 {dimension_numbers = #tpu.dot_dimension_numbers<[1], [0], [0], [1], [0, 0, 1, 1], [], []>} : vector<8x128xf32>, vector<128x512xf32>, vector<8x512xf32> -> vector<8x512xf32>
    %548 = arith.addf %545, %547 : vector<8x512xf32>
    %549 = vector.extract_strided_slice %548 {offsets = [0, 0], sizes = [8, 128], strides = [1, 1]} : vector<8x512xf32> to vector<8x128xf32>
    %550 = arith.negf %549 : vector<8x128xf32>
    %551 = math.exp %550 : vector<8x128xf32>
    %cst_134 = arith.constant 1.000000e+00 : f32
    %552 = vector.broadcast %cst_134 : f32 to vector<8x128xf32>
    %553 = arith.addf %552, %551 : vector<8x128xf32>
    %554 = arith.divf %552, %553 : vector<8x128xf32>
    %555 = vector.extract_strided_slice %548 {offsets = [0, 128], sizes = [8, 128], strides = [1, 1]} : vector<8x512xf32> to vector<8x128xf32>
    %556 = arith.negf %555 : vector<8x128xf32>
    %557 = math.exp %556 : vector<8x128xf32>
    %cst_135 = arith.constant 1.000000e+00 : f32
    %558 = vector.broadcast %cst_135 : f32 to vector<8x128xf32>
    %559 = arith.addf %558, %557 : vector<8x128xf32>
    %560 = arith.divf %558, %559 : vector<8x128xf32>
    %561 = vector.extract_strided_slice %548 {offsets = [0, 256], sizes = [8, 128], strides = [1, 1]} : vector<8x512xf32> to vector<8x128xf32>
    %562 = math.tanh %561 : vector<8x128xf32>
    %563 = vector.extract_strided_slice %548 {offsets = [0, 384], sizes = [8, 128], strides = [1, 1]} : vector<8x512xf32> to vector<8x128xf32>
    %564 = arith.negf %563 : vector<8x128xf32>
    %565 = math.exp %564 : vector<8x128xf32>
    %cst_136 = arith.constant 1.000000e+00 : f32
    %566 = vector.broadcast %cst_136 : f32 to vector<8x128xf32>
    %567 = arith.addf %566, %565 : vector<8x128xf32>
    %568 = arith.divf %566, %567 : vector<8x128xf32>
    %569 = arith.mulf %560, %511 : vector<8x128xf32>
    %570 = arith.mulf %554, %562 : vector<8x128xf32>
    %571 = arith.addf %569, %570 : vector<8x128xf32>
    %572 = math.tanh %571 : vector<8x128xf32>
    %573 = arith.mulf %568, %572 : vector<8x128xf32>
    %574 = tpu.concatenate %573, %544 in 1 : vector<8x128xf32>, vector<8x128xf32> -> vector<8x256xf32>
    %c0_137 = arith.constant 0 : index
    %c0_138 = arith.constant 0 : index
    %575 = vector.load %arg9[%c0_137, %c0_138] : memref<256x512xf32, #tpu.memory_space<vmem>>, vector<256x512xf32>
    %cst_139 = arith.constant dense<0.000000e+00> : vector<8x512xf32>
    %576 = tpu.matmul %574, %575, %cst_139 {dimension_numbers = #tpu.dot_dimension_numbers<[1], [0], [0], [1], [0, 0, 1, 1], [], []>} : vector<8x256xf32>, vector<256x512xf32>, vector<8x512xf32> -> vector<8x512xf32>
    %c0_140 = arith.constant 0 : index
    %c0_141 = arith.constant 0 : index
    %577 = vector.load %arg10[%c0_140, %c0_141] : memref<1x512xf32, #tpu.memory_space<vmem>>, vector<1x512xf32>
    %578 = vector.broadcast %577 : vector<1x512xf32> to vector<8x512xf32>
    %579 = arith.addf %576, %578 : vector<8x512xf32>
    %580 = vector.extract_strided_slice %579 {offsets = [0, 0], sizes = [8, 128], strides = [1, 1]} : vector<8x512xf32> to vector<8x128xf32>
    %581 = arith.negf %580 : vector<8x128xf32>
    %582 = math.exp %581 : vector<8x128xf32>
    %cst_142 = arith.constant 1.000000e+00 : f32
    %583 = vector.broadcast %cst_142 : f32 to vector<8x128xf32>
    %584 = arith.addf %583, %582 : vector<8x128xf32>
    %585 = arith.divf %583, %584 : vector<8x128xf32>
    %586 = vector.extract_strided_slice %579 {offsets = [0, 128], sizes = [8, 128], strides = [1, 1]} : vector<8x512xf32> to vector<8x128xf32>
    %587 = arith.negf %586 : vector<8x128xf32>
    %588 = math.exp %587 : vector<8x128xf32>
    %cst_143 = arith.constant 1.000000e+00 : f32
    %589 = vector.broadcast %cst_143 : f32 to vector<8x128xf32>
    %590 = arith.addf %589, %588 : vector<8x128xf32>
    %591 = arith.divf %589, %590 : vector<8x128xf32>
    %592 = vector.extract_strided_slice %579 {offsets = [0, 256], sizes = [8, 128], strides = [1, 1]} : vector<8x512xf32> to vector<8x128xf32>
    %593 = math.tanh %592 : vector<8x128xf32>
    %594 = vector.extract_strided_slice %579 {offsets = [0, 384], sizes = [8, 128], strides = [1, 1]} : vector<8x512xf32> to vector<8x128xf32>
    %595 = arith.negf %594 : vector<8x128xf32>
    %596 = math.exp %595 : vector<8x128xf32>
    %cst_144 = arith.constant 1.000000e+00 : f32
    %597 = vector.broadcast %cst_144 : f32 to vector<8x128xf32>
    %598 = arith.addf %597, %596 : vector<8x128xf32>
    %599 = arith.divf %597, %598 : vector<8x128xf32>
    %600 = arith.mulf %591, %542 : vector<8x128xf32>
    %601 = arith.mulf %585, %593 : vector<8x128xf32>
    %602 = arith.addf %600, %601 : vector<8x128xf32>
    %603 = math.tanh %602 : vector<8x128xf32>
    %604 = arith.mulf %599, %603 : vector<8x128xf32>
    %605 = vector.extract_strided_slice %244 {offsets = [48, 0], sizes = [8, 512], strides = [1, 1]} : vector<64x512xf32> to vector<8x512xf32>
    %c0_145 = arith.constant 0 : index
    %c0_146 = arith.constant 0 : index
    %606 = vector.load %arg7[%c0_145, %c0_146] : memref<128x512xf32, #tpu.memory_space<vmem>>, vector<128x512xf32>
    %cst_147 = arith.constant dense<0.000000e+00> : vector<8x512xf32>
    %607 = tpu.matmul %573, %606, %cst_147 {dimension_numbers = #tpu.dot_dimension_numbers<[1], [0], [0], [1], [0, 0, 1, 1], [], []>} : vector<8x128xf32>, vector<128x512xf32>, vector<8x512xf32> -> vector<8x512xf32>
    %608 = arith.addf %605, %607 : vector<8x512xf32>
    %609 = vector.extract_strided_slice %608 {offsets = [0, 0], sizes = [8, 128], strides = [1, 1]} : vector<8x512xf32> to vector<8x128xf32>
    %610 = arith.negf %609 : vector<8x128xf32>
    %611 = math.exp %610 : vector<8x128xf32>
    %cst_148 = arith.constant 1.000000e+00 : f32
    %612 = vector.broadcast %cst_148 : f32 to vector<8x128xf32>
    %613 = arith.addf %612, %611 : vector<8x128xf32>
    %614 = arith.divf %612, %613 : vector<8x128xf32>
    %615 = vector.extract_strided_slice %608 {offsets = [0, 128], sizes = [8, 128], strides = [1, 1]} : vector<8x512xf32> to vector<8x128xf32>
    %616 = arith.negf %615 : vector<8x128xf32>
    %617 = math.exp %616 : vector<8x128xf32>
    %cst_149 = arith.constant 1.000000e+00 : f32
    %618 = vector.broadcast %cst_149 : f32 to vector<8x128xf32>
    %619 = arith.addf %618, %617 : vector<8x128xf32>
    %620 = arith.divf %618, %619 : vector<8x128xf32>
    %621 = vector.extract_strided_slice %608 {offsets = [0, 256], sizes = [8, 128], strides = [1, 1]} : vector<8x512xf32> to vector<8x128xf32>
    %622 = math.tanh %621 : vector<8x128xf32>
    %623 = vector.extract_strided_slice %608 {offsets = [0, 384], sizes = [8, 128], strides = [1, 1]} : vector<8x512xf32> to vector<8x128xf32>
    %624 = arith.negf %623 : vector<8x128xf32>
    %625 = math.exp %624 : vector<8x128xf32>
    %cst_150 = arith.constant 1.000000e+00 : f32
    %626 = vector.broadcast %cst_150 : f32 to vector<8x128xf32>
    %627 = arith.addf %626, %625 : vector<8x128xf32>
    %628 = arith.divf %626, %627 : vector<8x128xf32>
    %629 = arith.mulf %620, %571 : vector<8x128xf32>
    %630 = arith.mulf %614, %622 : vector<8x128xf32>
    %631 = arith.addf %629, %630 : vector<8x128xf32>
    %632 = math.tanh %631 : vector<8x128xf32>
    %633 = arith.mulf %628, %632 : vector<8x128xf32>
    %634 = tpu.concatenate %633, %604 in 1 : vector<8x128xf32>, vector<8x128xf32> -> vector<8x256xf32>
    %c0_151 = arith.constant 0 : index
    %c0_152 = arith.constant 0 : index
    %635 = vector.load %arg9[%c0_151, %c0_152] : memref<256x512xf32, #tpu.memory_space<vmem>>, vector<256x512xf32>
    %cst_153 = arith.constant dense<0.000000e+00> : vector<8x512xf32>
    %636 = tpu.matmul %634, %635, %cst_153 {dimension_numbers = #tpu.dot_dimension_numbers<[1], [0], [0], [1], [0, 0, 1, 1], [], []>} : vector<8x256xf32>, vector<256x512xf32>, vector<8x512xf32> -> vector<8x512xf32>
    %c0_154 = arith.constant 0 : index
    %c0_155 = arith.constant 0 : index
    %637 = vector.load %arg10[%c0_154, %c0_155] : memref<1x512xf32, #tpu.memory_space<vmem>>, vector<1x512xf32>
    %638 = vector.broadcast %637 : vector<1x512xf32> to vector<8x512xf32>
    %639 = arith.addf %636, %638 : vector<8x512xf32>
    %640 = vector.extract_strided_slice %639 {offsets = [0, 0], sizes = [8, 128], strides = [1, 1]} : vector<8x512xf32> to vector<8x128xf32>
    %641 = arith.negf %640 : vector<8x128xf32>
    %642 = math.exp %641 : vector<8x128xf32>
    %cst_156 = arith.constant 1.000000e+00 : f32
    %643 = vector.broadcast %cst_156 : f32 to vector<8x128xf32>
    %644 = arith.addf %643, %642 : vector<8x128xf32>
    %645 = arith.divf %643, %644 : vector<8x128xf32>
    %646 = vector.extract_strided_slice %639 {offsets = [0, 128], sizes = [8, 128], strides = [1, 1]} : vector<8x512xf32> to vector<8x128xf32>
    %647 = arith.negf %646 : vector<8x128xf32>
    %648 = math.exp %647 : vector<8x128xf32>
    %cst_157 = arith.constant 1.000000e+00 : f32
    %649 = vector.broadcast %cst_157 : f32 to vector<8x128xf32>
    %650 = arith.addf %649, %648 : vector<8x128xf32>
    %651 = arith.divf %649, %650 : vector<8x128xf32>
    %652 = vector.extract_strided_slice %639 {offsets = [0, 256], sizes = [8, 128], strides = [1, 1]} : vector<8x512xf32> to vector<8x128xf32>
    %653 = math.tanh %652 : vector<8x128xf32>
    %654 = vector.extract_strided_slice %639 {offsets = [0, 384], sizes = [8, 128], strides = [1, 1]} : vector<8x512xf32> to vector<8x128xf32>
    %655 = arith.negf %654 : vector<8x128xf32>
    %656 = math.exp %655 : vector<8x128xf32>
    %cst_158 = arith.constant 1.000000e+00 : f32
    %657 = vector.broadcast %cst_158 : f32 to vector<8x128xf32>
    %658 = arith.addf %657, %656 : vector<8x128xf32>
    %659 = arith.divf %657, %658 : vector<8x128xf32>
    %660 = arith.mulf %651, %602 : vector<8x128xf32>
    %661 = arith.mulf %645, %653 : vector<8x128xf32>
    %662 = arith.addf %660, %661 : vector<8x128xf32>
    %663 = math.tanh %662 : vector<8x128xf32>
    %664 = arith.mulf %659, %663 : vector<8x128xf32>
    %665 = vector.extract_strided_slice %244 {offsets = [56, 0], sizes = [8, 512], strides = [1, 1]} : vector<64x512xf32> to vector<8x512xf32>
    %c0_159 = arith.constant 0 : index
    %c0_160 = arith.constant 0 : index
    %666 = vector.load %arg7[%c0_159, %c0_160] : memref<128x512xf32, #tpu.memory_space<vmem>>, vector<128x512xf32>
    %cst_161 = arith.constant dense<0.000000e+00> : vector<8x512xf32>
    %667 = tpu.matmul %633, %666, %cst_161 {dimension_numbers = #tpu.dot_dimension_numbers<[1], [0], [0], [1], [0, 0, 1, 1], [], []>} : vector<8x128xf32>, vector<128x512xf32>, vector<8x512xf32> -> vector<8x512xf32>
    %668 = arith.addf %665, %667 : vector<8x512xf32>
    %669 = vector.extract_strided_slice %668 {offsets = [0, 0], sizes = [8, 128], strides = [1, 1]} : vector<8x512xf32> to vector<8x128xf32>
    %670 = arith.negf %669 : vector<8x128xf32>
    %671 = math.exp %670 : vector<8x128xf32>
    %cst_162 = arith.constant 1.000000e+00 : f32
    %672 = vector.broadcast %cst_162 : f32 to vector<8x128xf32>
    %673 = arith.addf %672, %671 : vector<8x128xf32>
    %674 = arith.divf %672, %673 : vector<8x128xf32>
    %675 = vector.extract_strided_slice %668 {offsets = [0, 128], sizes = [8, 128], strides = [1, 1]} : vector<8x512xf32> to vector<8x128xf32>
    %676 = arith.negf %675 : vector<8x128xf32>
    %677 = math.exp %676 : vector<8x128xf32>
    %cst_163 = arith.constant 1.000000e+00 : f32
    %678 = vector.broadcast %cst_163 : f32 to vector<8x128xf32>
    %679 = arith.addf %678, %677 : vector<8x128xf32>
    %680 = arith.divf %678, %679 : vector<8x128xf32>
    %681 = vector.extract_strided_slice %668 {offsets = [0, 256], sizes = [8, 128], strides = [1, 1]} : vector<8x512xf32> to vector<8x128xf32>
    %682 = math.tanh %681 : vector<8x128xf32>
    %683 = vector.extract_strided_slice %668 {offsets = [0, 384], sizes = [8, 128], strides = [1, 1]} : vector<8x512xf32> to vector<8x128xf32>
    %684 = arith.negf %683 : vector<8x128xf32>
    %685 = math.exp %684 : vector<8x128xf32>
    %cst_164 = arith.constant 1.000000e+00 : f32
    %686 = vector.broadcast %cst_164 : f32 to vector<8x128xf32>
    %687 = arith.addf %686, %685 : vector<8x128xf32>
    %688 = arith.divf %686, %687 : vector<8x128xf32>
    %689 = arith.mulf %680, %631 : vector<8x128xf32>
    %690 = arith.mulf %674, %682 : vector<8x128xf32>
    %691 = arith.addf %689, %690 : vector<8x128xf32>
    %692 = math.tanh %691 : vector<8x128xf32>
    %693 = arith.mulf %688, %692 : vector<8x128xf32>
    %694 = tpu.concatenate %693, %664 in 1 : vector<8x128xf32>, vector<8x128xf32> -> vector<8x256xf32>
    %c0_165 = arith.constant 0 : index
    %c0_166 = arith.constant 0 : index
    %695 = vector.load %arg9[%c0_165, %c0_166] : memref<256x512xf32, #tpu.memory_space<vmem>>, vector<256x512xf32>
    %cst_167 = arith.constant dense<0.000000e+00> : vector<8x512xf32>
    %696 = tpu.matmul %694, %695, %cst_167 {dimension_numbers = #tpu.dot_dimension_numbers<[1], [0], [0], [1], [0, 0, 1, 1], [], []>} : vector<8x256xf32>, vector<256x512xf32>, vector<8x512xf32> -> vector<8x512xf32>
    %c0_168 = arith.constant 0 : index
    %c0_169 = arith.constant 0 : index
    %697 = vector.load %arg10[%c0_168, %c0_169] : memref<1x512xf32, #tpu.memory_space<vmem>>, vector<1x512xf32>
    %698 = vector.broadcast %697 : vector<1x512xf32> to vector<8x512xf32>
    %699 = arith.addf %696, %698 : vector<8x512xf32>
    %700 = vector.extract_strided_slice %699 {offsets = [0, 0], sizes = [8, 128], strides = [1, 1]} : vector<8x512xf32> to vector<8x128xf32>
    %701 = arith.negf %700 : vector<8x128xf32>
    %702 = math.exp %701 : vector<8x128xf32>
    %cst_170 = arith.constant 1.000000e+00 : f32
    %703 = vector.broadcast %cst_170 : f32 to vector<8x128xf32>
    %704 = arith.addf %703, %702 : vector<8x128xf32>
    %705 = arith.divf %703, %704 : vector<8x128xf32>
    %706 = vector.extract_strided_slice %699 {offsets = [0, 128], sizes = [8, 128], strides = [1, 1]} : vector<8x512xf32> to vector<8x128xf32>
    %707 = arith.negf %706 : vector<8x128xf32>
    %708 = math.exp %707 : vector<8x128xf32>
    %cst_171 = arith.constant 1.000000e+00 : f32
    %709 = vector.broadcast %cst_171 : f32 to vector<8x128xf32>
    %710 = arith.addf %709, %708 : vector<8x128xf32>
    %711 = arith.divf %709, %710 : vector<8x128xf32>
    %712 = vector.extract_strided_slice %699 {offsets = [0, 256], sizes = [8, 128], strides = [1, 1]} : vector<8x512xf32> to vector<8x128xf32>
    %713 = math.tanh %712 : vector<8x128xf32>
    %714 = vector.extract_strided_slice %699 {offsets = [0, 384], sizes = [8, 128], strides = [1, 1]} : vector<8x512xf32> to vector<8x128xf32>
    %715 = arith.negf %714 : vector<8x128xf32>
    %716 = math.exp %715 : vector<8x128xf32>
    %cst_172 = arith.constant 1.000000e+00 : f32
    %717 = vector.broadcast %cst_172 : f32 to vector<8x128xf32>
    %718 = arith.addf %717, %716 : vector<8x128xf32>
    %719 = arith.divf %717, %718 : vector<8x128xf32>
    %720 = arith.mulf %711, %662 : vector<8x128xf32>
    %721 = arith.mulf %705, %713 : vector<8x128xf32>
    %722 = arith.addf %720, %721 : vector<8x128xf32>
    %723 = math.tanh %722 : vector<8x128xf32>
    %724 = arith.mulf %719, %723 : vector<8x128xf32>
    %c0_173 = arith.constant 0 : index
    %c0_174 = arith.constant 0 : index
    %725 = vector.load %arg11[%c0_173, %c0_174] : memref<2x256xf32, #tpu.memory_space<vmem>>, vector<2x256xf32>
    %c0_175 = arith.constant 0 : index
    %c0_176 = arith.constant 0 : index
    %726 = vector.load %arg2[%c0_175, %c0_176] : memref<8x128xf32, #tpu.memory_space<vmem>>, vector<8x128xf32>
    %727 = arith.addf %238, %726 : vector<8x128xf32>
    %728 = tpu.concatenate %727, %724 in 1 : vector<8x128xf32>, vector<8x128xf32> -> vector<8x256xf32>
    %729 = vector.extract_strided_slice %725 {offsets = [0, 0], sizes = [1, 256], strides = [1, 1]} : vector<2x256xf32> to vector<1x256xf32>
    %730 = vector.broadcast %729 : vector<1x256xf32> to vector<8x256xf32>
    %731 = arith.mulf %728, %730 : vector<8x256xf32>
    %732 = vector.extract_strided_slice %725 {offsets = [1, 0], sizes = [1, 256], strides = [1, 1]} : vector<2x256xf32> to vector<1x256xf32>
    %733 = vector.broadcast %732 : vector<1x256xf32> to vector<8x256xf32>
    %734 = arith.addf %731, %733 : vector<8x256xf32>
    %cst_177 = arith.constant 0.000000e+00 : f32
    %735 = vector.broadcast %cst_177 : f32 to vector<8x256xf32>
    %736 = arith.maximumf %734, %735 : vector<8x256xf32>
    %c0_178 = arith.constant 0 : index
    %c0_179 = arith.constant 0 : index
    %737 = vector.load %arg12[%c0_178, %c0_179] : memref<256x16xf32, #tpu.memory_space<vmem>>, vector<256x16xf32>
    %cst_180 = arith.constant dense<0.000000e+00> : vector<8x16xf32>
    %738 = tpu.matmul %736, %737, %cst_180 {dimension_numbers = #tpu.dot_dimension_numbers<[1], [0], [0], [1], [0, 0, 1, 1], [], []>} : vector<8x256xf32>, vector<256x16xf32>, vector<8x16xf32> -> vector<8x16xf32>
    %c0_181 = arith.constant 0 : index
    %c0_182 = arith.constant 0 : index
    %739 = vector.load %arg13[%c0_181, %c0_182] : memref<1x16xf32, #tpu.memory_space<vmem>>, vector<1x16xf32>
    %740 = vector.broadcast %739 : vector<1x16xf32> to vector<8x16xf32>
    %741 = arith.addf %738, %740 : vector<8x16xf32>
    %c0_183 = arith.constant 0 : index
    %c0_184 = arith.constant 0 : index
    %742 = vector.load %arg14[%c0_183, %c0_184] : memref<2x16xf32, #tpu.memory_space<vmem>>, vector<2x16xf32>
    %743 = vector.extract_strided_slice %742 {offsets = [0, 0], sizes = [1, 16], strides = [1, 1]} : vector<2x16xf32> to vector<1x16xf32>
    %744 = vector.broadcast %743 : vector<1x16xf32> to vector<8x16xf32>
    %745 = arith.mulf %741, %744 : vector<8x16xf32>
    %746 = vector.extract_strided_slice %742 {offsets = [1, 0], sizes = [1, 16], strides = [1, 1]} : vector<2x16xf32> to vector<1x16xf32>
    %747 = vector.broadcast %746 : vector<1x16xf32> to vector<8x16xf32>
    %748 = arith.addf %745, %747 : vector<8x16xf32>
    %cst_185 = arith.constant 0.000000e+00 : f32
    %749 = vector.broadcast %cst_185 : f32 to vector<8x16xf32>
    %750 = arith.maximumf %748, %749 : vector<8x16xf32>
    %c0_186 = arith.constant 0 : index
    %c0_187 = arith.constant 0 : index
    %751 = vector.load %arg15[%c0_186, %c0_187] : memref<16x2xf32, #tpu.memory_space<vmem>>, vector<16x2xf32>
    %cst_188 = arith.constant dense<0.000000e+00> : vector<8x2xf32>
    %752 = tpu.matmul %750, %751, %cst_188 {dimension_numbers = #tpu.dot_dimension_numbers<[1], [0], [0], [1], [0, 0, 1, 1], [], []>} : vector<8x16xf32>, vector<16x2xf32>, vector<8x2xf32> -> vector<8x2xf32>
    %c0_189 = arith.constant 0 : index
    %c0_190 = arith.constant 0 : index
    %753 = vector.load %arg16[%c0_189, %c0_190] : memref<1x2xf32, #tpu.memory_space<vmem>>, vector<1x2xf32>
    %754 = vector.broadcast %753 : vector<1x2xf32> to vector<8x2xf32>
    %755 = arith.addf %752, %754 : vector<8x2xf32>
    %c0_191 = arith.constant 0 : index
    %c0_192 = arith.constant 0 : index
    %756 = vector.load %arg17[%c0_191, %c0_192] : memref<8x2xf32, #tpu.memory_space<vmem>>, vector<8x2xf32>
    tpu.vector_store %arg17[%c0_191, %c0_192], %755 {strides = array<i32>} : memref<8x2xf32, #tpu.memory_space<vmem>>, vector<8x2xf32>,
    return
  }
}

</mosaic_0001>

<llo_original>
// kernel: _lambda_.1
$region0: #{_lambda_.1}
  #allocation0 [shape = 'u32[]', space=smem, size = 0x4, offset = 0x4, fixed_abs, tag = 'smem constant byte address 0x4 - core index']
  #allocation1 [shape = 'u32[144,128]{1,0:T(1,128)}', space=vmem, size = 0x12000, scoped, tag = 'internal scratch']
  %s0 = inlined_call_operand.vmem [shape: f32[64,4], index: 0, kind: input, shape index: {}]
  %s1 = inlined_call_operand.vmem [shape: f32[64,4], index: 1, kind: input, shape index: {}]
  %s2 = inlined_call_operand.vmem [shape: f32[8,128], index: 2, kind: input, shape index: {}]
  %s3 = inlined_call_operand.vmem [shape: f32[4,512], index: 3, kind: input, shape index: {}]
  %s4 = inlined_call_operand.vmem [shape: f32[128,512], index: 4, kind: input, shape index: {}]
  %s5 = inlined_call_operand.vmem [shape: f32[1,512], index: 5, kind: input, shape index: {}]
  %s6 = inlined_call_operand.vmem [shape: f32[4,512], index: 6, kind: input, shape index: {}]
  %s7 = inlined_call_operand.hbm [shape: f32[128,512], index: 7, kind: input, shape index: {}]
  %s8 = inlined_call_operand.vmem [shape: f32[1,512], index: 8, kind: input, shape index: {}]
  %s9 = inlined_call_operand.hbm [shape: f32[256,512], index: 9, kind: input, shape index: {}]
  %s10 = inlined_call_operand.vmem [shape: f32[1,512], index: 10, kind: input, shape index: {}]
  %s11 = inlined_call_operand.vmem [shape: f32[2,256], index: 11, kind: input, shape index: {}]
  %s12 = inlined_call_operand.hbm [shape: f32[256,16], index: 12, kind: input, shape index: {}]
  %s13 = inlined_call_operand.vmem [shape: f32[1,16], index: 13, kind: input, shape index: {}]
  %s14 = inlined_call_operand.vmem [shape: f32[2,16], index: 14, kind: input, shape index: {}]
  %s15 = inlined_call_operand.vmem [shape: f32[16,2], index: 15, kind: input, shape index: {}]
  %s16 = inlined_call_operand.vmem [shape: f32[1,2], index: 16, kind: input, shape index: {}]
  %s17 = inlined_call_operand.vmem [shape: f32[8,2], index: 17, kind: output, shape index: {}]
  %s18 = sld [smem:[#allocation0]]
  $region90: #{_lambda_.1} parent=0
    _
  %s20 = ssub.s32 1, %s18
  %s21 = scalar_select 0, %s20, %s18
  $region1: #{_lambda_.1} parent=0
    #allocation2 [shape = 'u8[262144]{0}', space=vmem, size = 0x40000, scoped, tag = 'input window, operand 7, single buffered']
    #allocation3 [shape = 's32[1]{0}', space=sflag, size = 0x4, scoped, tag = 'scoped memory for _lambda_.1']
    #allocation4 [shape = 'u8[524288]{0}', space=vmem, size = 0x80000, scoped, tag = 'input window, operand 9, single buffered']
    #allocation5 [shape = 's32[1]{0}', space=sflag, size = 0x4, scoped, tag = 'scoped memory for _lambda_.1']
    #allocation6 [shape = 'u8[131072]{0}', space=vmem, size = 0x20000, scoped, tag = 'input window, operand 12, single buffered']
    %22 = vsyncpa [#allocation3], 0
    %23 = vsyncpa [#allocation5], 0
    // Predicated region
    $region2: #{_lambda_.1} parent=1 // pred_check
      _
    $region3: #{_lambda_.1} parent=1 // pred_check_branch
      %25 = sbr.rel (0) target = $region5
    $region4: #{_lambda_.1} parent=1 // pred_region
      _
    $region5: #{_lambda_.1} parent=1 // pred_fallthru
      _
    // Predicated region
    $region6: #{_lambda_.1} parent=1 // pred_check
      _
    $region7: #{_lambda_.1} parent=1 // pred_check_branch
      %27 = sbr.rel (0) target = $region9
    $region8: #{_lambda_.1} parent=1 // pred_region
      _
    $region9: #{_lambda_.1} parent=1 // pred_fallthru
      _
    // Predicated region
    $region10: #{_lambda_.1} parent=1 // pred_check
      _
    $region11: #{_lambda_.1} parent=1 // pred_check_branch
      %29 = sbr.rel (0) target = $region13
    $region12: #{_lambda_.1} parent=1 // pred_region
      _
    $region13: #{_lambda_.1} parent=1 // pred_fallthru
      _
    // Predicated region
    $region14: #{_lambda_.1} parent=1 // pred_check
      _
    $region15: #{_lambda_.1} parent=1 // pred_check_branch
      %31 = sbr.rel (0) target = $region17
    $region16: #{_lambda_.1} parent=1 // pred_region
      _
    $region17: #{_lambda_.1} parent=1 // pred_fallthru
      _
    // Predicated region
    $region18: #{_lambda_.1} parent=1 // pred_check
      _
    $region19: #{_lambda_.1} parent=1 // pred_check_branch
      %33 = sbr.rel (0) target = $region21
    $region20: #{_lambda_.1} parent=1 // pred_region
      _
    $region21: #{_lambda_.1} parent=1 // pred_fallthru
      _
    // Predicated region
    $region22: #{_lambda_.1} parent=1 // pred_check
      _
    $region23: #{_lambda_.1} parent=1 // pred_check_branch
      %35 = sbr.rel (0) target = $region25
    $region24: #{_lambda_.1} parent=1 // pred_region
      _
    $region25: #{_lambda_.1} parent=1 // pred_fallthru
      _
    // Predicated region
    $region26: #{_lambda_.1} parent=1 // pred_check
      _
    $region27: #{_lambda_.1} parent=1 // pred_check_branch
      %37 = sbr.rel (0) target = $region29
    $region28: #{_lambda_.1} parent=1 // pred_region
      _
    $region29: #{_lambda_.1} parent=1 // pred_fallthru
      _
    // Predicated region
    $region30: #{_lambda_.1} parent=1 // pred_check
      _
    $region31: #{_lambda_.1} parent=1 // pred_check_branch
      %39 = sbr.rel (0) target = $region33
    $region32: #{_lambda_.1} parent=1 // pred_region
      %s41 = ssub.s32 8192, 8192
      %42 = vsyncadd [#allocation3], %s41
      %s43 = sshll.u32 [#allocation2], 4
      %s44 = int_to_ptr.vmem [resolvable:$true] %s43
      %49 = dma.hbm_to_vmem [thread:$0]  %s7, 8192, %s44, [#allocation3], 512, 512, 32
    $region33: #{_lambda_.1} parent=1 // pred_fallthru
      _
    // Predicated region
    $region34: #{_lambda_.1} parent=1 // pred_check
      _
    $region35: #{_lambda_.1} parent=1 // pred_check_branch
      %51 = sbr.rel (0) target = $region37
    $region36: #{_lambda_.1} parent=1 // pred_region
      _
    $region37: #{_lambda_.1} parent=1 // pred_fallthru
      _
    // Predicated region
    $region38: #{_lambda_.1} parent=1 // pred_check
      _
    $region39: #{_lambda_.1} parent=1 // pred_check_branch
      %53 = sbr.rel (0) target = $region41
    $region40: #{_lambda_.1} parent=1 // pred_region
      %s55 = ssub.s32 16384, 16384
      %56 = vsyncadd [#allocation5], %s55
      %s57 = sshll.u32 [#allocation4], 4
      %s58 = int_to_ptr.vmem [resolvable:$true] %s57
      %63 = dma.hbm_to_vmem [thread:$0]  %s9, 16384, %s58, [#allocation5], 512, 512, 32
    $region41: #{_lambda_.1} parent=1 // pred_fallthru
      _
    // Predicated region
    $region42: #{_lambda_.1} parent=1 // pred_check
      _
    $region43: #{_lambda_.1} parent=1 // pred_check_branch
      %65 = sbr.rel (0) target = $region45
    $region44: #{_lambda_.1} parent=1 // pred_region
      _
    $region45: #{_lambda_.1} parent=1 // pred_fallthru
      _
    // Predicated region
    $region46: #{_lambda_.1} parent=1 // pred_check
      _
    $region47: #{_lambda_.1} parent=1 // pred_check_branch
      %67 = sbr.rel (0) target = $region49
    $region48: #{_lambda_.1} parent=1 // pred_region
      _
    $region49: #{_lambda_.1} parent=1 // pred_fallthru
      _
    // Predicated region
    $region50: #{_lambda_.1} parent=1 // pred_check
      _
    $region51: #{_lambda_.1} parent=1 // pred_check_branch
      %69 = sbr.rel (0) target = $region53
    $region52: #{_lambda_.1} parent=1 // pred_region
      %s71 = ssub.s32 4096, 4096
      %72 = vsyncadd [#allocation5], %s71
      %s73 = sshll.u32 [#allocation6], 4
      %s74 = int_to_ptr.vmem [resolvable:$true] %s73
      %79 = dma.hbm_to_vmem [thread:$0]  %s12, 4096, %s74, [#allocation5], 128, 128, 8
    $region53: #{_lambda_.1} parent=1 // pred_fallthru
      _
    // Predicated region
    $region54: #{_lambda_.1} parent=1 // pred_check
      _
    $region55: #{_lambda_.1} parent=1 // pred_check_branch
      %81 = sbr.rel (0) target = $region57
    $region56: #{_lambda_.1} parent=1 // pred_region
      _
    $region57: #{_lambda_.1} parent=1 // pred_fallthru
      _
    // Predicated region
    $region58: #{_lambda_.1} parent=1 // pred_check
      _
    $region59: #{_lambda_.1} parent=1 // pred_check_branch
      %83 = sbr.rel (0) target = $region61
    $region60: #{_lambda_.1} parent=1 // pred_region
      _
    $region61: #{_lambda_.1} parent=1 // pred_fallthru
      _
    // Predicated region
    $region62: #{_lambda_.1} parent=1 // pred_check
      _
    $region63: #{_lambda_.1} parent=1 // pred_check_branch
      %85 = sbr.rel (0) target = $region65
    $region64: #{_lambda_.1} parent=1 // pred_region
      _
    $region65: #{_lambda_.1} parent=1 // pred_fallthru
      _
    // Predicated region
    $region66: #{_lambda_.1} parent=1 // pred_check
      _
    $region67: #{_lambda_.1} parent=1 // pred_check_branch
      %87 = sbr.rel (0) target = $region69
    $region68: #{_lambda_.1} parent=1 // pred_region
      _
    $region69: #{_lambda_.1} parent=1 // pred_fallthru
      _
    // Predicated region
    $region70: #{_lambda_.1} parent=1 // pred_check
      _
    $region71: #{_lambda_.1} parent=1 // pred_check_branch
      %89 = sbr.rel (0) target = $region73
    $region72: #{_lambda_.1} parent=1 // pred_region
      %90 = dma.done [#allocation3], 8192
    $region73: #{_lambda_.1} parent=1 // pred_fallthru
      _
    // Predicated region
    $region74: #{_lambda_.1} parent=1 // pred_check
      _
    $region75: #{_lambda_.1} parent=1 // pred_check_branch
      %92 = sbr.rel (0) target = $region77
    $region76: #{_lambda_.1} parent=1 // pred_region
      %93 = dma.done [#allocation5], 16384
    $region77: #{_lambda_.1} parent=1 // pred_fallthru
      _
    // Predicated region
    $region78: #{_lambda_.1} parent=1 // pred_check
      _
    $region79: #{_lambda_.1} parent=1 // pred_check_branch
      %95 = sbr.rel (0) target = $region81
    $region80: #{_lambda_.1} parent=1 // pred_region
      %96 = dma.done [#allocation5], 4096
    $region81: #{_lambda_.1} parent=1 // pred_fallthru
      _
    %v97 = vld [vmem:[%s0] sm:$0xff]
    %v98 = vld [vmem:[%s0 + $0x8] sm:$0xff]
    %v99 = vld [vmem:[%s0 + $0x10] sm:$0xff]
    %v100 = vld [vmem:[%s0 + $0x18] sm:$0xff]
    %v101 = vld [vmem:[%s0 + $0x20] sm:$0xff]
    %v102 = vld [vmem:[%s0 + $0x28] sm:$0xff]
    %v103 = vld [vmem:[%s0 + $0x30] sm:$0xff]
    %v104 = vld [vmem:[%s0 + $0x38] sm:$0xff]
    %v105 = vld [vmem:[%s3] sm:$0xff]
    %v106 = vld [vmem:[%s3 + $0x8] sm:$0xff]
    %v107 = vld [vmem:[%s5] sm:$0xf]
    %v109 = vlaneseq
    %v110 = vshrl.u32 %v109, 7
    %v111 = vsub.s32 0, %v110
    %v112 = vrot.slane %v107, %v111
    %v113 = vlaneseq
    %v114 = vshrl.u32 %v113, 7
    %v115 = vsub.s32 1, %v114
    %v116 = vrot.slane %v107, %v115
    %v117 = vlaneseq
    %v118 = vshrl.u32 %v117, 7
    %v119 = vsub.s32 2, %v118
    %v120 = vrot.slane %v107, %v119
    %v121 = vlaneseq
    %v122 = vshrl.u32 %v121, 7
    %v123 = vsub.s32 3, %v122
    %v124 = vrot.slane %v107, %v123
    %v131 = vcombine.high %v105, %v105
    %v132 = vcombine.high %v106, %v106
    %vm133 = vcmask 31744
    %v135 = vsel %vm133, %v97, 0
    %v138 = vsel %vm133, %v98, 0
    %v141 = vsel %vm133, %v99, 0
    %v144 = vsel %vm133, %v100, 0
    %v147 = vsel %vm133, %v101, 0
    %v150 = vsel %vm133, %v102, 0
    %v153 = vsel %vm133, %v103, 0
    %v156 = vsel %vm133, %v104, 0
    %vm158 = vcmask 1043456
    %v159 = vsel %vm158, %v105, 0
    %v161 = vsel %vm158, %v131, 0
    %v163 = vsel %vm158, %v106, 0
    %v165 = vsel %vm158, %v132, 0
    %167 = vmatprep.subr.mxu0 %v161
    %168 = vmatpush1.msra.mxu0 %v159
    %169 = vmatprep.subr.mxu0 0.0
    %170 = vmatpush1.msra.mxu0 0.0
    %171 = vmatprep.subr.mxu0 0.0
    %172 = vmatpush1.msra.mxu0 0.0
    %173 = vmatprep.subr.mxu0 0.0
    %174 = vmatpush1.msra.mxu0 0.0
    %175 = vmatprep.subr.mxu0 0.0
    %176 = vmatpush1.msra.mxu0 0.0
    %177 = vmatprep.subr.mxu0 0.0
    %178 = vmatpush1.msra.mxu0 0.0
    %179 = vmatprep.subr.mxu0 0.0
    %180 = vmatpush1.msra.mxu0 0.0
    %181 = vmatprep.subr.mxu0 0.0
    %182 = vmatpush1.msra.mxu0 0.0
    %183 = vmatprep.subr.mxu0 0.0
    %184 = vmatpush1.msra.mxu0 0.0
    %185 = vmatprep.subr.mxu0 0.0
    %186 = vmatpush1.msra.mxu0 0.0
    %187 = vmatprep.subr.mxu0 0.0
    %188 = vmatpush1.msra.mxu0 0.0
    %189 = vmatprep.subr.mxu0 0.0
    %190 = vmatpush1.msra.mxu0 0.0
    %191 = vmatprep.subr.mxu0 0.0
    %192 = vmatpush1.msra.mxu0 0.0
    %193 = vmatprep.subr.mxu0 0.0
    %194 = vmatpush1.msra.mxu0 0.0
    %195 = vmatprep.subr.mxu0 0.0
    %196 = vmatpush1.msra.mxu0 0.0
    %197 = vmatprep.subr.mxu0 0.0
    %198 = vmatpush1.msra.mxu0 0.0
    %199 = vmatprep.subr.mxu0 0.0
    %200 = vmatpush1.msra.mxu0 0.0
    %201 = vmatprep.subr.mxu0 0.0
    %202 = vmatpush1.msra.mxu0 0.0
    %203 = vmatprep.subr.mxu0 0.0
    %204 = vmatpush1.msra.mxu0 0.0
    %205 = vmatprep.subr.mxu0 0.0
    %206 = vmatpush1.msra.mxu0 0.0
    %207 = vmatprep.subr.mxu0 0.0
    %208 = vmatpush1.msra.mxu0 0.0
    %209 = vmatprep.subr.mxu0 0.0
    %210 = vmatpush1.msra.mxu0 0.0
    %211 = vmatprep.subr.mxu0 0.0
    %212 = vmatpush1.msra.mxu0 0.0
    %213 = vmatprep.subr.mxu0 0.0
    %214 = vmatpush1.msra.mxu0 0.0
    %215 = vmatprep.subr.mxu0 0.0
    %216 = vmatpush1.msra.mxu0 0.0
    %217 = vmatprep.subr.mxu0 0.0
    %218 = vmatpush1.msra.mxu0 0.0
    %219 = vmatprep.subr.mxu0 0.0
    %220 = vmatpush1.msra.mxu0 0.0
    %221 = vmatprep.subr.mxu0 0.0
    %222 = vmatpush1.msra.mxu0 0.0
    %223 = vmatprep.subr.mxu0 0.0
    %224 = vmatpush1.msra.mxu0 0.0
    %225 = vmatprep.subr.mxu0 0.0
    %226 = vmatpush1.msra.mxu0 0.0
    %227 = vmatprep.subr.mxu0 0.0
    %228 = vmatpush1.msra.mxu0 0.0
    %229 = vmatprep.subr.mxu0 0.0
    %230 = vmatpush1.msra.mxu0 0.0
    %231 = vmatprep.mubr.f32.mxu0 0.0
    %232 = vmatmul.mubr.f32.gmra.mrb[0].mxu0 %v135
    %v233 = vpop.f32.mrb[0].mxu0
    %v234 = vadd.f32 %v112, %v233
    %v235 = vpop.f32.mrb[0].mxu0
    %v236 = vadd.f32 %v116, %v235
    %237 = vmatprep.mubr.f32.mxu0 0.0
    %238 = vmatmul.mubr.f32.gmra.mrb[0].mxu0 %v138
    %v239 = vpop.f32.mrb[0].mxu0
    %v240 = vadd.f32 %v112, %v239
    %v241 = vpop.f32.mrb[0].mxu0
    %v242 = vadd.f32 %v116, %v241
    %243 = vmatprep.mubr.f32.mxu0 0.0
    %244 = vmatmul.mubr.f32.gmra.mrb[0].mxu0 %v141
    %v245 = vpop.f32.mrb[0].mxu0
    %v246 = vadd.f32 %v112, %v245
    %v247 = vpop.f32.mrb[0].mxu0
    %v248 = vadd.f32 %v116, %v247
    %249 = vmatprep.mubr.f32.mxu0 0.0
    %250 = vmatmul.mubr.f32.gmra.mrb[0].mxu0 %v144
    %v251 = vpop.f32.mrb[0].mxu0
    %v252 = vadd.f32 %v112, %v251
    %v253 = vpop.f32.mrb[0].mxu0
    %v254 = vadd.f32 %v116, %v253
    %255 = vmatprep.mubr.f32.mxu0 0.0
    %256 = vmatmul.mubr.f32.gmra.mrb[0].mxu0 %v147
    %v257 = vpop.f32.mrb[0].mxu0
    %v258 = vadd.f32 %v112, %v257
    %v259 = vpop.f32.mrb[0].mxu0
    %v260 = vadd.f32 %v116, %v259
    %261 = vmatprep.mubr.f32.mxu0 0.0
    %262 = vmatmul.mubr.f32.gmra.mrb[0].mxu0 %v150
    %v263 = vpop.f32.mrb[0].mxu0
    %v264 = vadd.f32 %v112, %v263
    %v265 = vpop.f32.mrb[0].mxu0
    %v266 = vadd.f32 %v116, %v265
    %267 = vmatprep.mubr.f32.mxu0 0.0
    %268 = vmatmul.mubr.f32.gmra.mrb[0].mxu0 %v153
    %v269 = vpop.f32.mrb[0].mxu0
    %v270 = vadd.f32 %v112, %v269
    %v271 = vpop.f32.mrb[0].mxu0
    %v272 = vadd.f32 %v116, %v271
    %273 = vmatprep.mubr.f32.mxu0 0.0
    %274 = vmatmul.mubr.f32.gmra.mrb[0].mxu0 %v156
    %v275 = vpop.f32.mrb[0].mxu0
    %v276 = vadd.f32 %v112, %v275
    %v277 = vpop.f32.mrb[0].mxu0
    %v278 = vadd.f32 %v116, %v277
    %279 = vdwg.mxu0
    %280 = vmatprep.subr.mxu0 %v165
    %281 = vmatpush1.msra.mxu0 %v163
    %282 = vmatprep.subr.mxu0 0.0
    %283 = vmatpush1.msra.mxu0 0.0
    %284 = vmatprep.subr.mxu0 0.0
    %285 = vmatpush1.msra.mxu0 0.0
    %286 = vmatprep.subr.mxu0 0.0
    %287 = vmatpush1.msra.mxu0 0.0
    %288 = vmatprep.subr.mxu0 0.0
    %289 = vmatpush1.msra.mxu0 0.0
    %290 = vmatprep.subr.mxu0 0.0
    %291 = vmatpush1.msra.mxu0 0.0
    %292 = vmatprep.subr.mxu0 0.0
    %293 = vmatpush1.msra.mxu0 0.0
    %294 = vmatprep.subr.mxu0 0.0
    %295 = vmatpush1.msra.mxu0 0.0
    %296 = vmatprep.subr.mxu0 0.0
    %297 = vmatpush1.msra.mxu0 0.0
    %298 = vmatprep.subr.mxu0 0.0
    %299 = vmatpush1.msra.mxu0 0.0
    %300 = vmatprep.subr.mxu0 0.0
    %301 = vmatpush1.msra.mxu0 0.0
    %302 = vmatprep.subr.mxu0 0.0
    %303 = vmatpush1.msra.mxu0 0.0
    %304 = vmatprep.subr.mxu0 0.0
    %305 = vmatpush1.msra.mxu0 0.0
    %306 = vmatprep.subr.mxu0 0.0
    %307 = vmatpush1.msra.mxu0 0.0
    %308 = vmatprep.subr.mxu0 0.0
    %309 = vmatpush1.msra.mxu0 0.0
    %310 = vmatprep.subr.mxu0 0.0
    %311 = vmatpush1.msra.mxu0 0.0
    %312 = vmatprep.subr.mxu0 0.0
    %313 = vmatpush1.msra.mxu0 0.0
    %314 = vmatprep.subr.mxu0 0.0
    %315 = vmatpush1.msra.mxu0 0.0
    %316 = vmatprep.subr.mxu0 0.0
    %317 = vmatpush1.msra.mxu0 0.0
    %318 = vmatprep.subr.mxu0 0.0
    %319 = vmatpush1.msra.mxu0 0.0
    %320 = vmatprep.subr.mxu0 0.0
    %321 = vmatpush1.msra.mxu0 0.0
    %322 = vmatprep.subr.mxu0 0.0
    %323 = vmatpush1.msra.mxu0 0.0
    %324 = vmatprep.subr.mxu0 0.0
    %325 = vmatpush1.msra.mxu0 0.0
    %326 = vmatprep.subr.mxu0 0.0
    %327 = vmatpush1.msra.mxu0 0.0
    %328 = vmatprep.subr.mxu0 0.0
    %329 = vmatpush1.msra.mxu0 0.0
    %330 = vmatprep.subr.mxu0 0.0
    %331 = vmatpush1.msra.mxu0 0.0
    %332 = vmatprep.subr.mxu0 0.0
    %333 = vmatpush1.msra.mxu0 0.0
    %334 = vmatprep.subr.mxu0 0.0
    %335 = vmatpush1.msra.mxu0 0.0
    %336 = vmatprep.subr.mxu0 0.0
    %337 = vmatpush1.msra.mxu0 0.0
    %338 = vmatprep.subr.mxu0 0.0
    %339 = vmatpush1.msra.mxu0 0.0
    %340 = vmatprep.subr.mxu0 0.0
    %341 = vmatpush1.msra.mxu0 0.0
    %342 = vmatprep.subr.mxu0 0.0
    %343 = vmatpush1.msra.mxu0 0.0
    %344 = vmatprep.mubr.f32.mxu0 0.0
    %345 = vmatmul.mubr.f32.gmra.mrb[0].mxu0 %v135
    %v346 = vpop.f32.mrb[0].mxu0
    %v347 = vadd.f32 %v120, %v346
    %v348 = vpop.f32.mrb[0].mxu0
    %v349 = vadd.f32 %v124, %v348
    %350 = vmatprep.mubr.f32.mxu0 0.0
    %351 = vmatmul.mubr.f32.gmra.mrb[0].mxu0 %v138
    %v352 = vpop.f32.mrb[0].mxu0
    %v353 = vadd.f32 %v120, %v352
    %v354 = vpop.f32.mrb[0].mxu0
    %v355 = vadd.f32 %v124, %v354
    %356 = vmatprep.mubr.f32.mxu0 0.0
    %357 = vmatmul.mubr.f32.gmra.mrb[0].mxu0 %v141
    %v358 = vpop.f32.mrb[0].mxu0
    %v359 = vadd.f32 %v120, %v358
    %v360 = vpop.f32.mrb[0].mxu0
    %v361 = vadd.f32 %v124, %v360
    %362 = vmatprep.mubr.f32.mxu0 0.0
    %363 = vmatmul.mubr.f32.gmra.mrb[0].mxu0 %v144
    %v364 = vpop.f32.mrb[0].mxu0
    %v365 = vadd.f32 %v120, %v364
    %v366 = vpop.f32.mrb[0].mxu0
    %v367 = vadd.f32 %v124, %v366
    %368 = vmatprep.mubr.f32.mxu0 0.0
    %369 = vmatmul.mubr.f32.gmra.mrb[0].mxu0 %v147
    %v370 = vpop.f32.mrb[0].mxu0
    %v371 = vadd.f32 %v120, %v370
    %v372 = vpop.f32.mrb[0].mxu0
    %v373 = vadd.f32 %v124, %v372
    %374 = vmatprep.mubr.f32.mxu0 0.0
    %375 = vmatmul.mubr.f32.gmra.mrb[0].mxu0 %v150
    %v376 = vpop.f32.mrb[0].mxu0
    %v377 = vadd.f32 %v120, %v376
    %v378 = vpop.f32.mrb[0].mxu0
    %v379 = vadd.f32 %v124, %v378
    %380 = vmatprep.mubr.f32.mxu0 0.0
    %381 = vmatmul.mubr.f32.gmra.mrb[0].mxu0 %v153
    %v382 = vpop.f32.mrb[0].mxu0
    %v383 = vadd.f32 %v120, %v382
    %v384 = vpop.f32.mrb[0].mxu0
    %v385 = vadd.f32 %v124, %v384
    %386 = vmatprep.mubr.f32.mxu0 0.0
    %387 = vmatmul.mubr.f32.gmra.mrb[0].mxu0 %v156
    %v388 = vpop.f32.mrb[0].mxu0
    %v389 = vadd.f32 %v120, %v388
    %v390 = vpop.f32.mrb[0].mxu0
    %v391 = vadd.f32 %v124, %v390
    %392 = vdwg.mxu0
    %v393 = vld [vmem:[%s4] sm:$0xff]
    %v394 = vld [vmem:[%s4 + $0x8] sm:$0xff]
    %v395 = vld [vmem:[%s4 + $0x10] sm:$0xff]
    %v396 = vld [vmem:[%s4 + $0x18] sm:$0xff]
    %v397 = vld [vmem:[%s4 + $0x20] sm:$0xff]
    %v398 = vld [vmem:[%s4 + $0x28] sm:$0xff]
    %v399 = vld [vmem:[%s4 + $0x30] sm:$0xff]
    %v400 = vld [vmem:[%s4 + $0x38] sm:$0xff]
    %v401 = vld [vmem:[%s4 + $0x40] sm:$0xff]
    %v402 = vld [vmem:[%s4 + $0x48] sm:$0xff]
    %v403 = vld [vmem:[%s4 + $0x50] sm:$0xff]
    %v404 = vld [vmem:[%s4 + $0x58] sm:$0xff]
    %v405 = vld [vmem:[%s4 + $0x60] sm:$0xff]
    %v406 = vld [vmem:[%s4 + $0x68] sm:$0xff]
    %v407 = vld [vmem:[%s4 + $0x70] sm:$0xff]
    %v408 = vld [vmem:[%s4 + $0x78] sm:$0xff]
    %v409 = vld [vmem:[%s4 + $0x80] sm:$0xff]
    %v410 = vld [vmem:[%s4 + $0x88] sm:$0xff]
    %v411 = vld [vmem:[%s4 + $0x90] sm:$0xff]
    %v412 = vld [vmem:[%s4 + $0x98] sm:$0xff]
    %v413 = vld [vmem:[%s4 + $0xa0] sm:$0xff]
    %v414 = vld [vmem:[%s4 + $0xa8] sm:$0xff]
    %v415 = vld [vmem:[%s4 + $0xb0] sm:$0xff]
    %v416 = vld [vmem:[%s4 + $0xb8] sm:$0xff]
    %v417 = vld [vmem:[%s4 + $0xc0] sm:$0xff]
    %v418 = vld [vmem:[%s4 + $0xc8] sm:$0xff]
    %v419 = vld [vmem:[%s4 + $0xd0] sm:$0xff]
    %v420 = vld [vmem:[%s4 + $0xd8] sm:$0xff]
    %v421 = vld [vmem:[%s4 + $0xe0] sm:$0xff]
    %v422 = vld [vmem:[%s4 + $0xe8] sm:$0xff]
    %v423 = vld [vmem:[%s4 + $0xf0] sm:$0xff]
    %v424 = vld [vmem:[%s4 + $0xf8] sm:$0xff]
    %v425 = vld [vmem:[%s4 + $0x100] sm:$0xff]
    %v426 = vld [vmem:[%s4 + $0x108] sm:$0xff]
    %v427 = vld [vmem:[%s4 + $0x110] sm:$0xff]
    %v428 = vld [vmem:[%s4 + $0x118] sm:$0xff]
    %v429 = vld [vmem:[%s4 + $0x120] sm:$0xff]
    %v430 = vld [vmem:[%s4 + $0x128] sm:$0xff]
    %v431 = vld [vmem:[%s4 + $0x130] sm:$0xff]
    %v432 = vld [vmem:[%s4 + $0x138] sm:$0xff]
    %v433 = vld [vmem:[%s4 + $0x140] sm:$0xff]
    %v434 = vld [vmem:[%s4 + $0x148] sm:$0xff]
    %v435 = vld [vmem:[%s4 + $0x150] sm:$0xff]
    %v436 = vld [vmem:[%s4 + $0x158] sm:$0xff]
    %v437 = vld [vmem:[%s4 + $0x160] sm:$0xff]
    %v438 = vld [vmem:[%s4 + $0x168] sm:$0xff]
    %v439 = vld [vmem:[%s4 + $0x170] sm:$0xff]
    %v440 = vld [vmem:[%s4 + $0x178] sm:$0xff]
    %v441 = vld [vmem:[%s4 + $0x180] sm:$0xff]
    %v442 = vld [vmem:[%s4 + $0x188] sm:$0xff]
    %v443 = vld [vmem:[%s4 + $0x190] sm:$0xff]
    %v444 = vld [vmem:[%s4 + $0x198] sm:$0xff]
    %v445 = vld [vmem:[%s4 + $0x1a0] sm:$0xff]
    %v446 = vld [vmem:[%s4 + $0x1a8] sm:$0xff]
    %v447 = vld [vmem:[%s4 + $0x1b0] sm:$0xff]
    %v448 = vld [vmem:[%s4 + $0x1b8] sm:$0xff]
    %v449 = vld [vmem:[%s4 + $0x1c0] sm:$0xff]
    %v450 = vld [vmem:[%s4 + $0x1c8] sm:$0xff]
    %v451 = vld [vmem:[%s4 + $0x1d0] sm:$0xff]
    %v452 = vld [vmem:[%s4 + $0x1d8] sm:$0xff]
    %v453 = vld [vmem:[%s4 + $0x1e0] sm:$0xff]
    %v454 = vld [vmem:[%s4 + $0x1e8] sm:$0xff]
    %v455 = vld [vmem:[%s4 + $0x1f0] sm:$0xff]
    %v456 = vld [vmem:[%s4 + $0x1f8] sm:$0xff]
    %457 = vmatprep.subr.mxu0 %v394
    %458 = vmatpush1.msra.mxu0 %v393
    %459 = vmatprep.subr.mxu0 %v398
    %460 = vmatpush1.msra.mxu0 %v397
    %461 = vmatprep.subr.mxu0 %v402
    %462 = vmatpush1.msra.mxu0 %v401
    %463 = vmatprep.subr.mxu0 %v406
    %464 = vmatpush1.msra.mxu0 %v405
    %465 = vmatprep.subr.mxu0 %v410
    %466 = vmatpush1.msra.mxu0 %v409
    %467 = vmatprep.subr.mxu0 %v414
    %468 = vmatpush1.msra.mxu0 %v413
    %469 = vmatprep.subr.mxu0 %v418
    %470 = vmatpush1.msra.mxu0 %v417
    %471 = vmatprep.subr.mxu0 %v422
    %472 = vmatpush1.msra.mxu0 %v421
    %473 = vmatprep.subr.mxu0 %v426
    %474 = vmatpush1.msra.mxu0 %v425
    %475 = vmatprep.subr.mxu0 %v430
    %476 = vmatpush1.msra.mxu0 %v429
    %477 = vmatprep.subr.mxu0 %v434
    %478 = vmatpush1.msra.mxu0 %v433
    %479 = vmatprep.subr.mxu0 %v438
    %480 = vmatpush1.msra.mxu0 %v437
    %481 = vmatprep.subr.mxu0 %v442
    %482 = vmatpush1.msra.mxu0 %v441
    %483 = vmatprep.subr.mxu0 %v446
    %484 = vmatpush1.msra.mxu0 %v445
    %485 = vmatprep.subr.mxu0 %v450
    %486 = vmatpush1.msra.mxu0 %v449
    %487 = vmatprep.subr.mxu0 %v454
    %488 = vmatpush1.msra.mxu0 %v453
    %489 = vmatprep.subr.mxu0 0.0
    %490 = vmatpush1.msra.mxu0 0.0
    %491 = vmatprep.subr.mxu0 0.0
    %492 = vmatpush1.msra.mxu0 0.0
    %493 = vmatprep.subr.mxu0 0.0
    %494 = vmatpush1.msra.mxu0 0.0
    %495 = vmatprep.subr.mxu0 0.0
    %496 = vmatpush1.msra.mxu0 0.0
    %497 = vmatprep.subr.mxu0 0.0
    %498 = vmatpush1.msra.mxu0 0.0
    %499 = vmatprep.subr.mxu0 0.0
    %500 = vmatpush1.msra.mxu0 0.0
    %501 = vmatprep.subr.mxu0 0.0
    %502 = vmatpush1.msra.mxu0 0.0
    %503 = vmatprep.subr.mxu0 0.0
    %504 = vmatpush1.msra.mxu0 0.0
    %505 = vmatprep.subr.mxu0 0.0
    %506 = vmatpush1.msra.mxu0 0.0
    %507 = vmatprep.subr.mxu0 0.0
    %508 = vmatpush1.msra.mxu0 0.0
    %509 = vmatprep.subr.mxu0 0.0
    %510 = vmatpush1.msra.mxu0 0.0
    %511 = vmatprep.subr.mxu0 0.0
    %512 = vmatpush1.msra.mxu0 0.0
    %513 = vmatprep.subr.mxu0 0.0
    %514 = vmatpush1.msra.mxu0 0.0
    %515 = vmatprep.subr.mxu0 0.0
    %516 = vmatpush1.msra.mxu0 0.0
    %517 = vmatprep.subr.mxu0 0.0
    %518 = vmatpush1.msra.mxu0 0.0
    %519 = vmatprep.subr.mxu0 0.0
    %520 = vmatpush1.msra.mxu0 0.0
    %521 = vmatprep.mubr.f32.mxu0 0.0
    %522 = vmatmul.mubr.f32.gmra.mrb[0].mxu0 0.0
    %v523 = vpop.f32.mrb[0].mxu0
    %v524 = vadd.f32 0.0, %v523
    %v525 = vpop.f32.mrb[0].mxu0
    %v526 = vadd.f32 0.0, %v525
    %527 = vdwg.mxu0
    %528 = vmatprep.subr.mxu0 %v396
    %529 = vmatpush1.msra.mxu0 %v395
    %530 = vmatprep.subr.mxu0 %v400
    %531 = vmatpush1.msra.mxu0 %v399
    %532 = vmatprep.subr.mxu0 %v404
    %533 = vmatpush1.msra.mxu0 %v403
    %534 = vmatprep.subr.mxu0 %v408
    %535 = vmatpush1.msra.mxu0 %v407
    %536 = vmatprep.subr.mxu0 %v412
    %537 = vmatpush1.msra.mxu0 %v411
    %538 = vmatprep.subr.mxu0 %v416
    %539 = vmatpush1.msra.mxu0 %v415
    %540 = vmatprep.subr.mxu0 %v420
    %541 = vmatpush1.msra.mxu0 %v419
    %542 = vmatprep.subr.mxu0 %v424
    %543 = vmatpush1.msra.mxu0 %v423
    %544 = vmatprep.subr.mxu0 %v428
    %545 = vmatpush1.msra.mxu0 %v427
    %546 = vmatprep.subr.mxu0 %v432
    %547 = vmatpush1.msra.mxu0 %v431
    %548 = vmatprep.subr.mxu0 %v436
    %549 = vmatpush1.msra.mxu0 %v435
    %550 = vmatprep.subr.mxu0 %v440
    %551 = vmatpush1.msra.mxu0 %v439
    %552 = vmatprep.subr.mxu0 %v444
    %553 = vmatpush1.msra.mxu0 %v443
    %554 = vmatprep.subr.mxu0 %v448
    %555 = vmatpush1.msra.mxu0 %v447
    %556 = vmatprep.subr.mxu0 %v452
    %557 = vmatpush1.msra.mxu0 %v451
    %558 = vmatprep.subr.mxu0 %v456
    %559 = vmatpush1.msra.mxu0 %v455
    %560 = vmatprep.subr.mxu0 0.0
    %561 = vmatpush1.msra.mxu0 0.0
    %562 = vmatprep.subr.mxu0 0.0
    %563 = vmatpush1.msra.mxu0 0.0
    %564 = vmatprep.subr.mxu0 0.0
    %565 = vmatpush1.msra.mxu0 0.0
    %566 = vmatprep.subr.mxu0 0.0
    %567 = vmatpush1.msra.mxu0 0.0
    %568 = vmatprep.subr.mxu0 0.0
    %569 = vmatpush1.msra.mxu0 0.0
    %570 = vmatprep.subr.mxu0 0.0
    %571 = vmatpush1.msra.mxu0 0.0
    %572 = vmatprep.subr.mxu0 0.0
    %573 = vmatpush1.msra.mxu0 0.0
    %574 = vmatprep.subr.mxu0 0.0
    %575 = vmatpush1.msra.mxu0 0.0
    %576 = vmatprep.subr.mxu0 0.0
    %577 = vmatpush1.msra.mxu0 0.0
    %578 = vmatprep.subr.mxu0 0.0
    %579 = vmatpush1.msra.mxu0 0.0
    %580 = vmatprep.subr.mxu0 0.0
    %581 = vmatpush1.msra.mxu0 0.0
    %582 = vmatprep.subr.mxu0 0.0
    %583 = vmatpush1.msra.mxu0 0.0
    %584 = vmatprep.subr.mxu0 0.0
    %585 = vmatpush1.msra.mxu0 0.0
    %586 = vmatprep.subr.mxu0 0.0
    %587 = vmatpush1.msra.mxu0 0.0
    %588 = vmatprep.subr.mxu0 0.0
    %589 = vmatpush1.msra.mxu0 0.0
    %590 = vmatprep.subr.mxu0 0.0
    %591 = vmatpush1.msra.mxu0 0.0
    %592 = vmatprep.mubr.f32.mxu0 0.0
    %593 = vmatmul.mubr.f32.gmra.mrb[0].mxu0 0.0
    %v594 = vpop.f32.mrb[0].mxu0
    %v595 = vadd.f32 0.0, %v594
    %v596 = vpop.f32.mrb[0].mxu0
    %v597 = vadd.f32 0.0, %v596
    %598 = vdwg.mxu0
    %v599 = vadd.f32 %v234, %v524
    %v600 = vadd.f32 %v236, %v526
    %v601 = vadd.f32 %v347, %v595
    %v602 = vadd.f32 %v349, %v597
    %v603 = vxor.u32 %v599, 2147483648
    %v604 = vmul.f32 %v603, 1.442695
    %v605 = vpow.pop %v604
    %v606 = vadd.f32 %v605, 1.0
    %v607 = vrcp.pop %v606
    %v608 = vmul.f32 1.0, %v607
    %v609 = vxor.u32 %v600, 2147483648
    %v610 = vmul.f32 %v609, 1.442695
    %v611 = vpow.pop %v610
    %v612 = vadd.f32 %v611, 1.0
    %v613 = vrcp.pop %v612
    %v614 = vmul.f32 1.0, %v613
    %v615 = vtanh.pop %v601
    %v616 = vxor.u32 %v602, 2147483648
    %v617 = vmul.f32 %v616, 1.442695
    %v618 = vpow.pop %v617
    %v619 = vadd.f32 %v618, 1.0
    %v620 = vrcp.pop %v619
    %v621 = vmul.f32 1.0, %v620
    %v622 = vmul.f32 %v614, 0.0
    %v623 = vmul.f32 %v608, %v615
    %v624 = vadd.f32 %v622, %v623
    %v625 = vtanh.pop %v624
    %v626 = vmul.f32 %v621, %v625
    %627 = vmatprep.subr.mxu0 %v394
    %628 = vmatpush1.msra.mxu0 %v393
    %629 = vmatprep.subr.mxu0 %v398
    %630 = vmatpush1.msra.mxu0 %v397
    %631 = vmatprep.subr.mxu0 %v402
    %632 = vmatpush1.msra.mxu0 %v401
    %633 = vmatprep.subr.mxu0 %v406
    %634 = vmatpush1.msra.mxu0 %v405
    %635 = vmatprep.subr.mxu0 %v410
    %636 = vmatpush1.msra.mxu0 %v409
    %637 = vmatprep.subr.mxu0 %v414
    %638 = vmatpush1.msra.mxu0 %v413
    %639 = vmatprep.subr.mxu0 %v418
    %640 = vmatpush1.msra.mxu0 %v417
    %641 = vmatprep.subr.mxu0 %v422
    %642 = vmatpush1.msra.mxu0 %v421
    %643 = vmatprep.subr.mxu0 %v426
    %644 = vmatpush1.msra.mxu0 %v425
    %645 = vmatprep.subr.mxu0 %v430
    %646 = vmatpush1.msra.mxu0 %v429
    %647 = vmatprep.subr.mxu0 %v434
    %648 = vmatpush1.msra.mxu0 %v433
    %649 = vmatprep.subr.mxu0 %v438
    %650 = vmatpush1.msra.mxu0 %v437
    %651 = vmatprep.subr.mxu0 %v442
    %652 = vmatpush1.msra.mxu0 %v441
    %653 = vmatprep.subr.mxu0 %v446
    %654 = vmatpush1.msra.mxu0 %v445
    %655 = vmatprep.subr.mxu0 %v450
    %656 = vmatpush1.msra.mxu0 %v449
    %657 = vmatprep.subr.mxu0 %v454
    %658 = vmatpush1.msra.mxu0 %v453
    %659 = vmatprep.subr.mxu0 0.0
    %660 = vmatpush1.msra.mxu0 0.0
    %661 = vmatprep.subr.mxu0 0.0
    %662 = vmatpush1.msra.mxu0 0.0
    %663 = vmatprep.subr.mxu0 0.0
    %664 = vmatpush1.msra.mxu0 0.0
    %665 = vmatprep.subr.mxu0 0.0
    %666 = vmatpush1.msra.mxu0 0.0
    %667 = vmatprep.subr.mxu0 0.0
    %668 = vmatpush1.msra.mxu0 0.0
    %669 = vmatprep.subr.mxu0 0.0
    %670 = vmatpush1.msra.mxu0 0.0
    %671 = vmatprep.subr.mxu0 0.0
    %672 = vmatpush1.msra.mxu0 0.0
    %673 = vmatprep.subr.mxu0 0.0
    %674 = vmatpush1.msra.mxu0 0.0
    %675 = vmatprep.subr.mxu0 0.0
    %676 = vmatpush1.msra.mxu0 0.0
    %677 = vmatprep.subr.mxu0 0.0
    %678 = vmatpush1.msra.mxu0 0.0
    %679 = vmatprep.subr.mxu0 0.0
    %680 = vmatpush1.msra.mxu0 0.0
    %681 = vmatprep.subr.mxu0 0.0
    %682 = vmatpush1.msra.mxu0 0.0
    %683 = vmatprep.subr.mxu0 0.0
    %684 = vmatpush1.msra.mxu0 0.0
    %685 = vmatprep.subr.mxu0 0.0
    %686 = vmatpush1.msra.mxu0 0.0
    %687 = vmatprep.subr.mxu0 0.0
    %688 = vmatpush1.msra.mxu0 0.0
    %689 = vmatprep.subr.mxu0 0.0
    %690 = vmatpush1.msra.mxu0 0.0
    %691 = vmatprep.mubr.f32.mxu0 0.0
    %692 = vmatmul.mubr.f32.gmra.mrb[0].mxu0 %v626
    %v693 = vpop.f32.mrb[0].mxu0
    %v694 = vadd.f32 0.0, %v693
    %v695 = vpop.f32.mrb[0].mxu0
    %v696 = vadd.f32 0.0, %v695
    %697 = vdwg.mxu0
    %698 = vmatprep.subr.mxu0 %v396
    %699 = vmatpush1.msra.mxu0 %v395
    %700 = vmatprep.subr.mxu0 %v400
    %701 = vmatpush1.msra.mxu0 %v399
    %702 = vmatprep.subr.mxu0 %v404
    %703 = vmatpush1.msra.mxu0 %v403
    %704 = vmatprep.subr.mxu0 %v408
    %705 = vmatpush1.msra.mxu0 %v407
    %706 = vmatprep.subr.mxu0 %v412
    %707 = vmatpush1.msra.mxu0 %v411
    %708 = vmatprep.subr.mxu0 %v416
    %709 = vmatpush1.msra.mxu0 %v415
    %710 = vmatprep.subr.mxu0 %v420
    %711 = vmatpush1.msra.mxu0 %v419
    %712 = vmatprep.subr.mxu0 %v424
    %713 = vmatpush1.msra.mxu0 %v423
    %714 = vmatprep.subr.mxu0 %v428
    %715 = vmatpush1.msra.mxu0 %v427
    %716 = vmatprep.subr.mxu0 %v432
    %717 = vmatpush1.msra.mxu0 %v431
    %718 = vmatprep.subr.mxu0 %v436
    %719 = vmatpush1.msra.mxu0 %v435
    %720 = vmatprep.subr.mxu0 %v440
    %721 = vmatpush1.msra.mxu0 %v439
    %722 = vmatprep.subr.mxu0 %v444
    %723 = vmatpush1.msra.mxu0 %v443
    %724 = vmatprep.subr.mxu0 %v448
    %725 = vmatpush1.msra.mxu0 %v447
    %726 = vmatprep.subr.mxu0 %v452
    %727 = vmatpush1.msra.mxu0 %v451
    %728 = vmatprep.subr.mxu0 %v456
    %729 = vmatpush1.msra.mxu0 %v455
    %730 = vmatprep.subr.mxu0 0.0
    %731 = vmatpush1.msra.mxu0 0.0
    %732 = vmatprep.subr.mxu0 0.0
    %733 = vmatpush1.msra.mxu0 0.0
    %734 = vmatprep.subr.mxu0 0.0
    %735 = vmatpush1.msra.mxu0 0.0
    %736 = vmatprep.subr.mxu0 0.0
    %737 = vmatpush1.msra.mxu0 0.0
    %738 = vmatprep.subr.mxu0 0.0
    %739 = vmatpush1.msra.mxu0 0.0
    %740 = vmatprep.subr.mxu0 0.0
    %741 = vmatpush1.msra.mxu0 0.0
    %742 = vmatprep.subr.mxu0 0.0
    %743 = vmatpush1.msra.mxu0 0.0
    %744 = vmatprep.subr.mxu0 0.0
    %745 = vmatpush1.msra.mxu0 0.0
    %746 = vmatprep.subr.mxu0 0.0
    %747 = vmatpush1.msra.mxu0 0.0
    %748 = vmatprep.subr.mxu0 0.0
    %749 = vmatpush1.msra.mxu0 0.0
    %750 = vmatprep.subr.mxu0 0.0
    %751 = vmatpush1.msra.mxu0 0.0
    %752 = vmatprep.subr.mxu0 0.0
    %753 = vmatpush1.msra.mxu0 0.0
    %754 = vmatprep.subr.mxu0 0.0
    %755 = vmatpush1.msra.mxu0 0.0
    %756 = vmatprep.subr.mxu0 0.0
    %757 = vmatpush1.msra.mxu0 0.0
    %758 = vmatprep.subr.mxu0 0.0
    %759 = vmatpush1.msra.mxu0 0.0
    %760 = vmatprep.subr.mxu0 0.0
    %761 = vmatpush1.msra.mxu0 0.0
    %762 = vmatprep.mubr.f32.mxu0 0.0
    %763 = vmatmul.mubr.f32.gmra.mrb[0].mxu0 %v626
    %v764 = vpop.f32.mrb[0].mxu0
    %v765 = vadd.f32 0.0, %v764
    %v766 = vpop.f32.mrb[0].mxu0
    %v767 = vadd.f32 0.0, %v766
    %768 = vdwg.mxu0
    %v769 = vadd.f32 %v240, %v694
    %v770 = vadd.f32 %v242, %v696
    %v771 = vadd.f32 %v353, %v765
    %v772 = vadd.f32 %v355, %v767
    %v773 = vxor.u32 %v769, 2147483648
    %v774 = vmul.f32 %v773, 1.442695
    %v775 = vpow.pop %v774
    %v776 = vadd.f32 %v775, 1.0
    %v777 = vrcp.pop %v776
    %v778 = vmul.f32 1.0, %v777
    %v779 = vxor.u32 %v770, 2147483648
    %v780 = vmul.f32 %v779, 1.442695
    %v781 = vpow.pop %v780
    %v782 = vadd.f32 %v781, 1.0
    %v783 = vrcp.pop %v782
    %v784 = vmul.f32 1.0, %v783
    %v785 = vtanh.pop %v771
    %v786 = vxor.u32 %v772, 2147483648
    %v787 = vmul.f32 %v786, 1.442695
    %v788 = vpow.pop %v787
    %v789 = vadd.f32 %v788, 1.0
    %v790 = vrcp.pop %v789
    %v791 = vmul.f32 1.0, %v790
    %v792 = vmul.f32 %v784, %v624
    %v793 = vmul.f32 %v778, %v785
    %v794 = vadd.f32 %v792, %v793
    %v795 = vtanh.pop %v794
    %v796 = vmul.f32 %v791, %v795
    %797 = vmatprep.subr.mxu0 %v394
    %798 = vmatpush1.msra.mxu0 %v393
    %799 = vmatprep.subr.mxu0 %v398
    %800 = vmatpush1.msra.mxu0 %v397
    %801 = vmatprep.subr.mxu0 %v402
    %802 = vmatpush1.msra.mxu0 %v401
    %803 = vmatprep.subr.mxu0 %v406
    %804 = vmatpush1.msra.mxu0 %v405
    %805 = vmatprep.subr.mxu0 %v410
    %806 = vmatpush1.msra.mxu0 %v409
    %807 = vmatprep.subr.mxu0 %v414
    %808 = vmatpush1.msra.mxu0 %v413
    %809 = vmatprep.subr.mxu0 %v418
    %810 = vmatpush1.msra.mxu0 %v417
    %811 = vmatprep.subr.mxu0 %v422
    %812 = vmatpush1.msra.mxu0 %v421
    %813 = vmatprep.subr.mxu0 %v426
    %814 = vmatpush1.msra.mxu0 %v425
    %815 = vmatprep.subr.mxu0 %v430
    %816 = vmatpush1.msra.mxu0 %v429
    %817 = vmatprep.subr.mxu0 %v434
    %818 = vmatpush1.msra.mxu0 %v433
    %819 = vmatprep.subr.mxu0 %v438
    %820 = vmatpush1.msra.mxu0 %v437
    %821 = vmatprep.subr.mxu0 %v442
    %822 = vmatpush1.msra.mxu0 %v441
    %823 = vmatprep.subr.mxu0 %v446
    %824 = vmatpush1.msra.mxu0 %v445
    %825 = vmatprep.subr.mxu0 %v450
    %826 = vmatpush1.msra.mxu0 %v449
    %827 = vmatprep.subr.mxu0 %v454
    %828 = vmatpush1.msra.mxu0 %v453
    %829 = vmatprep.subr.mxu0 0.0
    %830 = vmatpush1.msra.mxu0 0.0
    %831 = vmatprep.subr.mxu0 0.0
    %832 = vmatpush1.msra.mxu0 0.0
    %833 = vmatprep.subr.mxu0 0.0
    %834 = vmatpush1.msra.mxu0 0.0
    %835 = vmatprep.subr.mxu0 0.0
    %836 = vmatpush1.msra.mxu0 0.0
    %837 = vmatprep.subr.mxu0 0.0
    %838 = vmatpush1.msra.mxu0 0.0
    %839 = vmatprep.subr.mxu0 0.0
    %840 = vmatpush1.msra.mxu0 0.0
    %841 = vmatprep.subr.mxu0 0.0
    %842 = vmatpush1.msra.mxu0 0.0
    %843 = vmatprep.subr.mxu0 0.0
    %844 = vmatpush1.msra.mxu0 0.0
    %845 = vmatprep.subr.mxu0 0.0
    %846 = vmatpush1.msra.mxu0 0.0
    %847 = vmatprep.subr.mxu0 0.0
    %848 = vmatpush1.msra.mxu0 0.0
    %849 = vmatprep.subr.mxu0 0.0
    %850 = vmatpush1.msra.mxu0 0.0
    %851 = vmatprep.subr.mxu0 0.0
    %852 = vmatpush1.msra.mxu0 0.0
    %853 = vmatprep.subr.mxu0 0.0
    %854 = vmatpush1.msra.mxu0 0.0
    %855 = vmatprep.subr.mxu0 0.0
    %856 = vmatpush1.msra.mxu0 0.0
    %857 = vmatprep.subr.mxu0 0.0
    %858 = vmatpush1.msra.mxu0 0.0
    %859 = vmatprep.subr.mxu0 0.0
    %860 = vmatpush1.msra.mxu0 0.0
    %861 = vmatprep.mubr.f32.mxu0 0.0
    %862 = vmatmul.mubr.f32.gmra.mrb[0].mxu0 %v796
    %v863 = vpop.f32.mrb[0].mxu0
    %v864 = vadd.f32 0.0, %v863
    %v865 = vpop.f32.mrb[0].mxu0
    %v866 = vadd.f32 0.0, %v865
    %867 = vdwg.mxu0
    %868 = vmatprep.subr.mxu0 %v396
    %869 = vmatpush1.msra.mxu0 %v395
    %870 = vmatprep.subr.mxu0 %v400
    %871 = vmatpush1.msra.mxu0 %v399
    %872 = vmatprep.subr.mxu0 %v404
    %873 = vmatpush1.msra.mxu0 %v403
    %874 = vmatprep.subr.mxu0 %v408
    %875 = vmatpush1.msra.mxu0 %v407
    %876 = vmatprep.subr.mxu0 %v412
    %877 = vmatpush1.msra.mxu0 %v411
    %878 = vmatprep.subr.mxu0 %v416
    %879 = vmatpush1.msra.mxu0 %v415
    %880 = vmatprep.subr.mxu0 %v420
    %881 = vmatpush1.msra.mxu0 %v419
    %882 = vmatprep.subr.mxu0 %v424
    %883 = vmatpush1.msra.mxu0 %v423
    %884 = vmatprep.subr.mxu0 %v428
    %885 = vmatpush1.msra.mxu0 %v427
    %886 = vmatprep.subr.mxu0 %v432
    %887 = vmatpush1.msra.mxu0 %v431
    %888 = vmatprep.subr.mxu0 %v436
    %889 = vmatpush1.msra.mxu0 %v435
    %890 = vmatprep.subr.mxu0 %v440
    %891 = vmatpush1.msra.mxu0 %v439
    %892 = vmatprep.subr.mxu0 %v444
    %893 = vmatpush1.msra.mxu0 %v443
    %894 = vmatprep.subr.mxu0 %v448
    %895 = vmatpush1.msra.mxu0 %v447
    %896 = vmatprep.subr.mxu0 %v452
    %897 = vmatpush1.msra.mxu0 %v451
    %898 = vmatprep.subr.mxu0 %v456
    %899 = vmatpush1.msra.mxu0 %v455
    %900 = vmatprep.subr.mxu0 0.0
    %901 = vmatpush1.msra.mxu0 0.0
    %902 = vmatprep.subr.mxu0 0.0
    %903 = vmatpush1.msra.mxu0 0.0
    %904 = vmatprep.subr.mxu0 0.0
    %905 = vmatpush1.msra.mxu0 0.0
    %906 = vmatprep.subr.mxu0 0.0
    %907 = vmatpush1.msra.mxu0 0.0
    %908 = vmatprep.subr.mxu0 0.0
    %909 = vmatpush1.msra.mxu0 0.0
    %910 = vmatprep.subr.mxu0 0.0
    %911 = vmatpush1.msra.mxu0 0.0
    %912 = vmatprep.subr.mxu0 0.0
    %913 = vmatpush1.msra.mxu0 0.0
    %914 = vmatprep.subr.mxu0 0.0
    %915 = vmatpush1.msra.mxu0 0.0
    %916 = vmatprep.subr.mxu0 0.0
    %917 = vmatpush1.msra.mxu0 0.0
    %918 = vmatprep.subr.mxu0 0.0
    %919 = vmatpush1.msra.mxu0 0.0
    %920 = vmatprep.subr.mxu0 0.0
    %921 = vmatpush1.msra.mxu0 0.0
    %922 = vmatprep.subr.mxu0 0.0
    %923 = vmatpush1.msra.mxu0 0.0
    %924 = vmatprep.subr.mxu0 0.0
    %925 = vmatpush1.msra.mxu0 0.0
    %926 = vmatprep.subr.mxu0 0.0
    %927 = vmatpush1.msra.mxu0 0.0
    %928 = vmatprep.subr.mxu0 0.0
    %929 = vmatpush1.msra.mxu0 0.0
    %930 = vmatprep.subr.mxu0 0.0
    %931 = vmatpush1.msra.mxu0 0.0
    %932 = vmatprep.mubr.f32.mxu0 0.0
    %933 = vmatmul.mubr.f32.gmra.mrb[0].mxu0 %v796
    %v934 = vpop.f32.mrb[0].mxu0
    %v935 = vadd.f32 0.0, %v934
    %v936 = vpop.f32.mrb[0].mxu0
    %v937 = vadd.f32 0.0, %v936
    %938 = vdwg.mxu0
    %v939 = vadd.f32 %v246, %v864
    %v940 = vadd.f32 %v248, %v866
    %v941 = vadd.f32 %v359, %v935
    %v942 = vadd.f32 %v361, %v937
    %v943 = vxor.u32 %v939, 2147483648
    %v944 = vmul.f32 %v943, 1.442695
    %v945 = vpow.pop %v944
    %v946 = vadd.f32 %v945, 1.0
    %v947 = vrcp.pop %v946
    %v948 = vmul.f32 1.0, %v947
    %v949 = vxor.u32 %v940, 2147483648
    %v950 = vmul.f32 %v949, 1.442695
    %v951 = vpow.pop %v950
    %v952 = vadd.f32 %v951, 1.0
    %v953 = vrcp.pop %v952
    %v954 = vmul.f32 1.0, %v953
    %v955 = vtanh.pop %v941
    %v956 = vxor.u32 %v942, 2147483648
    %v957 = vmul.f32 %v956, 1.442695
    %v958 = vpow.pop %v957
    %v959 = vadd.f32 %v958, 1.0
    %v960 = vrcp.pop %v959
    %v961 = vmul.f32 1.0, %v960
    %v962 = vmul.f32 %v954, %v794
    %v963 = vmul.f32 %v948, %v955
    %v964 = vadd.f32 %v962, %v963
    %v965 = vtanh.pop %v964
    %v966 = vmul.f32 %v961, %v965
    %967 = vmatprep.subr.mxu0 %v394
    %968 = vmatpush1.msra.mxu0 %v393
    %969 = vmatprep.subr.mxu0 %v398
    %970 = vmatpush1.msra.mxu0 %v397
    %971 = vmatprep.subr.mxu0 %v402
    %972 = vmatpush1.msra.mxu0 %v401
    %973 = vmatprep.subr.mxu0 %v406
    %974 = vmatpush1.msra.mxu0 %v405
    %975 = vmatprep.subr.mxu0 %v410
    %976 = vmatpush1.msra.mxu0 %v409
    %977 = vmatprep.subr.mxu0 %v414
    %978 = vmatpush1.msra.mxu0 %v413
    %979 = vmatprep.subr.mxu0 %v418
    %980 = vmatpush1.msra.mxu0 %v417
    %981 = vmatprep.subr.mxu0 %v422
    %982 = vmatpush1.msra.mxu0 %v421
    %983 = vmatprep.subr.mxu0 %v426
    %984 = vmatpush1.msra.mxu0 %v425
    %985 = vmatprep.subr.mxu0 %v430
    %986 = vmatpush1.msra.mxu0 %v429
    %987 = vmatprep.subr.mxu0 %v434
    %988 = vmatpush1.msra.mxu0 %v433
    %989 = vmatprep.subr.mxu0 %v438
    %990 = vmatpush1.msra.mxu0 %v437
    %991 = vmatprep.subr.mxu0 %v442
    %992 = vmatpush1.msra.mxu0 %v441
    %993 = vmatprep.subr.mxu0 %v446
    %994 = vmatpush1.msra.mxu0 %v445
    %995 = vmatprep.subr.mxu0 %v450
    %996 = vmatpush1.msra.mxu0 %v449
    %997 = vmatprep.subr.mxu0 %v454
    %998 = vmatpush1.msra.mxu0 %v453
    %999 = vmatprep.subr.mxu0 0.0
    %1000 = vmatpush1.msra.mxu0 0.0
    %1001 = vmatprep.subr.mxu0 0.0
    %1002 = vmatpush1.msra.mxu0 0.0
    %1003 = vmatprep.subr.mxu0 0.0
    %1004 = vmatpush1.msra.mxu0 0.0
    %1005 = vmatprep.subr.mxu0 0.0
    %1006 = vmatpush1.msra.mxu0 0.0
    %1007 = vmatprep.subr.mxu0 0.0
    %1008 = vmatpush1.msra.mxu0 0.0
    %1009 = vmatprep.subr.mxu0 0.0
    %1010 = vmatpush1.msra.mxu0 0.0
    %1011 = vmatprep.subr.mxu0 0.0
    %1012 = vmatpush1.msra.mxu0 0.0
    %1013 = vmatprep.subr.mxu0 0.0
    %1014 = vmatpush1.msra.mxu0 0.0
    %1015 = vmatprep.subr.mxu0 0.0
    %1016 = vmatpush1.msra.mxu0 0.0
    %1017 = vmatprep.subr.mxu0 0.0
    %1018 = vmatpush1.msra.mxu0 0.0
    %1019 = vmatprep.subr.mxu0 0.0
    %1020 = vmatpush1.msra.mxu0 0.0
    %1021 = vmatprep.subr.mxu0 0.0
    %1022 = vmatpush1.msra.mxu0 0.0
    %1023 = vmatprep.subr.mxu0 0.0
    %1024 = vmatpush1.msra.mxu0 0.0
    %1025 = vmatprep.subr.mxu0 0.0
    %1026 = vmatpush1.msra.mxu0 0.0
    %1027 = vmatprep.subr.mxu0 0.0
    %1028 = vmatpush1.msra.mxu0 0.0
    %1029 = vmatprep.subr.mxu0 0.0
    %1030 = vmatpush1.msra.mxu0 0.0
    %1031 = vmatprep.mubr.f32.mxu0 0.0
    %1032 = vmatmul.mubr.f32.gmra.mrb[0].mxu0 %v966
    %v1033 = vpop.f32.mrb[0].mxu0
    %v1034 = vadd.f32 0.0, %v1033
    %v1035 = vpop.f32.mrb[0].mxu0
    %v1036 = vadd.f32 0.0, %v1035
    %1037 = vdwg.mxu0
    %1038 = vmatprep.subr.mxu0 %v396
    %1039 = vmatpush1.msra.mxu0 %v395
    %1040 = vmatprep.subr.mxu0 %v400
    %1041 = vmatpush1.msra.mxu0 %v399
    %1042 = vmatprep.subr.mxu0 %v404
    %1043 = vmatpush1.msra.mxu0 %v403
    %1044 = vmatprep.subr.mxu0 %v408
    %1045 = vmatpush1.msra.mxu0 %v407
    %1046 = vmatprep.subr.mxu0 %v412
    %1047 = vmatpush1.msra.mxu0 %v411
    %1048 = vmatprep.subr.mxu0 %v416
    %1049 = vmatpush1.msra.mxu0 %v415
    %1050 = vmatprep.subr.mxu0 %v420
    %1051 = vmatpush1.msra.mxu0 %v419
    %1052 = vmatprep.subr.mxu0 %v424
    %1053 = vmatpush1.msra.mxu0 %v423
    %1054 = vmatprep.subr.mxu0 %v428
    %1055 = vmatpush1.msra.mxu0 %v427
    %1056 = vmatprep.subr.mxu0 %v432
    %1057 = vmatpush1.msra.mxu0 %v431
    %1058 = vmatprep.subr.mxu0 %v436
    %1059 = vmatpush1.msra.mxu0 %v435
    %1060 = vmatprep.subr.mxu0 %v440
    %1061 = vmatpush1.msra.mxu0 %v439
    %1062 = vmatprep.subr.mxu0 %v444
    %1063 = vmatpush1.msra.mxu0 %v443
    %1064 = vmatprep.subr.mxu0 %v448
    %1065 = vmatpush1.msra.mxu0 %v447
    %1066 = vmatprep.subr.mxu0 %v452
    %1067 = vmatpush1.msra.mxu0 %v451
    %1068 = vmatprep.subr.mxu0 %v456
    %1069 = vmatpush1.msra.mxu0 %v455
    %1070 = vmatprep.subr.mxu0 0.0
    %1071 = vmatpush1.msra.mxu0 0.0
    %1072 = vmatprep.subr.mxu0 0.0
    %1073 = vmatpush1.msra.mxu0 0.0
    %1074 = vmatprep.subr.mxu0 0.0
    %1075 = vmatpush1.msra.mxu0 0.0
    %1076 = vmatprep.subr.mxu0 0.0
    %1077 = vmatpush1.msra.mxu0 0.0
    %1078 = vmatprep.subr.mxu0 0.0
    %1079 = vmatpush1.msra.mxu0 0.0
    %1080 = vmatprep.subr.mxu0 0.0
    %1081 = vmatpush1.msra.mxu0 0.0
    %1082 = vmatprep.subr.mxu0 0.0
    %1083 = vmatpush1.msra.mxu0 0.0
    %1084 = vmatprep.subr.mxu0 0.0
    %1085 = vmatpush1.msra.mxu0 0.0
    %1086 = vmatprep.subr.mxu0 0.0
    %1087 = vmatpush1.msra.mxu0 0.0
    %1088 = vmatprep.subr.mxu0 0.0
    %1089 = vmatpush1.msra.mxu0 0.0
    %1090 = vmatprep.subr.mxu0 0.0
    %1091 = vmatpush1.msra.mxu0 0.0
    %1092 = vmatprep.subr.mxu0 0.0
    %1093 = vmatpush1.msra.mxu0 0.0
    %1094 = vmatprep.subr.mxu0 0.0
    %1095 = vmatpush1.msra.mxu0 0.0
    %1096 = vmatprep.subr.mxu0 0.0
    %1097 = vmatpush1.msra.mxu0 0.0
    %1098 = vmatprep.subr.mxu0 0.0
    %1099 = vmatpush1.msra.mxu0 0.0
    %1100 = vmatprep.subr.mxu0 0.0
    %1101 = vmatpush1.msra.mxu0 0.0
    %1102 = vmatprep.mubr.f32.mxu0 0.0
    %1103 = vmatmul.mubr.f32.gmra.mrb[0].mxu0 %v966
    %v1104 = vpop.f32.mrb[0].mxu0
    %v1105 = vadd.f32 0.0, %v1104
    %v1106 = vpop.f32.mrb[0].mxu0
    %v1107 = vadd.f32 0.0, %v1106
    %1108 = vdwg.mxu0
    %v1109 = vadd.f32 %v252, %v1034
    %v1110 = vadd.f32 %v254, %v1036
    %v1111 = vadd.f32 %v365, %v1105
    %v1112 = vadd.f32 %v367, %v1107
    %v1113 = vxor.u32 %v1109, 2147483648
    %v1114 = vmul.f32 %v1113, 1.442695
    %v1115 = vpow.pop %v1114
    %v1116 = vadd.f32 %v1115, 1.0
    %v1117 = vrcp.pop %v1116
    %v1118 = vmul.f32 1.0, %v1117
    %v1119 = vxor.u32 %v1110, 2147483648
    %v1120 = vmul.f32 %v1119, 1.442695
    %v1121 = vpow.pop %v1120
    %v1122 = vadd.f32 %v1121, 1.0
    %v1123 = vrcp.pop %v1122
    %v1124 = vmul.f32 1.0, %v1123
    %v1125 = vtanh.pop %v1111
    %v1126 = vxor.u32 %v1112, 2147483648
    %v1127 = vmul.f32 %v1126, 1.442695
    %v1128 = vpow.pop %v1127
    %v1129 = vadd.f32 %v1128, 1.0
    %v1130 = vrcp.pop %v1129
    %v1131 = vmul.f32 1.0, %v1130
    %v1132 = vmul.f32 %v1124, %v964
    %v1133 = vmul.f32 %v1118, %v1125
    %v1134 = vadd.f32 %v1132, %v1133
    %v1135 = vtanh.pop %v1134
    %v1136 = vmul.f32 %v1131, %v1135
    %1137 = vmatprep.subr.mxu0 %v394
    %1138 = vmatpush1.msra.mxu0 %v393
    %1139 = vmatprep.subr.mxu0 %v398
    %1140 = vmatpush1.msra.mxu0 %v397
    %1141 = vmatprep.subr.mxu0 %v402
    %1142 = vmatpush1.msra.mxu0 %v401
    %1143 = vmatprep.subr.mxu0 %v406
    %1144 = vmatpush1.msra.mxu0 %v405
    %1145 = vmatprep.subr.mxu0 %v410
    %1146 = vmatpush1.msra.mxu0 %v409
    %1147 = vmatprep.subr.mxu0 %v414
    %1148 = vmatpush1.msra.mxu0 %v413
    %1149 = vmatprep.subr.mxu0 %v418
    %1150 = vmatpush1.msra.mxu0 %v417
    %1151 = vmatprep.subr.mxu0 %v422
    %1152 = vmatpush1.msra.mxu0 %v421
    %1153 = vmatprep.subr.mxu0 %v426
    %1154 = vmatpush1.msra.mxu0 %v425
    %1155 = vmatprep.subr.mxu0 %v430
    %1156 = vmatpush1.msra.mxu0 %v429
    %1157 = vmatprep.subr.mxu0 %v434
    %1158 = vmatpush1.msra.mxu0 %v433
    %1159 = vmatprep.subr.mxu0 %v438
    %1160 = vmatpush1.msra.mxu0 %v437
    %1161 = vmatprep.subr.mxu0 %v442
    %1162 = vmatpush1.msra.mxu0 %v441
    %1163 = vmatprep.subr.mxu0 %v446
    %1164 = vmatpush1.msra.mxu0 %v445
    %1165 = vmatprep.subr.mxu0 %v450
    %1166 = vmatpush1.msra.mxu0 %v449
    %1167 = vmatprep.subr.mxu0 %v454
    %1168 = vmatpush1.msra.mxu0 %v453
    %1169 = vmatprep.subr.mxu0 0.0
    %1170 = vmatpush1.msra.mxu0 0.0
    %1171 = vmatprep.subr.mxu0 0.0
    %1172 = vmatpush1.msra.mxu0 0.0
    %1173 = vmatprep.subr.mxu0 0.0
    %1174 = vmatpush1.msra.mxu0 0.0
    %1175 = vmatprep.subr.mxu0 0.0
    %1176 = vmatpush1.msra.mxu0 0.0
    %1177 = vmatprep.subr.mxu0 0.0
    %1178 = vmatpush1.msra.mxu0 0.0
    %1179 = vmatprep.subr.mxu0 0.0
    %1180 = vmatpush1.msra.mxu0 0.0
    %1181 = vmatprep.subr.mxu0 0.0
    %1182 = vmatpush1.msra.mxu0 0.0
    %1183 = vmatprep.subr.mxu0 0.0
    %1184 = vmatpush1.msra.mxu0 0.0
    %1185 = vmatprep.subr.mxu0 0.0
    %1186 = vmatpush1.msra.mxu0 0.0
    %1187 = vmatprep.subr.mxu0 0.0
    %1188 = vmatpush1.msra.mxu0 0.0
    %1189 = vmatprep.subr.mxu0 0.0
    %1190 = vmatpush1.msra.mxu0 0.0
    %1191 = vmatprep.subr.mxu0 0.0
    %1192 = vmatpush1.msra.mxu0 0.0
    %1193 = vmatprep.subr.mxu0 0.0
    %1194 = vmatpush1.msra.mxu0 0.0
    %1195 = vmatprep.subr.mxu0 0.0
    %1196 = vmatpush1.msra.mxu0 0.0
    %1197 = vmatprep.subr.mxu0 0.0
    %1198 = vmatpush1.msra.mxu0 0.0
    %1199 = vmatprep.subr.mxu0 0.0
    %1200 = vmatpush1.msra.mxu0 0.0
    %1201 = vmatprep.mubr.f32.mxu0 0.0
    %1202 = vmatmul.mubr.f32.gmra.mrb[0].mxu0 %v1136
    %v1203 = vpop.f32.mrb[0].mxu0
    %v1204 = vadd.f32 0.0, %v1203
    %v1205 = vpop.f32.mrb[0].mxu0
    %v1206 = vadd.f32 0.0, %v1205
    %1207 = vdwg.mxu0
    %1208 = vmatprep.subr.mxu0 %v396
    %1209 = vmatpush1.msra.mxu0 %v395
    %1210 = vmatprep.subr.mxu0 %v400
    %1211 = vmatpush1.msra.mxu0 %v399
    %1212 = vmatprep.subr.mxu0 %v404
    %1213 = vmatpush1.msra.mxu0 %v403
    %1214 = vmatprep.subr.mxu0 %v408
    %1215 = vmatpush1.msra.mxu0 %v407
    %1216 = vmatprep.subr.mxu0 %v412
    %1217 = vmatpush1.msra.mxu0 %v411
    %1218 = vmatprep.subr.mxu0 %v416
    %1219 = vmatpush1.msra.mxu0 %v415
    %1220 = vmatprep.subr.mxu0 %v420
    %1221 = vmatpush1.msra.mxu0 %v419
    %1222 = vmatprep.subr.mxu0 %v424
    %1223 = vmatpush1.msra.mxu0 %v423
    %1224 = vmatprep.subr.mxu0 %v428
    %1225 = vmatpush1.msra.mxu0 %v427
    %1226 = vmatprep.subr.mxu0 %v432
    %1227 = vmatpush1.msra.mxu0 %v431
    %1228 = vmatprep.subr.mxu0 %v436
    %1229 = vmatpush1.msra.mxu0 %v435
    %1230 = vmatprep.subr.mxu0 %v440
    %1231 = vmatpush1.msra.mxu0 %v439
    %1232 = vmatprep.subr.mxu0 %v444
    %1233 = vmatpush1.msra.mxu0 %v443
    %1234 = vmatprep.subr.mxu0 %v448
    %1235 = vmatpush1.msra.mxu0 %v447
    %1236 = vmatprep.subr.mxu0 %v452
    %1237 = vmatpush1.msra.mxu0 %v451
    %1238 = vmatprep.subr.mxu0 %v456
    %1239 = vmatpush1.msra.mxu0 %v455
    %1240 = vmatprep.subr.mxu0 0.0
    %1241 = vmatpush1.msra.mxu0 0.0
    %1242 = vmatprep.subr.mxu0 0.0
    %1243 = vmatpush1.msra.mxu0 0.0
    %1244 = vmatprep.subr.mxu0 0.0
    %1245 = vmatpush1.msra.mxu0 0.0
    %1246 = vmatprep.subr.mxu0 0.0
    %1247 = vmatpush1.msra.mxu0 0.0
    %1248 = vmatprep.subr.mxu0 0.0
    %1249 = vmatpush1.msra.mxu0 0.0
    %1250 = vmatprep.subr.mxu0 0.0
    %1251 = vmatpush1.msra.mxu0 0.0
    %1252 = vmatprep.subr.mxu0 0.0
    %1253 = vmatpush1.msra.mxu0 0.0
    %1254 = vmatprep.subr.mxu0 0.0
    %1255 = vmatpush1.msra.mxu0 0.0
    %1256 = vmatprep.subr.mxu0 0.0
    %1257 = vmatpush1.msra.mxu0 0.0
    %1258 = vmatprep.subr.mxu0 0.0
    %1259 = vmatpush1.msra.mxu0 0.0
    %1260 = vmatprep.subr.mxu0 0.0
    %1261 = vmatpush1.msra.mxu0 0.0
    %1262 = vmatprep.subr.mxu0 0.0
    %1263 = vmatpush1.msra.mxu0 0.0
    %1264 = vmatprep.subr.mxu0 0.0
    %1265 = vmatpush1.msra.mxu0 0.0
    %1266 = vmatprep.subr.mxu0 0.0
    %1267 = vmatpush1.msra.mxu0 0.0
    %1268 = vmatprep.subr.mxu0 0.0
    %1269 = vmatpush1.msra.mxu0 0.0
    %1270 = vmatprep.subr.mxu0 0.0
    %1271 = vmatpush1.msra.mxu0 0.0
    %1272 = vmatprep.mubr.f32.mxu0 0.0
    %1273 = vmatmul.mubr.f32.gmra.mrb[0].mxu0 %v1136
    %v1274 = vpop.f32.mrb[0].mxu0
    %v1275 = vadd.f32 0.0, %v1274
    %v1276 = vpop.f32.mrb[0].mxu0
    %v1277 = vadd.f32 0.0, %v1276
    %1278 = vdwg.mxu0
    %v1279 = vadd.f32 %v258, %v1204
    %v1280 = vadd.f32 %v260, %v1206
    %v1281 = vadd.f32 %v371, %v1275
    %v1282 = vadd.f32 %v373, %v1277
    %v1283 = vxor.u32 %v1279, 2147483648
    %v1284 = vmul.f32 %v1283, 1.442695
    %v1285 = vpow.pop %v1284
    %v1286 = vadd.f32 %v1285, 1.0
    %v1287 = vrcp.pop %v1286
    %v1288 = vmul.f32 1.0, %v1287
    %v1289 = vxor.u32 %v1280, 2147483648
    %v1290 = vmul.f32 %v1289, 1.442695
    %v1291 = vpow.pop %v1290
    %v1292 = vadd.f32 %v1291, 1.0
    %v1293 = vrcp.pop %v1292
    %v1294 = vmul.f32 1.0, %v1293
    %v1295 = vtanh.pop %v1281
    %v1296 = vxor.u32 %v1282, 2147483648
    %v1297 = vmul.f32 %v1296, 1.442695
    %v1298 = vpow.pop %v1297
    %v1299 = vadd.f32 %v1298, 1.0
    %v1300 = vrcp.pop %v1299
    %v1301 = vmul.f32 1.0, %v1300
    %v1302 = vmul.f32 %v1294, %v1134
    %v1303 = vmul.f32 %v1288, %v1295
    %v1304 = vadd.f32 %v1302, %v1303
    %v1305 = vtanh.pop %v1304
    %v1306 = vmul.f32 %v1301, %v1305
    %1307 = vmatprep.subr.mxu0 %v394
    %1308 = vmatpush1.msra.mxu0 %v393
    %1309 = vmatprep.subr.mxu0 %v398
    %1310 = vmatpush1.msra.mxu0 %v397
    %1311 = vmatprep.subr.mxu0 %v402
    %1312 = vmatpush1.msra.mxu0 %v401
    %1313 = vmatprep.subr.mxu0 %v406
    %1314 = vmatpush1.msra.mxu0 %v405
    %1315 = vmatprep.subr.mxu0 %v410
    %1316 = vmatpush1.msra.mxu0 %v409
    %1317 = vmatprep.subr.mxu0 %v414
    %1318 = vmatpush1.msra.mxu0 %v413
    %1319 = vmatprep.subr.mxu0 %v418
    %1320 = vmatpush1.msra.mxu0 %v417
    %1321 = vmatprep.subr.mxu0 %v422
    %1322 = vmatpush1.msra.mxu0 %v421
    %1323 = vmatprep.subr.mxu0 %v426
    %1324 = vmatpush1.msra.mxu0 %v425
    %1325 = vmatprep.subr.mxu0 %v430
    %1326 = vmatpush1.msra.mxu0 %v429
    %1327 = vmatprep.subr.mxu0 %v434
    %1328 = vmatpush1.msra.mxu0 %v433
    %1329 = vmatprep.subr.mxu0 %v438
    %1330 = vmatpush1.msra.mxu0 %v437
    %1331 = vmatprep.subr.mxu0 %v442
    %1332 = vmatpush1.msra.mxu0 %v441
    %1333 = vmatprep.subr.mxu0 %v446
    %1334 = vmatpush1.msra.mxu0 %v445
    %1335 = vmatprep.subr.mxu0 %v450
    %1336 = vmatpush1.msra.mxu0 %v449
    %1337 = vmatprep.subr.mxu0 %v454
    %1338 = vmatpush1.msra.mxu0 %v453
    %1339 = vmatprep.subr.mxu0 0.0
    %1340 = vmatpush1.msra.mxu0 0.0
    %1341 = vmatprep.subr.mxu0 0.0
    %1342 = vmatpush1.msra.mxu0 0.0
    %1343 = vmatprep.subr.mxu0 0.0
    %1344 = vmatpush1.msra.mxu0 0.0
    %1345 = vmatprep.subr.mxu0 0.0
    %1346 = vmatpush1.msra.mxu0 0.0
    %1347 = vmatprep.subr.mxu0 0.0
    %1348 = vmatpush1.msra.mxu0 0.0
    %1349 = vmatprep.subr.mxu0 0.0
    %1350 = vmatpush1.msra.mxu0 0.0
    %1351 = vmatprep.subr.mxu0 0.0
    %1352 = vmatpush1.msra.mxu0 0.0
    %1353 = vmatprep.subr.mxu0 0.0
    %1354 = vmatpush1.msra.mxu0 0.0
    %1355 = vmatprep.subr.mxu0 0.0
    %1356 = vmatpush1.msra.mxu0 0.0
    %1357 = vmatprep.subr.mxu0 0.0
    %1358 = vmatpush1.msra.mxu0 0.0
    %1359 = vmatprep.subr.mxu0 0.0
    %1360 = vmatpush1.msra.mxu0 0.0
    %1361 = vmatprep.subr.mxu0 0.0
    %1362 = vmatpush1.msra.mxu0 0.0
    %1363 = vmatprep.subr.mxu0 0.0
    %1364 = vmatpush1.msra.mxu0 0.0
    %1365 = vmatprep.subr.mxu0 0.0
    %1366 = vmatpush1.msra.mxu0 0.0
    %1367 = vmatprep.subr.mxu0 0.0
    %1368 = vmatpush1.msra.mxu0 0.0
    %1369 = vmatprep.subr.mxu0 0.0
    %1370 = vmatpush1.msra.mxu0 0.0
    %1371 = vmatprep.mubr.f32.mxu0 0.0
    %1372 = vmatmul.mubr.f32.gmra.mrb[0].mxu0 %v1306
    %v1373 = vpop.f32.mrb[0].mxu0
    %v1374 = vadd.f32 0.0, %v1373
    %v1375 = vpop.f32.mrb[0].mxu0
    %v1376 = vadd.f32 0.0, %v1375
    %1377 = vdwg.mxu0
    %1378 = vmatprep.subr.mxu0 %v396
    %1379 = vmatpush1.msra.mxu0 %v395
    %1380 = vmatprep.subr.mxu0 %v400
    %1381 = vmatpush1.msra.mxu0 %v399
    %1382 = vmatprep.subr.mxu0 %v404
    %1383 = vmatpush1.msra.mxu0 %v403
    %1384 = vmatprep.subr.mxu0 %v408
    %1385 = vmatpush1.msra.mxu0 %v407
    %1386 = vmatprep.subr.mxu0 %v412
    %1387 = vmatpush1.msra.mxu0 %v411
    %1388 = vmatprep.subr.mxu0 %v416
    %1389 = vmatpush1.msra.mxu0 %v415
    %1390 = vmatprep.subr.mxu0 %v420
    %1391 = vmatpush1.msra.mxu0 %v419
    %1392 = vmatprep.subr.mxu0 %v424
    %1393 = vmatpush1.msra.mxu0 %v423
    %1394 = vmatprep.subr.mxu0 %v428
    %1395 = vmatpush1.msra.mxu0 %v427
    %1396 = vmatprep.subr.mxu0 %v432
    %1397 = vmatpush1.msra.mxu0 %v431
    %1398 = vmatprep.subr.mxu0 %v436
    %1399 = vmatpush1.msra.mxu0 %v435
    %1400 = vmatprep.subr.mxu0 %v440
    %1401 = vmatpush1.msra.mxu0 %v439
    %1402 = vmatprep.subr.mxu0 %v444
    %1403 = vmatpush1.msra.mxu0 %v443
    %1404 = vmatprep.subr.mxu0 %v448
    %1405 = vmatpush1.msra.mxu0 %v447
    %1406 = vmatprep.subr.mxu0 %v452
    %1407 = vmatpush1.msra.mxu0 %v451
    %1408 = vmatprep.subr.mxu0 %v456
    %1409 = vmatpush1.msra.mxu0 %v455
    %1410 = vmatprep.subr.mxu0 0.0
    %1411 = vmatpush1.msra.mxu0 0.0
    %1412 = vmatprep.subr.mxu0 0.0
    %1413 = vmatpush1.msra.mxu0 0.0
    %1414 = vmatprep.subr.mxu0 0.0
    %1415 = vmatpush1.msra.mxu0 0.0
    %1416 = vmatprep.subr.mxu0 0.0
    %1417 = vmatpush1.msra.mxu0 0.0
    %1418 = vmatprep.subr.mxu0 0.0
    %1419 = vmatpush1.msra.mxu0 0.0
    %1420 = vmatprep.subr.mxu0 0.0
    %1421 = vmatpush1.msra.mxu0 0.0
    %1422 = vmatprep.subr.mxu0 0.0
    %1423 = vmatpush1.msra.mxu0 0.0
    %1424 = vmatprep.subr.mxu0 0.0
    %1425 = vmatpush1.msra.mxu0 0.0
    %1426 = vmatprep.subr.mxu0 0.0
    %1427 = vmatpush1.msra.mxu0 0.0
    %1428 = vmatprep.subr.mxu0 0.0
    %1429 = vmatpush1.msra.mxu0 0.0
    %1430 = vmatprep.subr.mxu0 0.0
    %1431 = vmatpush1.msra.mxu0 0.0
    %1432 = vmatprep.subr.mxu0 0.0
    %1433 = vmatpush1.msra.mxu0 0.0
    %1434 = vmatprep.subr.mxu0 0.0
    %1435 = vmatpush1.msra.mxu0 0.0
    %1436 = vmatprep.subr.mxu0 0.0
    %1437 = vmatpush1.msra.mxu0 0.0
    %1438 = vmatprep.subr.mxu0 0.0
    %1439 = vmatpush1.msra.mxu0 0.0
    %1440 = vmatprep.subr.mxu0 0.0
    %1441 = vmatpush1.msra.mxu0 0.0
    %1442 = vmatprep.mubr.f32.mxu0 0.0
    %1443 = vmatmul.mubr.f32.gmra.mrb[0].mxu0 %v1306
    %v1444 = vpop.f32.mrb[0].mxu0
    %v1445 = vadd.f32 0.0, %v1444
    %v1446 = vpop.f32.mrb[0].mxu0
    %v1447 = vadd.f32 0.0, %v1446
    %1448 = vdwg.mxu0
    %v1449 = vadd.f32 %v264, %v1374
    %v1450 = vadd.f32 %v266, %v1376
    %v1451 = vadd.f32 %v377, %v1445
    %v1452 = vadd.f32 %v379, %v1447
    %v1453 = vxor.u32 %v1449, 2147483648
    %v1454 = vmul.f32 %v1453, 1.442695
    %v1455 = vpow.pop %v1454
    %v1456 = vadd.f32 %v1455, 1.0
    %v1457 = vrcp.pop %v1456
    %v1458 = vmul.f32 1.0, %v1457
    %v1459 = vxor.u32 %v1450, 2147483648
    %v1460 = vmul.f32 %v1459, 1.442695
    %v1461 = vpow.pop %v1460
    %v1462 = vadd.f32 %v1461, 1.0
    %v1463 = vrcp.pop %v1462
    %v1464 = vmul.f32 1.0, %v1463
    %v1465 = vtanh.pop %v1451
    %v1466 = vxor.u32 %v1452, 2147483648
    %v1467 = vmul.f32 %v1466, 1.442695
    %v1468 = vpow.pop %v1467
    %v1469 = vadd.f32 %v1468, 1.0
    %v1470 = vrcp.pop %v1469
    %v1471 = vmul.f32 1.0, %v1470
    %v1472 = vmul.f32 %v1464, %v1304
    %v1473 = vmul.f32 %v1458, %v1465
    %v1474 = vadd.f32 %v1472, %v1473
    %v1475 = vtanh.pop %v1474
    %v1476 = vmul.f32 %v1471, %v1475
    %1477 = vmatprep.subr.mxu0 %v394
    %1478 = vmatpush1.msra.mxu0 %v393
    %1479 = vmatprep.subr.mxu0 %v398
    %1480 = vmatpush1.msra.mxu0 %v397
    %1481 = vmatprep.subr.mxu0 %v402
    %1482 = vmatpush1.msra.mxu0 %v401
    %1483 = vmatprep.subr.mxu0 %v406
    %1484 = vmatpush1.msra.mxu0 %v405
    %1485 = vmatprep.subr.mxu0 %v410
    %1486 = vmatpush1.msra.mxu0 %v409
    %1487 = vmatprep.subr.mxu0 %v414
    %1488 = vmatpush1.msra.mxu0 %v413
    %1489 = vmatprep.subr.mxu0 %v418
    %1490 = vmatpush1.msra.mxu0 %v417
    %1491 = vmatprep.subr.mxu0 %v422
    %1492 = vmatpush1.msra.mxu0 %v421
    %1493 = vmatprep.subr.mxu0 %v426
    %1494 = vmatpush1.msra.mxu0 %v425
    %1495 = vmatprep.subr.mxu0 %v430
    %1496 = vmatpush1.msra.mxu0 %v429
    %1497 = vmatprep.subr.mxu0 %v434
    %1498 = vmatpush1.msra.mxu0 %v433
    %1499 = vmatprep.subr.mxu0 %v438
    %1500 = vmatpush1.msra.mxu0 %v437
    %1501 = vmatprep.subr.mxu0 %v442
    %1502 = vmatpush1.msra.mxu0 %v441
    %1503 = vmatprep.subr.mxu0 %v446
    %1504 = vmatpush1.msra.mxu0 %v445
    %1505 = vmatprep.subr.mxu0 %v450
    %1506 = vmatpush1.msra.mxu0 %v449
    %1507 = vmatprep.subr.mxu0 %v454
    %1508 = vmatpush1.msra.mxu0 %v453
    %1509 = vmatprep.subr.mxu0 0.0
    %1510 = vmatpush1.msra.mxu0 0.0
    %1511 = vmatprep.subr.mxu0 0.0
    %1512 = vmatpush1.msra.mxu0 0.0
    %1513 = vmatprep.subr.mxu0 0.0
    %1514 = vmatpush1.msra.mxu0 0.0
    %1515 = vmatprep.subr.mxu0 0.0
    %1516 = vmatpush1.msra.mxu0 0.0
    %1517 = vmatprep.subr.mxu0 0.0
    %1518 = vmatpush1.msra.mxu0 0.0
    %1519 = vmatprep.subr.mxu0 0.0
    %1520 = vmatpush1.msra.mxu0 0.0
    %1521 = vmatprep.subr.mxu0 0.0
    %1522 = vmatpush1.msra.mxu0 0.0
    %1523 = vmatprep.subr.mxu0 0.0
    %1524 = vmatpush1.msra.mxu0 0.0
    %1525 = vmatprep.subr.mxu0 0.0
    %1526 = vmatpush1.msra.mxu0 0.0
    %1527 = vmatprep.subr.mxu0 0.0
    %1528 = vmatpush1.msra.mxu0 0.0
    %1529 = vmatprep.subr.mxu0 0.0
    %1530 = vmatpush1.msra.mxu0 0.0
    %1531 = vmatprep.subr.mxu0 0.0
    %1532 = vmatpush1.msra.mxu0 0.0
    %1533 = vmatprep.subr.mxu0 0.0
    %1534 = vmatpush1.msra.mxu0 0.0
    %1535 = vmatprep.subr.mxu0 0.0
    %1536 = vmatpush1.msra.mxu0 0.0
    %1537 = vmatprep.subr.mxu0 0.0
    %1538 = vmatpush1.msra.mxu0 0.0
    %1539 = vmatprep.subr.mxu0 0.0
    %1540 = vmatpush1.msra.mxu0 0.0
    %1541 = vmatprep.mubr.f32.mxu0 0.0
    %1542 = vmatmul.mubr.f32.gmra.mrb[0].mxu0 %v1476
    %v1543 = vpop.f32.mrb[0].mxu0
    %v1544 = vadd.f32 0.0, %v1543
    %v1545 = vpop.f32.mrb[0].mxu0
    %v1546 = vadd.f32 0.0, %v1545
    %1547 = vdwg.mxu0
    %1548 = vmatprep.subr.mxu0 %v396
    %1549 = vmatpush1.msra.mxu0 %v395
    %1550 = vmatprep.subr.mxu0 %v400
    %1551 = vmatpush1.msra.mxu0 %v399
    %1552 = vmatprep.subr.mxu0 %v404
    %1553 = vmatpush1.msra.mxu0 %v403
    %1554 = vmatprep.subr.mxu0 %v408
    %1555 = vmatpush1.msra.mxu0 %v407
    %1556 = vmatprep.subr.mxu0 %v412
    %1557 = vmatpush1.msra.mxu0 %v411
    %1558 = vmatprep.subr.mxu0 %v416
    %1559 = vmatpush1.msra.mxu0 %v415
    %1560 = vmatprep.subr.mxu0 %v420
    %1561 = vmatpush1.msra.mxu0 %v419
    %1562 = vmatprep.subr.mxu0 %v424
    %1563 = vmatpush1.msra.mxu0 %v423
    %1564 = vmatprep.subr.mxu0 %v428
    %1565 = vmatpush1.msra.mxu0 %v427
    %1566 = vmatprep.subr.mxu0 %v432
    %1567 = vmatpush1.msra.mxu0 %v431
    %1568 = vmatprep.subr.mxu0 %v436
    %1569 = vmatpush1.msra.mxu0 %v435
    %1570 = vmatprep.subr.mxu0 %v440
    %1571 = vmatpush1.msra.mxu0 %v439
    %1572 = vmatprep.subr.mxu0 %v444
    %1573 = vmatpush1.msra.mxu0 %v443
    %1574 = vmatprep.subr.mxu0 %v448
    %1575 = vmatpush1.msra.mxu0 %v447
    %1576 = vmatprep.subr.mxu0 %v452
    %1577 = vmatpush1.msra.mxu0 %v451
    %1578 = vmatprep.subr.mxu0 %v456
    %1579 = vmatpush1.msra.mxu0 %v455
    %1580 = vmatprep.subr.mxu0 0.0
    %1581 = vmatpush1.msra.mxu0 0.0
    %1582 = vmatprep.subr.mxu0 0.0
    %1583 = vmatpush1.msra.mxu0 0.0
    %1584 = vmatprep.subr.mxu0 0.0
    %1585 = vmatpush1.msra.mxu0 0.0
    %1586 = vmatprep.subr.mxu0 0.0
    %1587 = vmatpush1.msra.mxu0 0.0
    %1588 = vmatprep.subr.mxu0 0.0
    %1589 = vmatpush1.msra.mxu0 0.0
    %1590 = vmatprep.subr.mxu0 0.0
    %1591 = vmatpush1.msra.mxu0 0.0
    %1592 = vmatprep.subr.mxu0 0.0
    %1593 = vmatpush1.msra.mxu0 0.0
    %1594 = vmatprep.subr.mxu0 0.0
    %1595 = vmatpush1.msra.mxu0 0.0
    %1596 = vmatprep.subr.mxu0 0.0
    %1597 = vmatpush1.msra.mxu0 0.0
    %1598 = vmatprep.subr.mxu0 0.0
    %1599 = vmatpush1.msra.mxu0 0.0
    %1600 = vmatprep.subr.mxu0 0.0
    %1601 = vmatpush1.msra.mxu0 0.0
    %1602 = vmatprep.subr.mxu0 0.0
    %1603 = vmatpush1.msra.mxu0 0.0
    %1604 = vmatprep.subr.mxu0 0.0
    %1605 = vmatpush1.msra.mxu0 0.0
    %1606 = vmatprep.subr.mxu0 0.0
    %1607 = vmatpush1.msra.mxu0 0.0
    %1608 = vmatprep.subr.mxu0 0.0
    %1609 = vmatpush1.msra.mxu0 0.0
    %1610 = vmatprep.subr.mxu0 0.0
    %1611 = vmatpush1.msra.mxu0 0.0
    %1612 = vmatprep.mubr.f32.mxu0 0.0
    %1613 = vmatmul.mubr.f32.gmra.mrb[0].mxu0 %v1476
    %v1614 = vpop.f32.mrb[0].mxu0
    %v1615 = vadd.f32 0.0, %v1614
    %v1616 = vpop.f32.mrb[0].mxu0
    %v1617 = vadd.f32 0.0, %v1616
    %1618 = vdwg.mxu0
    %v1619 = vadd.f32 %v270, %v1544
    %v1620 = vadd.f32 %v272, %v1546
    %v1621 = vadd.f32 %v383, %v1615
    %v1622 = vadd.f32 %v385, %v1617
    %v1623 = vxor.u32 %v1619, 2147483648
    %v1624 = vmul.f32 %v1623, 1.442695
    %v1625 = vpow.pop %v1624
    %v1626 = vadd.f32 %v1625, 1.0
    %v1627 = vrcp.pop %v1626
    %v1628 = vmul.f32 1.0, %v1627
    %v1629 = vxor.u32 %v1620, 2147483648
    %v1630 = vmul.f32 %v1629, 1.442695
    %v1631 = vpow.pop %v1630
    %v1632 = vadd.f32 %v1631, 1.0
    %v1633 = vrcp.pop %v1632
    %v1634 = vmul.f32 1.0, %v1633
    %v1635 = vtanh.pop %v1621
    %v1636 = vxor.u32 %v1622, 2147483648
    %v1637 = vmul.f32 %v1636, 1.442695
    %v1638 = vpow.pop %v1637
    %v1639 = vadd.f32 %v1638, 1.0
    %v1640 = vrcp.pop %v1639
    %v1641 = vmul.f32 1.0, %v1640
    %v1642 = vmul.f32 %v1634, %v1474
    %v1643 = vmul.f32 %v1628, %v1635
    %v1644 = vadd.f32 %v1642, %v1643
    %v1645 = vtanh.pop %v1644
    %v1646 = vmul.f32 %v1641, %v1645
    %1647 = vmatprep.subr.mxu0 %v394
    %1648 = vmatpush1.msra.mxu0 %v393
    %1649 = vmatprep.subr.mxu0 %v398
    %1650 = vmatpush1.msra.mxu0 %v397
    %1651 = vmatprep.subr.mxu0 %v402
    %1652 = vmatpush1.msra.mxu0 %v401
    %1653 = vmatprep.subr.mxu0 %v406
    %1654 = vmatpush1.msra.mxu0 %v405
    %1655 = vmatprep.subr.mxu0 %v410
    %1656 = vmatpush1.msra.mxu0 %v409
    %1657 = vmatprep.subr.mxu0 %v414
    %1658 = vmatpush1.msra.mxu0 %v413
    %1659 = vmatprep.subr.mxu0 %v418
    %1660 = vmatpush1.msra.mxu0 %v417
    %1661 = vmatprep.subr.mxu0 %v422
    %1662 = vmatpush1.msra.mxu0 %v421
    %1663 = vmatprep.subr.mxu0 %v426
    %1664 = vmatpush1.msra.mxu0 %v425
    %1665 = vmatprep.subr.mxu0 %v430
    %1666 = vmatpush1.msra.mxu0 %v429
    %1667 = vmatprep.subr.mxu0 %v434
    %1668 = vmatpush1.msra.mxu0 %v433
    %1669 = vmatprep.subr.mxu0 %v438
    %1670 = vmatpush1.msra.mxu0 %v437
    %1671 = vmatprep.subr.mxu0 %v442
    %1672 = vmatpush1.msra.mxu0 %v441
    %1673 = vmatprep.subr.mxu0 %v446
    %1674 = vmatpush1.msra.mxu0 %v445
    %1675 = vmatprep.subr.mxu0 %v450
    %1676 = vmatpush1.msra.mxu0 %v449
    %1677 = vmatprep.subr.mxu0 %v454
    %1678 = vmatpush1.msra.mxu0 %v453
    %1679 = vmatprep.subr.mxu0 0.0
    %1680 = vmatpush1.msra.mxu0 0.0
    %1681 = vmatprep.subr.mxu0 0.0
    %1682 = vmatpush1.msra.mxu0 0.0
    %1683 = vmatprep.subr.mxu0 0.0
    %1684 = vmatpush1.msra.mxu0 0.0
    %1685 = vmatprep.subr.mxu0 0.0
    %1686 = vmatpush1.msra.mxu0 0.0
    %1687 = vmatprep.subr.mxu0 0.0
    %1688 = vmatpush1.msra.mxu0 0.0
    %1689 = vmatprep.subr.mxu0 0.0
    %1690 = vmatpush1.msra.mxu0 0.0
    %1691 = vmatprep.subr.mxu0 0.0
    %1692 = vmatpush1.msra.mxu0 0.0
    %1693 = vmatprep.subr.mxu0 0.0
    %1694 = vmatpush1.msra.mxu0 0.0
    %1695 = vmatprep.subr.mxu0 0.0
    %1696 = vmatpush1.msra.mxu0 0.0
    %1697 = vmatprep.subr.mxu0 0.0
    %1698 = vmatpush1.msra.mxu0 0.0
    %1699 = vmatprep.subr.mxu0 0.0
    %1700 = vmatpush1.msra.mxu0 0.0
    %1701 = vmatprep.subr.mxu0 0.0
    %1702 = vmatpush1.msra.mxu0 0.0
    %1703 = vmatprep.subr.mxu0 0.0
    %1704 = vmatpush1.msra.mxu0 0.0
    %1705 = vmatprep.subr.mxu0 0.0
    %1706 = vmatpush1.msra.mxu0 0.0
    %1707 = vmatprep.subr.mxu0 0.0
    %1708 = vmatpush1.msra.mxu0 0.0
    %1709 = vmatprep.subr.mxu0 0.0
    %1710 = vmatpush1.msra.mxu0 0.0
    %1711 = vmatprep.mubr.f32.mxu0 0.0
    %1712 = vmatmul.mubr.f32.gmra.mrb[0].mxu0 %v1646
    %v1713 = vpop.f32.mrb[0].mxu0
    %v1714 = vadd.f32 0.0, %v1713
    %v1715 = vpop.f32.mrb[0].mxu0
    %v1716 = vadd.f32 0.0, %v1715
    %1717 = vdwg.mxu0
    %1718 = vmatprep.subr.mxu0 %v396
    %1719 = vmatpush1.msra.mxu0 %v395
    %1720 = vmatprep.subr.mxu0 %v400
    %1721 = vmatpush1.msra.mxu0 %v399
    %1722 = vmatprep.subr.mxu0 %v404
    %1723 = vmatpush1.msra.mxu0 %v403
    %1724 = vmatprep.subr.mxu0 %v408
    %1725 = vmatpush1.msra.mxu0 %v407
    %1726 = vmatprep.subr.mxu0 %v412
    %1727 = vmatpush1.msra.mxu0 %v411
    %1728 = vmatprep.subr.mxu0 %v416
    %1729 = vmatpush1.msra.mxu0 %v415
    %1730 = vmatprep.subr.mxu0 %v420
    %1731 = vmatpush1.msra.mxu0 %v419
    %1732 = vmatprep.subr.mxu0 %v424
    %1733 = vmatpush1.msra.mxu0 %v423
    %1734 = vmatprep.subr.mxu0 %v428
    %1735 = vmatpush1.msra.mxu0 %v427
    %1736 = vmatprep.subr.mxu0 %v432
    %1737 = vmatpush1.msra.mxu0 %v431
    %1738 = vmatprep.subr.mxu0 %v436
    %1739 = vmatpush1.msra.mxu0 %v435
    %1740 = vmatprep.subr.mxu0 %v440
    %1741 = vmatpush1.msra.mxu0 %v439
    %1742 = vmatprep.subr.mxu0 %v444
    %1743 = vmatpush1.msra.mxu0 %v443
    %1744 = vmatprep.subr.mxu0 %v448
    %1745 = vmatpush1.msra.mxu0 %v447
    %1746 = vmatprep.subr.mxu0 %v452
    %1747 = vmatpush1.msra.mxu0 %v451
    %1748 = vmatprep.subr.mxu0 %v456
    %1749 = vmatpush1.msra.mxu0 %v455
    %1750 = vmatprep.subr.mxu0 0.0
    %1751 = vmatpush1.msra.mxu0 0.0
    %1752 = vmatprep.subr.mxu0 0.0
    %1753 = vmatpush1.msra.mxu0 0.0
    %1754 = vmatprep.subr.mxu0 0.0
    %1755 = vmatpush1.msra.mxu0 0.0
    %1756 = vmatprep.subr.mxu0 0.0
    %1757 = vmatpush1.msra.mxu0 0.0
    %1758 = vmatprep.subr.mxu0 0.0
    %1759 = vmatpush1.msra.mxu0 0.0
    %1760 = vmatprep.subr.mxu0 0.0
    %1761 = vmatpush1.msra.mxu0 0.0
    %1762 = vmatprep.subr.mxu0 0.0
    %1763 = vmatpush1.msra.mxu0 0.0
    %1764 = vmatprep.subr.mxu0 0.0
    %1765 = vmatpush1.msra.mxu0 0.0
    %1766 = vmatprep.subr.mxu0 0.0
    %1767 = vmatpush1.msra.mxu0 0.0
    %1768 = vmatprep.subr.mxu0 0.0
    %1769 = vmatpush1.msra.mxu0 0.0
    %1770 = vmatprep.subr.mxu0 0.0
    %1771 = vmatpush1.msra.mxu0 0.0
    %1772 = vmatprep.subr.mxu0 0.0
    %1773 = vmatpush1.msra.mxu0 0.0
    %1774 = vmatprep.subr.mxu0 0.0
    %1775 = vmatpush1.msra.mxu0 0.0
    %1776 = vmatprep.subr.mxu0 0.0
    %1777 = vmatpush1.msra.mxu0 0.0
    %1778 = vmatprep.subr.mxu0 0.0
    %1779 = vmatpush1.msra.mxu0 0.0
    %1780 = vmatprep.subr.mxu0 0.0
    %1781 = vmatpush1.msra.mxu0 0.0
    %1782 = vmatprep.mubr.f32.mxu0 0.0
    %1783 = vmatmul.mubr.f32.gmra.mrb[0].mxu0 %v1646
    %v1784 = vpop.f32.mrb[0].mxu0
    %v1785 = vadd.f32 0.0, %v1784
    %v1786 = vpop.f32.mrb[0].mxu0
    %v1787 = vadd.f32 0.0, %v1786
    %1788 = vdwg.mxu0
    %v1789 = vadd.f32 %v276, %v1714
    %v1790 = vadd.f32 %v278, %v1716
    %v1791 = vadd.f32 %v389, %v1785
    %v1792 = vadd.f32 %v391, %v1787
    %v1793 = vxor.u32 %v1789, 2147483648
    %v1794 = vmul.f32 %v1793, 1.442695
    %v1795 = vpow.pop %v1794
    %v1796 = vadd.f32 %v1795, 1.0
    %v1797 = vrcp.pop %v1796
    %v1798 = vmul.f32 1.0, %v1797
    %v1799 = vxor.u32 %v1790, 2147483648
    %v1800 = vmul.f32 %v1799, 1.442695
    %v1801 = vpow.pop %v1800
    %v1802 = vadd.f32 %v1801, 1.0
    %v1803 = vrcp.pop %v1802
    %v1804 = vmul.f32 1.0, %v1803
    %v1805 = vtanh.pop %v1791
    %v1806 = vxor.u32 %v1792, 2147483648
    %v1807 = vmul.f32 %v1806, 1.442695
    %v1808 = vpow.pop %v1807
    %v1809 = vadd.f32 %v1808, 1.0
    %v1810 = vrcp.pop %v1809
    %v1811 = vmul.f32 1.0, %v1810
    %v1812 = vmul.f32 %v1804, %v1644
    %v1813 = vmul.f32 %v1798, %v1805
    %v1814 = vadd.f32 %v1812, %v1813
    %v1815 = vtanh.pop %v1814
    %v1816 = vmul.f32 %v1811, %v1815
    %v1817 = vld [vmem:[%s1] sm:$0xff]
    %v1818 = vld [vmem:[%s1 + $0x8] sm:$0xff]
    %v1819 = vld [vmem:[%s1 + $0x10] sm:$0xff]
    %v1820 = vld [vmem:[%s1 + $0x18] sm:$0xff]
    %v1821 = vld [vmem:[%s1 + $0x20] sm:$0xff]
    %v1822 = vld [vmem:[%s1 + $0x28] sm:$0xff]
    %v1823 = vld [vmem:[%s1 + $0x30] sm:$0xff]
    %v1824 = vld [vmem:[%s1 + $0x38] sm:$0xff]
    %v1825 = vld [vmem:[%s6] sm:$0xff]
    %v1826 = vld [vmem:[%s6 + $0x8] sm:$0xff]
    %v1827 = vld [vmem:[%s8] sm:$0xf]
    %v1829 = vlaneseq
    %v1830 = vshrl.u32 %v1829, 7
    %v1831 = vsub.s32 0, %v1830
    %v1832 = vrot.slane %v1827, %v1831
    %v1833 = vlaneseq
    %v1834 = vshrl.u32 %v1833, 7
    %v1835 = vsub.s32 1, %v1834
    %v1836 = vrot.slane %v1827, %v1835
    %v1837 = vlaneseq
    %v1838 = vshrl.u32 %v1837, 7
    %v1839 = vsub.s32 2, %v1838
    %v1840 = vrot.slane %v1827, %v1839
    %v1841 = vlaneseq
    %v1842 = vshrl.u32 %v1841, 7
    %v1843 = vsub.s32 3, %v1842
    %v1844 = vrot.slane %v1827, %v1843
    %v1851 = vcombine.high %v1825, %v1825
    %v1852 = vcombine.high %v1826, %v1826
    %v1854 = vsel %vm133, %v1817, 0
    %v1857 = vsel %vm133, %v1818, 0
    %v1860 = vsel %vm133, %v1819, 0
    %v1863 = vsel %vm133, %v1820, 0
    %v1866 = vsel %vm133, %v1821, 0
    %v1869 = vsel %vm133, %v1822, 0
    %v1872 = vsel %vm133, %v1823, 0
    %v1875 = vsel %vm133, %v1824, 0
    %v1877 = vsel %vm158, %v1825, 0
    %v1879 = vsel %vm158, %v1851, 0
    %v1881 = vsel %vm158, %v1826, 0
    %v1883 = vsel %vm158, %v1852, 0
    %1885 = vmatprep.subr.mxu0 %v1879
    %1886 = vmatpush1.msra.mxu0 %v1877
    %1887 = vmatprep.subr.mxu0 0.0
    %1888 = vmatpush1.msra.mxu0 0.0
    %1889 = vmatprep.subr.mxu0 0.0
    %1890 = vmatpush1.msra.mxu0 0.0
    %1891 = vmatprep.subr.mxu0 0.0
    %1892 = vmatpush1.msra.mxu0 0.0
    %1893 = vmatprep.subr.mxu0 0.0
    %1894 = vmatpush1.msra.mxu0 0.0
    %1895 = vmatprep.subr.mxu0 0.0
    %1896 = vmatpush1.msra.mxu0 0.0
    %1897 = vmatprep.subr.mxu0 0.0
    %1898 = vmatpush1.msra.mxu0 0.0
    %1899 = vmatprep.subr.mxu0 0.0
    %1900 = vmatpush1.msra.mxu0 0.0
    %1901 = vmatprep.subr.mxu0 0.0
    %1902 = vmatpush1.msra.mxu0 0.0
    %1903 = vmatprep.subr.mxu0 0.0
    %1904 = vmatpush1.msra.mxu0 0.0
    %1905 = vmatprep.subr.mxu0 0.0
    %1906 = vmatpush1.msra.mxu0 0.0
    %1907 = vmatprep.subr.mxu0 0.0
    %1908 = vmatpush1.msra.mxu0 0.0
    %1909 = vmatprep.subr.mxu0 0.0
    %1910 = vmatpush1.msra.mxu0 0.0
    %1911 = vmatprep.subr.mxu0 0.0
    %1912 = vmatpush1.msra.mxu0 0.0
    %1913 = vmatprep.subr.mxu0 0.0
    %1914 = vmatpush1.msra.mxu0 0.0
    %1915 = vmatprep.subr.mxu0 0.0
    %1916 = vmatpush1.msra.mxu0 0.0
    %1917 = vmatprep.subr.mxu0 0.0
    %1918 = vmatpush1.msra.mxu0 0.0
    %1919 = vmatprep.subr.mxu0 0.0
    %1920 = vmatpush1.msra.mxu0 0.0
    %1921 = vmatprep.subr.mxu0 0.0
    %1922 = vmatpush1.msra.mxu0 0.0
    %1923 = vmatprep.subr.mxu0 0.0
    %1924 = vmatpush1.msra.mxu0 0.0
    %1925 = vmatprep.subr.mxu0 0.0
    %1926 = vmatpush1.msra.mxu0 0.0
    %1927 = vmatprep.subr.mxu0 0.0
    %1928 = vmatpush1.msra.mxu0 0.0
    %1929 = vmatprep.subr.mxu0 0.0
    %1930 = vmatpush1.msra.mxu0 0.0
    %1931 = vmatprep.subr.mxu0 0.0
    %1932 = vmatpush1.msra.mxu0 0.0
    %1933 = vmatprep.subr.mxu0 0.0
    %1934 = vmatpush1.msra.mxu0 0.0
    %1935 = vmatprep.subr.mxu0 0.0
    %1936 = vmatpush1.msra.mxu0 0.0
    %1937 = vmatprep.subr.mxu0 0.0
    %1938 = vmatpush1.msra.mxu0 0.0
    %1939 = vmatprep.subr.mxu0 0.0
    %1940 = vmatpush1.msra.mxu0 0.0
    %1941 = vmatprep.subr.mxu0 0.0
    %1942 = vmatpush1.msra.mxu0 0.0
    %1943 = vmatprep.subr.mxu0 0.0
    %1944 = vmatpush1.msra.mxu0 0.0
    %1945 = vmatprep.subr.mxu0 0.0
    %1946 = vmatpush1.msra.mxu0 0.0
    %1947 = vmatprep.subr.mxu0 0.0
    %1948 = vmatpush1.msra.mxu0 0.0
    %1949 = vmatprep.mubr.f32.mxu0 0.0
    %1950 = vmatmul.mubr.f32.gmra.mrb[0].mxu0 %v1854
    %v1951 = vpop.f32.mrb[0].mxu0
    %v1952 = vadd.f32 %v1832, %v1951
    %v1953 = vpop.f32.mrb[0].mxu0
    %v1954 = vadd.f32 %v1836, %v1953
    %1955 = vmatprep.mubr.f32.mxu0 0.0
    %1956 = vmatmul.mubr.f32.gmra.mrb[0].mxu0 %v1857
    %v1957 = vpop.f32.mrb[0].mxu0
    %v1958 = vadd.f32 %v1832, %v1957
    %v1959 = vpop.f32.mrb[0].mxu0
    %v1960 = vadd.f32 %v1836, %v1959
    %1961 = vmatprep.mubr.f32.mxu0 0.0
    %1962 = vmatmul.mubr.f32.gmra.mrb[0].mxu0 %v1860
    %v1963 = vpop.f32.mrb[0].mxu0
    %v1964 = vadd.f32 %v1832, %v1963
    %v1965 = vpop.f32.mrb[0].mxu0
    %v1966 = vadd.f32 %v1836, %v1965
    %1967 = vmatprep.mubr.f32.mxu0 0.0
    %1968 = vmatmul.mubr.f32.gmra.mrb[0].mxu0 %v1863
    %v1969 = vpop.f32.mrb[0].mxu0
    %v1970 = vadd.f32 %v1832, %v1969
    %v1971 = vpop.f32.mrb[0].mxu0
    %v1972 = vadd.f32 %v1836, %v1971
    %1973 = vmatprep.mubr.f32.mxu0 0.0
    %1974 = vmatmul.mubr.f32.gmra.mrb[0].mxu0 %v1866
    %v1975 = vpop.f32.mrb[0].mxu0
    %v1976 = vadd.f32 %v1832, %v1975
    %v1977 = vpop.f32.mrb[0].mxu0
    %v1978 = vadd.f32 %v1836, %v1977
    %1979 = vmatprep.mubr.f32.mxu0 0.0
    %1980 = vmatmul.mubr.f32.gmra.mrb[0].mxu0 %v1869
    %v1981 = vpop.f32.mrb[0].mxu0
    %v1982 = vadd.f32 %v1832, %v1981
    %v1983 = vpop.f32.mrb[0].mxu0
    %v1984 = vadd.f32 %v1836, %v1983
    %1985 = vmatprep.mubr.f32.mxu0 0.0
    %1986 = vmatmul.mubr.f32.gmra.mrb[0].mxu0 %v1872
    %v1987 = vpop.f32.mrb[0].mxu0
    %v1988 = vadd.f32 %v1832, %v1987
    %v1989 = vpop.f32.mrb[0].mxu0
    %v1990 = vadd.f32 %v1836, %v1989
    %1991 = vmatprep.mubr.f32.mxu0 0.0
    %1992 = vmatmul.mubr.f32.gmra.mrb[0].mxu0 %v1875
    %v1993 = vpop.f32.mrb[0].mxu0
    %v1994 = vadd.f32 %v1832, %v1993
    %v1995 = vpop.f32.mrb[0].mxu0
    %v1996 = vadd.f32 %v1836, %v1995
    %1997 = vdwg.mxu0
    %1998 = vmatprep.subr.mxu0 %v1883
    %1999 = vmatpush1.msra.mxu0 %v1881
    %2000 = vmatprep.subr.mxu0 0.0
    %2001 = vmatpush1.msra.mxu0 0.0
    %2002 = vmatprep.subr.mxu0 0.0
    %2003 = vmatpush1.msra.mxu0 0.0
    %2004 = vmatprep.subr.mxu0 0.0
    %2005 = vmatpush1.msra.mxu0 0.0
    %2006 = vmatprep.subr.mxu0 0.0
    %2007 = vmatpush1.msra.mxu0 0.0
    %2008 = vmatprep.subr.mxu0 0.0
    %2009 = vmatpush1.msra.mxu0 0.0
    %2010 = vmatprep.subr.mxu0 0.0
    %2011 = vmatpush1.msra.mxu0 0.0
    %2012 = vmatprep.subr.mxu0 0.0
    %2013 = vmatpush1.msra.mxu0 0.0
    %2014 = vmatprep.subr.mxu0 0.0
    %2015 = vmatpush1.msra.mxu0 0.0
    %2016 = vmatprep.subr.mxu0 0.0
    %2017 = vmatpush1.msra.mxu0 0.0
    %2018 = vmatprep.subr.mxu0 0.0
    %2019 = vmatpush1.msra.mxu0 0.0
    %2020 = vmatprep.subr.mxu0 0.0
    %2021 = vmatpush1.msra.mxu0 0.0
    %2022 = vmatprep.subr.mxu0 0.0
    %2023 = vmatpush1.msra.mxu0 0.0
    %2024 = vmatprep.subr.mxu0 0.0
    %2025 = vmatpush1.msra.mxu0 0.0
    %2026 = vmatprep.subr.mxu0 0.0
    %2027 = vmatpush1.msra.mxu0 0.0
    %2028 = vmatprep.subr.mxu0 0.0
    %2029 = vmatpush1.msra.mxu0 0.0
    %2030 = vmatprep.subr.mxu0 0.0
    %2031 = vmatpush1.msra.mxu0 0.0
    %2032 = vmatprep.subr.mxu0 0.0
    %2033 = vmatpush1.msra.mxu0 0.0
    %2034 = vmatprep.subr.mxu0 0.0
    %2035 = vmatpush1.msra.mxu0 0.0
    %2036 = vmatprep.subr.mxu0 0.0
    %2037 = vmatpush1.msra.mxu0 0.0
    %2038 = vmatprep.subr.mxu0 0.0
    %2039 = vmatpush1.msra.mxu0 0.0
    %2040 = vmatprep.subr.mxu0 0.0
    %2041 = vmatpush1.msra.mxu0 0.0
    %2042 = vmatprep.subr.mxu0 0.0
    %2043 = vmatpush1.msra.mxu0 0.0
    %2044 = vmatprep.subr.mxu0 0.0
    %2045 = vmatpush1.msra.mxu0 0.0
    %2046 = vmatprep.subr.mxu0 0.0
    %2047 = vmatpush1.msra.mxu0 0.0
    %2048 = vmatprep.subr.mxu0 0.0
    %2049 = vmatpush1.msra.mxu0 0.0
    %2050 = vmatprep.subr.mxu0 0.0
    %2051 = vmatpush1.msra.mxu0 0.0
    %2052 = vmatprep.subr.mxu0 0.0
    %2053 = vmatpush1.msra.mxu0 0.0
    %2054 = vmatprep.subr.mxu0 0.0
    %2055 = vmatpush1.msra.mxu0 0.0
    %2056 = vmatprep.subr.mxu0 0.0
    %2057 = vmatpush1.msra.mxu0 0.0
    %2058 = vmatprep.subr.mxu0 0.0
    %2059 = vmatpush1.msra.mxu0 0.0
    %2060 = vmatprep.subr.mxu0 0.0
    %2061 = vmatpush1.msra.mxu0 0.0
    %2062 = vmatprep.mubr.f32.mxu0 0.0
    %2063 = vmatmul.mubr.f32.gmra.mrb[0].mxu0 %v1854
    %v2064 = vpop.f32.mrb[0].mxu0
    %v2065 = vadd.f32 %v1840, %v2064
    %v2066 = vpop.f32.mrb[0].mxu0
    %v2067 = vadd.f32 %v1844, %v2066
    %2068 = vmatprep.mubr.f32.mxu0 0.0
    %2069 = vmatmul.mubr.f32.gmra.mrb[0].mxu0 %v1857
    %v2070 = vpop.f32.mrb[0].mxu0
    %v2071 = vadd.f32 %v1840, %v2070
    %v2072 = vpop.f32.mrb[0].mxu0
    %v2073 = vadd.f32 %v1844, %v2072
    %2074 = vmatprep.mubr.f32.mxu0 0.0
    %2075 = vmatmul.mubr.f32.gmra.mrb[0].mxu0 %v1860
    %v2076 = vpop.f32.mrb[0].mxu0
    %v2077 = vadd.f32 %v1840, %v2076
    %v2078 = vpop.f32.mrb[0].mxu0
    %v2079 = vadd.f32 %v1844, %v2078
    %2080 = vmatprep.mubr.f32.mxu0 0.0
    %2081 = vmatmul.mubr.f32.gmra.mrb[0].mxu0 %v1863
    %v2082 = vpop.f32.mrb[0].mxu0
    %v2083 = vadd.f32 %v1840, %v2082
    %v2084 = vpop.f32.mrb[0].mxu0
    %v2085 = vadd.f32 %v1844, %v2084
    %2086 = vmatprep.mubr.f32.mxu0 0.0
    %2087 = vmatmul.mubr.f32.gmra.mrb[0].mxu0 %v1866
    %v2088 = vpop.f32.mrb[0].mxu0
    %v2089 = vadd.f32 %v1840, %v2088
    %v2090 = vpop.f32.mrb[0].mxu0
    %v2091 = vadd.f32 %v1844, %v2090
    %2092 = vmatprep.mubr.f32.mxu0 0.0
    %2093 = vmatmul.mubr.f32.gmra.mrb[0].mxu0 %v1869
    %v2094 = vpop.f32.mrb[0].mxu0
    %v2095 = vadd.f32 %v1840, %v2094
    %v2096 = vpop.f32.mrb[0].mxu0
    %v2097 = vadd.f32 %v1844, %v2096
    %2098 = vmatprep.mubr.f32.mxu0 0.0
    %2099 = vmatmul.mubr.f32.gmra.mrb[0].mxu0 %v1872
    %v2100 = vpop.f32.mrb[0].mxu0
    %v2101 = vadd.f32 %v1840, %v2100
    %v2102 = vpop.f32.mrb[0].mxu0
    %v2103 = vadd.f32 %v1844, %v2102
    %2104 = vmatprep.mubr.f32.mxu0 0.0
    %2105 = vmatmul.mubr.f32.gmra.mrb[0].mxu0 %v1875
    %v2106 = vpop.f32.mrb[0].mxu0
    %v2107 = vadd.f32 %v1840, %v2106
    %v2108 = vpop.f32.mrb[0].mxu0
    %v2109 = vadd.f32 %v1844, %v2108
    %2110 = vdwg.mxu0
    %v2111 = vld [vmem:[#allocation2] sm:$0xff]
    %v2112 = vld [vmem:[#allocation2 + $0x8] sm:$0xff]
    %v2113 = vld [vmem:[#allocation2 + $0x10] sm:$0xff]
    %v2114 = vld [vmem:[#allocation2 + $0x18] sm:$0xff]
    %v2115 = vld [vmem:[#allocation2 + $0x20] sm:$0xff]
    %v2116 = vld [vmem:[#allocation2 + $0x28] sm:$0xff]
    %v2117 = vld [vmem:[#allocation2 + $0x30] sm:$0xff]
    %v2118 = vld [vmem:[#allocation2 + $0x38] sm:$0xff]
    %v2119 = vld [vmem:[#allocation2 + $0x40] sm:$0xff]
    %v2120 = vld [vmem:[#allocation2 + $0x48] sm:$0xff]
    %v2121 = vld [vmem:[#allocation2 + $0x50] sm:$0xff]
    %v2122 = vld [vmem:[#allocation2 + $0x58] sm:$0xff]
    %v2123 = vld [vmem:[#allocation2 + $0x60] sm:$0xff]
    %v2124 = vld [vmem:[#allocation2 + $0x68] sm:$0xff]
    %v2125 = vld [vmem:[#allocation2 + $0x70] sm:$0xff]
    %v2126 = vld [vmem:[#allocation2 + $0x78] sm:$0xff]
    %v2127 = vld [vmem:[#allocation2 + $0x80] sm:$0xff]
    %v2128 = vld [vmem:[#allocation2 + $0x88] sm:$0xff]
    %v2129 = vld [vmem:[#allocation2 + $0x90] sm:$0xff]
    %v2130 = vld [vmem:[#allocation2 + $0x98] sm:$0xff]
    %v2131 = vld [vmem:[#allocation2 + $0xa0] sm:$0xff]
    %v2132 = vld [vmem:[#allocation2 + $0xa8] sm:$0xff]
    %v2133 = vld [vmem:[#allocation2 + $0xb0] sm:$0xff]
    %v2134 = vld [vmem:[#allocation2 + $0xb8] sm:$0xff]
    %v2135 = vld [vmem:[#allocation2 + $0xc0] sm:$0xff]
    %v2136 = vld [vmem:[#allocation2 + $0xc8] sm:$0xff]
    %v2137 = vld [vmem:[#allocation2 + $0xd0] sm:$0xff]
    %v2138 = vld [vmem:[#allocation2 + $0xd8] sm:$0xff]
    %v2139 = vld [vmem:[#allocation2 + $0xe0] sm:$0xff]
    %v2140 = vld [vmem:[#allocation2 + $0xe8] sm:$0xff]
    %v2141 = vld [vmem:[#allocation2 + $0xf0] sm:$0xff]
    %v2142 = vld [vmem:[#allocation2 + $0xf8] sm:$0xff]
    %v2143 = vld [vmem:[#allocation2 + $0x100] sm:$0xff]
    %v2144 = vld [vmem:[#allocation2 + $0x108] sm:$0xff]
    %v2145 = vld [vmem:[#allocation2 + $0x110] sm:$0xff]
    %v2146 = vld [vmem:[#allocation2 + $0x118] sm:$0xff]
    %v2147 = vld [vmem:[#allocation2 + $0x120] sm:$0xff]
    %v2148 = vld [vmem:[#allocation2 + $0x128] sm:$0xff]
    %v2149 = vld [vmem:[#allocation2 + $0x130] sm:$0xff]
    %v2150 = vld [vmem:[#allocation2 + $0x138] sm:$0xff]
    %v2151 = vld [vmem:[#allocation2 + $0x140] sm:$0xff]
    %v2152 = vld [vmem:[#allocation2 + $0x148] sm:$0xff]
    %v2153 = vld [vmem:[#allocation2 + $0x150] sm:$0xff]
    %v2154 = vld [vmem:[#allocation2 + $0x158] sm:$0xff]
    %v2155 = vld [vmem:[#allocation2 + $0x160] sm:$0xff]
    %v2156 = vld [vmem:[#allocation2 + $0x168] sm:$0xff]
    %v2157 = vld [vmem:[#allocation2 + $0x170] sm:$0xff]
    %v2158 = vld [vmem:[#allocation2 + $0x178] sm:$0xff]
    %v2159 = vld [vmem:[#allocation2 + $0x180] sm:$0xff]
    %v2160 = vld [vmem:[#allocation2 + $0x188] sm:$0xff]
    %v2161 = vld [vmem:[#allocation2 + $0x190] sm:$0xff]
    %v2162 = vld [vmem:[#allocation2 + $0x198] sm:$0xff]
    %v2163 = vld [vmem:[#allocation2 + $0x1a0] sm:$0xff]
    %v2164 = vld [vmem:[#allocation2 + $0x1a8] sm:$0xff]
    %v2165 = vld [vmem:[#allocation2 + $0x1b0] sm:$0xff]
    %v2166 = vld [vmem:[#allocation2 + $0x1b8] sm:$0xff]
    %v2167 = vld [vmem:[#allocation2 + $0x1c0] sm:$0xff]
    %v2168 = vld [vmem:[#allocation2 + $0x1c8] sm:$0xff]
    %v2169 = vld [vmem:[#allocation2 + $0x1d0] sm:$0xff]
    %v2170 = vld [vmem:[#allocation2 + $0x1d8] sm:$0xff]
    %v2171 = vld [vmem:[#allocation2 + $0x1e0] sm:$0xff]
    %v2172 = vld [vmem:[#allocation2 + $0x1e8] sm:$0xff]
    %v2173 = vld [vmem:[#allocation2 + $0x1f0] sm:$0xff]
    %v2174 = vld [vmem:[#allocation2 + $0x1f8] sm:$0xff]
    %2175 = vmatprep.subr.mxu0 %v2112
    %2176 = vmatpush1.msra.mxu0 %v2111
    %2177 = vmatprep.subr.mxu0 %v2116
    %2178 = vmatpush1.msra.mxu0 %v2115
    %2179 = vmatprep.subr.mxu0 %v2120
    %2180 = vmatpush1.msra.mxu0 %v2119
    %2181 = vmatprep.subr.mxu0 %v2124
    %2182 = vmatpush1.msra.mxu0 %v2123
    %2183 = vmatprep.subr.mxu0 %v2128
    %2184 = vmatpush1.msra.mxu0 %v2127
    %2185 = vmatprep.subr.mxu0 %v2132
    %2186 = vmatpush1.msra.mxu0 %v2131
    %2187 = vmatprep.subr.mxu0 %v2136
    %2188 = vmatpush1.msra.mxu0 %v2135
    %2189 = vmatprep.subr.mxu0 %v2140
    %2190 = vmatpush1.msra.mxu0 %v2139
    %2191 = vmatprep.subr.mxu0 %v2144
    %2192 = vmatpush1.msra.mxu0 %v2143
    %2193 = vmatprep.subr.mxu0 %v2148
    %2194 = vmatpush1.msra.mxu0 %v2147
    %2195 = vmatprep.subr.mxu0 %v2152
    %2196 = vmatpush1.msra.mxu0 %v2151
    %2197 = vmatprep.subr.mxu0 %v2156
    %2198 = vmatpush1.msra.mxu0 %v2155
    %2199 = vmatprep.subr.mxu0 %v2160
    %2200 = vmatpush1.msra.mxu0 %v2159
    %2201 = vmatprep.subr.mxu0 %v2164
    %2202 = vmatpush1.msra.mxu0 %v2163
    %2203 = vmatprep.subr.mxu0 %v2168
    %2204 = vmatpush1.msra.mxu0 %v2167
    %2205 = vmatprep.subr.mxu0 %v2172
    %2206 = vmatpush1.msra.mxu0 %v2171
    %2207 = vmatprep.subr.mxu0 0.0
    %2208 = vmatpush1.msra.mxu0 0.0
    %2209 = vmatprep.subr.mxu0 0.0
    %2210 = vmatpush1.msra.mxu0 0.0
    %2211 = vmatprep.subr.mxu0 0.0
    %2212 = vmatpush1.msra.mxu0 0.0
    %2213 = vmatprep.subr.mxu0 0.0
    %2214 = vmatpush1.msra.mxu0 0.0
    %2215 = vmatprep.subr.mxu0 0.0
    %2216 = vmatpush1.msra.mxu0 0.0
    %2217 = vmatprep.subr.mxu0 0.0
    %2218 = vmatpush1.msra.mxu0 0.0
    %2219 = vmatprep.subr.mxu0 0.0
    %2220 = vmatpush1.msra.mxu0 0.0
    %2221 = vmatprep.subr.mxu0 0.0
    %2222 = vmatpush1.msra.mxu0 0.0
    %2223 = vmatprep.subr.mxu0 0.0
    %2224 = vmatpush1.msra.mxu0 0.0
    %2225 = vmatprep.subr.mxu0 0.0
    %2226 = vmatpush1.msra.mxu0 0.0
    %2227 = vmatprep.subr.mxu0 0.0
    %2228 = vmatpush1.msra.mxu0 0.0
    %2229 = vmatprep.subr.mxu0 0.0
    %2230 = vmatpush1.msra.mxu0 0.0
    %2231 = vmatprep.subr.mxu0 0.0
    %2232 = vmatpush1.msra.mxu0 0.0
    %2233 = vmatprep.subr.mxu0 0.0
    %2234 = vmatpush1.msra.mxu0 0.0
    %2235 = vmatprep.subr.mxu0 0.0
    %2236 = vmatpush1.msra.mxu0 0.0
    %2237 = vmatprep.subr.mxu0 0.0
    %2238 = vmatpush1.msra.mxu0 0.0
    %2239 = vmatprep.mubr.f32.mxu0 0.0
    %2240 = vmatmul.mubr.f32.gmra.mrb[0].mxu0 0.0
    %v2241 = vpop.f32.mrb[0].mxu0
    %v2242 = vadd.f32 0.0, %v2241
    %v2243 = vpop.f32.mrb[0].mxu0
    %v2244 = vadd.f32 0.0, %v2243
    %2245 = vdwg.mxu0
    %2246 = vmatprep.subr.mxu0 %v2114
    %2247 = vmatpush1.msra.mxu0 %v2113
    %2248 = vmatprep.subr.mxu0 %v2118
    %2249 = vmatpush1.msra.mxu0 %v2117
    %2250 = vmatprep.subr.mxu0 %v2122
    %2251 = vmatpush1.msra.mxu0 %v2121
    %2252 = vmatprep.subr.mxu0 %v2126
    %2253 = vmatpush1.msra.mxu0 %v2125
    %2254 = vmatprep.subr.mxu0 %v2130
    %2255 = vmatpush1.msra.mxu0 %v2129
    %2256 = vmatprep.subr.mxu0 %v2134
    %2257 = vmatpush1.msra.mxu0 %v2133
    %2258 = vmatprep.subr.mxu0 %v2138
    %2259 = vmatpush1.msra.mxu0 %v2137
    %2260 = vmatprep.subr.mxu0 %v2142
    %2261 = vmatpush1.msra.mxu0 %v2141
    %2262 = vmatprep.subr.mxu0 %v2146
    %2263 = vmatpush1.msra.mxu0 %v2145
    %2264 = vmatprep.subr.mxu0 %v2150
    %2265 = vmatpush1.msra.mxu0 %v2149
    %2266 = vmatprep.subr.mxu0 %v2154
    %2267 = vmatpush1.msra.mxu0 %v2153
    %2268 = vmatprep.subr.mxu0 %v2158
    %2269 = vmatpush1.msra.mxu0 %v2157
    %2270 = vmatprep.subr.mxu0 %v2162
    %2271 = vmatpush1.msra.mxu0 %v2161
    %2272 = vmatprep.subr.mxu0 %v2166
    %2273 = vmatpush1.msra.mxu0 %v2165
    %2274 = vmatprep.subr.mxu0 %v2170
    %2275 = vmatpush1.msra.mxu0 %v2169
    %2276 = vmatprep.subr.mxu0 %v2174
    %2277 = vmatpush1.msra.mxu0 %v2173
    %2278 = vmatprep.subr.mxu0 0.0
    %2279 = vmatpush1.msra.mxu0 0.0
    %2280 = vmatprep.subr.mxu0 0.0
    %2281 = vmatpush1.msra.mxu0 0.0
    %2282 = vmatprep.subr.mxu0 0.0
    %2283 = vmatpush1.msra.mxu0 0.0
    %2284 = vmatprep.subr.mxu0 0.0
    %2285 = vmatpush1.msra.mxu0 0.0
    %2286 = vmatprep.subr.mxu0 0.0
    %2287 = vmatpush1.msra.mxu0 0.0
    %2288 = vmatprep.subr.mxu0 0.0
    %2289 = vmatpush1.msra.mxu0 0.0
    %2290 = vmatprep.subr.mxu0 0.0
    %2291 = vmatpush1.msra.mxu0 0.0
    %2292 = vmatprep.subr.mxu0 0.0
    %2293 = vmatpush1.msra.mxu0 0.0
    %2294 = vmatprep.subr.mxu0 0.0
    %2295 = vmatpush1.msra.mxu0 0.0
    %2296 = vmatprep.subr.mxu0 0.0
    %2297 = vmatpush1.msra.mxu0 0.0
    %2298 = vmatprep.subr.mxu0 0.0
    %2299 = vmatpush1.msra.mxu0 0.0
    %2300 = vmatprep.subr.mxu0 0.0
    %2301 = vmatpush1.msra.mxu0 0.0
    %2302 = vmatprep.subr.mxu0 0.0
    %2303 = vmatpush1.msra.mxu0 0.0
    %2304 = vmatprep.subr.mxu0 0.0
    %2305 = vmatpush1.msra.mxu0 0.0
    %2306 = vmatprep.subr.mxu0 0.0
    %2307 = vmatpush1.msra.mxu0 0.0
    %2308 = vmatprep.subr.mxu0 0.0
    %2309 = vmatpush1.msra.mxu0 0.0
    %2310 = vmatprep.mubr.f32.mxu0 0.0
    %2311 = vmatmul.mubr.f32.gmra.mrb[0].mxu0 0.0
    %v2312 = vpop.f32.mrb[0].mxu0
    %v2313 = vadd.f32 0.0, %v2312
    %v2314 = vpop.f32.mrb[0].mxu0
    %v2315 = vadd.f32 0.0, %v2314
    %2316 = vdwg.mxu0
    %v2317 = vadd.f32 %v1952, %v2242
    %v2318 = vadd.f32 %v1954, %v2244
    %v2319 = vadd.f32 %v2065, %v2313
    %v2320 = vadd.f32 %v2067, %v2315
    %v2321 = vxor.u32 %v2317, 2147483648
    %v2322 = vmul.f32 %v2321, 1.442695
    %v2323 = vpow.pop %v2322
    %v2324 = vadd.f32 %v2323, 1.0
    %v2325 = vrcp.pop %v2324
    %v2326 = vmul.f32 1.0, %v2325
    %v2327 = vxor.u32 %v2318, 2147483648
    %v2328 = vmul.f32 %v2327, 1.442695
    %v2329 = vpow.pop %v2328
    %v2330 = vadd.f32 %v2329, 1.0
    %v2331 = vrcp.pop %v2330
    %v2332 = vmul.f32 1.0, %v2331
    %v2333 = vtanh.pop %v2319
    %v2334 = vxor.u32 %v2320, 2147483648
    %v2335 = vmul.f32 %v2334, 1.442695
    %v2336 = vpow.pop %v2335
    %v2337 = vadd.f32 %v2336, 1.0
    %v2338 = vrcp.pop %v2337
    %v2339 = vmul.f32 1.0, %v2338
    %v2340 = vmul.f32 %v2332, 0.0
    %v2341 = vmul.f32 %v2326, %v2333
    %v2342 = vadd.f32 %v2340, %v2341
    %v2343 = vtanh.pop %v2342
    %v2344 = vmul.f32 %v2339, %v2343
    %v2345 = vld [vmem:[#allocation4] sm:$0xff]
    %v2346 = vld [vmem:[#allocation4 + $0x8] sm:$0xff]
    %v2347 = vld [vmem:[#allocation4 + $0x10] sm:$0xff]
    %v2348 = vld [vmem:[#allocation4 + $0x18] sm:$0xff]
    %v2349 = vld [vmem:[#allocation4 + $0x20] sm:$0xff]
    %v2350 = vld [vmem:[#allocation4 + $0x28] sm:$0xff]
    %v2351 = vld [vmem:[#allocation4 + $0x30] sm:$0xff]
    %v2352 = vld [vmem:[#allocation4 + $0x38] sm:$0xff]
    %v2353 = vld [vmem:[#allocation4 + $0x40] sm:$0xff]
    %v2354 = vld [vmem:[#allocation4 + $0x48] sm:$0xff]
    %v2355 = vld [vmem:[#allocation4 + $0x50] sm:$0xff]
    %v2356 = vld [vmem:[#allocation4 + $0x58] sm:$0xff]
    %v2357 = vld [vmem:[#allocation4 + $0x60] sm:$0xff]
    %v2358 = vld [vmem:[#allocation4 + $0x68] sm:$0xff]
    %v2359 = vld [vmem:[#allocation4 + $0x70] sm:$0xff]
    %v2360 = vld [vmem:[#allocation4 + $0x78] sm:$0xff]
    %v2361 = vld [vmem:[#allocation4 + $0x80] sm:$0xff]
    %v2362 = vld [vmem:[#allocation4 + $0x88] sm:$0xff]
    %v2363 = vld [vmem:[#allocation4 + $0x90] sm:$0xff]
    %v2364 = vld [vmem:[#allocation4 + $0x98] sm:$0xff]
    %v2365 = vld [vmem:[#allocation4 + $0xa0] sm:$0xff]
    %v2366 = vld [vmem:[#allocation4 + $0xa8] sm:$0xff]
    %v2367 = vld [vmem:[#allocation4 + $0xb0] sm:$0xff]
    %v2368 = vld [vmem:[#allocation4 + $0xb8] sm:$0xff]
    %v2369 = vld [vmem:[#allocation4 + $0xc0] sm:$0xff]
    %v2370 = vld [vmem:[#allocation4 + $0xc8] sm:$0xff]
    %v2371 = vld [vmem:[#allocation4 + $0xd0] sm:$0xff]
    %v2372 = vld [vmem:[#allocation4 + $0xd8] sm:$0xff]
    %v2373 = vld [vmem:[#allocation4 + $0xe0] sm:$0xff]
    %v2374 = vld [vmem:[#allocation4 + $0xe8] sm:$0xff]
    %v2375 = vld [vmem:[#allocation4 + $0xf0] sm:$0xff]
    %v2376 = vld [vmem:[#allocation4 + $0xf8] sm:$0xff]
    %v2377 = vld [vmem:[#allocation4 + $0x100] sm:$0xff]
    %v2378 = vld [vmem:[#allocation4 + $0x108] sm:$0xff]
    %v2379 = vld [vmem:[#allocation4 + $0x110] sm:$0xff]
    %v2380 = vld [vmem:[#allocation4 + $0x118] sm:$0xff]
    %v2381 = vld [vmem:[#allocation4 + $0x120] sm:$0xff]
    %v2382 = vld [vmem:[#allocation4 + $0x128] sm:$0xff]
    %v2383 = vld [vmem:[#allocation4 + $0x130] sm:$0xff]
    %v2384 = vld [vmem:[#allocation4 + $0x138] sm:$0xff]
    %v2385 = vld [vmem:[#allocation4 + $0x140] sm:$0xff]
    %v2386 = vld [vmem:[#allocation4 + $0x148] sm:$0xff]
    %v2387 = vld [vmem:[#allocation4 + $0x150] sm:$0xff]
    %v2388 = vld [vmem:[#allocation4 + $0x158] sm:$0xff]
    %v2389 = vld [vmem:[#allocation4 + $0x160] sm:$0xff]
    %v2390 = vld [vmem:[#allocation4 + $0x168] sm:$0xff]
    %v2391 = vld [vmem:[#allocation4 + $0x170] sm:$0xff]
    %v2392 = vld [vmem:[#allocation4 + $0x178] sm:$0xff]
    %v2393 = vld [vmem:[#allocation4 + $0x180] sm:$0xff]
    %v2394 = vld [vmem:[#allocation4 + $0x188] sm:$0xff]
    %v2395 = vld [vmem:[#allocation4 + $0x190] sm:$0xff]
    %v2396 = vld [vmem:[#allocation4 + $0x198] sm:$0xff]
    %v2397 = vld [vmem:[#allocation4 + $0x1a0] sm:$0xff]
    %v2398 = vld [vmem:[#allocation4 + $0x1a8] sm:$0xff]
    %v2399 = vld [vmem:[#allocation4 + $0x1b0] sm:$0xff]
    %v2400 = vld [vmem:[#allocation4 + $0x1b8] sm:$0xff]
    %v2401 = vld [vmem:[#allocation4 + $0x1c0] sm:$0xff]
    %v2402 = vld [vmem:[#allocation4 + $0x1c8] sm:$0xff]
    %v2403 = vld [vmem:[#allocation4 + $0x1d0] sm:$0xff]
    %v2404 = vld [vmem:[#allocation4 + $0x1d8] sm:$0xff]
    %v2405 = vld [vmem:[#allocation4 + $0x1e0] sm:$0xff]
    %v2406 = vld [vmem:[#allocation4 + $0x1e8] sm:$0xff]
    %v2407 = vld [vmem:[#allocation4 + $0x1f0] sm:$0xff]
    %v2408 = vld [vmem:[#allocation4 + $0x1f8] sm:$0xff]
    %v2409 = vld [vmem:[#allocation4 + $0x200] sm:$0xff]
    %v2410 = vld [vmem:[#allocation4 + $0x208] sm:$0xff]
    %v2411 = vld [vmem:[#allocation4 + $0x210] sm:$0xff]
    %v2412 = vld [vmem:[#allocation4 + $0x218] sm:$0xff]
    %v2413 = vld [vmem:[#allocation4 + $0x220] sm:$0xff]
    %v2414 = vld [vmem:[#allocation4 + $0x228] sm:$0xff]
    %v2415 = vld [vmem:[#allocation4 + $0x230] sm:$0xff]
    %v2416 = vld [vmem:[#allocation4 + $0x238] sm:$0xff]
    %v2417 = vld [vmem:[#allocation4 + $0x240] sm:$0xff]
    %v2418 = vld [vmem:[#allocation4 + $0x248] sm:$0xff]
    %v2419 = vld [vmem:[#allocation4 + $0x250] sm:$0xff]
    %v2420 = vld [vmem:[#allocation4 + $0x258] sm:$0xff]
    %v2421 = vld [vmem:[#allocation4 + $0x260] sm:$0xff]
    %v2422 = vld [vmem:[#allocation4 + $0x268] sm:$0xff]
    %v2423 = vld [vmem:[#allocation4 + $0x270] sm:$0xff]
    %v2424 = vld [vmem:[#allocation4 + $0x278] sm:$0xff]
    %v2425 = vld [vmem:[#allocation4 + $0x280] sm:$0xff]
    %v2426 = vld [vmem:[#allocation4 + $0x288] sm:$0xff]
    %v2427 = vld [vmem:[#allocation4 + $0x290] sm:$0xff]
    %v2428 = vld [vmem:[#allocation4 + $0x298] sm:$0xff]
    %v2429 = vld [vmem:[#allocation4 + $0x2a0] sm:$0xff]
    %v2430 = vld [vmem:[#allocation4 + $0x2a8] sm:$0xff]
    %v2431 = vld [vmem:[#allocation4 + $0x2b0] sm:$0xff]
    %v2432 = vld [vmem:[#allocation4 + $0x2b8] sm:$0xff]
    %v2433 = vld [vmem:[#allocation4 + $0x2c0] sm:$0xff]
    %v2434 = vld [vmem:[#allocation4 + $0x2c8] sm:$0xff]
    %v2435 = vld [vmem:[#allocation4 + $0x2d0] sm:$0xff]
    %v2436 = vld [vmem:[#allocation4 + $0x2d8] sm:$0xff]
    %v2437 = vld [vmem:[#allocation4 + $0x2e0] sm:$0xff]
    %v2438 = vld [vmem:[#allocation4 + $0x2e8] sm:$0xff]
    %v2439 = vld [vmem:[#allocation4 + $0x2f0] sm:$0xff]
    %v2440 = vld [vmem:[#allocation4 + $0x2f8] sm:$0xff]
    %v2441 = vld [vmem:[#allocation4 + $0x300] sm:$0xff]
    %v2442 = vld [vmem:[#allocation4 + $0x308] sm:$0xff]
    %v2443 = vld [vmem:[#allocation4 + $0x310] sm:$0xff]
    %v2444 = vld [vmem:[#allocation4 + $0x318] sm:$0xff]
    %v2445 = vld [vmem:[#allocation4 + $0x320] sm:$0xff]
    %v2446 = vld [vmem:[#allocation4 + $0x328] sm:$0xff]
    %v2447 = vld [vmem:[#allocation4 + $0x330] sm:$0xff]
    %v2448 = vld [vmem:[#allocation4 + $0x338] sm:$0xff]
    %v2449 = vld [vmem:[#allocation4 + $0x340] sm:$0xff]
    %v2450 = vld [vmem:[#allocation4 + $0x348] sm:$0xff]
    %v2451 = vld [vmem:[#allocation4 + $0x350] sm:$0xff]
    %v2452 = vld [vmem:[#allocation4 + $0x358] sm:$0xff]
    %v2453 = vld [vmem:[#allocation4 + $0x360] sm:$0xff]
    %v2454 = vld [vmem:[#allocation4 + $0x368] sm:$0xff]
    %v2455 = vld [vmem:[#allocation4 + $0x370] sm:$0xff]
    %v2456 = vld [vmem:[#allocation4 + $0x378] sm:$0xff]
    %v2457 = vld [vmem:[#allocation4 + $0x380] sm:$0xff]
    %v2458 = vld [vmem:[#allocation4 + $0x388] sm:$0xff]
    %v2459 = vld [vmem:[#allocation4 + $0x390] sm:$0xff]
    %v2460 = vld [vmem:[#allocation4 + $0x398] sm:$0xff]
    %v2461 = vld [vmem:[#allocation4 + $0x3a0] sm:$0xff]
    %v2462 = vld [vmem:[#allocation4 + $0x3a8] sm:$0xff]
    %v2463 = vld [vmem:[#allocation4 + $0x3b0] sm:$0xff]
    %v2464 = vld [vmem:[#allocation4 + $0x3b8] sm:$0xff]
    %v2465 = vld [vmem:[#allocation4 + $0x3c0] sm:$0xff]
    %v2466 = vld [vmem:[#allocation4 + $0x3c8] sm:$0xff]
    %v2467 = vld [vmem:[#allocation4 + $0x3d0] sm:$0xff]
    %v2468 = vld [vmem:[#allocation4 + $0x3d8] sm:$0xff]
    %v2469 = vld [vmem:[#allocation4 + $0x3e0] sm:$0xff]
    %v2470 = vld [vmem:[#allocation4 + $0x3e8] sm:$0xff]
    %v2471 = vld [vmem:[#allocation4 + $0x3f0] sm:$0xff]
    %v2472 = vld [vmem:[#allocation4 + $0x3f8] sm:$0xff]
    %v2473 = vld [vmem:[%s10] sm:$0xf]
    %v2475 = vlaneseq
    %v2476 = vshrl.u32 %v2475, 7
    %v2477 = vsub.s32 0, %v2476
    %v2478 = vrot.slane %v2473, %v2477
    %v2479 = vlaneseq
    %v2480 = vshrl.u32 %v2479, 7
    %v2481 = vsub.s32 1, %v2480
    %v2482 = vrot.slane %v2473, %v2481
    %v2483 = vlaneseq
    %v2484 = vshrl.u32 %v2483, 7
    %v2485 = vsub.s32 2, %v2484
    %v2486 = vrot.slane %v2473, %v2485
    %v2487 = vlaneseq
    %v2488 = vshrl.u32 %v2487, 7
    %v2489 = vsub.s32 3, %v2488
    %v2490 = vrot.slane %v2473, %v2489
    %2495 = vmatprep.subr.mxu0 %v2346
    %2496 = vmatpush1.msra.mxu0 %v2345
    %2497 = vmatprep.subr.mxu0 %v2350
    %2498 = vmatpush1.msra.mxu0 %v2349
    %2499 = vmatprep.subr.mxu0 %v2354
    %2500 = vmatpush1.msra.mxu0 %v2353
    %2501 = vmatprep.subr.mxu0 %v2358
    %2502 = vmatpush1.msra.mxu0 %v2357
    %2503 = vmatprep.subr.mxu0 %v2362
    %2504 = vmatpush1.msra.mxu0 %v2361
    %2505 = vmatprep.subr.mxu0 %v2366
    %2506 = vmatpush1.msra.mxu0 %v2365
    %2507 = vmatprep.subr.mxu0 %v2370
    %2508 = vmatpush1.msra.mxu0 %v2369
    %2509 = vmatprep.subr.mxu0 %v2374
    %2510 = vmatpush1.msra.mxu0 %v2373
    %2511 = vmatprep.subr.mxu0 %v2378
    %2512 = vmatpush1.msra.mxu0 %v2377
    %2513 = vmatprep.subr.mxu0 %v2382
    %2514 = vmatpush1.msra.mxu0 %v2381
    %2515 = vmatprep.subr.mxu0 %v2386
    %2516 = vmatpush1.msra.mxu0 %v2385
    %2517 = vmatprep.subr.mxu0 %v2390
    %2518 = vmatpush1.msra.mxu0 %v2389
    %2519 = vmatprep.subr.mxu0 %v2394
    %2520 = vmatpush1.msra.mxu0 %v2393
    %2521 = vmatprep.subr.mxu0 %v2398
    %2522 = vmatpush1.msra.mxu0 %v2397
    %2523 = vmatprep.subr.mxu0 %v2402
    %2524 = vmatpush1.msra.mxu0 %v2401
    %2525 = vmatprep.subr.mxu0 %v2406
    %2526 = vmatpush1.msra.mxu0 %v2405
    %2527 = vmatprep.subr.mxu0 %v2410
    %2528 = vmatpush1.msra.mxu0 %v2409
    %2529 = vmatprep.subr.mxu0 %v2414
    %2530 = vmatpush1.msra.mxu0 %v2413
    %2531 = vmatprep.subr.mxu0 %v2418
    %2532 = vmatpush1.msra.mxu0 %v2417
    %2533 = vmatprep.subr.mxu0 %v2422
    %2534 = vmatpush1.msra.mxu0 %v2421
    %2535 = vmatprep.subr.mxu0 %v2426
    %2536 = vmatpush1.msra.mxu0 %v2425
    %2537 = vmatprep.subr.mxu0 %v2430
    %2538 = vmatpush1.msra.mxu0 %v2429
    %2539 = vmatprep.subr.mxu0 %v2434
    %2540 = vmatpush1.msra.mxu0 %v2433
    %2541 = vmatprep.subr.mxu0 %v2438
    %2542 = vmatpush1.msra.mxu0 %v2437
    %2543 = vmatprep.subr.mxu0 %v2442
    %2544 = vmatpush1.msra.mxu0 %v2441
    %2545 = vmatprep.subr.mxu0 %v2446
    %2546 = vmatpush1.msra.mxu0 %v2445
    %2547 = vmatprep.subr.mxu0 %v2450
    %2548 = vmatpush1.msra.mxu0 %v2449
    %2549 = vmatprep.subr.mxu0 %v2454
    %2550 = vmatpush1.msra.mxu0 %v2453
    %2551 = vmatprep.subr.mxu0 %v2458
    %2552 = vmatpush1.msra.mxu0 %v2457
    %2553 = vmatprep.subr.mxu0 %v2462
    %2554 = vmatpush1.msra.mxu0 %v2461
    %2555 = vmatprep.subr.mxu0 %v2466
    %2556 = vmatpush1.msra.mxu0 %v2465
    %2557 = vmatprep.subr.mxu0 %v2470
    %2558 = vmatpush1.msra.mxu0 %v2469
    %2559 = vmatprep.mubr.f32.mxu0 0.0
    %2560 = vmatmul.mubr.f32.gmra.mrb[0].mxu0 %v2344
    %v2561 = vpop.f32.mrb[0].mxu0
    %v2562 = vadd.f32 %v2478, %v2561
    %v2563 = vpop.f32.mrb[0].mxu0
    %v2564 = vadd.f32 %v2482, %v2563
    %2565 = vdwg.mxu0
    %2566 = vmatprep.subr.mxu0 %v2348
    %2567 = vmatpush1.msra.mxu0 %v2347
    %2568 = vmatprep.subr.mxu0 %v2352
    %2569 = vmatpush1.msra.mxu0 %v2351
    %2570 = vmatprep.subr.mxu0 %v2356
    %2571 = vmatpush1.msra.mxu0 %v2355
    %2572 = vmatprep.subr.mxu0 %v2360
    %2573 = vmatpush1.msra.mxu0 %v2359
    %2574 = vmatprep.subr.mxu0 %v2364
    %2575 = vmatpush1.msra.mxu0 %v2363
    %2576 = vmatprep.subr.mxu0 %v2368
    %2577 = vmatpush1.msra.mxu0 %v2367
    %2578 = vmatprep.subr.mxu0 %v2372
    %2579 = vmatpush1.msra.mxu0 %v2371
    %2580 = vmatprep.subr.mxu0 %v2376
    %2581 = vmatpush1.msra.mxu0 %v2375
    %2582 = vmatprep.subr.mxu0 %v2380
    %2583 = vmatpush1.msra.mxu0 %v2379
    %2584 = vmatprep.subr.mxu0 %v2384
    %2585 = vmatpush1.msra.mxu0 %v2383
    %2586 = vmatprep.subr.mxu0 %v2388
    %2587 = vmatpush1.msra.mxu0 %v2387
    %2588 = vmatprep.subr.mxu0 %v2392
    %2589 = vmatpush1.msra.mxu0 %v2391
    %2590 = vmatprep.subr.mxu0 %v2396
    %2591 = vmatpush1.msra.mxu0 %v2395
    %2592 = vmatprep.subr.mxu0 %v2400
    %2593 = vmatpush1.msra.mxu0 %v2399
    %2594 = vmatprep.subr.mxu0 %v2404
    %2595 = vmatpush1.msra.mxu0 %v2403
    %2596 = vmatprep.subr.mxu0 %v2408
    %2597 = vmatpush1.msra.mxu0 %v2407
    %2598 = vmatprep.subr.mxu0 %v2412
    %2599 = vmatpush1.msra.mxu0 %v2411
    %2600 = vmatprep.subr.mxu0 %v2416
    %2601 = vmatpush1.msra.mxu0 %v2415
    %2602 = vmatprep.subr.mxu0 %v2420
    %2603 = vmatpush1.msra.mxu0 %v2419
    %2604 = vmatprep.subr.mxu0 %v2424
    %2605 = vmatpush1.msra.mxu0 %v2423
    %2606 = vmatprep.subr.mxu0 %v2428
    %2607 = vmatpush1.msra.mxu0 %v2427
    %2608 = vmatprep.subr.mxu0 %v2432
    %2609 = vmatpush1.msra.mxu0 %v2431
    %2610 = vmatprep.subr.mxu0 %v2436
    %2611 = vmatpush1.msra.mxu0 %v2435
    %2612 = vmatprep.subr.mxu0 %v2440
    %2613 = vmatpush1.msra.mxu0 %v2439
    %2614 = vmatprep.subr.mxu0 %v2444
    %2615 = vmatpush1.msra.mxu0 %v2443
    %2616 = vmatprep.subr.mxu0 %v2448
    %2617 = vmatpush1.msra.mxu0 %v2447
    %2618 = vmatprep.subr.mxu0 %v2452
    %2619 = vmatpush1.msra.mxu0 %v2451
    %2620 = vmatprep.subr.mxu0 %v2456
    %2621 = vmatpush1.msra.mxu0 %v2455
    %2622 = vmatprep.subr.mxu0 %v2460
    %2623 = vmatpush1.msra.mxu0 %v2459
    %2624 = vmatprep.subr.mxu0 %v2464
    %2625 = vmatpush1.msra.mxu0 %v2463
    %2626 = vmatprep.subr.mxu0 %v2468
    %2627 = vmatpush1.msra.mxu0 %v2467
    %2628 = vmatprep.subr.mxu0 %v2472
    %2629 = vmatpush1.msra.mxu0 %v2471
    %2630 = vmatprep.mubr.f32.mxu0 0.0
    %2631 = vmatmul.mubr.f32.gmra.mrb[0].mxu0 %v2344
    %v2632 = vpop.f32.mrb[0].mxu0
    %v2633 = vadd.f32 %v2486, %v2632
    %v2634 = vpop.f32.mrb[0].mxu0
    %v2635 = vadd.f32 %v2490, %v2634
    %2636 = vdwg.mxu0
    %v2637 = vxor.u32 %v2562, 2147483648
    %v2638 = vmul.f32 %v2637, 1.442695
    %v2639 = vpow.pop %v2638
    %v2640 = vadd.f32 %v2639, 1.0
    %v2641 = vrcp.pop %v2640
    %v2642 = vmul.f32 1.0, %v2641
    %v2643 = vxor.u32 %v2564, 2147483648
    %v2644 = vmul.f32 %v2643, 1.442695
    %v2645 = vpow.pop %v2644
    %v2646 = vadd.f32 %v2645, 1.0
    %v2647 = vrcp.pop %v2646
    %v2648 = vmul.f32 1.0, %v2647
    %v2649 = vtanh.pop %v2633
    %v2650 = vxor.u32 %v2635, 2147483648
    %v2651 = vmul.f32 %v2650, 1.442695
    %v2652 = vpow.pop %v2651
    %v2653 = vadd.f32 %v2652, 1.0
    %v2654 = vrcp.pop %v2653
    %v2655 = vmul.f32 1.0, %v2654
    %v2656 = vmul.f32 %v2648, 0.0
    %v2657 = vmul.f32 %v2642, %v2649
    %v2658 = vadd.f32 %v2656, %v2657
    %v2659 = vtanh.pop %v2658
    %v2660 = vmul.f32 %v2655, %v2659
    %2661 = vmatprep.subr.mxu0 %v2112
    %2662 = vmatpush1.msra.mxu0 %v2111
    %2663 = vmatprep.subr.mxu0 %v2116
    %2664 = vmatpush1.msra.mxu0 %v2115
    %2665 = vmatprep.subr.mxu0 %v2120
    %2666 = vmatpush1.msra.mxu0 %v2119
    %2667 = vmatprep.subr.mxu0 %v2124
    %2668 = vmatpush1.msra.mxu0 %v2123
    %2669 = vmatprep.subr.mxu0 %v2128
    %2670 = vmatpush1.msra.mxu0 %v2127
    %2671 = vmatprep.subr.mxu0 %v2132
    %2672 = vmatpush1.msra.mxu0 %v2131
    %2673 = vmatprep.subr.mxu0 %v2136
    %2674 = vmatpush1.msra.mxu0 %v2135
    %2675 = vmatprep.subr.mxu0 %v2140
    %2676 = vmatpush1.msra.mxu0 %v2139
    %2677 = vmatprep.subr.mxu0 %v2144
    %2678 = vmatpush1.msra.mxu0 %v2143
    %2679 = vmatprep.subr.mxu0 %v2148
    %2680 = vmatpush1.msra.mxu0 %v2147
    %2681 = vmatprep.subr.mxu0 %v2152
    %2682 = vmatpush1.msra.mxu0 %v2151
    %2683 = vmatprep.subr.mxu0 %v2156
    %2684 = vmatpush1.msra.mxu0 %v2155
    %2685 = vmatprep.subr.mxu0 %v2160
    %2686 = vmatpush1.msra.mxu0 %v2159
    %2687 = vmatprep.subr.mxu0 %v2164
    %2688 = vmatpush1.msra.mxu0 %v2163
    %2689 = vmatprep.subr.mxu0 %v2168
    %2690 = vmatpush1.msra.mxu0 %v2167
    %2691 = vmatprep.subr.mxu0 %v2172
    %2692 = vmatpush1.msra.mxu0 %v2171
    %2693 = vmatprep.subr.mxu0 0.0
    %2694 = vmatpush1.msra.mxu0 0.0
    %2695 = vmatprep.subr.mxu0 0.0
    %2696 = vmatpush1.msra.mxu0 0.0
    %2697 = vmatprep.subr.mxu0 0.0
    %2698 = vmatpush1.msra.mxu0 0.0
    %2699 = vmatprep.subr.mxu0 0.0
    %2700 = vmatpush1.msra.mxu0 0.0
    %2701 = vmatprep.subr.mxu0 0.0
    %2702 = vmatpush1.msra.mxu0 0.0
    %2703 = vmatprep.subr.mxu0 0.0
    %2704 = vmatpush1.msra.mxu0 0.0
    %2705 = vmatprep.subr.mxu0 0.0
    %2706 = vmatpush1.msra.mxu0 0.0
    %2707 = vmatprep.subr.mxu0 0.0
    %2708 = vmatpush1.msra.mxu0 0.0
    %2709 = vmatprep.subr.mxu0 0.0
    %2710 = vmatpush1.msra.mxu0 0.0
    %2711 = vmatprep.subr.mxu0 0.0
    %2712 = vmatpush1.msra.mxu0 0.0
    %2713 = vmatprep.subr.mxu0 0.0
    %2714 = vmatpush1.msra.mxu0 0.0
    %2715 = vmatprep.subr.mxu0 0.0
    %2716 = vmatpush1.msra.mxu0 0.0
    %2717 = vmatprep.subr.mxu0 0.0
    %2718 = vmatpush1.msra.mxu0 0.0
    %2719 = vmatprep.subr.mxu0 0.0
    %2720 = vmatpush1.msra.mxu0 0.0
    %2721 = vmatprep.subr.mxu0 0.0
    %2722 = vmatpush1.msra.mxu0 0.0
    %2723 = vmatprep.subr.mxu0 0.0
    %2724 = vmatpush1.msra.mxu0 0.0
    %2725 = vmatprep.mubr.f32.mxu0 0.0
    %2726 = vmatmul.mubr.f32.gmra.mrb[0].mxu0 %v2344
    %v2727 = vpop.f32.mrb[0].mxu0
    %v2728 = vadd.f32 0.0, %v2727
    %v2729 = vpop.f32.mrb[0].mxu0
    %v2730 = vadd.f32 0.0, %v2729
    %2731 = vdwg.mxu0
    %2732 = vmatprep.subr.mxu0 %v2114
    %2733 = vmatpush1.msra.mxu0 %v2113
    %2734 = vmatprep.subr.mxu0 %v2118
    %2735 = vmatpush1.msra.mxu0 %v2117
    %2736 = vmatprep.subr.mxu0 %v2122
    %2737 = vmatpush1.msra.mxu0 %v2121
    %2738 = vmatprep.subr.mxu0 %v2126
    %2739 = vmatpush1.msra.mxu0 %v2125
    %2740 = vmatprep.subr.mxu0 %v2130
    %2741 = vmatpush1.msra.mxu0 %v2129
    %2742 = vmatprep.subr.mxu0 %v2134
    %2743 = vmatpush1.msra.mxu0 %v2133
    %2744 = vmatprep.subr.mxu0 %v2138
    %2745 = vmatpush1.msra.mxu0 %v2137
    %2746 = vmatprep.subr.mxu0 %v2142
    %2747 = vmatpush1.msra.mxu0 %v2141
    %2748 = vmatprep.subr.mxu0 %v2146
    %2749 = vmatpush1.msra.mxu0 %v2145
    %2750 = vmatprep.subr.mxu0 %v2150
    %2751 = vmatpush1.msra.mxu0 %v2149
    %2752 = vmatprep.subr.mxu0 %v2154
    %2753 = vmatpush1.msra.mxu0 %v2153
    %2754 = vmatprep.subr.mxu0 %v2158
    %2755 = vmatpush1.msra.mxu0 %v2157
    %2756 = vmatprep.subr.mxu0 %v2162
    %2757 = vmatpush1.msra.mxu0 %v2161
    %2758 = vmatprep.subr.mxu0 %v2166
    %2759 = vmatpush1.msra.mxu0 %v2165
    %2760 = vmatprep.subr.mxu0 %v2170
    %2761 = vmatpush1.msra.mxu0 %v2169
    %2762 = vmatprep.subr.mxu0 %v2174
    %2763 = vmatpush1.msra.mxu0 %v2173
    %2764 = vmatprep.subr.mxu0 0.0
    %2765 = vmatpush1.msra.mxu0 0.0
    %2766 = vmatprep.subr.mxu0 0.0
    %2767 = vmatpush1.msra.mxu0 0.0
    %2768 = vmatprep.subr.mxu0 0.0
    %2769 = vmatpush1.msra.mxu0 0.0
    %2770 = vmatprep.subr.mxu0 0.0
    %2771 = vmatpush1.msra.mxu0 0.0
    %2772 = vmatprep.subr.mxu0 0.0
    %2773 = vmatpush1.msra.mxu0 0.0
    %2774 = vmatprep.subr.mxu0 0.0
    %2775 = vmatpush1.msra.mxu0 0.0
    %2776 = vmatprep.subr.mxu0 0.0
    %2777 = vmatpush1.msra.mxu0 0.0
    %2778 = vmatprep.subr.mxu0 0.0
    %2779 = vmatpush1.msra.mxu0 0.0
    %2780 = vmatprep.subr.mxu0 0.0
    %2781 = vmatpush1.msra.mxu0 0.0
    %2782 = vmatprep.subr.mxu0 0.0
    %2783 = vmatpush1.msra.mxu0 0.0
    %2784 = vmatprep.subr.mxu0 0.0
    %2785 = vmatpush1.msra.mxu0 0.0
    %2786 = vmatprep.subr.mxu0 0.0
    %2787 = vmatpush1.msra.mxu0 0.0
    %2788 = vmatprep.subr.mxu0 0.0
    %2789 = vmatpush1.msra.mxu0 0.0
    %2790 = vmatprep.subr.mxu0 0.0
    %2791 = vmatpush1.msra.mxu0 0.0
    %2792 = vmatprep.subr.mxu0 0.0
    %2793 = vmatpush1.msra.mxu0 0.0
    %2794 = vmatprep.subr.mxu0 0.0
    %2795 = vmatpush1.msra.mxu0 0.0
    %2796 = vmatprep.mubr.f32.mxu0 0.0
    %2797 = vmatmul.mubr.f32.gmra.mrb[0].mxu0 %v2344
    %v2798 = vpop.f32.mrb[0].mxu0
    %v2799 = vadd.f32 0.0, %v2798
    %v2800 = vpop.f32.mrb[0].mxu0
    %v2801 = vadd.f32 0.0, %v2800
    %2802 = vdwg.mxu0
    %v2803 = vadd.f32 %v1958, %v2728
    %v2804 = vadd.f32 %v1960, %v2730
    %v2805 = vadd.f32 %v2071, %v2799
    %v2806 = vadd.f32 %v2073, %v2801
    %v2807 = vxor.u32 %v2803, 2147483648
    %v2808 = vmul.f32 %v2807, 1.442695
    %v2809 = vpow.pop %v2808
    %v2810 = vadd.f32 %v2809, 1.0
    %v2811 = vrcp.pop %v2810
    %v2812 = vmul.f32 1.0, %v2811
    %v2813 = vxor.u32 %v2804, 2147483648
    %v2814 = vmul.f32 %v2813, 1.442695
    %v2815 = vpow.pop %v2814
    %v2816 = vadd.f32 %v2815, 1.0
    %v2817 = vrcp.pop %v2816
    %v2818 = vmul.f32 1.0, %v2817
    %v2819 = vtanh.pop %v2805
    %v2820 = vxor.u32 %v2806, 2147483648
    %v2821 = vmul.f32 %v2820, 1.442695
    %v2822 = vpow.pop %v2821
    %v2823 = vadd.f32 %v2822, 1.0
    %v2824 = vrcp.pop %v2823
    %v2825 = vmul.f32 1.0, %v2824
    %v2826 = vmul.f32 %v2818, %v2342
    %v2827 = vmul.f32 %v2812, %v2819
    %v2828 = vadd.f32 %v2826, %v2827
    %v2829 = vtanh.pop %v2828
    %v2830 = vmul.f32 %v2825, %v2829
    %2831 = vmatprep.subr.mxu0 %v2346
    %2832 = vmatpush1.msra.mxu0 %v2345
    %2833 = vmatprep.subr.mxu0 %v2350
    %2834 = vmatpush1.msra.mxu0 %v2349
    %2835 = vmatprep.subr.mxu0 %v2354
    %2836 = vmatpush1.msra.mxu0 %v2353
    %2837 = vmatprep.subr.mxu0 %v2358
    %2838 = vmatpush1.msra.mxu0 %v2357
    %2839 = vmatprep.subr.mxu0 %v2362
    %2840 = vmatpush1.msra.mxu0 %v2361
    %2841 = vmatprep.subr.mxu0 %v2366
    %2842 = vmatpush1.msra.mxu0 %v2365
    %2843 = vmatprep.subr.mxu0 %v2370
    %2844 = vmatpush1.msra.mxu0 %v2369
    %2845 = vmatprep.subr.mxu0 %v2374
    %2846 = vmatpush1.msra.mxu0 %v2373
    %2847 = vmatprep.subr.mxu0 %v2378
    %2848 = vmatpush1.msra.mxu0 %v2377
    %2849 = vmatprep.subr.mxu0 %v2382
    %2850 = vmatpush1.msra.mxu0 %v2381
    %2851 = vmatprep.subr.mxu0 %v2386
    %2852 = vmatpush1.msra.mxu0 %v2385
    %2853 = vmatprep.subr.mxu0 %v2390
    %2854 = vmatpush1.msra.mxu0 %v2389
    %2855 = vmatprep.subr.mxu0 %v2394
    %2856 = vmatpush1.msra.mxu0 %v2393
    %2857 = vmatprep.subr.mxu0 %v2398
    %2858 = vmatpush1.msra.mxu0 %v2397
    %2859 = vmatprep.subr.mxu0 %v2402
    %2860 = vmatpush1.msra.mxu0 %v2401
    %2861 = vmatprep.subr.mxu0 %v2406
    %2862 = vmatpush1.msra.mxu0 %v2405
    %2863 = vmatprep.subr.mxu0 %v2410
    %2864 = vmatpush1.msra.mxu0 %v2409
    %2865 = vmatprep.subr.mxu0 %v2414
    %2866 = vmatpush1.msra.mxu0 %v2413
    %2867 = vmatprep.subr.mxu0 %v2418
    %2868 = vmatpush1.msra.mxu0 %v2417
    %2869 = vmatprep.subr.mxu0 %v2422
    %2870 = vmatpush1.msra.mxu0 %v2421
    %2871 = vmatprep.subr.mxu0 %v2426
    %2872 = vmatpush1.msra.mxu0 %v2425
    %2873 = vmatprep.subr.mxu0 %v2430
    %2874 = vmatpush1.msra.mxu0 %v2429
    %2875 = vmatprep.subr.mxu0 %v2434
    %2876 = vmatpush1.msra.mxu0 %v2433
    %2877 = vmatprep.subr.mxu0 %v2438
    %2878 = vmatpush1.msra.mxu0 %v2437
    %2879 = vmatprep.subr.mxu0 %v2442
    %2880 = vmatpush1.msra.mxu0 %v2441
    %2881 = vmatprep.subr.mxu0 %v2446
    %2882 = vmatpush1.msra.mxu0 %v2445
    %2883 = vmatprep.subr.mxu0 %v2450
    %2884 = vmatpush1.msra.mxu0 %v2449
    %2885 = vmatprep.subr.mxu0 %v2454
    %2886 = vmatpush1.msra.mxu0 %v2453
    %2887 = vmatprep.subr.mxu0 %v2458
    %2888 = vmatpush1.msra.mxu0 %v2457
    %2889 = vmatprep.subr.mxu0 %v2462
    %2890 = vmatpush1.msra.mxu0 %v2461
    %2891 = vmatprep.subr.mxu0 %v2466
    %2892 = vmatpush1.msra.mxu0 %v2465
    %2893 = vmatprep.subr.mxu0 %v2470
    %2894 = vmatpush1.msra.mxu0 %v2469
    %2895 = vmatprep.mubr.f32.mxu0 %v2660
    %2896 = vmatmul.mubr.f32.gmra.mrb[0].mxu0 %v2830
    %v2897 = vpop.f32.mrb[0].mxu0
    %v2898 = vadd.f32 %v2478, %v2897
    %v2899 = vpop.f32.mrb[0].mxu0
    %v2900 = vadd.f32 %v2482, %v2899
    %2901 = vdwg.mxu0
    %2902 = vmatprep.subr.mxu0 %v2348
    %2903 = vmatpush1.msra.mxu0 %v2347
    %2904 = vmatprep.subr.mxu0 %v2352
    %2905 = vmatpush1.msra.mxu0 %v2351
    %2906 = vmatprep.subr.mxu0 %v2356
    %2907 = vmatpush1.msra.mxu0 %v2355
    %2908 = vmatprep.subr.mxu0 %v2360
    %2909 = vmatpush1.msra.mxu0 %v2359
    %2910 = vmatprep.subr.mxu0 %v2364
    %2911 = vmatpush1.msra.mxu0 %v2363
    %2912 = vmatprep.subr.mxu0 %v2368
    %2913 = vmatpush1.msra.mxu0 %v2367
    %2914 = vmatprep.subr.mxu0 %v2372
    %2915 = vmatpush1.msra.mxu0 %v2371
    %2916 = vmatprep.subr.mxu0 %v2376
    %2917 = vmatpush1.msra.mxu0 %v2375
    %2918 = vmatprep.subr.mxu0 %v2380
    %2919 = vmatpush1.msra.mxu0 %v2379
    %2920 = vmatprep.subr.mxu0 %v2384
    %2921 = vmatpush1.msra.mxu0 %v2383
    %2922 = vmatprep.subr.mxu0 %v2388
    %2923 = vmatpush1.msra.mxu0 %v2387
    %2924 = vmatprep.subr.mxu0 %v2392
    %2925 = vmatpush1.msra.mxu0 %v2391
    %2926 = vmatprep.subr.mxu0 %v2396
    %2927 = vmatpush1.msra.mxu0 %v2395
    %2928 = vmatprep.subr.mxu0 %v2400
    %2929 = vmatpush1.msra.mxu0 %v2399
    %2930 = vmatprep.subr.mxu0 %v2404
    %2931 = vmatpush1.msra.mxu0 %v2403
    %2932 = vmatprep.subr.mxu0 %v2408
    %2933 = vmatpush1.msra.mxu0 %v2407
    %2934 = vmatprep.subr.mxu0 %v2412
    %2935 = vmatpush1.msra.mxu0 %v2411
    %2936 = vmatprep.subr.mxu0 %v2416
    %2937 = vmatpush1.msra.mxu0 %v2415
    %2938 = vmatprep.subr.mxu0 %v2420
    %2939 = vmatpush1.msra.mxu0 %v2419
    %2940 = vmatprep.subr.mxu0 %v2424
    %2941 = vmatpush1.msra.mxu0 %v2423
    %2942 = vmatprep.subr.mxu0 %v2428
    %2943 = vmatpush1.msra.mxu0 %v2427
    %2944 = vmatprep.subr.mxu0 %v2432
    %2945 = vmatpush1.msra.mxu0 %v2431
    %2946 = vmatprep.subr.mxu0 %v2436
    %2947 = vmatpush1.msra.mxu0 %v2435
    %2948 = vmatprep.subr.mxu0 %v2440
    %2949 = vmatpush1.msra.mxu0 %v2439
    %2950 = vmatprep.subr.mxu0 %v2444
    %2951 = vmatpush1.msra.mxu0 %v2443
    %2952 = vmatprep.subr.mxu0 %v2448
    %2953 = vmatpush1.msra.mxu0 %v2447
    %2954 = vmatprep.subr.mxu0 %v2452
    %2955 = vmatpush1.msra.mxu0 %v2451
    %2956 = vmatprep.subr.mxu0 %v2456
    %2957 = vmatpush1.msra.mxu0 %v2455
    %2958 = vmatprep.subr.mxu0 %v2460
    %2959 = vmatpush1.msra.mxu0 %v2459
    %2960 = vmatprep.subr.mxu0 %v2464
    %2961 = vmatpush1.msra.mxu0 %v2463
    %2962 = vmatprep.subr.mxu0 %v2468
    %2963 = vmatpush1.msra.mxu0 %v2467
    %2964 = vmatprep.subr.mxu0 %v2472
    %2965 = vmatpush1.msra.mxu0 %v2471
    %2966 = vmatprep.mubr.f32.mxu0 %v2660
    %2967 = vmatmul.mubr.f32.gmra.mrb[0].mxu0 %v2830
    %v2968 = vpop.f32.mrb[0].mxu0
    %v2969 = vadd.f32 %v2486, %v2968
    %v2970 = vpop.f32.mrb[0].mxu0
    %v2971 = vadd.f32 %v2490, %v2970
    %2972 = vdwg.mxu0
    %v2973 = vxor.u32 %v2898, 2147483648
    %v2974 = vmul.f32 %v2973, 1.442695
    %v2975 = vpow.pop %v2974
    %v2976 = vadd.f32 %v2975, 1.0
    %v2977 = vrcp.pop %v2976
    %v2978 = vmul.f32 1.0, %v2977
    %v2979 = vxor.u32 %v2900, 2147483648
    %v2980 = vmul.f32 %v2979, 1.442695
    %v2981 = vpow.pop %v2980
    %v2982 = vadd.f32 %v2981, 1.0
    %v2983 = vrcp.pop %v2982
    %v2984 = vmul.f32 1.0, %v2983
    %v2985 = vtanh.pop %v2969
    %v2986 = vxor.u32 %v2971, 2147483648
    %v2987 = vmul.f32 %v2986, 1.442695
    %v2988 = vpow.pop %v2987
    %v2989 = vadd.f32 %v2988, 1.0
    %v2990 = vrcp.pop %v2989
    %v2991 = vmul.f32 1.0, %v2990
    %v2992 = vmul.f32 %v2984, %v2658
    %v2993 = vmul.f32 %v2978, %v2985
    %v2994 = vadd.f32 %v2992, %v2993
    %v2995 = vtanh.pop %v2994
    %v2996 = vmul.f32 %v2991, %v2995
    %2997 = vmatprep.subr.mxu0 %v2112
    %2998 = vmatpush1.msra.mxu0 %v2111
    %2999 = vmatprep.subr.mxu0 %v2116
    %3000 = vmatpush1.msra.mxu0 %v2115
    %3001 = vmatprep.subr.mxu0 %v2120
    %3002 = vmatpush1.msra.mxu0 %v2119
    %3003 = vmatprep.subr.mxu0 %v2124
    %3004 = vmatpush1.msra.mxu0 %v2123
    %3005 = vmatprep.subr.mxu0 %v2128
    %3006 = vmatpush1.msra.mxu0 %v2127
    %3007 = vmatprep.subr.mxu0 %v2132
    %3008 = vmatpush1.msra.mxu0 %v2131
    %3009 = vmatprep.subr.mxu0 %v2136
    %3010 = vmatpush1.msra.mxu0 %v2135
    %3011 = vmatprep.subr.mxu0 %v2140
    %3012 = vmatpush1.msra.mxu0 %v2139
    %3013 = vmatprep.subr.mxu0 %v2144
    %3014 = vmatpush1.msra.mxu0 %v2143
    %3015 = vmatprep.subr.mxu0 %v2148
    %3016 = vmatpush1.msra.mxu0 %v2147
    %3017 = vmatprep.subr.mxu0 %v2152
    %3018 = vmatpush1.msra.mxu0 %v2151
    %3019 = vmatprep.subr.mxu0 %v2156
    %3020 = vmatpush1.msra.mxu0 %v2155
    %3021 = vmatprep.subr.mxu0 %v2160
    %3022 = vmatpush1.msra.mxu0 %v2159
    %3023 = vmatprep.subr.mxu0 %v2164
    %3024 = vmatpush1.msra.mxu0 %v2163
    %3025 = vmatprep.subr.mxu0 %v2168
    %3026 = vmatpush1.msra.mxu0 %v2167
    %3027 = vmatprep.subr.mxu0 %v2172
    %3028 = vmatpush1.msra.mxu0 %v2171
    %3029 = vmatprep.subr.mxu0 0.0
    %3030 = vmatpush1.msra.mxu0 0.0
    %3031 = vmatprep.subr.mxu0 0.0
    %3032 = vmatpush1.msra.mxu0 0.0
    %3033 = vmatprep.subr.mxu0 0.0
    %3034 = vmatpush1.msra.mxu0 0.0
    %3035 = vmatprep.subr.mxu0 0.0
    %3036 = vmatpush1.msra.mxu0 0.0
    %3037 = vmatprep.subr.mxu0 0.0
    %3038 = vmatpush1.msra.mxu0 0.0
    %3039 = vmatprep.subr.mxu0 0.0
    %3040 = vmatpush1.msra.mxu0 0.0
    %3041 = vmatprep.subr.mxu0 0.0
    %3042 = vmatpush1.msra.mxu0 0.0
    %3043 = vmatprep.subr.mxu0 0.0
    %3044 = vmatpush1.msra.mxu0 0.0
    %3045 = vmatprep.subr.mxu0 0.0
    %3046 = vmatpush1.msra.mxu0 0.0
    %3047 = vmatprep.subr.mxu0 0.0
    %3048 = vmatpush1.msra.mxu0 0.0
    %3049 = vmatprep.subr.mxu0 0.0
    %3050 = vmatpush1.msra.mxu0 0.0
    %3051 = vmatprep.subr.mxu0 0.0
    %3052 = vmatpush1.msra.mxu0 0.0
    %3053 = vmatprep.subr.mxu0 0.0
    %3054 = vmatpush1.msra.mxu0 0.0
    %3055 = vmatprep.subr.mxu0 0.0
    %3056 = vmatpush1.msra.mxu0 0.0
    %3057 = vmatprep.subr.mxu0 0.0
    %3058 = vmatpush1.msra.mxu0 0.0
    %3059 = vmatprep.subr.mxu0 0.0
    %3060 = vmatpush1.msra.mxu0 0.0
    %3061 = vmatprep.mubr.f32.mxu0 0.0
    %3062 = vmatmul.mubr.f32.gmra.mrb[0].mxu0 %v2830
    %v3063 = vpop.f32.mrb[0].mxu0
    %v3064 = vadd.f32 0.0, %v3063
    %v3065 = vpop.f32.mrb[0].mxu0
    %v3066 = vadd.f32 0.0, %v3065
    %3067 = vdwg.mxu0
    %3068 = vmatprep.subr.mxu0 %v2114
    %3069 = vmatpush1.msra.mxu0 %v2113
    %3070 = vmatprep.subr.mxu0 %v2118
    %3071 = vmatpush1.msra.mxu0 %v2117
    %3072 = vmatprep.subr.mxu0 %v2122
    %3073 = vmatpush1.msra.mxu0 %v2121
    %3074 = vmatprep.subr.mxu0 %v2126
    %3075 = vmatpush1.msra.mxu0 %v2125
    %3076 = vmatprep.subr.mxu0 %v2130
    %3077 = vmatpush1.msra.mxu0 %v2129
    %3078 = vmatprep.subr.mxu0 %v2134
    %3079 = vmatpush1.msra.mxu0 %v2133
    %3080 = vmatprep.subr.mxu0 %v2138
    %3081 = vmatpush1.msra.mxu0 %v2137
    %3082 = vmatprep.subr.mxu0 %v2142
    %3083 = vmatpush1.msra.mxu0 %v2141
    %3084 = vmatprep.subr.mxu0 %v2146
    %3085 = vmatpush1.msra.mxu0 %v2145
    %3086 = vmatprep.subr.mxu0 %v2150
    %3087 = vmatpush1.msra.mxu0 %v2149
    %3088 = vmatprep.subr.mxu0 %v2154
    %3089 = vmatpush1.msra.mxu0 %v2153
    %3090 = vmatprep.subr.mxu0 %v2158
    %3091 = vmatpush1.msra.mxu0 %v2157
    %3092 = vmatprep.subr.mxu0 %v2162
    %3093 = vmatpush1.msra.mxu0 %v2161
    %3094 = vmatprep.subr.mxu0 %v2166
    %3095 = vmatpush1.msra.mxu0 %v2165
    %3096 = vmatprep.subr.mxu0 %v2170
    %3097 = vmatpush1.msra.mxu0 %v2169
    %3098 = vmatprep.subr.mxu0 %v2174
    %3099 = vmatpush1.msra.mxu0 %v2173
    %3100 = vmatprep.subr.mxu0 0.0
    %3101 = vmatpush1.msra.mxu0 0.0
    %3102 = vmatprep.subr.mxu0 0.0
    %3103 = vmatpush1.msra.mxu0 0.0
    %3104 = vmatprep.subr.mxu0 0.0
    %3105 = vmatpush1.msra.mxu0 0.0
    %3106 = vmatprep.subr.mxu0 0.0
    %3107 = vmatpush1.msra.mxu0 0.0
    %3108 = vmatprep.subr.mxu0 0.0
    %3109 = vmatpush1.msra.mxu0 0.0
    %3110 = vmatprep.subr.mxu0 0.0
    %3111 = vmatpush1.msra.mxu0 0.0
    %3112 = vmatprep.subr.mxu0 0.0
    %3113 = vmatpush1.msra.mxu0 0.0
    %3114 = vmatprep.subr.mxu0 0.0
    %3115 = vmatpush1.msra.mxu0 0.0
    %3116 = vmatprep.subr.mxu0 0.0
    %3117 = vmatpush1.msra.mxu0 0.0
    %3118 = vmatprep.subr.mxu0 0.0
    %3119 = vmatpush1.msra.mxu0 0.0
    %3120 = vmatprep.subr.mxu0 0.0
    %3121 = vmatpush1.msra.mxu0 0.0
    %3122 = vmatprep.subr.mxu0 0.0
    %3123 = vmatpush1.msra.mxu0 0.0
    %3124 = vmatprep.subr.mxu0 0.0
    %3125 = vmatpush1.msra.mxu0 0.0
    %3126 = vmatprep.subr.mxu0 0.0
    %3127 = vmatpush1.msra.mxu0 0.0
    %3128 = vmatprep.subr.mxu0 0.0
    %3129 = vmatpush1.msra.mxu0 0.0
    %3130 = vmatprep.subr.mxu0 0.0
    %3131 = vmatpush1.msra.mxu0 0.0
    %3132 = vmatprep.mubr.f32.mxu0 0.0
    %3133 = vmatmul.mubr.f32.gmra.mrb[0].mxu0 %v2830
    %v3134 = vpop.f32.mrb[0].mxu0
    %v3135 = vadd.f32 0.0, %v3134
    %v3136 = vpop.f32.mrb[0].mxu0
    %v3137 = vadd.f32 0.0, %v3136
    %3138 = vdwg.mxu0
    %v3139 = vadd.f32 %v1964, %v3064
    %v3140 = vadd.f32 %v1966, %v3066
    %v3141 = vadd.f32 %v2077, %v3135
    %v3142 = vadd.f32 %v2079, %v3137
    %v3143 = vxor.u32 %v3139, 2147483648
    %v3144 = vmul.f32 %v3143, 1.442695
    %v3145 = vpow.pop %v3144
    %v3146 = vadd.f32 %v3145, 1.0
    %v3147 = vrcp.pop %v3146
    %v3148 = vmul.f32 1.0, %v3147
    %v3149 = vxor.u32 %v3140, 2147483648
    %v3150 = vmul.f32 %v3149, 1.442695
    %v3151 = vpow.pop %v3150
    %v3152 = vadd.f32 %v3151, 1.0
    %v3153 = vrcp.pop %v3152
    %v3154 = vmul.f32 1.0, %v3153
    %v3155 = vtanh.pop %v3141
    %v3156 = vxor.u32 %v3142, 2147483648
    %v3157 = vmul.f32 %v3156, 1.442695
    %v3158 = vpow.pop %v3157
    %v3159 = vadd.f32 %v3158, 1.0
    %v3160 = vrcp.pop %v3159
    %v3161 = vmul.f32 1.0, %v3160
    %v3162 = vmul.f32 %v3154, %v2828
    %v3163 = vmul.f32 %v3148, %v3155
    %v3164 = vadd.f32 %v3162, %v3163
    %v3165 = vtanh.pop %v3164
    %v3166 = vmul.f32 %v3161, %v3165
    %3167 = vmatprep.subr.mxu0 %v2346
    %3168 = vmatpush1.msra.mxu0 %v2345
    %3169 = vmatprep.subr.mxu0 %v2350
    %3170 = vmatpush1.msra.mxu0 %v2349
    %3171 = vmatprep.subr.mxu0 %v2354
    %3172 = vmatpush1.msra.mxu0 %v2353
    %3173 = vmatprep.subr.mxu0 %v2358
    %3174 = vmatpush1.msra.mxu0 %v2357
    %3175 = vmatprep.subr.mxu0 %v2362
    %3176 = vmatpush1.msra.mxu0 %v2361
    %3177 = vmatprep.subr.mxu0 %v2366
    %3178 = vmatpush1.msra.mxu0 %v2365
    %3179 = vmatprep.subr.mxu0 %v2370
    %3180 = vmatpush1.msra.mxu0 %v2369
    %3181 = vmatprep.subr.mxu0 %v2374
    %3182 = vmatpush1.msra.mxu0 %v2373
    %3183 = vmatprep.subr.mxu0 %v2378
    %3184 = vmatpush1.msra.mxu0 %v2377
    %3185 = vmatprep.subr.mxu0 %v2382
    %3186 = vmatpush1.msra.mxu0 %v2381
    %3187 = vmatprep.subr.mxu0 %v2386
    %3188 = vmatpush1.msra.mxu0 %v2385
    %3189 = vmatprep.subr.mxu0 %v2390
    %3190 = vmatpush1.msra.mxu0 %v2389
    %3191 = vmatprep.subr.mxu0 %v2394
    %3192 = vmatpush1.msra.mxu0 %v2393
    %3193 = vmatprep.subr.mxu0 %v2398
    %3194 = vmatpush1.msra.mxu0 %v2397
    %3195 = vmatprep.subr.mxu0 %v2402
    %3196 = vmatpush1.msra.mxu0 %v2401
    %3197 = vmatprep.subr.mxu0 %v2406
    %3198 = vmatpush1.msra.mxu0 %v2405
    %3199 = vmatprep.subr.mxu0 %v2410
    %3200 = vmatpush1.msra.mxu0 %v2409
    %3201 = vmatprep.subr.mxu0 %v2414
    %3202 = vmatpush1.msra.mxu0 %v2413
    %3203 = vmatprep.subr.mxu0 %v2418
    %3204 = vmatpush1.msra.mxu0 %v2417
    %3205 = vmatprep.subr.mxu0 %v2422
    %3206 = vmatpush1.msra.mxu0 %v2421
    %3207 = vmatprep.subr.mxu0 %v2426
    %3208 = vmatpush1.msra.mxu0 %v2425
    %3209 = vmatprep.subr.mxu0 %v2430
    %3210 = vmatpush1.msra.mxu0 %v2429
    %3211 = vmatprep.subr.mxu0 %v2434
    %3212 = vmatpush1.msra.mxu0 %v2433
    %3213 = vmatprep.subr.mxu0 %v2438
    %3214 = vmatpush1.msra.mxu0 %v2437
    %3215 = vmatprep.subr.mxu0 %v2442
    %3216 = vmatpush1.msra.mxu0 %v2441
    %3217 = vmatprep.subr.mxu0 %v2446
    %3218 = vmatpush1.msra.mxu0 %v2445
    %3219 = vmatprep.subr.mxu0 %v2450
    %3220 = vmatpush1.msra.mxu0 %v2449
    %3221 = vmatprep.subr.mxu0 %v2454
    %3222 = vmatpush1.msra.mxu0 %v2453
    %3223 = vmatprep.subr.mxu0 %v2458
    %3224 = vmatpush1.msra.mxu0 %v2457
    %3225 = vmatprep.subr.mxu0 %v2462
    %3226 = vmatpush1.msra.mxu0 %v2461
    %3227 = vmatprep.subr.mxu0 %v2466
    %3228 = vmatpush1.msra.mxu0 %v2465
    %3229 = vmatprep.subr.mxu0 %v2470
    %3230 = vmatpush1.msra.mxu0 %v2469
    %3231 = vmatprep.mubr.f32.mxu0 %v2996
    %3232 = vmatmul.mubr.f32.gmra.mrb[0].mxu0 %v3166
    %v3233 = vpop.f32.mrb[0].mxu0
    %v3234 = vadd.f32 %v2478, %v3233
    %v3235 = vpop.f32.mrb[0].mxu0
    %v3236 = vadd.f32 %v2482, %v3235
    %3237 = vdwg.mxu0
    %3238 = vmatprep.subr.mxu0 %v2348
    %3239 = vmatpush1.msra.mxu0 %v2347
    %3240 = vmatprep.subr.mxu0 %v2352
    %3241 = vmatpush1.msra.mxu0 %v2351
    %3242 = vmatprep.subr.mxu0 %v2356
    %3243 = vmatpush1.msra.mxu0 %v2355
    %3244 = vmatprep.subr.mxu0 %v2360
    %3245 = vmatpush1.msra.mxu0 %v2359
    %3246 = vmatprep.subr.mxu0 %v2364
    %3247 = vmatpush1.msra.mxu0 %v2363
    %3248 = vmatprep.subr.mxu0 %v2368
    %3249 = vmatpush1.msra.mxu0 %v2367
    %3250 = vmatprep.subr.mxu0 %v2372
    %3251 = vmatpush1.msra.mxu0 %v2371
    %3252 = vmatprep.subr.mxu0 %v2376
    %3253 = vmatpush1.msra.mxu0 %v2375
    %3254 = vmatprep.subr.mxu0 %v2380
    %3255 = vmatpush1.msra.mxu0 %v2379
    %3256 = vmatprep.subr.mxu0 %v2384
    %3257 = vmatpush1.msra.mxu0 %v2383
    %3258 = vmatprep.subr.mxu0 %v2388
    %3259 = vmatpush1.msra.mxu0 %v2387
    %3260 = vmatprep.subr.mxu0 %v2392
    %3261 = vmatpush1.msra.mxu0 %v2391
    %3262 = vmatprep.subr.mxu0 %v2396
    %3263 = vmatpush1.msra.mxu0 %v2395
    %3264 = vmatprep.subr.mxu0 %v2400
    %3265 = vmatpush1.msra.mxu0 %v2399
    %3266 = vmatprep.subr.mxu0 %v2404
    %3267 = vmatpush1.msra.mxu0 %v2403
    %3268 = vmatprep.subr.mxu0 %v2408
    %3269 = vmatpush1.msra.mxu0 %v2407
    %3270 = vmatprep.subr.mxu0 %v2412
    %3271 = vmatpush1.msra.mxu0 %v2411
    %3272 = vmatprep.subr.mxu0 %v2416
    %3273 = vmatpush1.msra.mxu0 %v2415
    %3274 = vmatprep.subr.mxu0 %v2420
    %3275 = vmatpush1.msra.mxu0 %v2419
    %3276 = vmatprep.subr.mxu0 %v2424
    %3277 = vmatpush1.msra.mxu0 %v2423
    %3278 = vmatprep.subr.mxu0 %v2428
    %3279 = vmatpush1.msra.mxu0 %v2427
    %3280 = vmatprep.subr.mxu0 %v2432
    %3281 = vmatpush1.msra.mxu0 %v2431
    %3282 = vmatprep.subr.mxu0 %v2436
    %3283 = vmatpush1.msra.mxu0 %v2435
    %3284 = vmatprep.subr.mxu0 %v2440
    %3285 = vmatpush1.msra.mxu0 %v2439
    %3286 = vmatprep.subr.mxu0 %v2444
    %3287 = vmatpush1.msra.mxu0 %v2443
    %3288 = vmatprep.subr.mxu0 %v2448
    %3289 = vmatpush1.msra.mxu0 %v2447
    %3290 = vmatprep.subr.mxu0 %v2452
    %3291 = vmatpush1.msra.mxu0 %v2451
    %3292 = vmatprep.subr.mxu0 %v2456
    %3293 = vmatpush1.msra.mxu0 %v2455
    %3294 = vmatprep.subr.mxu0 %v2460
    %3295 = vmatpush1.msra.mxu0 %v2459
    %3296 = vmatprep.subr.mxu0 %v2464
    %3297 = vmatpush1.msra.mxu0 %v2463
    %3298 = vmatprep.subr.mxu0 %v2468
    %3299 = vmatpush1.msra.mxu0 %v2467
    %3300 = vmatprep.subr.mxu0 %v2472
    %3301 = vmatpush1.msra.mxu0 %v2471
    %3302 = vmatprep.mubr.f32.mxu0 %v2996
    %3303 = vmatmul.mubr.f32.gmra.mrb[0].mxu0 %v3166
    %v3304 = vpop.f32.mrb[0].mxu0
    %v3305 = vadd.f32 %v2486, %v3304
    %v3306 = vpop.f32.mrb[0].mxu0
    %v3307 = vadd.f32 %v2490, %v3306
    %3308 = vdwg.mxu0
    %v3309 = vxor.u32 %v3234, 2147483648
    %v3310 = vmul.f32 %v3309, 1.442695
    %v3311 = vpow.pop %v3310
    %v3312 = vadd.f32 %v3311, 1.0
    %v3313 = vrcp.pop %v3312
    %v3314 = vmul.f32 1.0, %v3313
    %v3315 = vxor.u32 %v3236, 2147483648
    %v3316 = vmul.f32 %v3315, 1.442695
    %v3317 = vpow.pop %v3316
    %v3318 = vadd.f32 %v3317, 1.0
    %v3319 = vrcp.pop %v3318
    %v3320 = vmul.f32 1.0, %v3319
    %v3321 = vtanh.pop %v3305
    %v3322 = vxor.u32 %v3307, 2147483648
    %v3323 = vmul.f32 %v3322, 1.442695
    %v3324 = vpow.pop %v3323
    %v3325 = vadd.f32 %v3324, 1.0
    %v3326 = vrcp.pop %v3325
    %v3327 = vmul.f32 1.0, %v3326
    %v3328 = vmul.f32 %v3320, %v2994
    %v3329 = vmul.f32 %v3314, %v3321
    %v3330 = vadd.f32 %v3328, %v3329
    %v3331 = vtanh.pop %v3330
    %v3332 = vmul.f32 %v3327, %v3331
    %3333 = vmatprep.subr.mxu0 %v2112
    %3334 = vmatpush1.msra.mxu0 %v2111
    %3335 = vmatprep.subr.mxu0 %v2116
    %3336 = vmatpush1.msra.mxu0 %v2115
    %3337 = vmatprep.subr.mxu0 %v2120
    %3338 = vmatpush1.msra.mxu0 %v2119
    %3339 = vmatprep.subr.mxu0 %v2124
    %3340 = vmatpush1.msra.mxu0 %v2123
    %3341 = vmatprep.subr.mxu0 %v2128
    %3342 = vmatpush1.msra.mxu0 %v2127
    %3343 = vmatprep.subr.mxu0 %v2132
    %3344 = vmatpush1.msra.mxu0 %v2131
    %3345 = vmatprep.subr.mxu0 %v2136
    %3346 = vmatpush1.msra.mxu0 %v2135
    %3347 = vmatprep.subr.mxu0 %v2140
    %3348 = vmatpush1.msra.mxu0 %v2139
    %3349 = vmatprep.subr.mxu0 %v2144
    %3350 = vmatpush1.msra.mxu0 %v2143
    %3351 = vmatprep.subr.mxu0 %v2148
    %3352 = vmatpush1.msra.mxu0 %v2147
    %3353 = vmatprep.subr.mxu0 %v2152
    %3354 = vmatpush1.msra.mxu0 %v2151
    %3355 = vmatprep.subr.mxu0 %v2156
    %3356 = vmatpush1.msra.mxu0 %v2155
    %3357 = vmatprep.subr.mxu0 %v2160
    %3358 = vmatpush1.msra.mxu0 %v2159
    %3359 = vmatprep.subr.mxu0 %v2164
    %3360 = vmatpush1.msra.mxu0 %v2163
    %3361 = vmatprep.subr.mxu0 %v2168
    %3362 = vmatpush1.msra.mxu0 %v2167
    %3363 = vmatprep.subr.mxu0 %v2172
    %3364 = vmatpush1.msra.mxu0 %v2171
    %3365 = vmatprep.subr.mxu0 0.0
    %3366 = vmatpush1.msra.mxu0 0.0
    %3367 = vmatprep.subr.mxu0 0.0
    %3368 = vmatpush1.msra.mxu0 0.0
    %3369 = vmatprep.subr.mxu0 0.0
    %3370 = vmatpush1.msra.mxu0 0.0
    %3371 = vmatprep.subr.mxu0 0.0
    %3372 = vmatpush1.msra.mxu0 0.0
    %3373 = vmatprep.subr.mxu0 0.0
    %3374 = vmatpush1.msra.mxu0 0.0
    %3375 = vmatprep.subr.mxu0 0.0
    %3376 = vmatpush1.msra.mxu0 0.0
    %3377 = vmatprep.subr.mxu0 0.0
    %3378 = vmatpush1.msra.mxu0 0.0
    %3379 = vmatprep.subr.mxu0 0.0
    %3380 = vmatpush1.msra.mxu0 0.0
    %3381 = vmatprep.subr.mxu0 0.0
    %3382 = vmatpush1.msra.mxu0 0.0
    %3383 = vmatprep.subr.mxu0 0.0
    %3384 = vmatpush1.msra.mxu0 0.0
    %3385 = vmatprep.subr.mxu0 0.0
    %3386 = vmatpush1.msra.mxu0 0.0
    %3387 = vmatprep.subr.mxu0 0.0
    %3388 = vmatpush1.msra.mxu0 0.0
    %3389 = vmatprep.subr.mxu0 0.0
    %3390 = vmatpush1.msra.mxu0 0.0
    %3391 = vmatprep.subr.mxu0 0.0
    %3392 = vmatpush1.msra.mxu0 0.0
    %3393 = vmatprep.subr.mxu0 0.0
    %3394 = vmatpush1.msra.mxu0 0.0
    %3395 = vmatprep.subr.mxu0 0.0
    %3396 = vmatpush1.msra.mxu0 0.0
    %3397 = vmatprep.mubr.f32.mxu0 0.0
    %3398 = vmatmul.mubr.f32.gmra.mrb[0].mxu0 %v3166
    %v3399 = vpop.f32.mrb[0].mxu0
    %v3400 = vadd.f32 0.0, %v3399
    %v3401 = vpop.f32.mrb[0].mxu0
    %v3402 = vadd.f32 0.0, %v3401
    %3403 = vdwg.mxu0
    %3404 = vmatprep.subr.mxu0 %v2114
    %3405 = vmatpush1.msra.mxu0 %v2113
    %3406 = vmatprep.subr.mxu0 %v2118
    %3407 = vmatpush1.msra.mxu0 %v2117
    %3408 = vmatprep.subr.mxu0 %v2122
    %3409 = vmatpush1.msra.mxu0 %v2121
    %3410 = vmatprep.subr.mxu0 %v2126
    %3411 = vmatpush1.msra.mxu0 %v2125
    %3412 = vmatprep.subr.mxu0 %v2130
    %3413 = vmatpush1.msra.mxu0 %v2129
    %3414 = vmatprep.subr.mxu0 %v2134
    %3415 = vmatpush1.msra.mxu0 %v2133
    %3416 = vmatprep.subr.mxu0 %v2138
    %3417 = vmatpush1.msra.mxu0 %v2137
    %3418 = vmatprep.subr.mxu0 %v2142
    %3419 = vmatpush1.msra.mxu0 %v2141
    %3420 = vmatprep.subr.mxu0 %v2146
    %3421 = vmatpush1.msra.mxu0 %v2145
    %3422 = vmatprep.subr.mxu0 %v2150
    %3423 = vmatpush1.msra.mxu0 %v2149
    %3424 = vmatprep.subr.mxu0 %v2154
    %3425 = vmatpush1.msra.mxu0 %v2153
    %3426 = vmatprep.subr.mxu0 %v2158
    %3427 = vmatpush1.msra.mxu0 %v2157
    %3428 = vmatprep.subr.mxu0 %v2162
    %3429 = vmatpush1.msra.mxu0 %v2161
    %3430 = vmatprep.subr.mxu0 %v2166
    %3431 = vmatpush1.msra.mxu0 %v2165
    %3432 = vmatprep.subr.mxu0 %v2170
    %3433 = vmatpush1.msra.mxu0 %v2169
    %3434 = vmatprep.subr.mxu0 %v2174
    %3435 = vmatpush1.msra.mxu0 %v2173
    %3436 = vmatprep.subr.mxu0 0.0
    %3437 = vmatpush1.msra.mxu0 0.0
    %3438 = vmatprep.subr.mxu0 0.0
    %3439 = vmatpush1.msra.mxu0 0.0
    %3440 = vmatprep.subr.mxu0 0.0
    %3441 = vmatpush1.msra.mxu0 0.0
    %3442 = vmatprep.subr.mxu0 0.0
    %3443 = vmatpush1.msra.mxu0 0.0
    %3444 = vmatprep.subr.mxu0 0.0
    %3445 = vmatpush1.msra.mxu0 0.0
    %3446 = vmatprep.subr.mxu0 0.0
    %3447 = vmatpush1.msra.mxu0 0.0
    %3448 = vmatprep.subr.mxu0 0.0
    %3449 = vmatpush1.msra.mxu0 0.0
    %3450 = vmatprep.subr.mxu0 0.0
    %3451 = vmatpush1.msra.mxu0 0.0
    %3452 = vmatprep.subr.mxu0 0.0
    %3453 = vmatpush1.msra.mxu0 0.0
    %3454 = vmatprep.subr.mxu0 0.0
    %3455 = vmatpush1.msra.mxu0 0.0
    %3456 = vmatprep.subr.mxu0 0.0
    %3457 = vmatpush1.msra.mxu0 0.0
    %3458 = vmatprep.subr.mxu0 0.0
    %3459 = vmatpush1.msra.mxu0 0.0
    %3460 = vmatprep.subr.mxu0 0.0
    %3461 = vmatpush1.msra.mxu0 0.0
    %3462 = vmatprep.subr.mxu0 0.0
    %3463 = vmatpush1.msra.mxu0 0.0
    %3464 = vmatprep.subr.mxu0 0.0
    %3465 = vmatpush1.msra.mxu0 0.0
    %3466 = vmatprep.subr.mxu0 0.0
    %3467 = vmatpush1.msra.mxu0 0.0
    %3468 = vmatprep.mubr.f32.mxu0 0.0
    %3469 = vmatmul.mubr.f32.gmra.mrb[0].mxu0 %v3166
    %v3470 = vpop.f32.mrb[0].mxu0
    %v3471 = vadd.f32 0.0, %v3470
    %v3472 = vpop.f32.mrb[0].mxu0
    %v3473 = vadd.f32 0.0, %v3472
    %3474 = vdwg.mxu0
    %v3475 = vadd.f32 %v1970, %v3400
    %v3476 = vadd.f32 %v1972, %v3402
    %v3477 = vadd.f32 %v2083, %v3471
    %v3478 = vadd.f32 %v2085, %v3473
    %v3479 = vxor.u32 %v3475, 2147483648
    %v3480 = vmul.f32 %v3479, 1.442695
    %v3481 = vpow.pop %v3480
    %v3482 = vadd.f32 %v3481, 1.0
    %v3483 = vrcp.pop %v3482
    %v3484 = vmul.f32 1.0, %v3483
    %v3485 = vxor.u32 %v3476, 2147483648
    %v3486 = vmul.f32 %v3485, 1.442695
    %v3487 = vpow.pop %v3486
    %v3488 = vadd.f32 %v3487, 1.0
    %v3489 = vrcp.pop %v3488
    %v3490 = vmul.f32 1.0, %v3489
    %v3491 = vtanh.pop %v3477
    %v3492 = vxor.u32 %v3478, 2147483648
    %v3493 = vmul.f32 %v3492, 1.442695
    %v3494 = vpow.pop %v3493
    %v3495 = vadd.f32 %v3494, 1.0
    %v3496 = vrcp.pop %v3495
    %v3497 = vmul.f32 1.0, %v3496
    %v3498 = vmul.f32 %v3490, %v3164
    %v3499 = vmul.f32 %v3484, %v3491
    %v3500 = vadd.f32 %v3498, %v3499
    %v3501 = vtanh.pop %v3500
    %v3502 = vmul.f32 %v3497, %v3501
    %3503 = vmatprep.subr.mxu0 %v2346
    %3504 = vmatpush1.msra.mxu0 %v2345
    %3505 = vmatprep.subr.mxu0 %v2350
    %3506 = vmatpush1.msra.mxu0 %v2349
    %3507 = vmatprep.subr.mxu0 %v2354
    %3508 = vmatpush1.msra.mxu0 %v2353
    %3509 = vmatprep.subr.mxu0 %v2358
    %3510 = vmatpush1.msra.mxu0 %v2357
    %3511 = vmatprep.subr.mxu0 %v2362
    %3512 = vmatpush1.msra.mxu0 %v2361
    %3513 = vmatprep.subr.mxu0 %v2366
    %3514 = vmatpush1.msra.mxu0 %v2365
    %3515 = vmatprep.subr.mxu0 %v2370
    %3516 = vmatpush1.msra.mxu0 %v2369
    %3517 = vmatprep.subr.mxu0 %v2374
    %3518 = vmatpush1.msra.mxu0 %v2373
    %3519 = vmatprep.subr.mxu0 %v2378
    %3520 = vmatpush1.msra.mxu0 %v2377
    %3521 = vmatprep.subr.mxu0 %v2382
    %3522 = vmatpush1.msra.mxu0 %v2381
    %3523 = vmatprep.subr.mxu0 %v2386
    %3524 = vmatpush1.msra.mxu0 %v2385
    %3525 = vmatprep.subr.mxu0 %v2390
    %3526 = vmatpush1.msra.mxu0 %v2389
    %3527 = vmatprep.subr.mxu0 %v2394
    %3528 = vmatpush1.msra.mxu0 %v2393
    %3529 = vmatprep.subr.mxu0 %v2398
    %3530 = vmatpush1.msra.mxu0 %v2397
    %3531 = vmatprep.subr.mxu0 %v2402
    %3532 = vmatpush1.msra.mxu0 %v2401
    %3533 = vmatprep.subr.mxu0 %v2406
    %3534 = vmatpush1.msra.mxu0 %v2405
    %3535 = vmatprep.subr.mxu0 %v2410
    %3536 = vmatpush1.msra.mxu0 %v2409
    %3537 = vmatprep.subr.mxu0 %v2414
    %3538 = vmatpush1.msra.mxu0 %v2413
    %3539 = vmatprep.subr.mxu0 %v2418
    %3540 = vmatpush1.msra.mxu0 %v2417
    %3541 = vmatprep.subr.mxu0 %v2422
    %3542 = vmatpush1.msra.mxu0 %v2421
    %3543 = vmatprep.subr.mxu0 %v2426
    %3544 = vmatpush1.msra.mxu0 %v2425
    %3545 = vmatprep.subr.mxu0 %v2430
    %3546 = vmatpush1.msra.mxu0 %v2429
    %3547 = vmatprep.subr.mxu0 %v2434
    %3548 = vmatpush1.msra.mxu0 %v2433
    %3549 = vmatprep.subr.mxu0 %v2438
    %3550 = vmatpush1.msra.mxu0 %v2437
    %3551 = vmatprep.subr.mxu0 %v2442
    %3552 = vmatpush1.msra.mxu0 %v2441
    %3553 = vmatprep.subr.mxu0 %v2446
    %3554 = vmatpush1.msra.mxu0 %v2445
    %3555 = vmatprep.subr.mxu0 %v2450
    %3556 = vmatpush1.msra.mxu0 %v2449
    %3557 = vmatprep.subr.mxu0 %v2454
    %3558 = vmatpush1.msra.mxu0 %v2453
    %3559 = vmatprep.subr.mxu0 %v2458
    %3560 = vmatpush1.msra.mxu0 %v2457
    %3561 = vmatprep.subr.mxu0 %v2462
    %3562 = vmatpush1.msra.mxu0 %v2461
    %3563 = vmatprep.subr.mxu0 %v2466
    %3564 = vmatpush1.msra.mxu0 %v2465
    %3565 = vmatprep.subr.mxu0 %v2470
    %3566 = vmatpush1.msra.mxu0 %v2469
    %3567 = vmatprep.mubr.f32.mxu0 %v3332
    %3568 = vmatmul.mubr.f32.gmra.mrb[0].mxu0 %v3502
    %v3569 = vpop.f32.mrb[0].mxu0
    %v3570 = vadd.f32 %v2478, %v3569
    %v3571 = vpop.f32.mrb[0].mxu0
    %v3572 = vadd.f32 %v2482, %v3571
    %3573 = vdwg.mxu0
    %3574 = vmatprep.subr.mxu0 %v2348
    %3575 = vmatpush1.msra.mxu0 %v2347
    %3576 = vmatprep.subr.mxu0 %v2352
    %3577 = vmatpush1.msra.mxu0 %v2351
    %3578 = vmatprep.subr.mxu0 %v2356
    %3579 = vmatpush1.msra.mxu0 %v2355
    %3580 = vmatprep.subr.mxu0 %v2360
    %3581 = vmatpush1.msra.mxu0 %v2359
    %3582 = vmatprep.subr.mxu0 %v2364
    %3583 = vmatpush1.msra.mxu0 %v2363
    %3584 = vmatprep.subr.mxu0 %v2368
    %3585 = vmatpush1.msra.mxu0 %v2367
    %3586 = vmatprep.subr.mxu0 %v2372
    %3587 = vmatpush1.msra.mxu0 %v2371
    %3588 = vmatprep.subr.mxu0 %v2376
    %3589 = vmatpush1.msra.mxu0 %v2375
    %3590 = vmatprep.subr.mxu0 %v2380
    %3591 = vmatpush1.msra.mxu0 %v2379
    %3592 = vmatprep.subr.mxu0 %v2384
    %3593 = vmatpush1.msra.mxu0 %v2383
    %3594 = vmatprep.subr.mxu0 %v2388
    %3595 = vmatpush1.msra.mxu0 %v2387
    %3596 = vmatprep.subr.mxu0 %v2392
    %3597 = vmatpush1.msra.mxu0 %v2391
    %3598 = vmatprep.subr.mxu0 %v2396
    %3599 = vmatpush1.msra.mxu0 %v2395
    %3600 = vmatprep.subr.mxu0 %v2400
    %3601 = vmatpush1.msra.mxu0 %v2399
    %3602 = vmatprep.subr.mxu0 %v2404
    %3603 = vmatpush1.msra.mxu0 %v2403
    %3604 = vmatprep.subr.mxu0 %v2408
    %3605 = vmatpush1.msra.mxu0 %v2407
    %3606 = vmatprep.subr.mxu0 %v2412
    %3607 = vmatpush1.msra.mxu0 %v2411
    %3608 = vmatprep.subr.mxu0 %v2416
    %3609 = vmatpush1.msra.mxu0 %v2415
    %3610 = vmatprep.subr.mxu0 %v2420
    %3611 = vmatpush1.msra.mxu0 %v2419
    %3612 = vmatprep.subr.mxu0 %v2424
    %3613 = vmatpush1.msra.mxu0 %v2423
    %3614 = vmatprep.subr.mxu0 %v2428
    %3615 = vmatpush1.msra.mxu0 %v2427
    %3616 = vmatprep.subr.mxu0 %v2432
    %3617 = vmatpush1.msra.mxu0 %v2431
    %3618 = vmatprep.subr.mxu0 %v2436
    %3619 = vmatpush1.msra.mxu0 %v2435
    %3620 = vmatprep.subr.mxu0 %v2440
    %3621 = vmatpush1.msra.mxu0 %v2439
    %3622 = vmatprep.subr.mxu0 %v2444
    %3623 = vmatpush1.msra.mxu0 %v2443
    %3624 = vmatprep.subr.mxu0 %v2448
    %3625 = vmatpush1.msra.mxu0 %v2447
    %3626 = vmatprep.subr.mxu0 %v2452
    %3627 = vmatpush1.msra.mxu0 %v2451
    %3628 = vmatprep.subr.mxu0 %v2456
    %3629 = vmatpush1.msra.mxu0 %v2455
    %3630 = vmatprep.subr.mxu0 %v2460
    %3631 = vmatpush1.msra.mxu0 %v2459
    %3632 = vmatprep.subr.mxu0 %v2464
    %3633 = vmatpush1.msra.mxu0 %v2463
    %3634 = vmatprep.subr.mxu0 %v2468
    %3635 = vmatpush1.msra.mxu0 %v2467
    %3636 = vmatprep.subr.mxu0 %v2472
    %3637 = vmatpush1.msra.mxu0 %v2471
    %3638 = vmatprep.mubr.f32.mxu0 %v3332
    %3639 = vmatmul.mubr.f32.gmra.mrb[0].mxu0 %v3502
    %v3640 = vpop.f32.mrb[0].mxu0
    %v3641 = vadd.f32 %v2486, %v3640
    %v3642 = vpop.f32.mrb[0].mxu0
    %v3643 = vadd.f32 %v2490, %v3642
    %3644 = vdwg.mxu0
    %v3645 = vxor.u32 %v3570, 2147483648
    %v3646 = vmul.f32 %v3645, 1.442695
    %v3647 = vpow.pop %v3646
    %v3648 = vadd.f32 %v3647, 1.0
    %v3649 = vrcp.pop %v3648
    %v3650 = vmul.f32 1.0, %v3649
    %v3651 = vxor.u32 %v3572, 2147483648
    %v3652 = vmul.f32 %v3651, 1.442695
    %v3653 = vpow.pop %v3652
    %v3654 = vadd.f32 %v3653, 1.0
    %v3655 = vrcp.pop %v3654
    %v3656 = vmul.f32 1.0, %v3655
    %v3657 = vtanh.pop %v3641
    %v3658 = vxor.u32 %v3643, 2147483648
    %v3659 = vmul.f32 %v3658, 1.442695
    %v3660 = vpow.pop %v3659
    %v3661 = vadd.f32 %v3660, 1.0
    %v3662 = vrcp.pop %v3661
    %v3663 = vmul.f32 1.0, %v3662
    %v3664 = vmul.f32 %v3656, %v3330
    %v3665 = vmul.f32 %v3650, %v3657
    %v3666 = vadd.f32 %v3664, %v3665
    %v3667 = vtanh.pop %v3666
    %v3668 = vmul.f32 %v3663, %v3667
    %3669 = vmatprep.subr.mxu0 %v2112
    %3670 = vmatpush1.msra.mxu0 %v2111
    %3671 = vmatprep.subr.mxu0 %v2116
    %3672 = vmatpush1.msra.mxu0 %v2115
    %3673 = vmatprep.subr.mxu0 %v2120
    %3674 = vmatpush1.msra.mxu0 %v2119
    %3675 = vmatprep.subr.mxu0 %v2124
    %3676 = vmatpush1.msra.mxu0 %v2123
    %3677 = vmatprep.subr.mxu0 %v2128
    %3678 = vmatpush1.msra.mxu0 %v2127
    %3679 = vmatprep.subr.mxu0 %v2132
    %3680 = vmatpush1.msra.mxu0 %v2131
    %3681 = vmatprep.subr.mxu0 %v2136
    %3682 = vmatpush1.msra.mxu0 %v2135
    %3683 = vmatprep.subr.mxu0 %v2140
    %3684 = vmatpush1.msra.mxu0 %v2139
    %3685 = vmatprep.subr.mxu0 %v2144
    %3686 = vmatpush1.msra.mxu0 %v2143
    %3687 = vmatprep.subr.mxu0 %v2148
    %3688 = vmatpush1.msra.mxu0 %v2147
    %3689 = vmatprep.subr.mxu0 %v2152
    %3690 = vmatpush1.msra.mxu0 %v2151
    %3691 = vmatprep.subr.mxu0 %v2156
    %3692 = vmatpush1.msra.mxu0 %v2155
    %3693 = vmatprep.subr.mxu0 %v2160
    %3694 = vmatpush1.msra.mxu0 %v2159
    %3695 = vmatprep.subr.mxu0 %v2164
    %3696 = vmatpush1.msra.mxu0 %v2163
    %3697 = vmatprep.subr.mxu0 %v2168
    %3698 = vmatpush1.msra.mxu0 %v2167
    %3699 = vmatprep.subr.mxu0 %v2172
    %3700 = vmatpush1.msra.mxu0 %v2171
    %3701 = vmatprep.subr.mxu0 0.0
    %3702 = vmatpush1.msra.mxu0 0.0
    %3703 = vmatprep.subr.mxu0 0.0
    %3704 = vmatpush1.msra.mxu0 0.0
    %3705 = vmatprep.subr.mxu0 0.0
    %3706 = vmatpush1.msra.mxu0 0.0
    %3707 = vmatprep.subr.mxu0 0.0
    %3708 = vmatpush1.msra.mxu0 0.0
    %3709 = vmatprep.subr.mxu0 0.0
    %3710 = vmatpush1.msra.mxu0 0.0
    %3711 = vmatprep.subr.mxu0 0.0
    %3712 = vmatpush1.msra.mxu0 0.0
    %3713 = vmatprep.subr.mxu0 0.0
    %3714 = vmatpush1.msra.mxu0 0.0
    %3715 = vmatprep.subr.mxu0 0.0
    %3716 = vmatpush1.msra.mxu0 0.0
    %3717 = vmatprep.subr.mxu0 0.0
    %3718 = vmatpush1.msra.mxu0 0.0
    %3719 = vmatprep.subr.mxu0 0.0
    %3720 = vmatpush1.msra.mxu0 0.0
    %3721 = vmatprep.subr.mxu0 0.0
    %3722 = vmatpush1.msra.mxu0 0.0
    %3723 = vmatprep.subr.mxu0 0.0
    %3724 = vmatpush1.msra.mxu0 0.0
    %3725 = vmatprep.subr.mxu0 0.0
    %3726 = vmatpush1.msra.mxu0 0.0
    %3727 = vmatprep.subr.mxu0 0.0
    %3728 = vmatpush1.msra.mxu0 0.0
    %3729 = vmatprep.subr.mxu0 0.0
    %3730 = vmatpush1.msra.mxu0 0.0
    %3731 = vmatprep.subr.mxu0 0.0
    %3732 = vmatpush1.msra.mxu0 0.0
    %3733 = vmatprep.mubr.f32.mxu0 0.0
    %3734 = vmatmul.mubr.f32.gmra.mrb[0].mxu0 %v3502
    %v3735 = vpop.f32.mrb[0].mxu0
    %v3736 = vadd.f32 0.0, %v3735
    %v3737 = vpop.f32.mrb[0].mxu0
    %v3738 = vadd.f32 0.0, %v3737
    %3739 = vdwg.mxu0
    %3740 = vmatprep.subr.mxu0 %v2114
    %3741 = vmatpush1.msra.mxu0 %v2113
    %3742 = vmatprep.subr.mxu0 %v2118
    %3743 = vmatpush1.msra.mxu0 %v2117
    %3744 = vmatprep.subr.mxu0 %v2122
    %3745 = vmatpush1.msra.mxu0 %v2121
    %3746 = vmatprep.subr.mxu0 %v2126
    %3747 = vmatpush1.msra.mxu0 %v2125
    %3748 = vmatprep.subr.mxu0 %v2130
    %3749 = vmatpush1.msra.mxu0 %v2129
    %3750 = vmatprep.subr.mxu0 %v2134
    %3751 = vmatpush1.msra.mxu0 %v2133
    %3752 = vmatprep.subr.mxu0 %v2138
    %3753 = vmatpush1.msra.mxu0 %v2137
    %3754 = vmatprep.subr.mxu0 %v2142
    %3755 = vmatpush1.msra.mxu0 %v2141
    %3756 = vmatprep.subr.mxu0 %v2146
    %3757 = vmatpush1.msra.mxu0 %v2145
    %3758 = vmatprep.subr.mxu0 %v2150
    %3759 = vmatpush1.msra.mxu0 %v2149
    %3760 = vmatprep.subr.mxu0 %v2154
    %3761 = vmatpush1.msra.mxu0 %v2153
    %3762 = vmatprep.subr.mxu0 %v2158
    %3763 = vmatpush1.msra.mxu0 %v2157
    %3764 = vmatprep.subr.mxu0 %v2162
    %3765 = vmatpush1.msra.mxu0 %v2161
    %3766 = vmatprep.subr.mxu0 %v2166
    %3767 = vmatpush1.msra.mxu0 %v2165
    %3768 = vmatprep.subr.mxu0 %v2170
    %3769 = vmatpush1.msra.mxu0 %v2169
    %3770 = vmatprep.subr.mxu0 %v2174
    %3771 = vmatpush1.msra.mxu0 %v2173
    %3772 = vmatprep.subr.mxu0 0.0
    %3773 = vmatpush1.msra.mxu0 0.0
    %3774 = vmatprep.subr.mxu0 0.0
    %3775 = vmatpush1.msra.mxu0 0.0
    %3776 = vmatprep.subr.mxu0 0.0
    %3777 = vmatpush1.msra.mxu0 0.0
    %3778 = vmatprep.subr.mxu0 0.0
    %3779 = vmatpush1.msra.mxu0 0.0
    %3780 = vmatprep.subr.mxu0 0.0
    %3781 = vmatpush1.msra.mxu0 0.0
    %3782 = vmatprep.subr.mxu0 0.0
    %3783 = vmatpush1.msra.mxu0 0.0
    %3784 = vmatprep.subr.mxu0 0.0
    %3785 = vmatpush1.msra.mxu0 0.0
    %3786 = vmatprep.subr.mxu0 0.0
    %3787 = vmatpush1.msra.mxu0 0.0
    %3788 = vmatprep.subr.mxu0 0.0
    %3789 = vmatpush1.msra.mxu0 0.0
    %3790 = vmatprep.subr.mxu0 0.0
    %3791 = vmatpush1.msra.mxu0 0.0
    %3792 = vmatprep.subr.mxu0 0.0
    %3793 = vmatpush1.msra.mxu0 0.0
    %3794 = vmatprep.subr.mxu0 0.0
    %3795 = vmatpush1.msra.mxu0 0.0
    %3796 = vmatprep.subr.mxu0 0.0
    %3797 = vmatpush1.msra.mxu0 0.0
    %3798 = vmatprep.subr.mxu0 0.0
    %3799 = vmatpush1.msra.mxu0 0.0
    %3800 = vmatprep.subr.mxu0 0.0
    %3801 = vmatpush1.msra.mxu0 0.0
    %3802 = vmatprep.subr.mxu0 0.0
    %3803 = vmatpush1.msra.mxu0 0.0
    %3804 = vmatprep.mubr.f32.mxu0 0.0
    %3805 = vmatmul.mubr.f32.gmra.mrb[0].mxu0 %v3502
    %v3806 = vpop.f32.mrb[0].mxu0
    %v3807 = vadd.f32 0.0, %v3806
    %v3808 = vpop.f32.mrb[0].mxu0
    %v3809 = vadd.f32 0.0, %v3808
    %3810 = vdwg.mxu0
    %v3811 = vadd.f32 %v1976, %v3736
    %v3812 = vadd.f32 %v1978, %v3738
    %v3813 = vadd.f32 %v2089, %v3807
    %v3814 = vadd.f32 %v2091, %v3809
    %v3815 = vxor.u32 %v3811, 2147483648
    %v3816 = vmul.f32 %v3815, 1.442695
    %v3817 = vpow.pop %v3816
    %v3818 = vadd.f32 %v3817, 1.0
    %v3819 = vrcp.pop %v3818
    %v3820 = vmul.f32 1.0, %v3819
    %v3821 = vxor.u32 %v3812, 2147483648
    %v3822 = vmul.f32 %v3821, 1.442695
    %v3823 = vpow.pop %v3822
    %v3824 = vadd.f32 %v3823, 1.0
    %v3825 = vrcp.pop %v3824
    %v3826 = vmul.f32 1.0, %v3825
    %v3827 = vtanh.pop %v3813
    %v3828 = vxor.u32 %v3814, 2147483648
    %v3829 = vmul.f32 %v3828, 1.442695
    %v3830 = vpow.pop %v3829
    %v3831 = vadd.f32 %v3830, 1.0
    %v3832 = vrcp.pop %v3831
    %v3833 = vmul.f32 1.0, %v3832
    %v3834 = vmul.f32 %v3826, %v3500
    %v3835 = vmul.f32 %v3820, %v3827
    %v3836 = vadd.f32 %v3834, %v3835
    %v3837 = vtanh.pop %v3836
    %v3838 = vmul.f32 %v3833, %v3837
    %3839 = vmatprep.subr.mxu0 %v2346
    %3840 = vmatpush1.msra.mxu0 %v2345
    %3841 = vmatprep.subr.mxu0 %v2350
    %3842 = vmatpush1.msra.mxu0 %v2349
    %3843 = vmatprep.subr.mxu0 %v2354
    %3844 = vmatpush1.msra.mxu0 %v2353
    %3845 = vmatprep.subr.mxu0 %v2358
    %3846 = vmatpush1.msra.mxu0 %v2357
    %3847 = vmatprep.subr.mxu0 %v2362
    %3848 = vmatpush1.msra.mxu0 %v2361
    %3849 = vmatprep.subr.mxu0 %v2366
    %3850 = vmatpush1.msra.mxu0 %v2365
    %3851 = vmatprep.subr.mxu0 %v2370
    %3852 = vmatpush1.msra.mxu0 %v2369
    %3853 = vmatprep.subr.mxu0 %v2374
    %3854 = vmatpush1.msra.mxu0 %v2373
    %3855 = vmatprep.subr.mxu0 %v2378
    %3856 = vmatpush1.msra.mxu0 %v2377
    %3857 = vmatprep.subr.mxu0 %v2382
    %3858 = vmatpush1.msra.mxu0 %v2381
    %3859 = vmatprep.subr.mxu0 %v2386
    %3860 = vmatpush1.msra.mxu0 %v2385
    %3861 = vmatprep.subr.mxu0 %v2390
    %3862 = vmatpush1.msra.mxu0 %v2389
    %3863 = vmatprep.subr.mxu0 %v2394
    %3864 = vmatpush1.msra.mxu0 %v2393
    %3865 = vmatprep.subr.mxu0 %v2398
    %3866 = vmatpush1.msra.mxu0 %v2397
    %3867 = vmatprep.subr.mxu0 %v2402
    %3868 = vmatpush1.msra.mxu0 %v2401
    %3869 = vmatprep.subr.mxu0 %v2406
    %3870 = vmatpush1.msra.mxu0 %v2405
    %3871 = vmatprep.subr.mxu0 %v2410
    %3872 = vmatpush1.msra.mxu0 %v2409
    %3873 = vmatprep.subr.mxu0 %v2414
    %3874 = vmatpush1.msra.mxu0 %v2413
    %3875 = vmatprep.subr.mxu0 %v2418
    %3876 = vmatpush1.msra.mxu0 %v2417
    %3877 = vmatprep.subr.mxu0 %v2422
    %3878 = vmatpush1.msra.mxu0 %v2421
    %3879 = vmatprep.subr.mxu0 %v2426
    %3880 = vmatpush1.msra.mxu0 %v2425
    %3881 = vmatprep.subr.mxu0 %v2430
    %3882 = vmatpush1.msra.mxu0 %v2429
    %3883 = vmatprep.subr.mxu0 %v2434
    %3884 = vmatpush1.msra.mxu0 %v2433
    %3885 = vmatprep.subr.mxu0 %v2438
    %3886 = vmatpush1.msra.mxu0 %v2437
    %3887 = vmatprep.subr.mxu0 %v2442
    %3888 = vmatpush1.msra.mxu0 %v2441
    %3889 = vmatprep.subr.mxu0 %v2446
    %3890 = vmatpush1.msra.mxu0 %v2445
    %3891 = vmatprep.subr.mxu0 %v2450
    %3892 = vmatpush1.msra.mxu0 %v2449
    %3893 = vmatprep.subr.mxu0 %v2454
    %3894 = vmatpush1.msra.mxu0 %v2453
    %3895 = vmatprep.subr.mxu0 %v2458
    %3896 = vmatpush1.msra.mxu0 %v2457
    %3897 = vmatprep.subr.mxu0 %v2462
    %3898 = vmatpush1.msra.mxu0 %v2461
    %3899 = vmatprep.subr.mxu0 %v2466
    %3900 = vmatpush1.msra.mxu0 %v2465
    %3901 = vmatprep.subr.mxu0 %v2470
    %3902 = vmatpush1.msra.mxu0 %v2469
    %3903 = vmatprep.mubr.f32.mxu0 %v3668
    %3904 = vmatmul.mubr.f32.gmra.mrb[0].mxu0 %v3838
    %v3905 = vpop.f32.mrb[0].mxu0
    %v3906 = vadd.f32 %v2478, %v3905
    %v3907 = vpop.f32.mrb[0].mxu0
    %v3908 = vadd.f32 %v2482, %v3907
    %3909 = vdwg.mxu0
    %3910 = vmatprep.subr.mxu0 %v2348
    %3911 = vmatpush1.msra.mxu0 %v2347
    %3912 = vmatprep.subr.mxu0 %v2352
    %3913 = vmatpush1.msra.mxu0 %v2351
    %3914 = vmatprep.subr.mxu0 %v2356
    %3915 = vmatpush1.msra.mxu0 %v2355
    %3916 = vmatprep.subr.mxu0 %v2360
    %3917 = vmatpush1.msra.mxu0 %v2359
    %3918 = vmatprep.subr.mxu0 %v2364
    %3919 = vmatpush1.msra.mxu0 %v2363
    %3920 = vmatprep.subr.mxu0 %v2368
    %3921 = vmatpush1.msra.mxu0 %v2367
    %3922 = vmatprep.subr.mxu0 %v2372
    %3923 = vmatpush1.msra.mxu0 %v2371
    %3924 = vmatprep.subr.mxu0 %v2376
    %3925 = vmatpush1.msra.mxu0 %v2375
    %3926 = vmatprep.subr.mxu0 %v2380
    %3927 = vmatpush1.msra.mxu0 %v2379
    %3928 = vmatprep.subr.mxu0 %v2384
    %3929 = vmatpush1.msra.mxu0 %v2383
    %3930 = vmatprep.subr.mxu0 %v2388
    %3931 = vmatpush1.msra.mxu0 %v2387
    %3932 = vmatprep.subr.mxu0 %v2392
    %3933 = vmatpush1.msra.mxu0 %v2391
    %3934 = vmatprep.subr.mxu0 %v2396
    %3935 = vmatpush1.msra.mxu0 %v2395
    %3936 = vmatprep.subr.mxu0 %v2400
    %3937 = vmatpush1.msra.mxu0 %v2399
    %3938 = vmatprep.subr.mxu0 %v2404
    %3939 = vmatpush1.msra.mxu0 %v2403
    %3940 = vmatprep.subr.mxu0 %v2408
    %3941 = vmatpush1.msra.mxu0 %v2407
    %3942 = vmatprep.subr.mxu0 %v2412
    %3943 = vmatpush1.msra.mxu0 %v2411
    %3944 = vmatprep.subr.mxu0 %v2416
    %3945 = vmatpush1.msra.mxu0 %v2415
    %3946 = vmatprep.subr.mxu0 %v2420
    %3947 = vmatpush1.msra.mxu0 %v2419
    %3948 = vmatprep.subr.mxu0 %v2424
    %3949 = vmatpush1.msra.mxu0 %v2423
    %3950 = vmatprep.subr.mxu0 %v2428
    %3951 = vmatpush1.msra.mxu0 %v2427
    %3952 = vmatprep.subr.mxu0 %v2432
    %3953 = vmatpush1.msra.mxu0 %v2431
    %3954 = vmatprep.subr.mxu0 %v2436
    %3955 = vmatpush1.msra.mxu0 %v2435
    %3956 = vmatprep.subr.mxu0 %v2440
    %3957 = vmatpush1.msra.mxu0 %v2439
    %3958 = vmatprep.subr.mxu0 %v2444
    %3959 = vmatpush1.msra.mxu0 %v2443
    %3960 = vmatprep.subr.mxu0 %v2448
    %3961 = vmatpush1.msra.mxu0 %v2447
    %3962 = vmatprep.subr.mxu0 %v2452
    %3963 = vmatpush1.msra.mxu0 %v2451
    %3964 = vmatprep.subr.mxu0 %v2456
    %3965 = vmatpush1.msra.mxu0 %v2455
    %3966 = vmatprep.subr.mxu0 %v2460
    %3967 = vmatpush1.msra.mxu0 %v2459
    %3968 = vmatprep.subr.mxu0 %v2464
    %3969 = vmatpush1.msra.mxu0 %v2463
    %3970 = vmatprep.subr.mxu0 %v2468
    %3971 = vmatpush1.msra.mxu0 %v2467
    %3972 = vmatprep.subr.mxu0 %v2472
    %3973 = vmatpush1.msra.mxu0 %v2471
    %3974 = vmatprep.mubr.f32.mxu0 %v3668
    %3975 = vmatmul.mubr.f32.gmra.mrb[0].mxu0 %v3838
    %v3976 = vpop.f32.mrb[0].mxu0
    %v3977 = vadd.f32 %v2486, %v3976
    %v3978 = vpop.f32.mrb[0].mxu0
    %v3979 = vadd.f32 %v2490, %v3978
    %3980 = vdwg.mxu0
    %v3981 = vxor.u32 %v3906, 2147483648
    %v3982 = vmul.f32 %v3981, 1.442695
    %v3983 = vpow.pop %v3982
    %v3984 = vadd.f32 %v3983, 1.0
    %v3985 = vrcp.pop %v3984
    %v3986 = vmul.f32 1.0, %v3985
    %v3987 = vxor.u32 %v3908, 2147483648
    %v3988 = vmul.f32 %v3987, 1.442695
    %v3989 = vpow.pop %v3988
    %v3990 = vadd.f32 %v3989, 1.0
    %v3991 = vrcp.pop %v3990
    %v3992 = vmul.f32 1.0, %v3991
    %v3993 = vtanh.pop %v3977
    %v3994 = vxor.u32 %v3979, 2147483648
    %v3995 = vmul.f32 %v3994, 1.442695
    %v3996 = vpow.pop %v3995
    %v3997 = vadd.f32 %v3996, 1.0
    %v3998 = vrcp.pop %v3997
    %v3999 = vmul.f32 1.0, %v3998
    %v4000 = vmul.f32 %v3992, %v3666
    %v4001 = vmul.f32 %v3986, %v3993
    %v4002 = vadd.f32 %v4000, %v4001
    %v4003 = vtanh.pop %v4002
    %v4004 = vmul.f32 %v3999, %v4003
    %4005 = vmatprep.subr.mxu0 %v2112
    %4006 = vmatpush1.msra.mxu0 %v2111
    %4007 = vmatprep.subr.mxu0 %v2116
    %4008 = vmatpush1.msra.mxu0 %v2115
    %4009 = vmatprep.subr.mxu0 %v2120
    %4010 = vmatpush1.msra.mxu0 %v2119
    %4011 = vmatprep.subr.mxu0 %v2124
    %4012 = vmatpush1.msra.mxu0 %v2123
    %4013 = vmatprep.subr.mxu0 %v2128
    %4014 = vmatpush1.msra.mxu0 %v2127
    %4015 = vmatprep.subr.mxu0 %v2132
    %4016 = vmatpush1.msra.mxu0 %v2131
    %4017 = vmatprep.subr.mxu0 %v2136
    %4018 = vmatpush1.msra.mxu0 %v2135
    %4019 = vmatprep.subr.mxu0 %v2140
    %4020 = vmatpush1.msra.mxu0 %v2139
    %4021 = vmatprep.subr.mxu0 %v2144
    %4022 = vmatpush1.msra.mxu0 %v2143
    %4023 = vmatprep.subr.mxu0 %v2148
    %4024 = vmatpush1.msra.mxu0 %v2147
    %4025 = vmatprep.subr.mxu0 %v2152
    %4026 = vmatpush1.msra.mxu0 %v2151
    %4027 = vmatprep.subr.mxu0 %v2156
    %4028 = vmatpush1.msra.mxu0 %v2155
    %4029 = vmatprep.subr.mxu0 %v2160
    %4030 = vmatpush1.msra.mxu0 %v2159
    %4031 = vmatprep.subr.mxu0 %v2164
    %4032 = vmatpush1.msra.mxu0 %v2163
    %4033 = vmatprep.subr.mxu0 %v2168
    %4034 = vmatpush1.msra.mxu0 %v2167
    %4035 = vmatprep.subr.mxu0 %v2172
    %4036 = vmatpush1.msra.mxu0 %v2171
    %4037 = vmatprep.subr.mxu0 0.0
    %4038 = vmatpush1.msra.mxu0 0.0
    %4039 = vmatprep.subr.mxu0 0.0
    %4040 = vmatpush1.msra.mxu0 0.0
    %4041 = vmatprep.subr.mxu0 0.0
    %4042 = vmatpush1.msra.mxu0 0.0
    %4043 = vmatprep.subr.mxu0 0.0
    %4044 = vmatpush1.msra.mxu0 0.0
    %4045 = vmatprep.subr.mxu0 0.0
    %4046 = vmatpush1.msra.mxu0 0.0
    %4047 = vmatprep.subr.mxu0 0.0
    %4048 = vmatpush1.msra.mxu0 0.0
    %4049 = vmatprep.subr.mxu0 0.0
    %4050 = vmatpush1.msra.mxu0 0.0
    %4051 = vmatprep.subr.mxu0 0.0
    %4052 = vmatpush1.msra.mxu0 0.0
    %4053 = vmatprep.subr.mxu0 0.0
    %4054 = vmatpush1.msra.mxu0 0.0
    %4055 = vmatprep.subr.mxu0 0.0
    %4056 = vmatpush1.msra.mxu0 0.0
    %4057 = vmatprep.subr.mxu0 0.0
    %4058 = vmatpush1.msra.mxu0 0.0
    %4059 = vmatprep.subr.mxu0 0.0
    %4060 = vmatpush1.msra.mxu0 0.0
    %4061 = vmatprep.subr.mxu0 0.0
    %4062 = vmatpush1.msra.mxu0 0.0
    %4063 = vmatprep.subr.mxu0 0.0
    %4064 = vmatpush1.msra.mxu0 0.0
    %4065 = vmatprep.subr.mxu0 0.0
    %4066 = vmatpush1.msra.mxu0 0.0
    %4067 = vmatprep.subr.mxu0 0.0
    %4068 = vmatpush1.msra.mxu0 0.0
    %4069 = vmatprep.mubr.f32.mxu0 0.0
    %4070 = vmatmul.mubr.f32.gmra.mrb[0].mxu0 %v3838
    %v4071 = vpop.f32.mrb[0].mxu0
    %v4072 = vadd.f32 0.0, %v4071
    %v4073 = vpop.f32.mrb[0].mxu0
    %v4074 = vadd.f32 0.0, %v4073
    %4075 = vdwg.mxu0
    %4076 = vmatprep.subr.mxu0 %v2114
    %4077 = vmatpush1.msra.mxu0 %v2113
    %4078 = vmatprep.subr.mxu0 %v2118
    %4079 = vmatpush1.msra.mxu0 %v2117
    %4080 = vmatprep.subr.mxu0 %v2122
    %4081 = vmatpush1.msra.mxu0 %v2121
    %4082 = vmatprep.subr.mxu0 %v2126
    %4083 = vmatpush1.msra.mxu0 %v2125
    %4084 = vmatprep.subr.mxu0 %v2130
    %4085 = vmatpush1.msra.mxu0 %v2129
    %4086 = vmatprep.subr.mxu0 %v2134
    %4087 = vmatpush1.msra.mxu0 %v2133
    %4088 = vmatprep.subr.mxu0 %v2138
    %4089 = vmatpush1.msra.mxu0 %v2137
    %4090 = vmatprep.subr.mxu0 %v2142
    %4091 = vmatpush1.msra.mxu0 %v2141
    %4092 = vmatprep.subr.mxu0 %v2146
    %4093 = vmatpush1.msra.mxu0 %v2145
    %4094 = vmatprep.subr.mxu0 %v2150
    %4095 = vmatpush1.msra.mxu0 %v2149
    %4096 = vmatprep.subr.mxu0 %v2154
    %4097 = vmatpush1.msra.mxu0 %v2153
    %4098 = vmatprep.subr.mxu0 %v2158
    %4099 = vmatpush1.msra.mxu0 %v2157
    %4100 = vmatprep.subr.mxu0 %v2162
    %4101 = vmatpush1.msra.mxu0 %v2161
    %4102 = vmatprep.subr.mxu0 %v2166
    %4103 = vmatpush1.msra.mxu0 %v2165
    %4104 = vmatprep.subr.mxu0 %v2170
    %4105 = vmatpush1.msra.mxu0 %v2169
    %4106 = vmatprep.subr.mxu0 %v2174
    %4107 = vmatpush1.msra.mxu0 %v2173
    %4108 = vmatprep.subr.mxu0 0.0
    %4109 = vmatpush1.msra.mxu0 0.0
    %4110 = vmatprep.subr.mxu0 0.0
    %4111 = vmatpush1.msra.mxu0 0.0
    %4112 = vmatprep.subr.mxu0 0.0
    %4113 = vmatpush1.msra.mxu0 0.0
    %4114 = vmatprep.subr.mxu0 0.0
    %4115 = vmatpush1.msra.mxu0 0.0
    %4116 = vmatprep.subr.mxu0 0.0
    %4117 = vmatpush1.msra.mxu0 0.0
    %4118 = vmatprep.subr.mxu0 0.0
    %4119 = vmatpush1.msra.mxu0 0.0
    %4120 = vmatprep.subr.mxu0 0.0
    %4121 = vmatpush1.msra.mxu0 0.0
    %4122 = vmatprep.subr.mxu0 0.0
    %4123 = vmatpush1.msra.mxu0 0.0
    %4124 = vmatprep.subr.mxu0 0.0
    %4125 = vmatpush1.msra.mxu0 0.0
    %4126 = vmatprep.subr.mxu0 0.0
    %4127 = vmatpush1.msra.mxu0 0.0
    %4128 = vmatprep.subr.mxu0 0.0
    %4129 = vmatpush1.msra.mxu0 0.0
    %4130 = vmatprep.subr.mxu0 0.0
    %4131 = vmatpush1.msra.mxu0 0.0
    %4132 = vmatprep.subr.mxu0 0.0
    %4133 = vmatpush1.msra.mxu0 0.0
    %4134 = vmatprep.subr.mxu0 0.0
    %4135 = vmatpush1.msra.mxu0 0.0
    %4136 = vmatprep.subr.mxu0 0.0
    %4137 = vmatpush1.msra.mxu0 0.0
    %4138 = vmatprep.subr.mxu0 0.0
    %4139 = vmatpush1.msra.mxu0 0.0
    %4140 = vmatprep.mubr.f32.mxu0 0.0
    %4141 = vmatmul.mubr.f32.gmra.mrb[0].mxu0 %v3838
    %v4142 = vpop.f32.mrb[0].mxu0
    %v4143 = vadd.f32 0.0, %v4142
    %v4144 = vpop.f32.mrb[0].mxu0
    %v4145 = vadd.f32 0.0, %v4144
    %4146 = vdwg.mxu0
    %v4147 = vadd.f32 %v1982, %v4072
    %v4148 = vadd.f32 %v1984, %v4074
    %v4149 = vadd.f32 %v2095, %v4143
    %v4150 = vadd.f32 %v2097, %v4145
    %v4151 = vxor.u32 %v4147, 2147483648
    %v4152 = vmul.f32 %v4151, 1.442695
    %v4153 = vpow.pop %v4152
    %v4154 = vadd.f32 %v4153, 1.0
    %v4155 = vrcp.pop %v4154
    %v4156 = vmul.f32 1.0, %v4155
    %v4157 = vxor.u32 %v4148, 2147483648
    %v4158 = vmul.f32 %v4157, 1.442695
    %v4159 = vpow.pop %v4158
    %v4160 = vadd.f32 %v4159, 1.0
    %v4161 = vrcp.pop %v4160
    %v4162 = vmul.f32 1.0, %v4161
    %v4163 = vtanh.pop %v4149
    %v4164 = vxor.u32 %v4150, 2147483648
    %v4165 = vmul.f32 %v4164, 1.442695
    %v4166 = vpow.pop %v4165
    %v4167 = vadd.f32 %v4166, 1.0
    %v4168 = vrcp.pop %v4167
    %v4169 = vmul.f32 1.0, %v4168
    %v4170 = vmul.f32 %v4162, %v3836
    %v4171 = vmul.f32 %v4156, %v4163
    %v4172 = vadd.f32 %v4170, %v4171
    %v4173 = vtanh.pop %v4172
    %v4174 = vmul.f32 %v4169, %v4173
    %4175 = vmatprep.subr.mxu0 %v2346
    %4176 = vmatpush1.msra.mxu0 %v2345
    %4177 = vmatprep.subr.mxu0 %v2350
    %4178 = vmatpush1.msra.mxu0 %v2349
    %4179 = vmatprep.subr.mxu0 %v2354
    %4180 = vmatpush1.msra.mxu0 %v2353
    %4181 = vmatprep.subr.mxu0 %v2358
    %4182 = vmatpush1.msra.mxu0 %v2357
    %4183 = vmatprep.subr.mxu0 %v2362
    %4184 = vmatpush1.msra.mxu0 %v2361
    %4185 = vmatprep.subr.mxu0 %v2366
    %4186 = vmatpush1.msra.mxu0 %v2365
    %4187 = vmatprep.subr.mxu0 %v2370
    %4188 = vmatpush1.msra.mxu0 %v2369
    %4189 = vmatprep.subr.mxu0 %v2374
    %4190 = vmatpush1.msra.mxu0 %v2373
    %4191 = vmatprep.subr.mxu0 %v2378
    %4192 = vmatpush1.msra.mxu0 %v2377
    %4193 = vmatprep.subr.mxu0 %v2382
    %4194 = vmatpush1.msra.mxu0 %v2381
    %4195 = vmatprep.subr.mxu0 %v2386
    %4196 = vmatpush1.msra.mxu0 %v2385
    %4197 = vmatprep.subr.mxu0 %v2390
    %4198 = vmatpush1.msra.mxu0 %v2389
    %4199 = vmatprep.subr.mxu0 %v2394
    %4200 = vmatpush1.msra.mxu0 %v2393
    %4201 = vmatprep.subr.mxu0 %v2398
    %4202 = vmatpush1.msra.mxu0 %v2397
    %4203 = vmatprep.subr.mxu0 %v2402
    %4204 = vmatpush1.msra.mxu0 %v2401
    %4205 = vmatprep.subr.mxu0 %v2406
    %4206 = vmatpush1.msra.mxu0 %v2405
    %4207 = vmatprep.subr.mxu0 %v2410
    %4208 = vmatpush1.msra.mxu0 %v2409
    %4209 = vmatprep.subr.mxu0 %v2414
    %4210 = vmatpush1.msra.mxu0 %v2413
    %4211 = vmatprep.subr.mxu0 %v2418
    %4212 = vmatpush1.msra.mxu0 %v2417
    %4213 = vmatprep.subr.mxu0 %v2422
    %4214 = vmatpush1.msra.mxu0 %v2421
    %4215 = vmatprep.subr.mxu0 %v2426
    %4216 = vmatpush1.msra.mxu0 %v2425
    %4217 = vmatprep.subr.mxu0 %v2430
    %4218 = vmatpush1.msra.mxu0 %v2429
    %4219 = vmatprep.subr.mxu0 %v2434
    %4220 = vmatpush1.msra.mxu0 %v2433
    %4221 = vmatprep.subr.mxu0 %v2438
    %4222 = vmatpush1.msra.mxu0 %v2437
    %4223 = vmatprep.subr.mxu0 %v2442
    %4224 = vmatpush1.msra.mxu0 %v2441
    %4225 = vmatprep.subr.mxu0 %v2446
    %4226 = vmatpush1.msra.mxu0 %v2445
    %4227 = vmatprep.subr.mxu0 %v2450
    %4228 = vmatpush1.msra.mxu0 %v2449
    %4229 = vmatprep.subr.mxu0 %v2454
    %4230 = vmatpush1.msra.mxu0 %v2453
    %4231 = vmatprep.subr.mxu0 %v2458
    %4232 = vmatpush1.msra.mxu0 %v2457
    %4233 = vmatprep.subr.mxu0 %v2462
    %4234 = vmatpush1.msra.mxu0 %v2461
    %4235 = vmatprep.subr.mxu0 %v2466
    %4236 = vmatpush1.msra.mxu0 %v2465
    %4237 = vmatprep.subr.mxu0 %v2470
    %4238 = vmatpush1.msra.mxu0 %v2469
    %4239 = vmatprep.mubr.f32.mxu0 %v4004
    %4240 = vmatmul.mubr.f32.gmra.mrb[0].mxu0 %v4174
    %v4241 = vpop.f32.mrb[0].mxu0
    %v4242 = vadd.f32 %v2478, %v4241
    %v4243 = vpop.f32.mrb[0].mxu0
    %v4244 = vadd.f32 %v2482, %v4243
    %4245 = vdwg.mxu0
    %4246 = vmatprep.subr.mxu0 %v2348
    %4247 = vmatpush1.msra.mxu0 %v2347
    %4248 = vmatprep.subr.mxu0 %v2352
    %4249 = vmatpush1.msra.mxu0 %v2351
    %4250 = vmatprep.subr.mxu0 %v2356
    %4251 = vmatpush1.msra.mxu0 %v2355
    %4252 = vmatprep.subr.mxu0 %v2360
    %4253 = vmatpush1.msra.mxu0 %v2359
    %4254 = vmatprep.subr.mxu0 %v2364
    %4255 = vmatpush1.msra.mxu0 %v2363
    %4256 = vmatprep.subr.mxu0 %v2368
    %4257 = vmatpush1.msra.mxu0 %v2367
    %4258 = vmatprep.subr.mxu0 %v2372
    %4259 = vmatpush1.msra.mxu0 %v2371
    %4260 = vmatprep.subr.mxu0 %v2376
    %4261 = vmatpush1.msra.mxu0 %v2375
    %4262 = vmatprep.subr.mxu0 %v2380
    %4263 = vmatpush1.msra.mxu0 %v2379
    %4264 = vmatprep.subr.mxu0 %v2384
    %4265 = vmatpush1.msra.mxu0 %v2383
    %4266 = vmatprep.subr.mxu0 %v2388
    %4267 = vmatpush1.msra.mxu0 %v2387
    %4268 = vmatprep.subr.mxu0 %v2392
    %4269 = vmatpush1.msra.mxu0 %v2391
    %4270 = vmatprep.subr.mxu0 %v2396
    %4271 = vmatpush1.msra.mxu0 %v2395
    %4272 = vmatprep.subr.mxu0 %v2400
    %4273 = vmatpush1.msra.mxu0 %v2399
    %4274 = vmatprep.subr.mxu0 %v2404
    %4275 = vmatpush1.msra.mxu0 %v2403
    %4276 = vmatprep.subr.mxu0 %v2408
    %4277 = vmatpush1.msra.mxu0 %v2407
    %4278 = vmatprep.subr.mxu0 %v2412
    %4279 = vmatpush1.msra.mxu0 %v2411
    %4280 = vmatprep.subr.mxu0 %v2416
    %4281 = vmatpush1.msra.mxu0 %v2415
    %4282 = vmatprep.subr.mxu0 %v2420
    %4283 = vmatpush1.msra.mxu0 %v2419
    %4284 = vmatprep.subr.mxu0 %v2424
    %4285 = vmatpush1.msra.mxu0 %v2423
    %4286 = vmatprep.subr.mxu0 %v2428
    %4287 = vmatpush1.msra.mxu0 %v2427
    %4288 = vmatprep.subr.mxu0 %v2432
    %4289 = vmatpush1.msra.mxu0 %v2431
    %4290 = vmatprep.subr.mxu0 %v2436
    %4291 = vmatpush1.msra.mxu0 %v2435
    %4292 = vmatprep.subr.mxu0 %v2440
    %4293 = vmatpush1.msra.mxu0 %v2439
    %4294 = vmatprep.subr.mxu0 %v2444
    %4295 = vmatpush1.msra.mxu0 %v2443
    %4296 = vmatprep.subr.mxu0 %v2448
    %4297 = vmatpush1.msra.mxu0 %v2447
    %4298 = vmatprep.subr.mxu0 %v2452
    %4299 = vmatpush1.msra.mxu0 %v2451
    %4300 = vmatprep.subr.mxu0 %v2456
    %4301 = vmatpush1.msra.mxu0 %v2455
    %4302 = vmatprep.subr.mxu0 %v2460
    %4303 = vmatpush1.msra.mxu0 %v2459
    %4304 = vmatprep.subr.mxu0 %v2464
    %4305 = vmatpush1.msra.mxu0 %v2463
    %4306 = vmatprep.subr.mxu0 %v2468
    %4307 = vmatpush1.msra.mxu0 %v2467
    %4308 = vmatprep.subr.mxu0 %v2472
    %4309 = vmatpush1.msra.mxu0 %v2471
    %4310 = vmatprep.mubr.f32.mxu0 %v4004
    %4311 = vmatmul.mubr.f32.gmra.mrb[0].mxu0 %v4174
    %v4312 = vpop.f32.mrb[0].mxu0
    %v4313 = vadd.f32 %v2486, %v4312
    %v4314 = vpop.f32.mrb[0].mxu0
    %v4315 = vadd.f32 %v2490, %v4314
    %4316 = vdwg.mxu0
    %v4317 = vxor.u32 %v4242, 2147483648
    %v4318 = vmul.f32 %v4317, 1.442695
    %v4319 = vpow.pop %v4318
    %v4320 = vadd.f32 %v4319, 1.0
    %v4321 = vrcp.pop %v4320
    %v4322 = vmul.f32 1.0, %v4321
    %v4323 = vxor.u32 %v4244, 2147483648
    %v4324 = vmul.f32 %v4323, 1.442695
    %v4325 = vpow.pop %v4324
    %v4326 = vadd.f32 %v4325, 1.0
    %v4327 = vrcp.pop %v4326
    %v4328 = vmul.f32 1.0, %v4327
    %v4329 = vtanh.pop %v4313
    %v4330 = vxor.u32 %v4315, 2147483648
    %v4331 = vmul.f32 %v4330, 1.442695
    %v4332 = vpow.pop %v4331
    %v4333 = vadd.f32 %v4332, 1.0
    %v4334 = vrcp.pop %v4333
    %v4335 = vmul.f32 1.0, %v4334
    %v4336 = vmul.f32 %v4328, %v4002
    %v4337 = vmul.f32 %v4322, %v4329
    %v4338 = vadd.f32 %v4336, %v4337
    %v4339 = vtanh.pop %v4338
    %v4340 = vmul.f32 %v4335, %v4339
    %4341 = vmatprep.subr.mxu0 %v2112
    %4342 = vmatpush1.msra.mxu0 %v2111
    %4343 = vmatprep.subr.mxu0 %v2116
    %4344 = vmatpush1.msra.mxu0 %v2115
    %4345 = vmatprep.subr.mxu0 %v2120
    %4346 = vmatpush1.msra.mxu0 %v2119
    %4347 = vmatprep.subr.mxu0 %v2124
    %4348 = vmatpush1.msra.mxu0 %v2123
    %4349 = vmatprep.subr.mxu0 %v2128
    %4350 = vmatpush1.msra.mxu0 %v2127
    %4351 = vmatprep.subr.mxu0 %v2132
    %4352 = vmatpush1.msra.mxu0 %v2131
    %4353 = vmatprep.subr.mxu0 %v2136
    %4354 = vmatpush1.msra.mxu0 %v2135
    %4355 = vmatprep.subr.mxu0 %v2140
    %4356 = vmatpush1.msra.mxu0 %v2139
    %4357 = vmatprep.subr.mxu0 %v2144
    %4358 = vmatpush1.msra.mxu0 %v2143
    %4359 = vmatprep.subr.mxu0 %v2148
    %4360 = vmatpush1.msra.mxu0 %v2147
    %4361 = vmatprep.subr.mxu0 %v2152
    %4362 = vmatpush1.msra.mxu0 %v2151
    %4363 = vmatprep.subr.mxu0 %v2156
    %4364 = vmatpush1.msra.mxu0 %v2155
    %4365 = vmatprep.subr.mxu0 %v2160
    %4366 = vmatpush1.msra.mxu0 %v2159
    %4367 = vmatprep.subr.mxu0 %v2164
    %4368 = vmatpush1.msra.mxu0 %v2163
    %4369 = vmatprep.subr.mxu0 %v2168
    %4370 = vmatpush1.msra.mxu0 %v2167
    %4371 = vmatprep.subr.mxu0 %v2172
    %4372 = vmatpush1.msra.mxu0 %v2171
    %4373 = vmatprep.subr.mxu0 0.0
    %4374 = vmatpush1.msra.mxu0 0.0
    %4375 = vmatprep.subr.mxu0 0.0
    %4376 = vmatpush1.msra.mxu0 0.0
    %4377 = vmatprep.subr.mxu0 0.0
    %4378 = vmatpush1.msra.mxu0 0.0
    %4379 = vmatprep.subr.mxu0 0.0
    %4380 = vmatpush1.msra.mxu0 0.0
    %4381 = vmatprep.subr.mxu0 0.0
    %4382 = vmatpush1.msra.mxu0 0.0
    %4383 = vmatprep.subr.mxu0 0.0
    %4384 = vmatpush1.msra.mxu0 0.0
    %4385 = vmatprep.subr.mxu0 0.0
    %4386 = vmatpush1.msra.mxu0 0.0
    %4387 = vmatprep.subr.mxu0 0.0
    %4388 = vmatpush1.msra.mxu0 0.0
    %4389 = vmatprep.subr.mxu0 0.0
    %4390 = vmatpush1.msra.mxu0 0.0
    %4391 = vmatprep.subr.mxu0 0.0
    %4392 = vmatpush1.msra.mxu0 0.0
    %4393 = vmatprep.subr.mxu0 0.0
    %4394 = vmatpush1.msra.mxu0 0.0
    %4395 = vmatprep.subr.mxu0 0.0
    %4396 = vmatpush1.msra.mxu0 0.0
    %4397 = vmatprep.subr.mxu0 0.0
    %4398 = vmatpush1.msra.mxu0 0.0
    %4399 = vmatprep.subr.mxu0 0.0
    %4400 = vmatpush1.msra.mxu0 0.0
    %4401 = vmatprep.subr.mxu0 0.0
    %4402 = vmatpush1.msra.mxu0 0.0
    %4403 = vmatprep.subr.mxu0 0.0
    %4404 = vmatpush1.msra.mxu0 0.0
    %4405 = vmatprep.mubr.f32.mxu0 0.0
    %4406 = vmatmul.mubr.f32.gmra.mrb[0].mxu0 %v4174
    %v4407 = vpop.f32.mrb[0].mxu0
    %v4408 = vadd.f32 0.0, %v4407
    %v4409 = vpop.f32.mrb[0].mxu0
    %v4410 = vadd.f32 0.0, %v4409
    %4411 = vdwg.mxu0
    %4412 = vmatprep.subr.mxu0 %v2114
    %4413 = vmatpush1.msra.mxu0 %v2113
    %4414 = vmatprep.subr.mxu0 %v2118
    %4415 = vmatpush1.msra.mxu0 %v2117
    %4416 = vmatprep.subr.mxu0 %v2122
    %4417 = vmatpush1.msra.mxu0 %v2121
    %4418 = vmatprep.subr.mxu0 %v2126
    %4419 = vmatpush1.msra.mxu0 %v2125
    %4420 = vmatprep.subr.mxu0 %v2130
    %4421 = vmatpush1.msra.mxu0 %v2129
    %4422 = vmatprep.subr.mxu0 %v2134
    %4423 = vmatpush1.msra.mxu0 %v2133
    %4424 = vmatprep.subr.mxu0 %v2138
    %4425 = vmatpush1.msra.mxu0 %v2137
    %4426 = vmatprep.subr.mxu0 %v2142
    %4427 = vmatpush1.msra.mxu0 %v2141
    %4428 = vmatprep.subr.mxu0 %v2146
    %4429 = vmatpush1.msra.mxu0 %v2145
    %4430 = vmatprep.subr.mxu0 %v2150
    %4431 = vmatpush1.msra.mxu0 %v2149
    %4432 = vmatprep.subr.mxu0 %v2154
    %4433 = vmatpush1.msra.mxu0 %v2153
    %4434 = vmatprep.subr.mxu0 %v2158
    %4435 = vmatpush1.msra.mxu0 %v2157
    %4436 = vmatprep.subr.mxu0 %v2162
    %4437 = vmatpush1.msra.mxu0 %v2161
    %4438 = vmatprep.subr.mxu0 %v2166
    %4439 = vmatpush1.msra.mxu0 %v2165
    %4440 = vmatprep.subr.mxu0 %v2170
    %4441 = vmatpush1.msra.mxu0 %v2169
    %4442 = vmatprep.subr.mxu0 %v2174
    %4443 = vmatpush1.msra.mxu0 %v2173
    %4444 = vmatprep.subr.mxu0 0.0
    %4445 = vmatpush1.msra.mxu0 0.0
    %4446 = vmatprep.subr.mxu0 0.0
    %4447 = vmatpush1.msra.mxu0 0.0
    %4448 = vmatprep.subr.mxu0 0.0
    %4449 = vmatpush1.msra.mxu0 0.0
    %4450 = vmatprep.subr.mxu0 0.0
    %4451 = vmatpush1.msra.mxu0 0.0
    %4452 = vmatprep.subr.mxu0 0.0
    %4453 = vmatpush1.msra.mxu0 0.0
    %4454 = vmatprep.subr.mxu0 0.0
    %4455 = vmatpush1.msra.mxu0 0.0
    %4456 = vmatprep.subr.mxu0 0.0
    %4457 = vmatpush1.msra.mxu0 0.0
    %4458 = vmatprep.subr.mxu0 0.0
    %4459 = vmatpush1.msra.mxu0 0.0
    %4460 = vmatprep.subr.mxu0 0.0
    %4461 = vmatpush1.msra.mxu0 0.0
    %4462 = vmatprep.subr.mxu0 0.0
    %4463 = vmatpush1.msra.mxu0 0.0
    %4464 = vmatprep.subr.mxu0 0.0
    %4465 = vmatpush1.msra.mxu0 0.0
    %4466 = vmatprep.subr.mxu0 0.0
    %4467 = vmatpush1.msra.mxu0 0.0
    %4468 = vmatprep.subr.mxu0 0.0
    %4469 = vmatpush1.msra.mxu0 0.0
    %4470 = vmatprep.subr.mxu0 0.0
    %4471 = vmatpush1.msra.mxu0 0.0
    %4472 = vmatprep.subr.mxu0 0.0
    %4473 = vmatpush1.msra.mxu0 0.0
    %4474 = vmatprep.subr.mxu0 0.0
    %4475 = vmatpush1.msra.mxu0 0.0
    %4476 = vmatprep.mubr.f32.mxu0 0.0
    %4477 = vmatmul.mubr.f32.gmra.mrb[0].mxu0 %v4174
    %v4478 = vpop.f32.mrb[0].mxu0
    %v4479 = vadd.f32 0.0, %v4478
    %v4480 = vpop.f32.mrb[0].mxu0
    %v4481 = vadd.f32 0.0, %v4480
    %4482 = vdwg.mxu0
    %v4483 = vadd.f32 %v1988, %v4408
    %v4484 = vadd.f32 %v1990, %v4410
    %v4485 = vadd.f32 %v2101, %v4479
    %v4486 = vadd.f32 %v2103, %v4481
    %v4487 = vxor.u32 %v4483, 2147483648
    %v4488 = vmul.f32 %v4487, 1.442695
    %v4489 = vpow.pop %v4488
    %v4490 = vadd.f32 %v4489, 1.0
    %v4491 = vrcp.pop %v4490
    %v4492 = vmul.f32 1.0, %v4491
    %v4493 = vxor.u32 %v4484, 2147483648
    %v4494 = vmul.f32 %v4493, 1.442695
    %v4495 = vpow.pop %v4494
    %v4496 = vadd.f32 %v4495, 1.0
    %v4497 = vrcp.pop %v4496
    %v4498 = vmul.f32 1.0, %v4497
    %v4499 = vtanh.pop %v4485
    %v4500 = vxor.u32 %v4486, 2147483648
    %v4501 = vmul.f32 %v4500, 1.442695
    %v4502 = vpow.pop %v4501
    %v4503 = vadd.f32 %v4502, 1.0
    %v4504 = vrcp.pop %v4503
    %v4505 = vmul.f32 1.0, %v4504
    %v4506 = vmul.f32 %v4498, %v4172
    %v4507 = vmul.f32 %v4492, %v4499
    %v4508 = vadd.f32 %v4506, %v4507
    %v4509 = vtanh.pop %v4508
    %v4510 = vmul.f32 %v4505, %v4509
    %4511 = vmatprep.subr.mxu0 %v2346
    %4512 = vmatpush1.msra.mxu0 %v2345
    %4513 = vmatprep.subr.mxu0 %v2350
    %4514 = vmatpush1.msra.mxu0 %v2349
    %4515 = vmatprep.subr.mxu0 %v2354
    %4516 = vmatpush1.msra.mxu0 %v2353
    %4517 = vmatprep.subr.mxu0 %v2358
    %4518 = vmatpush1.msra.mxu0 %v2357
    %4519 = vmatprep.subr.mxu0 %v2362
    %4520 = vmatpush1.msra.mxu0 %v2361
    %4521 = vmatprep.subr.mxu0 %v2366
    %4522 = vmatpush1.msra.mxu0 %v2365
    %4523 = vmatprep.subr.mxu0 %v2370
    %4524 = vmatpush1.msra.mxu0 %v2369
    %4525 = vmatprep.subr.mxu0 %v2374
    %4526 = vmatpush1.msra.mxu0 %v2373
    %4527 = vmatprep.subr.mxu0 %v2378
    %4528 = vmatpush1.msra.mxu0 %v2377
    %4529 = vmatprep.subr.mxu0 %v2382
    %4530 = vmatpush1.msra.mxu0 %v2381
    %4531 = vmatprep.subr.mxu0 %v2386
    %4532 = vmatpush1.msra.mxu0 %v2385
    %4533 = vmatprep.subr.mxu0 %v2390
    %4534 = vmatpush1.msra.mxu0 %v2389
    %4535 = vmatprep.subr.mxu0 %v2394
    %4536 = vmatpush1.msra.mxu0 %v2393
    %4537 = vmatprep.subr.mxu0 %v2398
    %4538 = vmatpush1.msra.mxu0 %v2397
    %4539 = vmatprep.subr.mxu0 %v2402
    %4540 = vmatpush1.msra.mxu0 %v2401
    %4541 = vmatprep.subr.mxu0 %v2406
    %4542 = vmatpush1.msra.mxu0 %v2405
    %4543 = vmatprep.subr.mxu0 %v2410
    %4544 = vmatpush1.msra.mxu0 %v2409
    %4545 = vmatprep.subr.mxu0 %v2414
    %4546 = vmatpush1.msra.mxu0 %v2413
    %4547 = vmatprep.subr.mxu0 %v2418
    %4548 = vmatpush1.msra.mxu0 %v2417
    %4549 = vmatprep.subr.mxu0 %v2422
    %4550 = vmatpush1.msra.mxu0 %v2421
    %4551 = vmatprep.subr.mxu0 %v2426
    %4552 = vmatpush1.msra.mxu0 %v2425
    %4553 = vmatprep.subr.mxu0 %v2430
    %4554 = vmatpush1.msra.mxu0 %v2429
    %4555 = vmatprep.subr.mxu0 %v2434
    %4556 = vmatpush1.msra.mxu0 %v2433
    %4557 = vmatprep.subr.mxu0 %v2438
    %4558 = vmatpush1.msra.mxu0 %v2437
    %4559 = vmatprep.subr.mxu0 %v2442
    %4560 = vmatpush1.msra.mxu0 %v2441
    %4561 = vmatprep.subr.mxu0 %v2446
    %4562 = vmatpush1.msra.mxu0 %v2445
    %4563 = vmatprep.subr.mxu0 %v2450
    %4564 = vmatpush1.msra.mxu0 %v2449
    %4565 = vmatprep.subr.mxu0 %v2454
    %4566 = vmatpush1.msra.mxu0 %v2453
    %4567 = vmatprep.subr.mxu0 %v2458
    %4568 = vmatpush1.msra.mxu0 %v2457
    %4569 = vmatprep.subr.mxu0 %v2462
    %4570 = vmatpush1.msra.mxu0 %v2461
    %4571 = vmatprep.subr.mxu0 %v2466
    %4572 = vmatpush1.msra.mxu0 %v2465
    %4573 = vmatprep.subr.mxu0 %v2470
    %4574 = vmatpush1.msra.mxu0 %v2469
    %4575 = vmatprep.mubr.f32.mxu0 %v4340
    %4576 = vmatmul.mubr.f32.gmra.mrb[0].mxu0 %v4510
    %v4577 = vpop.f32.mrb[0].mxu0
    %v4578 = vadd.f32 %v2478, %v4577
    %v4579 = vpop.f32.mrb[0].mxu0
    %v4580 = vadd.f32 %v2482, %v4579
    %4581 = vdwg.mxu0
    %4582 = vmatprep.subr.mxu0 %v2348
    %4583 = vmatpush1.msra.mxu0 %v2347
    %4584 = vmatprep.subr.mxu0 %v2352
    %4585 = vmatpush1.msra.mxu0 %v2351
    %4586 = vmatprep.subr.mxu0 %v2356
    %4587 = vmatpush1.msra.mxu0 %v2355
    %4588 = vmatprep.subr.mxu0 %v2360
    %4589 = vmatpush1.msra.mxu0 %v2359
    %4590 = vmatprep.subr.mxu0 %v2364
    %4591 = vmatpush1.msra.mxu0 %v2363
    %4592 = vmatprep.subr.mxu0 %v2368
    %4593 = vmatpush1.msra.mxu0 %v2367
    %4594 = vmatprep.subr.mxu0 %v2372
    %4595 = vmatpush1.msra.mxu0 %v2371
    %4596 = vmatprep.subr.mxu0 %v2376
    %4597 = vmatpush1.msra.mxu0 %v2375
    %4598 = vmatprep.subr.mxu0 %v2380
    %4599 = vmatpush1.msra.mxu0 %v2379
    %4600 = vmatprep.subr.mxu0 %v2384
    %4601 = vmatpush1.msra.mxu0 %v2383
    %4602 = vmatprep.subr.mxu0 %v2388
    %4603 = vmatpush1.msra.mxu0 %v2387
    %4604 = vmatprep.subr.mxu0 %v2392
    %4605 = vmatpush1.msra.mxu0 %v2391
    %4606 = vmatprep.subr.mxu0 %v2396
    %4607 = vmatpush1.msra.mxu0 %v2395
    %4608 = vmatprep.subr.mxu0 %v2400
    %4609 = vmatpush1.msra.mxu0 %v2399
    %4610 = vmatprep.subr.mxu0 %v2404
    %4611 = vmatpush1.msra.mxu0 %v2403
    %4612 = vmatprep.subr.mxu0 %v2408
    %4613 = vmatpush1.msra.mxu0 %v2407
    %4614 = vmatprep.subr.mxu0 %v2412
    %4615 = vmatpush1.msra.mxu0 %v2411
    %4616 = vmatprep.subr.mxu0 %v2416
    %4617 = vmatpush1.msra.mxu0 %v2415
    %4618 = vmatprep.subr.mxu0 %v2420
    %4619 = vmatpush1.msra.mxu0 %v2419
    %4620 = vmatprep.subr.mxu0 %v2424
    %4621 = vmatpush1.msra.mxu0 %v2423
    %4622 = vmatprep.subr.mxu0 %v2428
    %4623 = vmatpush1.msra.mxu0 %v2427
    %4624 = vmatprep.subr.mxu0 %v2432
    %4625 = vmatpush1.msra.mxu0 %v2431
    %4626 = vmatprep.subr.mxu0 %v2436
    %4627 = vmatpush1.msra.mxu0 %v2435
    %4628 = vmatprep.subr.mxu0 %v2440
    %4629 = vmatpush1.msra.mxu0 %v2439
    %4630 = vmatprep.subr.mxu0 %v2444
    %4631 = vmatpush1.msra.mxu0 %v2443
    %4632 = vmatprep.subr.mxu0 %v2448
    %4633 = vmatpush1.msra.mxu0 %v2447
    %4634 = vmatprep.subr.mxu0 %v2452
    %4635 = vmatpush1.msra.mxu0 %v2451
    %4636 = vmatprep.subr.mxu0 %v2456
    %4637 = vmatpush1.msra.mxu0 %v2455
    %4638 = vmatprep.subr.mxu0 %v2460
    %4639 = vmatpush1.msra.mxu0 %v2459
    %4640 = vmatprep.subr.mxu0 %v2464
    %4641 = vmatpush1.msra.mxu0 %v2463
    %4642 = vmatprep.subr.mxu0 %v2468
    %4643 = vmatpush1.msra.mxu0 %v2467
    %4644 = vmatprep.subr.mxu0 %v2472
    %4645 = vmatpush1.msra.mxu0 %v2471
    %4646 = vmatprep.mubr.f32.mxu0 %v4340
    %4647 = vmatmul.mubr.f32.gmra.mrb[0].mxu0 %v4510
    %v4648 = vpop.f32.mrb[0].mxu0
    %v4649 = vadd.f32 %v2486, %v4648
    %v4650 = vpop.f32.mrb[0].mxu0
    %v4651 = vadd.f32 %v2490, %v4650
    %4652 = vdwg.mxu0
    %v4653 = vxor.u32 %v4578, 2147483648
    %v4654 = vmul.f32 %v4653, 1.442695
    %v4655 = vpow.pop %v4654
    %v4656 = vadd.f32 %v4655, 1.0
    %v4657 = vrcp.pop %v4656
    %v4658 = vmul.f32 1.0, %v4657
    %v4659 = vxor.u32 %v4580, 2147483648
    %v4660 = vmul.f32 %v4659, 1.442695
    %v4661 = vpow.pop %v4660
    %v4662 = vadd.f32 %v4661, 1.0
    %v4663 = vrcp.pop %v4662
    %v4664 = vmul.f32 1.0, %v4663
    %v4665 = vtanh.pop %v4649
    %v4666 = vxor.u32 %v4651, 2147483648
    %v4667 = vmul.f32 %v4666, 1.442695
    %v4668 = vpow.pop %v4667
    %v4669 = vadd.f32 %v4668, 1.0
    %v4670 = vrcp.pop %v4669
    %v4671 = vmul.f32 1.0, %v4670
    %v4672 = vmul.f32 %v4664, %v4338
    %v4673 = vmul.f32 %v4658, %v4665
    %v4674 = vadd.f32 %v4672, %v4673
    %v4675 = vtanh.pop %v4674
    %v4676 = vmul.f32 %v4671, %v4675
    %4677 = vmatprep.subr.mxu0 %v2112
    %4678 = vmatpush1.msra.mxu0 %v2111
    %4679 = vmatprep.subr.mxu0 %v2116
    %4680 = vmatpush1.msra.mxu0 %v2115
    %4681 = vmatprep.subr.mxu0 %v2120
    %4682 = vmatpush1.msra.mxu0 %v2119
    %4683 = vmatprep.subr.mxu0 %v2124
    %4684 = vmatpush1.msra.mxu0 %v2123
    %4685 = vmatprep.subr.mxu0 %v2128
    %4686 = vmatpush1.msra.mxu0 %v2127
    %4687 = vmatprep.subr.mxu0 %v2132
    %4688 = vmatpush1.msra.mxu0 %v2131
    %4689 = vmatprep.subr.mxu0 %v2136
    %4690 = vmatpush1.msra.mxu0 %v2135
    %4691 = vmatprep.subr.mxu0 %v2140
    %4692 = vmatpush1.msra.mxu0 %v2139
    %4693 = vmatprep.subr.mxu0 %v2144
    %4694 = vmatpush1.msra.mxu0 %v2143
    %4695 = vmatprep.subr.mxu0 %v2148
    %4696 = vmatpush1.msra.mxu0 %v2147
    %4697 = vmatprep.subr.mxu0 %v2152
    %4698 = vmatpush1.msra.mxu0 %v2151
    %4699 = vmatprep.subr.mxu0 %v2156
    %4700 = vmatpush1.msra.mxu0 %v2155
    %4701 = vmatprep.subr.mxu0 %v2160
    %4702 = vmatpush1.msra.mxu0 %v2159
    %4703 = vmatprep.subr.mxu0 %v2164
    %4704 = vmatpush1.msra.mxu0 %v2163
    %4705 = vmatprep.subr.mxu0 %v2168
    %4706 = vmatpush1.msra.mxu0 %v2167
    %4707 = vmatprep.subr.mxu0 %v2172
    %4708 = vmatpush1.msra.mxu0 %v2171
    %4709 = vmatprep.subr.mxu0 0.0
    %4710 = vmatpush1.msra.mxu0 0.0
    %4711 = vmatprep.subr.mxu0 0.0
    %4712 = vmatpush1.msra.mxu0 0.0
    %4713 = vmatprep.subr.mxu0 0.0
    %4714 = vmatpush1.msra.mxu0 0.0
    %4715 = vmatprep.subr.mxu0 0.0
    %4716 = vmatpush1.msra.mxu0 0.0
    %4717 = vmatprep.subr.mxu0 0.0
    %4718 = vmatpush1.msra.mxu0 0.0
    %4719 = vmatprep.subr.mxu0 0.0
    %4720 = vmatpush1.msra.mxu0 0.0
    %4721 = vmatprep.subr.mxu0 0.0
    %4722 = vmatpush1.msra.mxu0 0.0
    %4723 = vmatprep.subr.mxu0 0.0
    %4724 = vmatpush1.msra.mxu0 0.0
    %4725 = vmatprep.subr.mxu0 0.0
    %4726 = vmatpush1.msra.mxu0 0.0
    %4727 = vmatprep.subr.mxu0 0.0
    %4728 = vmatpush1.msra.mxu0 0.0
    %4729 = vmatprep.subr.mxu0 0.0
    %4730 = vmatpush1.msra.mxu0 0.0
    %4731 = vmatprep.subr.mxu0 0.0
    %4732 = vmatpush1.msra.mxu0 0.0
    %4733 = vmatprep.subr.mxu0 0.0
    %4734 = vmatpush1.msra.mxu0 0.0
    %4735 = vmatprep.subr.mxu0 0.0
    %4736 = vmatpush1.msra.mxu0 0.0
    %4737 = vmatprep.subr.mxu0 0.0
    %4738 = vmatpush1.msra.mxu0 0.0
    %4739 = vmatprep.subr.mxu0 0.0
    %4740 = vmatpush1.msra.mxu0 0.0
    %4741 = vmatprep.mubr.f32.mxu0 0.0
    %4742 = vmatmul.mubr.f32.gmra.mrb[0].mxu0 %v4510
    %v4743 = vpop.f32.mrb[0].mxu0
    %v4744 = vadd.f32 0.0, %v4743
    %v4745 = vpop.f32.mrb[0].mxu0
    %v4746 = vadd.f32 0.0, %v4745
    %4747 = vdwg.mxu0
    %4748 = vmatprep.subr.mxu0 %v2114
    %4749 = vmatpush1.msra.mxu0 %v2113
    %4750 = vmatprep.subr.mxu0 %v2118
    %4751 = vmatpush1.msra.mxu0 %v2117
    %4752 = vmatprep.subr.mxu0 %v2122
    %4753 = vmatpush1.msra.mxu0 %v2121
    %4754 = vmatprep.subr.mxu0 %v2126
    %4755 = vmatpush1.msra.mxu0 %v2125
    %4756 = vmatprep.subr.mxu0 %v2130
    %4757 = vmatpush1.msra.mxu0 %v2129
    %4758 = vmatprep.subr.mxu0 %v2134
    %4759 = vmatpush1.msra.mxu0 %v2133
    %4760 = vmatprep.subr.mxu0 %v2138
    %4761 = vmatpush1.msra.mxu0 %v2137
    %4762 = vmatprep.subr.mxu0 %v2142
    %4763 = vmatpush1.msra.mxu0 %v2141
    %4764 = vmatprep.subr.mxu0 %v2146
    %4765 = vmatpush1.msra.mxu0 %v2145
    %4766 = vmatprep.subr.mxu0 %v2150
    %4767 = vmatpush1.msra.mxu0 %v2149
    %4768 = vmatprep.subr.mxu0 %v2154
    %4769 = vmatpush1.msra.mxu0 %v2153
    %4770 = vmatprep.subr.mxu0 %v2158
    %4771 = vmatpush1.msra.mxu0 %v2157
    %4772 = vmatprep.subr.mxu0 %v2162
    %4773 = vmatpush1.msra.mxu0 %v2161
    %4774 = vmatprep.subr.mxu0 %v2166
    %4775 = vmatpush1.msra.mxu0 %v2165
    %4776 = vmatprep.subr.mxu0 %v2170
    %4777 = vmatpush1.msra.mxu0 %v2169
    %4778 = vmatprep.subr.mxu0 %v2174
    %4779 = vmatpush1.msra.mxu0 %v2173
    %4780 = vmatprep.subr.mxu0 0.0
    %4781 = vmatpush1.msra.mxu0 0.0
    %4782 = vmatprep.subr.mxu0 0.0
    %4783 = vmatpush1.msra.mxu0 0.0
    %4784 = vmatprep.subr.mxu0 0.0
    %4785 = vmatpush1.msra.mxu0 0.0
    %4786 = vmatprep.subr.mxu0 0.0
    %4787 = vmatpush1.msra.mxu0 0.0
    %4788 = vmatprep.subr.mxu0 0.0
    %4789 = vmatpush1.msra.mxu0 0.0
    %4790 = vmatprep.subr.mxu0 0.0
    %4791 = vmatpush1.msra.mxu0 0.0
    %4792 = vmatprep.subr.mxu0 0.0
    %4793 = vmatpush1.msra.mxu0 0.0
    %4794 = vmatprep.subr.mxu0 0.0
    %4795 = vmatpush1.msra.mxu0 0.0
    %4796 = vmatprep.subr.mxu0 0.0
    %4797 = vmatpush1.msra.mxu0 0.0
    %4798 = vmatprep.subr.mxu0 0.0
    %4799 = vmatpush1.msra.mxu0 0.0
    %4800 = vmatprep.subr.mxu0 0.0
    %4801 = vmatpush1.msra.mxu0 0.0
    %4802 = vmatprep.subr.mxu0 0.0
    %4803 = vmatpush1.msra.mxu0 0.0
    %4804 = vmatprep.subr.mxu0 0.0
    %4805 = vmatpush1.msra.mxu0 0.0
    %4806 = vmatprep.subr.mxu0 0.0
    %4807 = vmatpush1.msra.mxu0 0.0
    %4808 = vmatprep.subr.mxu0 0.0
    %4809 = vmatpush1.msra.mxu0 0.0
    %4810 = vmatprep.subr.mxu0 0.0
    %4811 = vmatpush1.msra.mxu0 0.0
    %4812 = vmatprep.mubr.f32.mxu0 0.0
    %4813 = vmatmul.mubr.f32.gmra.mrb[0].mxu0 %v4510
    %v4814 = vpop.f32.mrb[0].mxu0
    %v4815 = vadd.f32 0.0, %v4814
    %v4816 = vpop.f32.mrb[0].mxu0
    %v4817 = vadd.f32 0.0, %v4816
    %4818 = vdwg.mxu0
    %v4819 = vadd.f32 %v1994, %v4744
    %v4820 = vadd.f32 %v1996, %v4746
    %v4821 = vadd.f32 %v2107, %v4815
    %v4822 = vadd.f32 %v2109, %v4817
    %v4823 = vxor.u32 %v4819, 2147483648
    %v4824 = vmul.f32 %v4823, 1.442695
    %v4825 = vpow.pop %v4824
    %v4826 = vadd.f32 %v4825, 1.0
    %v4827 = vrcp.pop %v4826
    %v4828 = vmul.f32 1.0, %v4827
    %v4829 = vxor.u32 %v4820, 2147483648
    %v4830 = vmul.f32 %v4829, 1.442695
    %v4831 = vpow.pop %v4830
    %v4832 = vadd.f32 %v4831, 1.0
    %v4833 = vrcp.pop %v4832
    %v4834 = vmul.f32 1.0, %v4833
    %v4835 = vtanh.pop %v4821
    %v4836 = vxor.u32 %v4822, 2147483648
    %v4837 = vmul.f32 %v4836, 1.442695
    %v4838 = vpow.pop %v4837
    %v4839 = vadd.f32 %v4838, 1.0
    %v4840 = vrcp.pop %v4839
    %v4841 = vmul.f32 1.0, %v4840
    %v4842 = vmul.f32 %v4834, %v4508
    %v4843 = vmul.f32 %v4828, %v4835
    %v4844 = vadd.f32 %v4842, %v4843
    %v4845 = vtanh.pop %v4844
    %v4846 = vmul.f32 %v4841, %v4845
    %4847 = vmatprep.subr.mxu0 %v2346
    %4848 = vmatpush1.msra.mxu0 %v2345
    %4849 = vmatprep.subr.mxu0 %v2350
    %4850 = vmatpush1.msra.mxu0 %v2349
    %4851 = vmatprep.subr.mxu0 %v2354
    %4852 = vmatpush1.msra.mxu0 %v2353
    %4853 = vmatprep.subr.mxu0 %v2358
    %4854 = vmatpush1.msra.mxu0 %v2357
    %4855 = vmatprep.subr.mxu0 %v2362
    %4856 = vmatpush1.msra.mxu0 %v2361
    %4857 = vmatprep.subr.mxu0 %v2366
    %4858 = vmatpush1.msra.mxu0 %v2365
    %4859 = vmatprep.subr.mxu0 %v2370
    %4860 = vmatpush1.msra.mxu0 %v2369
    %4861 = vmatprep.subr.mxu0 %v2374
    %4862 = vmatpush1.msra.mxu0 %v2373
    %4863 = vmatprep.subr.mxu0 %v2378
    %4864 = vmatpush1.msra.mxu0 %v2377
    %4865 = vmatprep.subr.mxu0 %v2382
    %4866 = vmatpush1.msra.mxu0 %v2381
    %4867 = vmatprep.subr.mxu0 %v2386
    %4868 = vmatpush1.msra.mxu0 %v2385
    %4869 = vmatprep.subr.mxu0 %v2390
    %4870 = vmatpush1.msra.mxu0 %v2389
    %4871 = vmatprep.subr.mxu0 %v2394
    %4872 = vmatpush1.msra.mxu0 %v2393
    %4873 = vmatprep.subr.mxu0 %v2398
    %4874 = vmatpush1.msra.mxu0 %v2397
    %4875 = vmatprep.subr.mxu0 %v2402
    %4876 = vmatpush1.msra.mxu0 %v2401
    %4877 = vmatprep.subr.mxu0 %v2406
    %4878 = vmatpush1.msra.mxu0 %v2405
    %4879 = vmatprep.subr.mxu0 %v2410
    %4880 = vmatpush1.msra.mxu0 %v2409
    %4881 = vmatprep.subr.mxu0 %v2414
    %4882 = vmatpush1.msra.mxu0 %v2413
    %4883 = vmatprep.subr.mxu0 %v2418
    %4884 = vmatpush1.msra.mxu0 %v2417
    %4885 = vmatprep.subr.mxu0 %v2422
    %4886 = vmatpush1.msra.mxu0 %v2421
    %4887 = vmatprep.subr.mxu0 %v2426
    %4888 = vmatpush1.msra.mxu0 %v2425
    %4889 = vmatprep.subr.mxu0 %v2430
    %4890 = vmatpush1.msra.mxu0 %v2429
    %4891 = vmatprep.subr.mxu0 %v2434
    %4892 = vmatpush1.msra.mxu0 %v2433
    %4893 = vmatprep.subr.mxu0 %v2438
    %4894 = vmatpush1.msra.mxu0 %v2437
    %4895 = vmatprep.subr.mxu0 %v2442
    %4896 = vmatpush1.msra.mxu0 %v2441
    %4897 = vmatprep.subr.mxu0 %v2446
    %4898 = vmatpush1.msra.mxu0 %v2445
    %4899 = vmatprep.subr.mxu0 %v2450
    %4900 = vmatpush1.msra.mxu0 %v2449
    %4901 = vmatprep.subr.mxu0 %v2454
    %4902 = vmatpush1.msra.mxu0 %v2453
    %4903 = vmatprep.subr.mxu0 %v2458
    %4904 = vmatpush1.msra.mxu0 %v2457
    %4905 = vmatprep.subr.mxu0 %v2462
    %4906 = vmatpush1.msra.mxu0 %v2461
    %4907 = vmatprep.subr.mxu0 %v2466
    %4908 = vmatpush1.msra.mxu0 %v2465
    %4909 = vmatprep.subr.mxu0 %v2470
    %4910 = vmatpush1.msra.mxu0 %v2469
    %4911 = vmatprep.mubr.f32.mxu0 %v4676
    %4912 = vmatmul.mubr.f32.gmra.mrb[0].mxu0 %v4846
    %v4913 = vpop.f32.mrb[0].mxu0
    %v4914 = vadd.f32 %v2478, %v4913
    %v4915 = vpop.f32.mrb[0].mxu0
    %v4916 = vadd.f32 %v2482, %v4915
    %4917 = vdwg.mxu0
    %4918 = vmatprep.subr.mxu0 %v2348
    %4919 = vmatpush1.msra.mxu0 %v2347
    %4920 = vmatprep.subr.mxu0 %v2352
    %4921 = vmatpush1.msra.mxu0 %v2351
    %4922 = vmatprep.subr.mxu0 %v2356
    %4923 = vmatpush1.msra.mxu0 %v2355
    %4924 = vmatprep.subr.mxu0 %v2360
    %4925 = vmatpush1.msra.mxu0 %v2359
    %4926 = vmatprep.subr.mxu0 %v2364
    %4927 = vmatpush1.msra.mxu0 %v2363
    %4928 = vmatprep.subr.mxu0 %v2368
    %4929 = vmatpush1.msra.mxu0 %v2367
    %4930 = vmatprep.subr.mxu0 %v2372
    %4931 = vmatpush1.msra.mxu0 %v2371
    %4932 = vmatprep.subr.mxu0 %v2376
    %4933 = vmatpush1.msra.mxu0 %v2375
    %4934 = vmatprep.subr.mxu0 %v2380
    %4935 = vmatpush1.msra.mxu0 %v2379
    %4936 = vmatprep.subr.mxu0 %v2384
    %4937 = vmatpush1.msra.mxu0 %v2383
    %4938 = vmatprep.subr.mxu0 %v2388
    %4939 = vmatpush1.msra.mxu0 %v2387
    %4940 = vmatprep.subr.mxu0 %v2392
    %4941 = vmatpush1.msra.mxu0 %v2391
    %4942 = vmatprep.subr.mxu0 %v2396
    %4943 = vmatpush1.msra.mxu0 %v2395
    %4944 = vmatprep.subr.mxu0 %v2400
    %4945 = vmatpush1.msra.mxu0 %v2399
    %4946 = vmatprep.subr.mxu0 %v2404
    %4947 = vmatpush1.msra.mxu0 %v2403
    %4948 = vmatprep.subr.mxu0 %v2408
    %4949 = vmatpush1.msra.mxu0 %v2407
    %4950 = vmatprep.subr.mxu0 %v2412
    %4951 = vmatpush1.msra.mxu0 %v2411
    %4952 = vmatprep.subr.mxu0 %v2416
    %4953 = vmatpush1.msra.mxu0 %v2415
    %4954 = vmatprep.subr.mxu0 %v2420
    %4955 = vmatpush1.msra.mxu0 %v2419
    %4956 = vmatprep.subr.mxu0 %v2424
    %4957 = vmatpush1.msra.mxu0 %v2423
    %4958 = vmatprep.subr.mxu0 %v2428
    %4959 = vmatpush1.msra.mxu0 %v2427
    %4960 = vmatprep.subr.mxu0 %v2432
    %4961 = vmatpush1.msra.mxu0 %v2431
    %4962 = vmatprep.subr.mxu0 %v2436
    %4963 = vmatpush1.msra.mxu0 %v2435
    %4964 = vmatprep.subr.mxu0 %v2440
    %4965 = vmatpush1.msra.mxu0 %v2439
    %4966 = vmatprep.subr.mxu0 %v2444
    %4967 = vmatpush1.msra.mxu0 %v2443
    %4968 = vmatprep.subr.mxu0 %v2448
    %4969 = vmatpush1.msra.mxu0 %v2447
    %4970 = vmatprep.subr.mxu0 %v2452
    %4971 = vmatpush1.msra.mxu0 %v2451
    %4972 = vmatprep.subr.mxu0 %v2456
    %4973 = vmatpush1.msra.mxu0 %v2455
    %4974 = vmatprep.subr.mxu0 %v2460
    %4975 = vmatpush1.msra.mxu0 %v2459
    %4976 = vmatprep.subr.mxu0 %v2464
    %4977 = vmatpush1.msra.mxu0 %v2463
    %4978 = vmatprep.subr.mxu0 %v2468
    %4979 = vmatpush1.msra.mxu0 %v2467
    %4980 = vmatprep.subr.mxu0 %v2472
    %4981 = vmatpush1.msra.mxu0 %v2471
    %4982 = vmatprep.mubr.f32.mxu0 %v4676
    %4983 = vmatmul.mubr.f32.gmra.mrb[0].mxu0 %v4846
    %v4984 = vpop.f32.mrb[0].mxu0
    %v4985 = vadd.f32 %v2486, %v4984
    %v4986 = vpop.f32.mrb[0].mxu0
    %v4987 = vadd.f32 %v2490, %v4986
    %4988 = vdwg.mxu0
    %v4989 = vxor.u32 %v4914, 2147483648
    %v4990 = vmul.f32 %v4989, 1.442695
    %v4991 = vpow.pop %v4990
    %v4992 = vadd.f32 %v4991, 1.0
    %v4993 = vrcp.pop %v4992
    %v4994 = vmul.f32 1.0, %v4993
    %v4995 = vxor.u32 %v4916, 2147483648
    %v4996 = vmul.f32 %v4995, 1.442695
    %v4997 = vpow.pop %v4996
    %v4998 = vadd.f32 %v4997, 1.0
    %v4999 = vrcp.pop %v4998
    %v5000 = vmul.f32 1.0, %v4999
    %v5001 = vtanh.pop %v4985
    %v5002 = vxor.u32 %v4987, 2147483648
    %v5003 = vmul.f32 %v5002, 1.442695
    %v5004 = vpow.pop %v5003
    %v5005 = vadd.f32 %v5004, 1.0
    %v5006 = vrcp.pop %v5005
    %v5007 = vmul.f32 1.0, %v5006
    %v5008 = vmul.f32 %v5000, %v4674
    %v5009 = vmul.f32 %v4994, %v5001
    %v5010 = vadd.f32 %v5008, %v5009
    %v5011 = vtanh.pop %v5010
    %v5012 = vmul.f32 %v5007, %v5011
    %v5013 = vld [vmem:[%s11] sm:$0xf]
    %v5014 = vld [vmem:[%s2] sm:$0xff]
    %v5015 = vadd.f32 %v1816, %v5014
    %v5017 = vlaneseq
    %v5018 = vshrl.u32 %v5017, 7
    %v5019 = vsub.s32 0, %v5018
    %v5020 = vrot.slane %v5013, %v5019
    %v5021 = vlaneseq
    %v5022 = vshrl.u32 %v5021, 7
    %v5023 = vsub.s32 2, %v5022
    %v5024 = vrot.slane %v5013, %v5023
    %v5027 = vlaneseq
    %v5028 = vshrl.u32 %v5027, 7
    %v5029 = vsub.s32 0, %v5028
    %v5030 = vrot.slane %v5020, %v5029
    %v5031 = vlaneseq
    %v5032 = vshrl.u32 %v5031, 7
    %v5033 = vsub.s32 0, %v5032
    %v5034 = vrot.slane %v5024, %v5033
    %v5035 = vmul.f32 %v5015, %v5030
    %v5036 = vmul.f32 %v5012, %v5034
    %v5037 = vlaneseq
    %v5038 = vshrl.u32 %v5037, 7
    %v5039 = vsub.s32 1, %v5038
    %v5040 = vrot.slane %v5013, %v5039
    %v5041 = vlaneseq
    %v5042 = vshrl.u32 %v5041, 7
    %v5043 = vsub.s32 3, %v5042
    %v5044 = vrot.slane %v5013, %v5043
    %v5047 = vlaneseq
    %v5048 = vshrl.u32 %v5047, 7
    %v5049 = vsub.s32 1, %v5048
    %v5050 = vrot.slane %v5040, %v5049
    %v5051 = vlaneseq
    %v5052 = vshrl.u32 %v5051, 7
    %v5053 = vsub.s32 1, %v5052
    %v5054 = vrot.slane %v5044, %v5053
    %v5055 = vadd.f32 %v5035, %v5050
    %v5056 = vadd.f32 %v5036, %v5054
    %v5057 = vmax.f32 %v5055, 0.0
    %v5058 = vmax.f32 %v5056, 0.0
    %v5059 = vld [vmem:[#allocation6] sm:$0xff]
    %v5060 = vld [vmem:[#allocation6 + $0x8] sm:$0xff]
    %v5061 = vld [vmem:[#allocation6 + $0x10] sm:$0xff]
    %v5062 = vld [vmem:[#allocation6 + $0x18] sm:$0xff]
    %v5063 = vld [vmem:[#allocation6 + $0x20] sm:$0xff]
    %v5064 = vld [vmem:[#allocation6 + $0x28] sm:$0xff]
    %v5065 = vld [vmem:[#allocation6 + $0x30] sm:$0xff]
    %v5066 = vld [vmem:[#allocation6 + $0x38] sm:$0xff]
    %v5067 = vld [vmem:[#allocation6 + $0x40] sm:$0xff]
    %v5068 = vld [vmem:[#allocation6 + $0x48] sm:$0xff]
    %v5069 = vld [vmem:[#allocation6 + $0x50] sm:$0xff]
    %v5070 = vld [vmem:[#allocation6 + $0x58] sm:$0xff]
    %v5071 = vld [vmem:[#allocation6 + $0x60] sm:$0xff]
    %v5072 = vld [vmem:[#allocation6 + $0x68] sm:$0xff]
    %v5073 = vld [vmem:[#allocation6 + $0x70] sm:$0xff]
    %v5074 = vld [vmem:[#allocation6 + $0x78] sm:$0xff]
    %v5075 = vld [vmem:[#allocation6 + $0x80] sm:$0xff]
    %v5076 = vld [vmem:[#allocation6 + $0x88] sm:$0xff]
    %v5077 = vld [vmem:[#allocation6 + $0x90] sm:$0xff]
    %v5078 = vld [vmem:[#allocation6 + $0x98] sm:$0xff]
    %v5079 = vld [vmem:[#allocation6 + $0xa0] sm:$0xff]
    %v5080 = vld [vmem:[#allocation6 + $0xa8] sm:$0xff]
    %v5081 = vld [vmem:[#allocation6 + $0xb0] sm:$0xff]
    %v5082 = vld [vmem:[#allocation6 + $0xb8] sm:$0xff]
    %v5083 = vld [vmem:[#allocation6 + $0xc0] sm:$0xff]
    %v5084 = vld [vmem:[#allocation6 + $0xc8] sm:$0xff]
    %v5085 = vld [vmem:[#allocation6 + $0xd0] sm:$0xff]
    %v5086 = vld [vmem:[#allocation6 + $0xd8] sm:$0xff]
    %v5087 = vld [vmem:[#allocation6 + $0xe0] sm:$0xff]
    %v5088 = vld [vmem:[#allocation6 + $0xe8] sm:$0xff]
    %v5089 = vld [vmem:[#allocation6 + $0xf0] sm:$0xff]
    %v5090 = vld [vmem:[#allocation6 + $0xf8] sm:$0xff]
    %v5091 = vld [vmem:[%s13] sm:$0x1]
    %v5093 = vlaneseq
    %v5094 = vshrl.u32 %v5093, 7
    %v5095 = vsub.s32 0, %v5094
    %v5096 = vrot.slane %v5091, %v5095
    %5098 = vmatprep.subr.mxu0 0.0
    %5099 = vmatpush1.msra.mxu0 %v5059
    %5100 = vmatprep.subr.mxu0 0.0
    %5101 = vmatpush1.msra.mxu0 %v5060
    %5102 = vmatprep.subr.mxu0 0.0
    %5103 = vmatpush1.msra.mxu0 %v5061
    %5104 = vmatprep.subr.mxu0 0.0
    %5105 = vmatpush1.msra.mxu0 %v5062
    %5106 = vmatprep.subr.mxu0 0.0
    %5107 = vmatpush1.msra.mxu0 %v5063
    %5108 = vmatprep.subr.mxu0 0.0
    %5109 = vmatpush1.msra.mxu0 %v5064
    %5110 = vmatprep.subr.mxu0 0.0
    %5111 = vmatpush1.msra.mxu0 %v5065
    %5112 = vmatprep.subr.mxu0 0.0
    %5113 = vmatpush1.msra.mxu0 %v5066
    %5114 = vmatprep.subr.mxu0 0.0
    %5115 = vmatpush1.msra.mxu0 %v5067
    %5116 = vmatprep.subr.mxu0 0.0
    %5117 = vmatpush1.msra.mxu0 %v5068
    %5118 = vmatprep.subr.mxu0 0.0
    %5119 = vmatpush1.msra.mxu0 %v5069
    %5120 = vmatprep.subr.mxu0 0.0
    %5121 = vmatpush1.msra.mxu0 %v5070
    %5122 = vmatprep.subr.mxu0 0.0
    %5123 = vmatpush1.msra.mxu0 %v5071
    %5124 = vmatprep.subr.mxu0 0.0
    %5125 = vmatpush1.msra.mxu0 %v5072
    %5126 = vmatprep.subr.mxu0 0.0
    %5127 = vmatpush1.msra.mxu0 %v5073
    %5128 = vmatprep.subr.mxu0 0.0
    %5129 = vmatpush1.msra.mxu0 %v5074
    %5130 = vmatprep.subr.mxu0 0.0
    %5131 = vmatpush1.msra.mxu0 %v5075
    %5132 = vmatprep.subr.mxu0 0.0
    %5133 = vmatpush1.msra.mxu0 %v5076
    %5134 = vmatprep.subr.mxu0 0.0
    %5135 = vmatpush1.msra.mxu0 %v5077
    %5136 = vmatprep.subr.mxu0 0.0
    %5137 = vmatpush1.msra.mxu0 %v5078
    %5138 = vmatprep.subr.mxu0 0.0
    %5139 = vmatpush1.msra.mxu0 %v5079
    %5140 = vmatprep.subr.mxu0 0.0
    %5141 = vmatpush1.msra.mxu0 %v5080
    %5142 = vmatprep.subr.mxu0 0.0
    %5143 = vmatpush1.msra.mxu0 %v5081
    %5144 = vmatprep.subr.mxu0 0.0
    %5145 = vmatpush1.msra.mxu0 %v5082
    %5146 = vmatprep.subr.mxu0 0.0
    %5147 = vmatpush1.msra.mxu0 %v5083
    %5148 = vmatprep.subr.mxu0 0.0
    %5149 = vmatpush1.msra.mxu0 %v5084
    %5150 = vmatprep.subr.mxu0 0.0
    %5151 = vmatpush1.msra.mxu0 %v5085
    %5152 = vmatprep.subr.mxu0 0.0
    %5153 = vmatpush1.msra.mxu0 %v5086
    %5154 = vmatprep.subr.mxu0 0.0
    %5155 = vmatpush1.msra.mxu0 %v5087
    %5156 = vmatprep.subr.mxu0 0.0
    %5157 = vmatpush1.msra.mxu0 %v5088
    %5158 = vmatprep.subr.mxu0 0.0
    %5159 = vmatpush1.msra.mxu0 %v5089
    %5160 = vmatprep.subr.mxu0 0.0
    %5161 = vmatpush1.msra.mxu0 %v5090
    %5162 = vmatprep.mubr.f32.mxu0 %v5058
    %5163 = vmatmul.mubr.f32.gmra.mrb[0].mxu0 %v5057
    %v5164 = vpop.f32.mrb[0].mxu0
    %v5165 = vadd.f32 %v5096, %v5164
    %v5166 = vpop.f32.mrb[0].mxu0
    %5167 = vdwg.mxu0
    %v5168 = vld [vmem:[%s14] sm:$0x3]
    %v5169 = vlaneseq
    %v5170 = vshrl.u32 %v5169, 7
    %v5171 = vsub.s32 0, %v5170
    %v5172 = vrot.slane %v5168, %v5171
    %v5173 = vmul.f32 %v5165, %v5172
    %v5174 = vlaneseq
    %v5175 = vshrl.u32 %v5174, 7
    %v5176 = vsub.s32 1, %v5175
    %v5177 = vrot.slane %v5168, %v5176
    %v5178 = vadd.f32 %v5173, %v5177
    %v5179 = vmax.f32 %v5178, 0.0
    %v5180 = vld [vmem:[%s15] sm:$0xff]
    %v5181 = vld [vmem:[%s15 + $0x8] sm:$0xff]
    %v5182 = vld [vmem:[%s16] sm:$0x1]
    %v5184 = vlaneseq
    %v5185 = vshrl.u32 %v5184, 7
    %v5186 = vsub.s32 0, %v5185
    %v5187 = vrot.slane %v5182, %v5186
    %vm5189 = vcmask 130048
    %v5191 = vsel %vm5189, %v5179, 0
    %5193 = vmatprep.subr.mxu0 0.0
    %5194 = vmatpush1.msra.mxu0 %v5180
    %5195 = vmatprep.subr.mxu0 0.0
    %5196 = vmatpush1.msra.mxu0 %v5181
    %5197 = vmatprep.subr.mxu0 0.0
    %5198 = vmatpush1.msra.mxu0 0.0
    %5199 = vmatprep.subr.mxu0 0.0
    %5200 = vmatpush1.msra.mxu0 0.0
    %5201 = vmatprep.subr.mxu0 0.0
    %5202 = vmatpush1.msra.mxu0 0.0
    %5203 = vmatprep.subr.mxu0 0.0
    %5204 = vmatpush1.msra.mxu0 0.0
    %5205 = vmatprep.subr.mxu0 0.0
    %5206 = vmatpush1.msra.mxu0 0.0
    %5207 = vmatprep.subr.mxu0 0.0
    %5208 = vmatpush1.msra.mxu0 0.0
    %5209 = vmatprep.subr.mxu0 0.0
    %5210 = vmatpush1.msra.mxu0 0.0
    %5211 = vmatprep.subr.mxu0 0.0
    %5212 = vmatpush1.msra.mxu0 0.0
    %5213 = vmatprep.subr.mxu0 0.0
    %5214 = vmatpush1.msra.mxu0 0.0
    %5215 = vmatprep.subr.mxu0 0.0
    %5216 = vmatpush1.msra.mxu0 0.0
    %5217 = vmatprep.subr.mxu0 0.0
    %5218 = vmatpush1.msra.mxu0 0.0
    %5219 = vmatprep.subr.mxu0 0.0
    %5220 = vmatpush1.msra.mxu0 0.0
    %5221 = vmatprep.subr.mxu0 0.0
    %5222 = vmatpush1.msra.mxu0 0.0
    %5223 = vmatprep.subr.mxu0 0.0
    %5224 = vmatpush1.msra.mxu0 0.0
    %5225 = vmatprep.subr.mxu0 0.0
    %5226 = vmatpush1.msra.mxu0 0.0
    %5227 = vmatprep.subr.mxu0 0.0
    %5228 = vmatpush1.msra.mxu0 0.0
    %5229 = vmatprep.subr.mxu0 0.0
    %5230 = vmatpush1.msra.mxu0 0.0
    %5231 = vmatprep.subr.mxu0 0.0
    %5232 = vmatpush1.msra.mxu0 0.0
    %5233 = vmatprep.subr.mxu0 0.0
    %5234 = vmatpush1.msra.mxu0 0.0
    %5235 = vmatprep.subr.mxu0 0.0
    %5236 = vmatpush1.msra.mxu0 0.0
    %5237 = vmatprep.subr.mxu0 0.0
    %5238 = vmatpush1.msra.mxu0 0.0
    %5239 = vmatprep.subr.mxu0 0.0
    %5240 = vmatpush1.msra.mxu0 0.0
    %5241 = vmatprep.subr.mxu0 0.0
    %5242 = vmatpush1.msra.mxu0 0.0
    %5243 = vmatprep.subr.mxu0 0.0
    %5244 = vmatpush1.msra.mxu0 0.0
    %5245 = vmatprep.subr.mxu0 0.0
    %5246 = vmatpush1.msra.mxu0 0.0
    %5247 = vmatprep.subr.mxu0 0.0
    %5248 = vmatpush1.msra.mxu0 0.0
    %5249 = vmatprep.subr.mxu0 0.0
    %5250 = vmatpush1.msra.mxu0 0.0
    %5251 = vmatprep.subr.mxu0 0.0
    %5252 = vmatpush1.msra.mxu0 0.0
    %5253 = vmatprep.subr.mxu0 0.0
    %5254 = vmatpush1.msra.mxu0 0.0
    %5255 = vmatprep.subr.mxu0 0.0
    %5256 = vmatpush1.msra.mxu0 0.0
    %5257 = vmatprep.mubr.f32.mxu0 0.0
    %5258 = vmatmul.mubr.f32.gmra.mrb[0].mxu0 %v5191
    %v5259 = vpop.f32.mrb[0].mxu0
    %v5260 = vadd.f32 %v5187, %v5259
    %v5261 = vpop.f32.mrb[0].mxu0
    %5262 = vdwg.mxu0
    %vm5263 = vcmask 15360
    %5264 = vst.msk [vmem:[%s17] sm:$0xff] %vm5263, %v5260
    // Predicated region
    $region82: #{_lambda_.1} parent=1 // pred_check
      _
    $region83: #{_lambda_.1} parent=1 // pred_check_branch
      %5266 = sbr.rel (0) target = $region85
    $region84: #{_lambda_.1} parent=1 // pred_region
      _
    $region85: #{_lambda_.1} parent=1 // pred_fallthru
      _
    // Predicated region
    $region86: #{_lambda_.1} parent=1 // pred_check
      _
    $region87: #{_lambda_.1} parent=1 // pred_check_branch
      %5268 = sbr.rel (0) target = $region89
    $region88: #{_lambda_.1} parent=1 // pred_region
      _
    $region89: #{_lambda_.1} parent=1 // pred_fallthru
      _
    %5269 = vsyncpa [#allocation3], 1
    %5270 = vsyncpa [#allocation5], 1

</llo_original>
